<compile_context>
chip_gen: v7x
topology: tpu7x:2x2x1
jax: 0.10.0
libtpu: 0.0.40
codegen_flags: <defaults>
</compile_context>

<pallas_src>
import numpy as np
import jax
import jax.numpy as jnp
from jax import lax
from jax.experimental import pallas as pl
from jax.experimental.pallas import tpu as pltpu


def _round_up(x, m):
    return ((x + m - 1) // m) * m


def _pick_chunk(T, max_chunk):
    for c in range(min(T, max_chunk), 0, -1):
        if T % c == 0:
            return c
    return 1


# ----------------------------------------------------------------------------
# Fused whole-sequence kernel: embedding + GRU cell + Linear + LogSoftmax
# + in-kernel next-token feedback, CHUNK steps per grid iteration
# ----------------------------------------------------------------------------
def decoder_seq_kernel(
    # scalar prefetch (SMEM)
    sos_ref,       # (1,)      int32   <sos> token id
    flags_ref,     # (T,)      int32   per-step teacher-forcing flag
    tgt_ref,       # (T*Bp,)   int32   flattened target token ids
    # VMEM-resident inputs (constant index maps)
    h0_ref,        # (Bp, Hp)      f32   initial hidden state
    emb_ref,       # (Vp, Ep)      f32   embedding table (zero-padded)
    w_ref,         # (Ep+Hp, 4Hp)  bf16  fused GRU weight  [r | z | n_i | n_h]
    b_ref,         # (1, 4Hp)      f32   fused GRU bias [bir+bhr | biz+bhz | bin | bhn]
    w_hat_ref,     # (Hp, Vp)      bf16  output projection (zero-padded)
    b_hat_ref,     # (1, Vp)       f32   projection bias (-1e30 on vocab padding)
    # outputs
    logp_ref,      # (CHUNK, Bp, Vp) f32  log-probabilities for this chunk
    hfin_ref,      # (Bp, Hp)        f32  final hidden state (resident block)
    # scratch (persists across grid steps)
    h_acc,         # (Bp, Hp)      f32   carried hidden state
    xh_scr,        # (Bp, Ep+Hp)   f32   [ x_t | h_{t-1} ] staging buffer; the
                   #                     x-half carries the next input embedding
):
    t = pl.program_id(0)
    chunk = logp_ref.shape[0]
    Bp, Hp = h_acc.shape
    Ep = xh_scr.shape[1] - Hp
    Vp = b_hat_ref.shape[1]

    # ---- step-0 init: hidden <- h0, current input embedding <- emb[<sos>] ----
    @pl.when(t == 0)
    def _init():
        h_acc[...] = h0_ref[...]
        sos_row = emb_ref[pl.ds(sos_ref[0], 1), :]                     # (1, Ep)
        xh_scr[:, pl.ds(0, Ep)] = jnp.broadcast_to(sos_row, (Bp, Ep))

    # hoisted out of the unrolled chunk loop (JAX does not CSE broadcasts)
    iota_v = lax.broadcasted_iota(jnp.int32, (Bp, Vp), 1)

    def step(s, carry):
        gt = t * chunk + s                         # global decode step index

        # ---- GRU cell: single fused MXU pass over [x | h] ---------------------
        xh_scr[:, pl.ds(Ep, Hp)] = h_acc[...]
        h = h_acc[...]
        g = jnp.dot(xh_scr[...].astype(jnp.bfloat16), w_ref[...],
                    preferred_element_type=jnp.float32) + b_ref[...]
        r = jax.nn.sigmoid(g[:, :Hp])
        z = jax.nn.sigmoid(g[:, Hp:2 * Hp])
        n = jnp.tanh(g[:, 2 * Hp:3 * Hp] + r * g[:, 3 * Hp:4 * Hp])
        h_new = (1.0 - z) * n + z * h
        h_acc[...] = h_new

        # ---- DecoderHat: Linear + LogSoftmax (f32 logits; vocab pad -1e30) ----
        logits = jnp.dot(h_new.astype(jnp.bfloat16), w_hat_ref[...],
                         preferred_element_type=jnp.float32) + b_hat_ref[...]
        mx = jnp.max(logits, axis=-1, keepdims=True)
        lse = mx + jnp.log(jnp.sum(jnp.exp(logits - mx), axis=-1, keepdims=True))
        logp_ref[pl.ds(s, 1)] = (logits - lse)[None]

        # ---- next input embedding (in-kernel feedback) -------------------------
        f = flags_ref[gt]

        @pl.when(f == 1)          # teacher forcing: gather emb rows of targets[t]
        def _tf():
            for b in range(Bp):
                tok = tgt_ref[gt * Bp + b]
                xh_scr[pl.ds(b, 1), pl.ds(0, Ep)] = emb_ref[pl.ds(tok, 1), :]

        @pl.when(f == 0)          # greedy: first-max argmax (torch.topk order)
        def _greedy():
            amax = jnp.min(jnp.where(logits >= mx, iota_v, Vp),
                           axis=-1, keepdims=True)                     # (Bp, 1)
            onehot = (iota_v == amax).astype(jnp.float32)
            # TODO(synk): replace with per-row dynamic gathers once scalar
            # extraction of the argmax from vector registers is available;
            # this matmul only runs on non-teacher-forced steps.
            xh_scr[:, pl.ds(0, Ep)] = jnp.dot(
                onehot, emb_ref[...], preferred_element_type=jnp.float32)

        return carry

    lax.fori_loop(0, chunk, step, 0, unroll=True)

    # ---- single final-hidden writeback on the last grid step -------------------
    @pl.when(t == pl.num_programs(0) - 1)
    def _fin():
        hfin_ref[...] = h_acc[...]


# ----------------------------------------------------------------------------
# Parameter packing (one-time): fuse GRU gates into one weight, pad to (8,128)
# ----------------------------------------------------------------------------
def pack_params(p):
    V, E = p["emb"].shape
    H = p["w_hr"].shape[0]
    Ep, Hp, Vp = _round_up(E, 128), _round_up(H, 128), _round_up(V, 128)

    def pad2(a, rows, cols):
        out = jnp.zeros((rows, cols), jnp.float32)
        return out.at[:a.shape[0], :a.shape[1]].set(a)

    def col_block(w_i, w_h):
        # input-weight rows (E->Ep) stacked over hidden-weight rows (H->Hp)
        top = pad2(w_i, Ep, Hp) if w_i is not None else jnp.zeros((Ep, Hp), jnp.float32)
        bot = pad2(w_h, Hp, Hp) if w_h is not None else jnp.zeros((Hp, Hp), jnp.float32)
        return jnp.concatenate([top, bot], axis=0)

    # column blocks: [r | z | n_i | n_h]; n kept split so r*(W_hn h + b_hn) is exact
    w_fused = jnp.concatenate([
        col_block(p["w_ir"], p["w_hr"]),
        col_block(p["w_iz"], p["w_hz"]),
        col_block(p["w_in"], None),
        col_block(None, p["w_hn"]),
    ], axis=1).astype(jnp.bfloat16)

    def pad_bias(b):
        return jnp.zeros((1, Hp), jnp.float32).at[0, :b.shape[0]].set(b)

    b_fused = jnp.concatenate([
        pad_bias(p["b_ir"] + p["b_hr"]),
        pad_bias(p["b_iz"] + p["b_hz"]),
        pad_bias(p["b_in"]),
        pad_bias(p["b_hn"]),
    ], axis=1)

    b_hat = jnp.full((1, Vp), -1e30, jnp.float32).at[0, :V].set(p["b_hat"])

    return {
        "emb":   pad2(p["emb"], Vp, Ep),                           # f32 (row-gathered)
        "w":     w_fused,                                          # bf16 (Ep+Hp, 4Hp)
        "b":     b_fused,                                          # f32  (1, 4Hp)
        "w_hat": pad2(p["w_hat"], Hp, Vp).astype(jnp.bfloat16),    # bf16 (Hp, Vp)
        "b_hat": b_hat,                                            # f32  (1, Vp)
        "dims":  (V, E, H, Vp, Ep, Hp),
    }


# ----------------------------------------------------------------------------
# Wrapper: mirror of Decoder.forward, whole T loop in a single pallas_call
# ----------------------------------------------------------------------------
def decoder_forward(packed, hidden, encoder_outputs, sos_index, targets, tf_flags,
                    max_chunk=8):
    """hidden: (1, B, H) f32; targets: (T, B) int; tf_flags: (T,) 0/1."""
    del encoder_outputs  # attention is None path: rnn_input = embedded
    V, E, H, Vp, Ep, Hp = packed["dims"]
    T, B = targets.shape
    Bp = max(8, _round_up(B, 8))
    chunk = _pick_chunk(T, max_chunk)
    n_chunks = T // chunk

    # flattened 1-D targets live in SMEM via scalar prefetch (avoids the 2-D
    # SMEM [rows->8, cols->128] padding blowup and any per-step DMA)
    tgt_flat = jnp.zeros((T, Bp), jnp.int32).at[:, :B].set(
        targets.astype(jnp.int32)).reshape(T * Bp)
    h0_p = jnp.zeros((Bp, Hp), jnp.float32).at[:B, :H].set(hidden[0])
    sos_arr = jnp.asarray([sos_index], dtype=jnp.int32)
    flags_arr = jnp.asarray(tf_flags, dtype=jnp.int32)

    def _run(single_buffer_weights):
        # resident operands: constant index_map. Buffered(1) halves their VMEM
        # footprint (they're DMA'd once; no double buffering needed) - matters
        # on v7x where physical VMEM is 64 MiB.
        kw = {"pipeline_mode": pl.Buffered(1)} if single_buffer_weights else {}

        def const_spec(shape):
            nd = len(shape)
            return pl.BlockSpec(shape, lambda t, *prefetch: (0,) * nd, **kw)

        grid_spec = pltpu.PrefetchScalarGridSpec(
            num_scalar_prefetch=3,                   # sos, flags, targets -> SMEM
            grid=(n_chunks,),
            in_specs=[
                const_spec((Bp, Hp)),                # h0          (resident)
                const_spec((Vp, Ep)),                # embedding   (resident)
                const_spec((Ep + Hp, 4 * Hp)),       # fused GRU W (resident, bf16)
                const_spec((1, 4 * Hp)),             # fused GRU b (resident)
                const_spec((Hp, Vp)),                # w_hat       (resident, bf16)
                const_spec((1, Vp)),                 # b_hat       (resident)
            ],
            out_specs=(
                pl.BlockSpec((chunk, Bp, Vp), lambda t, *prefetch: (t, 0, 0)),
                pl.BlockSpec((Bp, Hp), lambda t, *prefetch: (0, 0)),
            ),
            scratch_shapes=[
                pltpu.VMEM((Bp, Hp), jnp.float32),        # carried hidden state
                pltpu.VMEM((Bp, Ep + Hp), jnp.float32),   # [x | h] staging buffer
            ],
        )
        return pl.pallas_call(
            decoder_seq_kernel,
            out_shape=(jax.ShapeDtypeStruct((T, Bp, Vp), jnp.float32),
                       jax.ShapeDtypeStruct((Bp, Hp), jnp.float32)),
            grid_spec=grid_spec,
            compiler_params=pltpu.CompilerParams(
                dimension_semantics=("arbitrary",),       # sequential recurrence
                # above v5e/v6e default scoped limits, below v7x's 64 MiB with headroom
                vmem_limit_bytes=48 * 1024 * 1024),
        )(sos_arr, flags_arr, tgt_flat, h0_p,
          packed["emb"], packed["w"], packed["b"],
          packed["w_hat"], packed["b_hat"])

    try:
        logp_p, h_fin_p = _run(True)
    except Exception:  # pragma: no cover - fall back if Buffered(1) is rejected
        logp_p, h_fin_p = _run(False)

    logp = logp_p[:, :B, :V]                                # (T, B, V)
    h_final = h_fin_p[:B, :H][None]                         # (1, B, H)
    return logp, h_final


# ----------------------------------------------------------------------------
# Pure-JAX reference mirroring the kernel numerics (bf16 MXU inputs, f32 accum)
# ----------------------------------------------------------------------------
def _bf16(x):
    return x.astype(jnp.bfloat16).astype(jnp.float32)


def ref_forward(p, hidden, encoder_outputs, sos_index, targets, tf_flags):
    del encoder_outputs
    T, B = targets.shape
    inp = jnp.full((B,), sos_index, jnp.int32)
    h = hidden[0]
    w_ir, w_iz, w_in = _bf16(p["w_ir"]), _bf16(p["w_iz"]), _bf16(p["w_in"])
    w_hr, w_hz, w_hn = _bf16(p["w_hr"]), _bf16(p["w_hz"]), _bf16(p["w_hn"])
    w_hat = _bf16(p["w_hat"])
    outs = []
    for t in range(T):
        x = _bf16(p["emb"][inp])
        hb = _bf16(h)
        r = jax.nn.sigmoid(x @ w_ir + p["b_ir"] + p["b_hr"] + hb @ w_hr)
        z = jax.nn.sigmoid(x @ w_iz + p["b_iz"] + p["b_hz"] + hb @ w_hz)
        n = jnp.tanh(x @ w_in + p["b_in"] + r * (hb @ w_hn + p["b_hn"]))
        h = (1.0 - z) * n + z * h
        logits = _bf16(h) @ w_hat + p["b_hat"]
        logp = logits - jax.scipy.special.logsumexp(logits, axis=-1, keepdims=True)
        outs.append(logp[None])
        if int(tf_flags[t]):
            inp = targets[t].astype(jnp.int32)
        else:
            inp = jnp.argmax(logp, axis=-1).astype(jnp.int32)
    return jnp.concatenate(outs, axis=0)


# ----------------------------------------------------------------------------
def init_params(key, vocab_size, emb_dim, hidden_size):
    ks = jax.random.split(key, 20)
    s_h = 1.0 / np.sqrt(hidden_size)
    u = lambda k, shape: jax.random.uniform(k, shape, jnp.float32, -s_h, s_h)
    return {
        "emb":   jax.random.normal(ks[0], (vocab_size, emb_dim), jnp.float32) * 0.1,
        "w_ir":  u(ks[1], (emb_dim, hidden_size)),
        "w_iz":  u(ks[2], (emb_dim, hidden_size)),
        "w_in":  u(ks[3], (emb_dim, hidden_size)),
        "w_hr":  u(ks[4], (hidden_size, hidden_size)),
        "w_hz":  u(ks[5], (hidden_size, hidden_size)),
        "w_hn":  u(ks[6], (hidden_size, hidden_size)),
        "b_ir":  u(ks[7], (hidden_size,)),
        "b_iz":  u(ks[8], (hidden_size,)),
        "b_in":  u(ks[9], (hidden_size,)),
        "b_hr":  u(ks[10], (hidden_size,)),
        "b_hz":  u(ks[11], (hidden_size,)),
        "b_hn":  u(ks[12], (hidden_size,)),
        "w_hat": u(ks[13], (hidden_size, vocab_size)),
        "b_hat": u(ks[14], (vocab_size,)),
    }


if __name__ == "__main__":
    # small shapes: batch=2, emb_dim=16, hidden=32, vocab=32, enc_len=8, T=8
    B, E, H, V = 2, 16, 32, 32
    ENC_LEN, T = 8, 8
    SOS = 1

    key = jax.random.PRNGKey(0)
    kp, kh, ke, kt = jax.random.split(key, 4)

    params = init_params(kp, V, E, H)
    hidden0 = jax.random.normal(kh, (1, B, H), jnp.float32)
    encoder_outputs = jax.random.normal(ke, (ENC_LEN, B, H), jnp.float32)
    targets = jax.random.randint(kt, (T, B), 0, V, dtype=jnp.int32)

    # teacher-forcing coin flips (np.random.binomial in the original), drawn
    # once on the host and shared with the reference for exact comparison
    tf_flags = np.random.RandomState(0).binomial(1, 0.5, size=T).astype(np.int32)

    packed = pack_params(params)
    # max_chunk=4 -> chunk=4, grid=(2,): exercises both the in-kernel chunk loop
    # and the cross-grid-step hidden/input carry
    out, h_fin = decoder_forward(packed, hidden0, encoder_outputs, SOS,
                                 targets, tf_flags, max_chunk=4)
    out = jax.block_until_ready(out)

    ref = ref_forward(params, hidden0, encoder_outputs, SOS, targets, tf_flags)
    ref = jax.block_until_ready(ref)

    assert out.shape == (T, B, V)
    np.testing.assert_allclose(np.asarray(out), np.asarray(ref),
                               rtol=2e-3, atol=2e-3)
    print("KERNEL_OK")
</pallas_src>

<mosaic_0001>
module attributes {stable_mosaic.version = 11 : i64} {
  func.func @decoder_seq_kernel(%arg0: i32, %arg1: memref<1xi32, #tpu.memory_space<smem>>, %arg2: memref<8xi32, #tpu.memory_space<smem>>, %arg3: memref<64xi32, #tpu.memory_space<smem>>, %arg4: memref<8x128xf32, #tpu.memory_space<vmem>>, %arg5: memref<128x128xf32, #tpu.memory_space<vmem>>, %arg6: memref<256x512xbf16, #tpu.memory_space<vmem>>, %arg7: memref<1x512xf32, #tpu.memory_space<vmem>>, %arg8: memref<128x128xbf16, #tpu.memory_space<vmem>>, %arg9: memref<1x128xf32, #tpu.memory_space<vmem>>, %arg10: memref<4x8x128xf32, #tpu.memory_space<vmem>>, %arg11: memref<8x128xf32, #tpu.memory_space<vmem>>, %arg12: memref<8x128xf32, #tpu.memory_space<vmem>>, %arg13: memref<8x256xf32, #tpu.memory_space<vmem>>) attributes {dimension_semantics = [#tpu.dimension_semantics<arbitrary>], iteration_bounds = array<i64: 2>, scalar_prefetch = 3 : i64, scratch_operands = 2 : i64, tpu.core_type = #tpu.core_type<tc>, window_params = [{pipeline_mode = #tpu.pipeline_mode<synchronous>, transform_indices = @transform_0, window_bounds = array<i64: 8, 128>}, {pipeline_mode = #tpu.pipeline_mode<synchronous>, transform_indices = @transform_1, window_bounds = array<i64: 128, 128>}, {pipeline_mode = #tpu.pipeline_mode<synchronous>, transform_indices = @transform_2, window_bounds = array<i64: 256, 512>}, {pipeline_mode = #tpu.pipeline_mode<synchronous>, transform_indices = @transform_3, window_bounds = array<i64: 1, 512>}, {pipeline_mode = #tpu.pipeline_mode<synchronous>, transform_indices = @transform_4, window_bounds = array<i64: 128, 128>}, {pipeline_mode = #tpu.pipeline_mode<synchronous>, transform_indices = @transform_5, window_bounds = array<i64: 1, 128>}, {transform_indices = @transform_6, window_bounds = array<i64: 4, 8, 128>}, {pipeline_mode = #tpu.pipeline_mode<synchronous>, transform_indices = @transform_7, window_bounds = array<i64: 8, 128>}]} {
    %c0_i32 = arith.constant 0 : i32
    %0 = arith.cmpi eq, %arg0, %c0_i32 : i32
    %1 = arith.extui %0 : i1 to i32
    %c0_i32_0 = arith.constant 0 : i32
    %2 = arith.cmpi ne, %1, %c0_i32_0 : i32
    scf.if %2 {
      %c0_129 = arith.constant 0 : index
      %c0_130 = arith.constant 0 : index
      %259 = vector.load %arg4[%c0_129, %c0_130] : memref<8x128xf32, #tpu.memory_space<vmem>>, vector<8x128xf32>
      %c0_131 = arith.constant 0 : index
      %c0_132 = arith.constant 0 : index
      %260 = vector.load %arg12[%c0_131, %c0_132] : memref<8x128xf32, #tpu.memory_space<vmem>>, vector<8x128xf32>
      tpu.vector_store %arg12[%c0_131, %c0_132], %259 {strides = array<i32>} : memref<8x128xf32, #tpu.memory_space<vmem>>, vector<8x128xf32>,
      %c0_133 = arith.constant 0 : index
      %261 = memref.load %arg1[%c0_133] : memref<1xi32, #tpu.memory_space<smem>>
      %262 = arith.index_cast %261 : i32 to index
      %c0_134 = arith.constant 0 : index
      %263 = vector.load %arg5[%262, %c0_134] : memref<128x128xf32, #tpu.memory_space<vmem>>, vector<1x128xf32>
      %264 = vector.shape_cast %263 : vector<1x128xf32> to vector<1x128xf32>
      %265 = vector.broadcast %264 : vector<1x128xf32> to vector<8x128xf32>
      %c0_135 = arith.constant 0 : index
      %c0_136 = arith.constant 0 : index
      %266 = vector.load %arg13[%c0_135, %c0_136] : memref<8x256xf32, #tpu.memory_space<vmem>>, vector<8x128xf32>
      tpu.vector_store %arg13[%c0_135, %c0_136], %265 {strides = array<i32>} : memref<8x256xf32, #tpu.memory_space<vmem>>, vector<8x128xf32>,
    } else {
    }
    %3 = tpu.iota {dimensions = array<i32: 1>} : vector<8x128xi32>
    %c0_i32_1 = arith.constant 0 : i32
    %c4_i32 = arith.constant 4 : i32
    %4 = arith.muli %arg0, %c4_i32 : i32
    %5 = arith.addi %4, %c0_i32_1 : i32
    %c0 = arith.constant 0 : index
    %c0_2 = arith.constant 0 : index
    %6 = vector.load %arg12[%c0, %c0_2] : memref<8x128xf32, #tpu.memory_space<vmem>>, vector<8x128xf32>
    %c0_3 = arith.constant 0 : index
    %c128 = arith.constant 128 : index
    %7 = vector.load %arg13[%c0_3, %c128] : memref<8x256xf32, #tpu.memory_space<vmem>>, vector<8x128xf32>
    tpu.vector_store %arg13[%c0_3, %c128], %6 {strides = array<i32>} : memref<8x256xf32, #tpu.memory_space<vmem>>, vector<8x128xf32>,
    %c0_4 = arith.constant 0 : index
    %c0_5 = arith.constant 0 : index
    %8 = vector.load %arg12[%c0_4, %c0_5] : memref<8x128xf32, #tpu.memory_space<vmem>>, vector<8x128xf32>
    %c0_6 = arith.constant 0 : index
    %c0_7 = arith.constant 0 : index
    %9 = vector.load %arg13[%c0_6, %c0_7] : memref<8x256xf32, #tpu.memory_space<vmem>>, vector<8x256xf32>
    %10 = arith.truncf %9 : vector<8x256xf32> to vector<8x256xbf16>
    %c0_8 = arith.constant 0 : index
    %c0_9 = arith.constant 0 : index
    %11 = vector.load %arg6[%c0_8, %c0_9] : memref<256x512xbf16, #tpu.memory_space<vmem>>, vector<256x512xbf16>
    %cst = arith.constant dense<0.000000e+00> : vector<8x512xf32>
    %12 = tpu.matmul %10, %11, %cst {dimension_numbers = #tpu.dot_dimension_numbers<[1], [0], [0], [1], [0, 0, 1, 1], [], []>} : vector<8x256xbf16>, vector<256x512xbf16>, vector<8x512xf32> -> vector<8x512xf32>
    %c0_10 = arith.constant 0 : index
    %c0_11 = arith.constant 0 : index
    %13 = vector.load %arg7[%c0_10, %c0_11] : memref<1x512xf32, #tpu.memory_space<vmem>>, vector<1x512xf32>
    %14 = vector.broadcast %13 : vector<1x512xf32> to vector<8x512xf32>
    %15 = arith.addf %12, %14 : vector<8x512xf32>
    %16 = vector.extract_strided_slice %15 {offsets = [0, 0], sizes = [8, 128], strides = [1, 1]} : vector<8x512xf32> to vector<8x128xf32>
    %17 = arith.negf %16 : vector<8x128xf32>
    %18 = math.exp %17 : vector<8x128xf32>
    %cst_12 = arith.constant 1.000000e+00 : f32
    %19 = vector.broadcast %cst_12 : f32 to vector<8x128xf32>
    %20 = arith.addf %19, %18 : vector<8x128xf32>
    %21 = arith.divf %19, %20 : vector<8x128xf32>
    %22 = vector.extract_strided_slice %15 {offsets = [0, 128], sizes = [8, 128], strides = [1, 1]} : vector<8x512xf32> to vector<8x128xf32>
    %23 = arith.negf %22 : vector<8x128xf32>
    %24 = math.exp %23 : vector<8x128xf32>
    %cst_13 = arith.constant 1.000000e+00 : f32
    %25 = vector.broadcast %cst_13 : f32 to vector<8x128xf32>
    %26 = arith.addf %25, %24 : vector<8x128xf32>
    %27 = arith.divf %25, %26 : vector<8x128xf32>
    %28 = vector.extract_strided_slice %15 {offsets = [0, 256], sizes = [8, 128], strides = [1, 1]} : vector<8x512xf32> to vector<8x128xf32>
    %29 = vector.extract_strided_slice %15 {offsets = [0, 384], sizes = [8, 128], strides = [1, 1]} : vector<8x512xf32> to vector<8x128xf32>
    %30 = arith.mulf %21, %29 : vector<8x128xf32>
    %31 = arith.addf %28, %30 : vector<8x128xf32>
    %32 = math.tanh %31 : vector<8x128xf32>
    %cst_14 = arith.constant 1.000000e+00 : f32
    %33 = vector.broadcast %cst_14 : f32 to vector<8x128xf32>
    %34 = arith.subf %33, %27 : vector<8x128xf32>
    %35 = arith.mulf %34, %32 : vector<8x128xf32>
    %36 = arith.mulf %27, %8 : vector<8x128xf32>
    %37 = arith.addf %35, %36 : vector<8x128xf32>
    %c0_15 = arith.constant 0 : index
    %c0_16 = arith.constant 0 : index
    %38 = vector.load %arg12[%c0_15, %c0_16] : memref<8x128xf32, #tpu.memory_space<vmem>>, vector<8x128xf32>
    tpu.vector_store %arg12[%c0_15, %c0_16], %37 {strides = array<i32>} : memref<8x128xf32, #tpu.memory_space<vmem>>, vector<8x128xf32>,
    %39 = arith.truncf %37 : vector<8x128xf32> to vector<8x128xbf16>
    %c0_17 = arith.constant 0 : index
    %c0_18 = arith.constant 0 : index
    %40 = vector.load %arg8[%c0_17, %c0_18] : memref<128x128xbf16, #tpu.memory_space<vmem>>, vector<128x128xbf16>
    %cst_19 = arith.constant dense<0.000000e+00> : vector<8x128xf32>
    %41 = tpu.matmul %39, %40, %cst_19 {dimension_numbers = #tpu.dot_dimension_numbers<[1], [0], [0], [1], [0, 0, 1, 1], [], []>} : vector<8x128xbf16>, vector<128x128xbf16>, vector<8x128xf32> -> vector<8x128xf32>
    %c0_20 = arith.constant 0 : index
    %c0_21 = arith.constant 0 : index
    %42 = vector.load %arg9[%c0_20, %c0_21] : memref<1x128xf32, #tpu.memory_space<vmem>>, vector<1x128xf32>
    %43 = vector.broadcast %42 : vector<1x128xf32> to vector<8x128xf32>
    %44 = arith.addf %41, %43 : vector<8x128xf32>
    %cst_22 = arith.constant dense<0xFF800000> : vector<8xf32>
    %45 = vector.multi_reduction <maximumf>, %44, %cst_22 [1] : vector<8x128xf32> to vector<8xf32>
    %46 = vector.shape_cast %45 : vector<8xf32> to vector<8x1xf32>
    %47 = vector.broadcast %46 : vector<8x1xf32> to vector<8x128xf32>
    %48 = arith.subf %44, %47 : vector<8x128xf32>
    %49 = math.exp %48 : vector<8x128xf32>
    %cst_23 = arith.constant dense<0.000000e+00> : vector<8xf32>
    %50 = vector.multi_reduction <add>, %49, %cst_23 [1] : vector<8x128xf32> to vector<8xf32>
    %51 = vector.shape_cast %50 : vector<8xf32> to vector<8x1xf32>
    %52 = math.log %51 : vector<8x1xf32>
    %53 = arith.addf %46, %52 : vector<8x1xf32>
    %54 = vector.broadcast %53 : vector<8x1xf32> to vector<8x128xf32>
    %55 = arith.subf %44, %54 : vector<8x128xf32>
    %56 = vector.shape_cast %55 : vector<8x128xf32> to vector<1x8x128xf32>
    %57 = arith.index_cast %c0_i32_1 : i32 to index
    %c0_24 = arith.constant 0 : index
    %c0_25 = arith.constant 0 : index
    %58 = vector.load %arg10[%57, %c0_24, %c0_25] : memref<4x8x128xf32, #tpu.memory_space<vmem>>, vector<1x8x128xf32>
    tpu.vector_store %arg10[%57, %c0_24, %c0_25], %56 {strides = array<i32>} : memref<4x8x128xf32, #tpu.memory_space<vmem>>, vector<1x8x128xf32>,
    %59 = arith.index_cast %5 : i32 to index
    %60 = memref.load %arg2[%59] : memref<8xi32, #tpu.memory_space<smem>>
    %c1_i32 = arith.constant 1 : i32
    %61 = arith.cmpi eq, %60, %c1_i32 : i32
    %62 = arith.extui %61 : i1 to i32
    %c0_i32_26 = arith.constant 0 : i32
    %63 = arith.cmpi ne, %62, %c0_i32_26 : i32
    scf.if %63 {
      %c8_i32 = arith.constant 8 : i32
      %259 = arith.muli %5, %c8_i32 : i32
      %c0_i32_129 = arith.constant 0 : i32
      %260 = arith.addi %259, %c0_i32_129 : i32
      %261 = arith.index_cast %260 : i32 to index
      %262 = memref.load %arg3[%261] : memref<64xi32, #tpu.memory_space<smem>>
      %263 = arith.index_cast %262 : i32 to index
      %c0_130 = arith.constant 0 : index
      %264 = vector.load %arg5[%263, %c0_130] : memref<128x128xf32, #tpu.memory_space<vmem>>, vector<1x128xf32>
      %c0_131 = arith.constant 0 : index
      %c0_132 = arith.constant 0 : index
      %265 = vector.load %arg13[%c0_131, %c0_132] : memref<8x256xf32, #tpu.memory_space<vmem>>, vector<1x128xf32>
      tpu.vector_store %arg13[%c0_131, %c0_132], %264 {strides = array<i32>} : memref<8x256xf32, #tpu.memory_space<vmem>>, vector<1x128xf32>,
      %c8_i32_133 = arith.constant 8 : i32
      %266 = arith.muli %5, %c8_i32_133 : i32
      %c1_i32_134 = arith.constant 1 : i32
      %267 = arith.addi %266, %c1_i32_134 : i32
      %268 = arith.index_cast %267 : i32 to index
      %269 = memref.load %arg3[%268] : memref<64xi32, #tpu.memory_space<smem>>
      %270 = arith.index_cast %269 : i32 to index
      %c0_135 = arith.constant 0 : index
      %271 = vector.load %arg5[%270, %c0_135] : memref<128x128xf32, #tpu.memory_space<vmem>>, vector<1x128xf32>
      %c1 = arith.constant 1 : index
      %c0_136 = arith.constant 0 : index
      %272 = vector.load %arg13[%c1, %c0_136] : memref<8x256xf32, #tpu.memory_space<vmem>>, vector<1x128xf32>
      tpu.vector_store %arg13[%c1, %c0_136], %271 {strides = array<i32>} : memref<8x256xf32, #tpu.memory_space<vmem>>, vector<1x128xf32>,
      %c8_i32_137 = arith.constant 8 : i32
      %273 = arith.muli %5, %c8_i32_137 : i32
      %c2_i32_138 = arith.constant 2 : i32
      %274 = arith.addi %273, %c2_i32_138 : i32
      %275 = arith.index_cast %274 : i32 to index
      %276 = memref.load %arg3[%275] : memref<64xi32, #tpu.memory_space<smem>>
      %277 = arith.index_cast %276 : i32 to index
      %c0_139 = arith.constant 0 : index
      %278 = vector.load %arg5[%277, %c0_139] : memref<128x128xf32, #tpu.memory_space<vmem>>, vector<1x128xf32>
      %c2 = arith.constant 2 : index
      %c0_140 = arith.constant 0 : index
      %279 = vector.load %arg13[%c2, %c0_140] : memref<8x256xf32, #tpu.memory_space<vmem>>, vector<1x128xf32>
      tpu.vector_store %arg13[%c2, %c0_140], %278 {strides = array<i32>} : memref<8x256xf32, #tpu.memory_space<vmem>>, vector<1x128xf32>,
      %c8_i32_141 = arith.constant 8 : i32
      %280 = arith.muli %5, %c8_i32_141 : i32
      %c3_i32_142 = arith.constant 3 : i32
      %281 = arith.addi %280, %c3_i32_142 : i32
      %282 = arith.index_cast %281 : i32 to index
      %283 = memref.load %arg3[%282] : memref<64xi32, #tpu.memory_space<smem>>
      %284 = arith.index_cast %283 : i32 to index
      %c0_143 = arith.constant 0 : index
      %285 = vector.load %arg5[%284, %c0_143] : memref<128x128xf32, #tpu.memory_space<vmem>>, vector<1x128xf32>
      %c3 = arith.constant 3 : index
      %c0_144 = arith.constant 0 : index
      %286 = vector.load %arg13[%c3, %c0_144] : memref<8x256xf32, #tpu.memory_space<vmem>>, vector<1x128xf32>
      tpu.vector_store %arg13[%c3, %c0_144], %285 {strides = array<i32>} : memref<8x256xf32, #tpu.memory_space<vmem>>, vector<1x128xf32>,
      %c8_i32_145 = arith.constant 8 : i32
      %287 = arith.muli %5, %c8_i32_145 : i32
      %c4_i32_146 = arith.constant 4 : i32
      %288 = arith.addi %287, %c4_i32_146 : i32
      %289 = arith.index_cast %288 : i32 to index
      %290 = memref.load %arg3[%289] : memref<64xi32, #tpu.memory_space<smem>>
      %291 = arith.index_cast %290 : i32 to index
      %c0_147 = arith.constant 0 : index
      %292 = vector.load %arg5[%291, %c0_147] : memref<128x128xf32, #tpu.memory_space<vmem>>, vector<1x128xf32>
      %c4 = arith.constant 4 : index
      %c0_148 = arith.constant 0 : index
      %293 = vector.load %arg13[%c4, %c0_148] : memref<8x256xf32, #tpu.memory_space<vmem>>, vector<1x128xf32>
      tpu.vector_store %arg13[%c4, %c0_148], %292 {strides = array<i32>} : memref<8x256xf32, #tpu.memory_space<vmem>>, vector<1x128xf32>,
      %c8_i32_149 = arith.constant 8 : i32
      %294 = arith.muli %5, %c8_i32_149 : i32
      %c5_i32 = arith.constant 5 : i32
      %295 = arith.addi %294, %c5_i32 : i32
      %296 = arith.index_cast %295 : i32 to index
      %297 = memref.load %arg3[%296] : memref<64xi32, #tpu.memory_space<smem>>
      %298 = arith.index_cast %297 : i32 to index
      %c0_150 = arith.constant 0 : index
      %299 = vector.load %arg5[%298, %c0_150] : memref<128x128xf32, #tpu.memory_space<vmem>>, vector<1x128xf32>
      %c5 = arith.constant 5 : index
      %c0_151 = arith.constant 0 : index
      %300 = vector.load %arg13[%c5, %c0_151] : memref<8x256xf32, #tpu.memory_space<vmem>>, vector<1x128xf32>
      tpu.vector_store %arg13[%c5, %c0_151], %299 {strides = array<i32>} : memref<8x256xf32, #tpu.memory_space<vmem>>, vector<1x128xf32>,
      %c8_i32_152 = arith.constant 8 : i32
      %301 = arith.muli %5, %c8_i32_152 : i32
      %c6_i32 = arith.constant 6 : i32
      %302 = arith.addi %301, %c6_i32 : i32
      %303 = arith.index_cast %302 : i32 to index
      %304 = memref.load %arg3[%303] : memref<64xi32, #tpu.memory_space<smem>>
      %305 = arith.index_cast %304 : i32 to index
      %c0_153 = arith.constant 0 : index
      %306 = vector.load %arg5[%305, %c0_153] : memref<128x128xf32, #tpu.memory_space<vmem>>, vector<1x128xf32>
      %c6 = arith.constant 6 : index
      %c0_154 = arith.constant 0 : index
      %307 = vector.load %arg13[%c6, %c0_154] : memref<8x256xf32, #tpu.memory_space<vmem>>, vector<1x128xf32>
      tpu.vector_store %arg13[%c6, %c0_154], %306 {strides = array<i32>} : memref<8x256xf32, #tpu.memory_space<vmem>>, vector<1x128xf32>,
      %c8_i32_155 = arith.constant 8 : i32
      %308 = arith.muli %5, %c8_i32_155 : i32
      %c7_i32 = arith.constant 7 : i32
      %309 = arith.addi %308, %c7_i32 : i32
      %310 = arith.index_cast %309 : i32 to index
      %311 = memref.load %arg3[%310] : memref<64xi32, #tpu.memory_space<smem>>
      %312 = arith.index_cast %311 : i32 to index
      %c0_156 = arith.constant 0 : index
      %313 = vector.load %arg5[%312, %c0_156] : memref<128x128xf32, #tpu.memory_space<vmem>>, vector<1x128xf32>
      %c7 = arith.constant 7 : index
      %c0_157 = arith.constant 0 : index
      %314 = vector.load %arg13[%c7, %c0_157] : memref<8x256xf32, #tpu.memory_space<vmem>>, vector<1x128xf32>
      tpu.vector_store %arg13[%c7, %c0_157], %313 {strides = array<i32>} : memref<8x256xf32, #tpu.memory_space<vmem>>, vector<1x128xf32>,
    } else {
    }
    %c0_i32_27 = arith.constant 0 : i32
    %64 = arith.cmpi eq, %60, %c0_i32_27 : i32
    %65 = arith.extui %64 : i1 to i32
    %c0_i32_28 = arith.constant 0 : i32
    %66 = arith.cmpi ne, %65, %c0_i32_28 : i32
    scf.if %66 {
      %259 = vector.broadcast %46 : vector<8x1xf32> to vector<8x128xf32>
      %260 = arith.cmpf oge, %44, %259 : vector<8x128xf32>
      %c128_i32 = arith.constant 128 : i32
      %261 = vector.broadcast %c128_i32 : i32 to vector<8x128xi32>
      %262 = arith.select %260, %3, %261 : vector<8x128xi1>, vector<8x128xi32>
      %cst_129 = arith.constant dense<2147483647> : vector<8xi32>
      %263 = vector.multi_reduction <minsi>, %262, %cst_129 [1] : vector<8x128xi32> to vector<8xi32>
      %264 = vector.shape_cast %263 : vector<8xi32> to vector<8x1xi32>
      %265 = vector.broadcast %264 : vector<8x1xi32> to vector<8x128xi32>
      %266 = arith.cmpi eq, %3, %265 : vector<8x128xi32>
      %267 = arith.extui %266 : vector<8x128xi1> to vector<8x128xi32>
      %268 = arith.sitofp %267 : vector<8x128xi32> to vector<8x128xf32>
      %c0_130 = arith.constant 0 : index
      %c0_131 = arith.constant 0 : index
      %269 = vector.load %arg5[%c0_130, %c0_131] : memref<128x128xf32, #tpu.memory_space<vmem>>, vector<128x128xf32>
      %cst_132 = arith.constant dense<0.000000e+00> : vector<8x128xf32>
      %270 = tpu.matmul %268, %269, %cst_132 {dimension_numbers = #tpu.dot_dimension_numbers<[1], [0], [0], [1], [0, 0, 1, 1], [], []>} : vector<8x128xf32>, vector<128x128xf32>, vector<8x128xf32> -> vector<8x128xf32>
      %c0_133 = arith.constant 0 : index
      %c0_134 = arith.constant 0 : index
      %271 = vector.load %arg13[%c0_133, %c0_134] : memref<8x256xf32, #tpu.memory_space<vmem>>, vector<8x128xf32>
      tpu.vector_store %arg13[%c0_133, %c0_134], %270 {strides = array<i32>} : memref<8x256xf32, #tpu.memory_space<vmem>>, vector<8x128xf32>,
    } else {
    }
    %c1_i32_29 = arith.constant 1 : i32
    %c4_i32_30 = arith.constant 4 : i32
    %67 = arith.muli %arg0, %c4_i32_30 : i32
    %68 = arith.addi %67, %c1_i32_29 : i32
    %c0_31 = arith.constant 0 : index
    %c0_32 = arith.constant 0 : index
    %69 = vector.load %arg12[%c0_31, %c0_32] : memref<8x128xf32, #tpu.memory_space<vmem>>, vector<8x128xf32>
    %c0_33 = arith.constant 0 : index
    %c128_34 = arith.constant 128 : index
    %70 = vector.load %arg13[%c0_33, %c128_34] : memref<8x256xf32, #tpu.memory_space<vmem>>, vector<8x128xf32>
    tpu.vector_store %arg13[%c0_33, %c128_34], %69 {strides = array<i32>} : memref<8x256xf32, #tpu.memory_space<vmem>>, vector<8x128xf32>,
    %c0_35 = arith.constant 0 : index
    %c0_36 = arith.constant 0 : index
    %71 = vector.load %arg12[%c0_35, %c0_36] : memref<8x128xf32, #tpu.memory_space<vmem>>, vector<8x128xf32>
    %c0_37 = arith.constant 0 : index
    %c0_38 = arith.constant 0 : index
    %72 = vector.load %arg13[%c0_37, %c0_38] : memref<8x256xf32, #tpu.memory_space<vmem>>, vector<8x256xf32>
    %73 = arith.truncf %72 : vector<8x256xf32> to vector<8x256xbf16>
    %c0_39 = arith.constant 0 : index
    %c0_40 = arith.constant 0 : index
    %74 = vector.load %arg6[%c0_39, %c0_40] : memref<256x512xbf16, #tpu.memory_space<vmem>>, vector<256x512xbf16>
    %cst_41 = arith.constant dense<0.000000e+00> : vector<8x512xf32>
    %75 = tpu.matmul %73, %74, %cst_41 {dimension_numbers = #tpu.dot_dimension_numbers<[1], [0], [0], [1], [0, 0, 1, 1], [], []>} : vector<8x256xbf16>, vector<256x512xbf16>, vector<8x512xf32> -> vector<8x512xf32>
    %c0_42 = arith.constant 0 : index
    %c0_43 = arith.constant 0 : index
    %76 = vector.load %arg7[%c0_42, %c0_43] : memref<1x512xf32, #tpu.memory_space<vmem>>, vector<1x512xf32>
    %77 = vector.broadcast %76 : vector<1x512xf32> to vector<8x512xf32>
    %78 = arith.addf %75, %77 : vector<8x512xf32>
    %79 = vector.extract_strided_slice %78 {offsets = [0, 0], sizes = [8, 128], strides = [1, 1]} : vector<8x512xf32> to vector<8x128xf32>
    %80 = arith.negf %79 : vector<8x128xf32>
    %81 = math.exp %80 : vector<8x128xf32>
    %cst_44 = arith.constant 1.000000e+00 : f32
    %82 = vector.broadcast %cst_44 : f32 to vector<8x128xf32>
    %83 = arith.addf %82, %81 : vector<8x128xf32>
    %84 = arith.divf %82, %83 : vector<8x128xf32>
    %85 = vector.extract_strided_slice %78 {offsets = [0, 128], sizes = [8, 128], strides = [1, 1]} : vector<8x512xf32> to vector<8x128xf32>
    %86 = arith.negf %85 : vector<8x128xf32>
    %87 = math.exp %86 : vector<8x128xf32>
    %cst_45 = arith.constant 1.000000e+00 : f32
    %88 = vector.broadcast %cst_45 : f32 to vector<8x128xf32>
    %89 = arith.addf %88, %87 : vector<8x128xf32>
    %90 = arith.divf %88, %89 : vector<8x128xf32>
    %91 = vector.extract_strided_slice %78 {offsets = [0, 256], sizes = [8, 128], strides = [1, 1]} : vector<8x512xf32> to vector<8x128xf32>
    %92 = vector.extract_strided_slice %78 {offsets = [0, 384], sizes = [8, 128], strides = [1, 1]} : vector<8x512xf32> to vector<8x128xf32>
    %93 = arith.mulf %84, %92 : vector<8x128xf32>
    %94 = arith.addf %91, %93 : vector<8x128xf32>
    %95 = math.tanh %94 : vector<8x128xf32>
    %cst_46 = arith.constant 1.000000e+00 : f32
    %96 = vector.broadcast %cst_46 : f32 to vector<8x128xf32>
    %97 = arith.subf %96, %90 : vector<8x128xf32>
    %98 = arith.mulf %97, %95 : vector<8x128xf32>
    %99 = arith.mulf %90, %71 : vector<8x128xf32>
    %100 = arith.addf %98, %99 : vector<8x128xf32>
    %c0_47 = arith.constant 0 : index
    %c0_48 = arith.constant 0 : index
    %101 = vector.load %arg12[%c0_47, %c0_48] : memref<8x128xf32, #tpu.memory_space<vmem>>, vector<8x128xf32>
    tpu.vector_store %arg12[%c0_47, %c0_48], %100 {strides = array<i32>} : memref<8x128xf32, #tpu.memory_space<vmem>>, vector<8x128xf32>,
    %102 = arith.truncf %100 : vector<8x128xf32> to vector<8x128xbf16>
    %c0_49 = arith.constant 0 : index
    %c0_50 = arith.constant 0 : index
    %103 = vector.load %arg8[%c0_49, %c0_50] : memref<128x128xbf16, #tpu.memory_space<vmem>>, vector<128x128xbf16>
    %cst_51 = arith.constant dense<0.000000e+00> : vector<8x128xf32>
    %104 = tpu.matmul %102, %103, %cst_51 {dimension_numbers = #tpu.dot_dimension_numbers<[1], [0], [0], [1], [0, 0, 1, 1], [], []>} : vector<8x128xbf16>, vector<128x128xbf16>, vector<8x128xf32> -> vector<8x128xf32>
    %c0_52 = arith.constant 0 : index
    %c0_53 = arith.constant 0 : index
    %105 = vector.load %arg9[%c0_52, %c0_53] : memref<1x128xf32, #tpu.memory_space<vmem>>, vector<1x128xf32>
    %106 = vector.broadcast %105 : vector<1x128xf32> to vector<8x128xf32>
    %107 = arith.addf %104, %106 : vector<8x128xf32>
    %cst_54 = arith.constant dense<0xFF800000> : vector<8xf32>
    %108 = vector.multi_reduction <maximumf>, %107, %cst_54 [1] : vector<8x128xf32> to vector<8xf32>
    %109 = vector.shape_cast %108 : vector<8xf32> to vector<8x1xf32>
    %110 = vector.broadcast %109 : vector<8x1xf32> to vector<8x128xf32>
    %111 = arith.subf %107, %110 : vector<8x128xf32>
    %112 = math.exp %111 : vector<8x128xf32>
    %cst_55 = arith.constant dense<0.000000e+00> : vector<8xf32>
    %113 = vector.multi_reduction <add>, %112, %cst_55 [1] : vector<8x128xf32> to vector<8xf32>
    %114 = vector.shape_cast %113 : vector<8xf32> to vector<8x1xf32>
    %115 = math.log %114 : vector<8x1xf32>
    %116 = arith.addf %109, %115 : vector<8x1xf32>
    %117 = vector.broadcast %116 : vector<8x1xf32> to vector<8x128xf32>
    %118 = arith.subf %107, %117 : vector<8x128xf32>
    %119 = vector.shape_cast %118 : vector<8x128xf32> to vector<1x8x128xf32>
    %120 = arith.index_cast %c1_i32_29 : i32 to index
    %c0_56 = arith.constant 0 : index
    %c0_57 = arith.constant 0 : index
    %121 = vector.load %arg10[%120, %c0_56, %c0_57] : memref<4x8x128xf32, #tpu.memory_space<vmem>>, vector<1x8x128xf32>
    tpu.vector_store %arg10[%120, %c0_56, %c0_57], %119 {strides = array<i32>} : memref<4x8x128xf32, #tpu.memory_space<vmem>>, vector<1x8x128xf32>,
    %122 = arith.index_cast %68 : i32 to index
    %123 = memref.load %arg2[%122] : memref<8xi32, #tpu.memory_space<smem>>
    %c1_i32_58 = arith.constant 1 : i32
    %124 = arith.cmpi eq, %123, %c1_i32_58 : i32
    %125 = arith.extui %124 : i1 to i32
    %c0_i32_59 = arith.constant 0 : i32
    %126 = arith.cmpi ne, %125, %c0_i32_59 : i32
    scf.if %126 {
      %c8_i32 = arith.constant 8 : i32
      %259 = arith.muli %68, %c8_i32 : i32
      %c0_i32_129 = arith.constant 0 : i32
      %260 = arith.addi %259, %c0_i32_129 : i32
      %261 = arith.index_cast %260 : i32 to index
      %262 = memref.load %arg3[%261] : memref<64xi32, #tpu.memory_space<smem>>
      %263 = arith.index_cast %262 : i32 to index
      %c0_130 = arith.constant 0 : index
      %264 = vector.load %arg5[%263, %c0_130] : memref<128x128xf32, #tpu.memory_space<vmem>>, vector<1x128xf32>
      %c0_131 = arith.constant 0 : index
      %c0_132 = arith.constant 0 : index
      %265 = vector.load %arg13[%c0_131, %c0_132] : memref<8x256xf32, #tpu.memory_space<vmem>>, vector<1x128xf32>
      tpu.vector_store %arg13[%c0_131, %c0_132], %264 {strides = array<i32>} : memref<8x256xf32, #tpu.memory_space<vmem>>, vector<1x128xf32>,
      %c8_i32_133 = arith.constant 8 : i32
      %266 = arith.muli %68, %c8_i32_133 : i32
      %c1_i32_134 = arith.constant 1 : i32
      %267 = arith.addi %266, %c1_i32_134 : i32
      %268 = arith.index_cast %267 : i32 to index
      %269 = memref.load %arg3[%268] : memref<64xi32, #tpu.memory_space<smem>>
      %270 = arith.index_cast %269 : i32 to index
      %c0_135 = arith.constant 0 : index
      %271 = vector.load %arg5[%270, %c0_135] : memref<128x128xf32, #tpu.memory_space<vmem>>, vector<1x128xf32>
      %c1 = arith.constant 1 : index
      %c0_136 = arith.constant 0 : index
      %272 = vector.load %arg13[%c1, %c0_136] : memref<8x256xf32, #tpu.memory_space<vmem>>, vector<1x128xf32>
      tpu.vector_store %arg13[%c1, %c0_136], %271 {strides = array<i32>} : memref<8x256xf32, #tpu.memory_space<vmem>>, vector<1x128xf32>,
      %c8_i32_137 = arith.constant 8 : i32
      %273 = arith.muli %68, %c8_i32_137 : i32
      %c2_i32_138 = arith.constant 2 : i32
      %274 = arith.addi %273, %c2_i32_138 : i32
      %275 = arith.index_cast %274 : i32 to index
      %276 = memref.load %arg3[%275] : memref<64xi32, #tpu.memory_space<smem>>
      %277 = arith.index_cast %276 : i32 to index
      %c0_139 = arith.constant 0 : index
      %278 = vector.load %arg5[%277, %c0_139] : memref<128x128xf32, #tpu.memory_space<vmem>>, vector<1x128xf32>
      %c2 = arith.constant 2 : index
      %c0_140 = arith.constant 0 : index
      %279 = vector.load %arg13[%c2, %c0_140] : memref<8x256xf32, #tpu.memory_space<vmem>>, vector<1x128xf32>
      tpu.vector_store %arg13[%c2, %c0_140], %278 {strides = array<i32>} : memref<8x256xf32, #tpu.memory_space<vmem>>, vector<1x128xf32>,
      %c8_i32_141 = arith.constant 8 : i32
      %280 = arith.muli %68, %c8_i32_141 : i32
      %c3_i32_142 = arith.constant 3 : i32
      %281 = arith.addi %280, %c3_i32_142 : i32
      %282 = arith.index_cast %281 : i32 to index
      %283 = memref.load %arg3[%282] : memref<64xi32, #tpu.memory_space<smem>>
      %284 = arith.index_cast %283 : i32 to index
      %c0_143 = arith.constant 0 : index
      %285 = vector.load %arg5[%284, %c0_143] : memref<128x128xf32, #tpu.memory_space<vmem>>, vector<1x128xf32>
      %c3 = arith.constant 3 : index
      %c0_144 = arith.constant 0 : index
      %286 = vector.load %arg13[%c3, %c0_144] : memref<8x256xf32, #tpu.memory_space<vmem>>, vector<1x128xf32>
      tpu.vector_store %arg13[%c3, %c0_144], %285 {strides = array<i32>} : memref<8x256xf32, #tpu.memory_space<vmem>>, vector<1x128xf32>,
      %c8_i32_145 = arith.constant 8 : i32
      %287 = arith.muli %68, %c8_i32_145 : i32
      %c4_i32_146 = arith.constant 4 : i32
      %288 = arith.addi %287, %c4_i32_146 : i32
      %289 = arith.index_cast %288 : i32 to index
      %290 = memref.load %arg3[%289] : memref<64xi32, #tpu.memory_space<smem>>
      %291 = arith.index_cast %290 : i32 to index
      %c0_147 = arith.constant 0 : index
      %292 = vector.load %arg5[%291, %c0_147] : memref<128x128xf32, #tpu.memory_space<vmem>>, vector<1x128xf32>
      %c4 = arith.constant 4 : index
      %c0_148 = arith.constant 0 : index
      %293 = vector.load %arg13[%c4, %c0_148] : memref<8x256xf32, #tpu.memory_space<vmem>>, vector<1x128xf32>
      tpu.vector_store %arg13[%c4, %c0_148], %292 {strides = array<i32>} : memref<8x256xf32, #tpu.memory_space<vmem>>, vector<1x128xf32>,
      %c8_i32_149 = arith.constant 8 : i32
      %294 = arith.muli %68, %c8_i32_149 : i32
      %c5_i32 = arith.constant 5 : i32
      %295 = arith.addi %294, %c5_i32 : i32
      %296 = arith.index_cast %295 : i32 to index
      %297 = memref.load %arg3[%296] : memref<64xi32, #tpu.memory_space<smem>>
      %298 = arith.index_cast %297 : i32 to index
      %c0_150 = arith.constant 0 : index
      %299 = vector.load %arg5[%298, %c0_150] : memref<128x128xf32, #tpu.memory_space<vmem>>, vector<1x128xf32>
      %c5 = arith.constant 5 : index
      %c0_151 = arith.constant 0 : index
      %300 = vector.load %arg13[%c5, %c0_151] : memref<8x256xf32, #tpu.memory_space<vmem>>, vector<1x128xf32>
      tpu.vector_store %arg13[%c5, %c0_151], %299 {strides = array<i32>} : memref<8x256xf32, #tpu.memory_space<vmem>>, vector<1x128xf32>,
      %c8_i32_152 = arith.constant 8 : i32
      %301 = arith.muli %68, %c8_i32_152 : i32
      %c6_i32 = arith.constant 6 : i32
      %302 = arith.addi %301, %c6_i32 : i32
      %303 = arith.index_cast %302 : i32 to index
      %304 = memref.load %arg3[%303] : memref<64xi32, #tpu.memory_space<smem>>
      %305 = arith.index_cast %304 : i32 to index
      %c0_153 = arith.constant 0 : index
      %306 = vector.load %arg5[%305, %c0_153] : memref<128x128xf32, #tpu.memory_space<vmem>>, vector<1x128xf32>
      %c6 = arith.constant 6 : index
      %c0_154 = arith.constant 0 : index
      %307 = vector.load %arg13[%c6, %c0_154] : memref<8x256xf32, #tpu.memory_space<vmem>>, vector<1x128xf32>
      tpu.vector_store %arg13[%c6, %c0_154], %306 {strides = array<i32>} : memref<8x256xf32, #tpu.memory_space<vmem>>, vector<1x128xf32>,
      %c8_i32_155 = arith.constant 8 : i32
      %308 = arith.muli %68, %c8_i32_155 : i32
      %c7_i32 = arith.constant 7 : i32
      %309 = arith.addi %308, %c7_i32 : i32
      %310 = arith.index_cast %309 : i32 to index
      %311 = memref.load %arg3[%310] : memref<64xi32, #tpu.memory_space<smem>>
      %312 = arith.index_cast %311 : i32 to index
      %c0_156 = arith.constant 0 : index
      %313 = vector.load %arg5[%312, %c0_156] : memref<128x128xf32, #tpu.memory_space<vmem>>, vector<1x128xf32>
      %c7 = arith.constant 7 : index
      %c0_157 = arith.constant 0 : index
      %314 = vector.load %arg13[%c7, %c0_157] : memref<8x256xf32, #tpu.memory_space<vmem>>, vector<1x128xf32>
      tpu.vector_store %arg13[%c7, %c0_157], %313 {strides = array<i32>} : memref<8x256xf32, #tpu.memory_space<vmem>>, vector<1x128xf32>,
    } else {
    }
    %c0_i32_60 = arith.constant 0 : i32
    %127 = arith.cmpi eq, %123, %c0_i32_60 : i32
    %128 = arith.extui %127 : i1 to i32
    %c0_i32_61 = arith.constant 0 : i32
    %129 = arith.cmpi ne, %128, %c0_i32_61 : i32
    scf.if %129 {
      %259 = vector.broadcast %109 : vector<8x1xf32> to vector<8x128xf32>
      %260 = arith.cmpf oge, %107, %259 : vector<8x128xf32>
      %c128_i32 = arith.constant 128 : i32
      %261 = vector.broadcast %c128_i32 : i32 to vector<8x128xi32>
      %262 = arith.select %260, %3, %261 : vector<8x128xi1>, vector<8x128xi32>
      %cst_129 = arith.constant dense<2147483647> : vector<8xi32>
      %263 = vector.multi_reduction <minsi>, %262, %cst_129 [1] : vector<8x128xi32> to vector<8xi32>
      %264 = vector.shape_cast %263 : vector<8xi32> to vector<8x1xi32>
      %265 = vector.broadcast %264 : vector<8x1xi32> to vector<8x128xi32>
      %266 = arith.cmpi eq, %3, %265 : vector<8x128xi32>
      %267 = arith.extui %266 : vector<8x128xi1> to vector<8x128xi32>
      %268 = arith.sitofp %267 : vector<8x128xi32> to vector<8x128xf32>
      %c0_130 = arith.constant 0 : index
      %c0_131 = arith.constant 0 : index
      %269 = vector.load %arg5[%c0_130, %c0_131] : memref<128x128xf32, #tpu.memory_space<vmem>>, vector<128x128xf32>
      %cst_132 = arith.constant dense<0.000000e+00> : vector<8x128xf32>
      %270 = tpu.matmul %268, %269, %cst_132 {dimension_numbers = #tpu.dot_dimension_numbers<[1], [0], [0], [1], [0, 0, 1, 1], [], []>} : vector<8x128xf32>, vector<128x128xf32>, vector<8x128xf32> -> vector<8x128xf32>
      %c0_133 = arith.constant 0 : index
      %c0_134 = arith.constant 0 : index
      %271 = vector.load %arg13[%c0_133, %c0_134] : memref<8x256xf32, #tpu.memory_space<vmem>>, vector<8x128xf32>
      tpu.vector_store %arg13[%c0_133, %c0_134], %270 {strides = array<i32>} : memref<8x256xf32, #tpu.memory_space<vmem>>, vector<8x128xf32>,
    } else {
    }
    %c2_i32 = arith.constant 2 : i32
    %c4_i32_62 = arith.constant 4 : i32
    %130 = arith.muli %arg0, %c4_i32_62 : i32
    %131 = arith.addi %130, %c2_i32 : i32
    %c0_63 = arith.constant 0 : index
    %c0_64 = arith.constant 0 : index
    %132 = vector.load %arg12[%c0_63, %c0_64] : memref<8x128xf32, #tpu.memory_space<vmem>>, vector<8x128xf32>
    %c0_65 = arith.constant 0 : index
    %c128_66 = arith.constant 128 : index
    %133 = vector.load %arg13[%c0_65, %c128_66] : memref<8x256xf32, #tpu.memory_space<vmem>>, vector<8x128xf32>
    tpu.vector_store %arg13[%c0_65, %c128_66], %132 {strides = array<i32>} : memref<8x256xf32, #tpu.memory_space<vmem>>, vector<8x128xf32>,
    %c0_67 = arith.constant 0 : index
    %c0_68 = arith.constant 0 : index
    %134 = vector.load %arg12[%c0_67, %c0_68] : memref<8x128xf32, #tpu.memory_space<vmem>>, vector<8x128xf32>
    %c0_69 = arith.constant 0 : index
    %c0_70 = arith.constant 0 : index
    %135 = vector.load %arg13[%c0_69, %c0_70] : memref<8x256xf32, #tpu.memory_space<vmem>>, vector<8x256xf32>
    %136 = arith.truncf %135 : vector<8x256xf32> to vector<8x256xbf16>
    %c0_71 = arith.constant 0 : index
    %c0_72 = arith.constant 0 : index
    %137 = vector.load %arg6[%c0_71, %c0_72] : memref<256x512xbf16, #tpu.memory_space<vmem>>, vector<256x512xbf16>
    %cst_73 = arith.constant dense<0.000000e+00> : vector<8x512xf32>
    %138 = tpu.matmul %136, %137, %cst_73 {dimension_numbers = #tpu.dot_dimension_numbers<[1], [0], [0], [1], [0, 0, 1, 1], [], []>} : vector<8x256xbf16>, vector<256x512xbf16>, vector<8x512xf32> -> vector<8x512xf32>
    %c0_74 = arith.constant 0 : index
    %c0_75 = arith.constant 0 : index
    %139 = vector.load %arg7[%c0_74, %c0_75] : memref<1x512xf32, #tpu.memory_space<vmem>>, vector<1x512xf32>
    %140 = vector.broadcast %139 : vector<1x512xf32> to vector<8x512xf32>
    %141 = arith.addf %138, %140 : vector<8x512xf32>
    %142 = vector.extract_strided_slice %141 {offsets = [0, 0], sizes = [8, 128], strides = [1, 1]} : vector<8x512xf32> to vector<8x128xf32>
    %143 = arith.negf %142 : vector<8x128xf32>
    %144 = math.exp %143 : vector<8x128xf32>
    %cst_76 = arith.constant 1.000000e+00 : f32
    %145 = vector.broadcast %cst_76 : f32 to vector<8x128xf32>
    %146 = arith.addf %145, %144 : vector<8x128xf32>
    %147 = arith.divf %145, %146 : vector<8x128xf32>
    %148 = vector.extract_strided_slice %141 {offsets = [0, 128], sizes = [8, 128], strides = [1, 1]} : vector<8x512xf32> to vector<8x128xf32>
    %149 = arith.negf %148 : vector<8x128xf32>
    %150 = math.exp %149 : vector<8x128xf32>
    %cst_77 = arith.constant 1.000000e+00 : f32
    %151 = vector.broadcast %cst_77 : f32 to vector<8x128xf32>
    %152 = arith.addf %151, %150 : vector<8x128xf32>
    %153 = arith.divf %151, %152 : vector<8x128xf32>
    %154 = vector.extract_strided_slice %141 {offsets = [0, 256], sizes = [8, 128], strides = [1, 1]} : vector<8x512xf32> to vector<8x128xf32>
    %155 = vector.extract_strided_slice %141 {offsets = [0, 384], sizes = [8, 128], strides = [1, 1]} : vector<8x512xf32> to vector<8x128xf32>
    %156 = arith.mulf %147, %155 : vector<8x128xf32>
    %157 = arith.addf %154, %156 : vector<8x128xf32>
    %158 = math.tanh %157 : vector<8x128xf32>
    %cst_78 = arith.constant 1.000000e+00 : f32
    %159 = vector.broadcast %cst_78 : f32 to vector<8x128xf32>
    %160 = arith.subf %159, %153 : vector<8x128xf32>
    %161 = arith.mulf %160, %158 : vector<8x128xf32>
    %162 = arith.mulf %153, %134 : vector<8x128xf32>
    %163 = arith.addf %161, %162 : vector<8x128xf32>
    %c0_79 = arith.constant 0 : index
    %c0_80 = arith.constant 0 : index
    %164 = vector.load %arg12[%c0_79, %c0_80] : memref<8x128xf32, #tpu.memory_space<vmem>>, vector<8x128xf32>
    tpu.vector_store %arg12[%c0_79, %c0_80], %163 {strides = array<i32>} : memref<8x128xf32, #tpu.memory_space<vmem>>, vector<8x128xf32>,
    %165 = arith.truncf %163 : vector<8x128xf32> to vector<8x128xbf16>
    %c0_81 = arith.constant 0 : index
    %c0_82 = arith.constant 0 : index
    %166 = vector.load %arg8[%c0_81, %c0_82] : memref<128x128xbf16, #tpu.memory_space<vmem>>, vector<128x128xbf16>
    %cst_83 = arith.constant dense<0.000000e+00> : vector<8x128xf32>
    %167 = tpu.matmul %165, %166, %cst_83 {dimension_numbers = #tpu.dot_dimension_numbers<[1], [0], [0], [1], [0, 0, 1, 1], [], []>} : vector<8x128xbf16>, vector<128x128xbf16>, vector<8x128xf32> -> vector<8x128xf32>
    %c0_84 = arith.constant 0 : index
    %c0_85 = arith.constant 0 : index
    %168 = vector.load %arg9[%c0_84, %c0_85] : memref<1x128xf32, #tpu.memory_space<vmem>>, vector<1x128xf32>
    %169 = vector.broadcast %168 : vector<1x128xf32> to vector<8x128xf32>
    %170 = arith.addf %167, %169 : vector<8x128xf32>
    %cst_86 = arith.constant dense<0xFF800000> : vector<8xf32>
    %171 = vector.multi_reduction <maximumf>, %170, %cst_86 [1] : vector<8x128xf32> to vector<8xf32>
    %172 = vector.shape_cast %171 : vector<8xf32> to vector<8x1xf32>
    %173 = vector.broadcast %172 : vector<8x1xf32> to vector<8x128xf32>
    %174 = arith.subf %170, %173 : vector<8x128xf32>
    %175 = math.exp %174 : vector<8x128xf32>
    %cst_87 = arith.constant dense<0.000000e+00> : vector<8xf32>
    %176 = vector.multi_reduction <add>, %175, %cst_87 [1] : vector<8x128xf32> to vector<8xf32>
    %177 = vector.shape_cast %176 : vector<8xf32> to vector<8x1xf32>
    %178 = math.log %177 : vector<8x1xf32>
    %179 = arith.addf %172, %178 : vector<8x1xf32>
    %180 = vector.broadcast %179 : vector<8x1xf32> to vector<8x128xf32>
    %181 = arith.subf %170, %180 : vector<8x128xf32>
    %182 = vector.shape_cast %181 : vector<8x128xf32> to vector<1x8x128xf32>
    %183 = arith.index_cast %c2_i32 : i32 to index
    %c0_88 = arith.constant 0 : index
    %c0_89 = arith.constant 0 : index
    %184 = vector.load %arg10[%183, %c0_88, %c0_89] : memref<4x8x128xf32, #tpu.memory_space<vmem>>, vector<1x8x128xf32>
    tpu.vector_store %arg10[%183, %c0_88, %c0_89], %182 {strides = array<i32>} : memref<4x8x128xf32, #tpu.memory_space<vmem>>, vector<1x8x128xf32>,
    %185 = arith.index_cast %131 : i32 to index
    %186 = memref.load %arg2[%185] : memref<8xi32, #tpu.memory_space<smem>>
    %c1_i32_90 = arith.constant 1 : i32
    %187 = arith.cmpi eq, %186, %c1_i32_90 : i32
    %188 = arith.extui %187 : i1 to i32
    %c0_i32_91 = arith.constant 0 : i32
    %189 = arith.cmpi ne, %188, %c0_i32_91 : i32
    scf.if %189 {
      %c8_i32 = arith.constant 8 : i32
      %259 = arith.muli %131, %c8_i32 : i32
      %c0_i32_129 = arith.constant 0 : i32
      %260 = arith.addi %259, %c0_i32_129 : i32
      %261 = arith.index_cast %260 : i32 to index
      %262 = memref.load %arg3[%261] : memref<64xi32, #tpu.memory_space<smem>>
      %263 = arith.index_cast %262 : i32 to index
      %c0_130 = arith.constant 0 : index
      %264 = vector.load %arg5[%263, %c0_130] : memref<128x128xf32, #tpu.memory_space<vmem>>, vector<1x128xf32>
      %c0_131 = arith.constant 0 : index
      %c0_132 = arith.constant 0 : index
      %265 = vector.load %arg13[%c0_131, %c0_132] : memref<8x256xf32, #tpu.memory_space<vmem>>, vector<1x128xf32>
      tpu.vector_store %arg13[%c0_131, %c0_132], %264 {strides = array<i32>} : memref<8x256xf32, #tpu.memory_space<vmem>>, vector<1x128xf32>,
      %c8_i32_133 = arith.constant 8 : i32
      %266 = arith.muli %131, %c8_i32_133 : i32
      %c1_i32_134 = arith.constant 1 : i32
      %267 = arith.addi %266, %c1_i32_134 : i32
      %268 = arith.index_cast %267 : i32 to index
      %269 = memref.load %arg3[%268] : memref<64xi32, #tpu.memory_space<smem>>
      %270 = arith.index_cast %269 : i32 to index
      %c0_135 = arith.constant 0 : index
      %271 = vector.load %arg5[%270, %c0_135] : memref<128x128xf32, #tpu.memory_space<vmem>>, vector<1x128xf32>
      %c1 = arith.constant 1 : index
      %c0_136 = arith.constant 0 : index
      %272 = vector.load %arg13[%c1, %c0_136] : memref<8x256xf32, #tpu.memory_space<vmem>>, vector<1x128xf32>
      tpu.vector_store %arg13[%c1, %c0_136], %271 {strides = array<i32>} : memref<8x256xf32, #tpu.memory_space<vmem>>, vector<1x128xf32>,
      %c8_i32_137 = arith.constant 8 : i32
      %273 = arith.muli %131, %c8_i32_137 : i32
      %c2_i32_138 = arith.constant 2 : i32
      %274 = arith.addi %273, %c2_i32_138 : i32
      %275 = arith.index_cast %274 : i32 to index
      %276 = memref.load %arg3[%275] : memref<64xi32, #tpu.memory_space<smem>>
      %277 = arith.index_cast %276 : i32 to index
      %c0_139 = arith.constant 0 : index
      %278 = vector.load %arg5[%277, %c0_139] : memref<128x128xf32, #tpu.memory_space<vmem>>, vector<1x128xf32>
      %c2 = arith.constant 2 : index
      %c0_140 = arith.constant 0 : index
      %279 = vector.load %arg13[%c2, %c0_140] : memref<8x256xf32, #tpu.memory_space<vmem>>, vector<1x128xf32>
      tpu.vector_store %arg13[%c2, %c0_140], %278 {strides = array<i32>} : memref<8x256xf32, #tpu.memory_space<vmem>>, vector<1x128xf32>,
      %c8_i32_141 = arith.constant 8 : i32
      %280 = arith.muli %131, %c8_i32_141 : i32
      %c3_i32_142 = arith.constant 3 : i32
      %281 = arith.addi %280, %c3_i32_142 : i32
      %282 = arith.index_cast %281 : i32 to index
      %283 = memref.load %arg3[%282] : memref<64xi32, #tpu.memory_space<smem>>
      %284 = arith.index_cast %283 : i32 to index
      %c0_143 = arith.constant 0 : index
      %285 = vector.load %arg5[%284, %c0_143] : memref<128x128xf32, #tpu.memory_space<vmem>>, vector<1x128xf32>
      %c3 = arith.constant 3 : index
      %c0_144 = arith.constant 0 : index
      %286 = vector.load %arg13[%c3, %c0_144] : memref<8x256xf32, #tpu.memory_space<vmem>>, vector<1x128xf32>
      tpu.vector_store %arg13[%c3, %c0_144], %285 {strides = array<i32>} : memref<8x256xf32, #tpu.memory_space<vmem>>, vector<1x128xf32>,
      %c8_i32_145 = arith.constant 8 : i32
      %287 = arith.muli %131, %c8_i32_145 : i32
      %c4_i32_146 = arith.constant 4 : i32
      %288 = arith.addi %287, %c4_i32_146 : i32
      %289 = arith.index_cast %288 : i32 to index
      %290 = memref.load %arg3[%289] : memref<64xi32, #tpu.memory_space<smem>>
      %291 = arith.index_cast %290 : i32 to index
      %c0_147 = arith.constant 0 : index
      %292 = vector.load %arg5[%291, %c0_147] : memref<128x128xf32, #tpu.memory_space<vmem>>, vector<1x128xf32>
      %c4 = arith.constant 4 : index
      %c0_148 = arith.constant 0 : index
      %293 = vector.load %arg13[%c4, %c0_148] : memref<8x256xf32, #tpu.memory_space<vmem>>, vector<1x128xf32>
      tpu.vector_store %arg13[%c4, %c0_148], %292 {strides = array<i32>} : memref<8x256xf32, #tpu.memory_space<vmem>>, vector<1x128xf32>,
      %c8_i32_149 = arith.constant 8 : i32
      %294 = arith.muli %131, %c8_i32_149 : i32
      %c5_i32 = arith.constant 5 : i32
      %295 = arith.addi %294, %c5_i32 : i32
      %296 = arith.index_cast %295 : i32 to index
      %297 = memref.load %arg3[%296] : memref<64xi32, #tpu.memory_space<smem>>
      %298 = arith.index_cast %297 : i32 to index
      %c0_150 = arith.constant 0 : index
      %299 = vector.load %arg5[%298, %c0_150] : memref<128x128xf32, #tpu.memory_space<vmem>>, vector<1x128xf32>
      %c5 = arith.constant 5 : index
      %c0_151 = arith.constant 0 : index
      %300 = vector.load %arg13[%c5, %c0_151] : memref<8x256xf32, #tpu.memory_space<vmem>>, vector<1x128xf32>
      tpu.vector_store %arg13[%c5, %c0_151], %299 {strides = array<i32>} : memref<8x256xf32, #tpu.memory_space<vmem>>, vector<1x128xf32>,
      %c8_i32_152 = arith.constant 8 : i32
      %301 = arith.muli %131, %c8_i32_152 : i32
      %c6_i32 = arith.constant 6 : i32
      %302 = arith.addi %301, %c6_i32 : i32
      %303 = arith.index_cast %302 : i32 to index
      %304 = memref.load %arg3[%303] : memref<64xi32, #tpu.memory_space<smem>>
      %305 = arith.index_cast %304 : i32 to index
      %c0_153 = arith.constant 0 : index
      %306 = vector.load %arg5[%305, %c0_153] : memref<128x128xf32, #tpu.memory_space<vmem>>, vector<1x128xf32>
      %c6 = arith.constant 6 : index
      %c0_154 = arith.constant 0 : index
      %307 = vector.load %arg13[%c6, %c0_154] : memref<8x256xf32, #tpu.memory_space<vmem>>, vector<1x128xf32>
      tpu.vector_store %arg13[%c6, %c0_154], %306 {strides = array<i32>} : memref<8x256xf32, #tpu.memory_space<vmem>>, vector<1x128xf32>,
      %c8_i32_155 = arith.constant 8 : i32
      %308 = arith.muli %131, %c8_i32_155 : i32
      %c7_i32 = arith.constant 7 : i32
      %309 = arith.addi %308, %c7_i32 : i32
      %310 = arith.index_cast %309 : i32 to index
      %311 = memref.load %arg3[%310] : memref<64xi32, #tpu.memory_space<smem>>
      %312 = arith.index_cast %311 : i32 to index
      %c0_156 = arith.constant 0 : index
      %313 = vector.load %arg5[%312, %c0_156] : memref<128x128xf32, #tpu.memory_space<vmem>>, vector<1x128xf32>
      %c7 = arith.constant 7 : index
      %c0_157 = arith.constant 0 : index
      %314 = vector.load %arg13[%c7, %c0_157] : memref<8x256xf32, #tpu.memory_space<vmem>>, vector<1x128xf32>
      tpu.vector_store %arg13[%c7, %c0_157], %313 {strides = array<i32>} : memref<8x256xf32, #tpu.memory_space<vmem>>, vector<1x128xf32>,
    } else {
    }
    %c0_i32_92 = arith.constant 0 : i32
    %190 = arith.cmpi eq, %186, %c0_i32_92 : i32
    %191 = arith.extui %190 : i1 to i32
    %c0_i32_93 = arith.constant 0 : i32
    %192 = arith.cmpi ne, %191, %c0_i32_93 : i32
    scf.if %192 {
      %259 = vector.broadcast %172 : vector<8x1xf32> to vector<8x128xf32>
      %260 = arith.cmpf oge, %170, %259 : vector<8x128xf32>
      %c128_i32 = arith.constant 128 : i32
      %261 = vector.broadcast %c128_i32 : i32 to vector<8x128xi32>
      %262 = arith.select %260, %3, %261 : vector<8x128xi1>, vector<8x128xi32>
      %cst_129 = arith.constant dense<2147483647> : vector<8xi32>
      %263 = vector.multi_reduction <minsi>, %262, %cst_129 [1] : vector<8x128xi32> to vector<8xi32>
      %264 = vector.shape_cast %263 : vector<8xi32> to vector<8x1xi32>
      %265 = vector.broadcast %264 : vector<8x1xi32> to vector<8x128xi32>
      %266 = arith.cmpi eq, %3, %265 : vector<8x128xi32>
      %267 = arith.extui %266 : vector<8x128xi1> to vector<8x128xi32>
      %268 = arith.sitofp %267 : vector<8x128xi32> to vector<8x128xf32>
      %c0_130 = arith.constant 0 : index
      %c0_131 = arith.constant 0 : index
      %269 = vector.load %arg5[%c0_130, %c0_131] : memref<128x128xf32, #tpu.memory_space<vmem>>, vector<128x128xf32>
      %cst_132 = arith.constant dense<0.000000e+00> : vector<8x128xf32>
      %270 = tpu.matmul %268, %269, %cst_132 {dimension_numbers = #tpu.dot_dimension_numbers<[1], [0], [0], [1], [0, 0, 1, 1], [], []>} : vector<8x128xf32>, vector<128x128xf32>, vector<8x128xf32> -> vector<8x128xf32>
      %c0_133 = arith.constant 0 : index
      %c0_134 = arith.constant 0 : index
      %271 = vector.load %arg13[%c0_133, %c0_134] : memref<8x256xf32, #tpu.memory_space<vmem>>, vector<8x128xf32>
      tpu.vector_store %arg13[%c0_133, %c0_134], %270 {strides = array<i32>} : memref<8x256xf32, #tpu.memory_space<vmem>>, vector<8x128xf32>,
    } else {
    }
    %c3_i32 = arith.constant 3 : i32
    %c4_i32_94 = arith.constant 4 : i32
    %193 = arith.muli %arg0, %c4_i32_94 : i32
    %194 = arith.addi %193, %c3_i32 : i32
    %c0_95 = arith.constant 0 : index
    %c0_96 = arith.constant 0 : index
    %195 = vector.load %arg12[%c0_95, %c0_96] : memref<8x128xf32, #tpu.memory_space<vmem>>, vector<8x128xf32>
    %c0_97 = arith.constant 0 : index
    %c128_98 = arith.constant 128 : index
    %196 = vector.load %arg13[%c0_97, %c128_98] : memref<8x256xf32, #tpu.memory_space<vmem>>, vector<8x128xf32>
    tpu.vector_store %arg13[%c0_97, %c128_98], %195 {strides = array<i32>} : memref<8x256xf32, #tpu.memory_space<vmem>>, vector<8x128xf32>,
    %c0_99 = arith.constant 0 : index
    %c0_100 = arith.constant 0 : index
    %197 = vector.load %arg12[%c0_99, %c0_100] : memref<8x128xf32, #tpu.memory_space<vmem>>, vector<8x128xf32>
    %c0_101 = arith.constant 0 : index
    %c0_102 = arith.constant 0 : index
    %198 = vector.load %arg13[%c0_101, %c0_102] : memref<8x256xf32, #tpu.memory_space<vmem>>, vector<8x256xf32>
    %199 = arith.truncf %198 : vector<8x256xf32> to vector<8x256xbf16>
    %c0_103 = arith.constant 0 : index
    %c0_104 = arith.constant 0 : index
    %200 = vector.load %arg6[%c0_103, %c0_104] : memref<256x512xbf16, #tpu.memory_space<vmem>>, vector<256x512xbf16>
    %cst_105 = arith.constant dense<0.000000e+00> : vector<8x512xf32>
    %201 = tpu.matmul %199, %200, %cst_105 {dimension_numbers = #tpu.dot_dimension_numbers<[1], [0], [0], [1], [0, 0, 1, 1], [], []>} : vector<8x256xbf16>, vector<256x512xbf16>, vector<8x512xf32> -> vector<8x512xf32>
    %c0_106 = arith.constant 0 : index
    %c0_107 = arith.constant 0 : index
    %202 = vector.load %arg7[%c0_106, %c0_107] : memref<1x512xf32, #tpu.memory_space<vmem>>, vector<1x512xf32>
    %203 = vector.broadcast %202 : vector<1x512xf32> to vector<8x512xf32>
    %204 = arith.addf %201, %203 : vector<8x512xf32>
    %205 = vector.extract_strided_slice %204 {offsets = [0, 0], sizes = [8, 128], strides = [1, 1]} : vector<8x512xf32> to vector<8x128xf32>
    %206 = arith.negf %205 : vector<8x128xf32>
    %207 = math.exp %206 : vector<8x128xf32>
    %cst_108 = arith.constant 1.000000e+00 : f32
    %208 = vector.broadcast %cst_108 : f32 to vector<8x128xf32>
    %209 = arith.addf %208, %207 : vector<8x128xf32>
    %210 = arith.divf %208, %209 : vector<8x128xf32>
    %211 = vector.extract_strided_slice %204 {offsets = [0, 128], sizes = [8, 128], strides = [1, 1]} : vector<8x512xf32> to vector<8x128xf32>
    %212 = arith.negf %211 : vector<8x128xf32>
    %213 = math.exp %212 : vector<8x128xf32>
    %cst_109 = arith.constant 1.000000e+00 : f32
    %214 = vector.broadcast %cst_109 : f32 to vector<8x128xf32>
    %215 = arith.addf %214, %213 : vector<8x128xf32>
    %216 = arith.divf %214, %215 : vector<8x128xf32>
    %217 = vector.extract_strided_slice %204 {offsets = [0, 256], sizes = [8, 128], strides = [1, 1]} : vector<8x512xf32> to vector<8x128xf32>
    %218 = vector.extract_strided_slice %204 {offsets = [0, 384], sizes = [8, 128], strides = [1, 1]} : vector<8x512xf32> to vector<8x128xf32>
    %219 = arith.mulf %210, %218 : vector<8x128xf32>
    %220 = arith.addf %217, %219 : vector<8x128xf32>
    %221 = math.tanh %220 : vector<8x128xf32>
    %cst_110 = arith.constant 1.000000e+00 : f32
    %222 = vector.broadcast %cst_110 : f32 to vector<8x128xf32>
    %223 = arith.subf %222, %216 : vector<8x128xf32>
    %224 = arith.mulf %223, %221 : vector<8x128xf32>
    %225 = arith.mulf %216, %197 : vector<8x128xf32>
    %226 = arith.addf %224, %225 : vector<8x128xf32>
    %c0_111 = arith.constant 0 : index
    %c0_112 = arith.constant 0 : index
    %227 = vector.load %arg12[%c0_111, %c0_112] : memref<8x128xf32, #tpu.memory_space<vmem>>, vector<8x128xf32>
    tpu.vector_store %arg12[%c0_111, %c0_112], %226 {strides = array<i32>} : memref<8x128xf32, #tpu.memory_space<vmem>>, vector<8x128xf32>,
    %228 = arith.truncf %226 : vector<8x128xf32> to vector<8x128xbf16>
    %c0_113 = arith.constant 0 : index
    %c0_114 = arith.constant 0 : index
    %229 = vector.load %arg8[%c0_113, %c0_114] : memref<128x128xbf16, #tpu.memory_space<vmem>>, vector<128x128xbf16>
    %cst_115 = arith.constant dense<0.000000e+00> : vector<8x128xf32>
    %230 = tpu.matmul %228, %229, %cst_115 {dimension_numbers = #tpu.dot_dimension_numbers<[1], [0], [0], [1], [0, 0, 1, 1], [], []>} : vector<8x128xbf16>, vector<128x128xbf16>, vector<8x128xf32> -> vector<8x128xf32>
    %c0_116 = arith.constant 0 : index
    %c0_117 = arith.constant 0 : index
    %231 = vector.load %arg9[%c0_116, %c0_117] : memref<1x128xf32, #tpu.memory_space<vmem>>, vector<1x128xf32>
    %232 = vector.broadcast %231 : vector<1x128xf32> to vector<8x128xf32>
    %233 = arith.addf %230, %232 : vector<8x128xf32>
    %cst_118 = arith.constant dense<0xFF800000> : vector<8xf32>
    %234 = vector.multi_reduction <maximumf>, %233, %cst_118 [1] : vector<8x128xf32> to vector<8xf32>
    %235 = vector.shape_cast %234 : vector<8xf32> to vector<8x1xf32>
    %236 = vector.broadcast %235 : vector<8x1xf32> to vector<8x128xf32>
    %237 = arith.subf %233, %236 : vector<8x128xf32>
    %238 = math.exp %237 : vector<8x128xf32>
    %cst_119 = arith.constant dense<0.000000e+00> : vector<8xf32>
    %239 = vector.multi_reduction <add>, %238, %cst_119 [1] : vector<8x128xf32> to vector<8xf32>
    %240 = vector.shape_cast %239 : vector<8xf32> to vector<8x1xf32>
    %241 = math.log %240 : vector<8x1xf32>
    %242 = arith.addf %235, %241 : vector<8x1xf32>
    %243 = vector.broadcast %242 : vector<8x1xf32> to vector<8x128xf32>
    %244 = arith.subf %233, %243 : vector<8x128xf32>
    %245 = vector.shape_cast %244 : vector<8x128xf32> to vector<1x8x128xf32>
    %246 = arith.index_cast %c3_i32 : i32 to index
    %c0_120 = arith.constant 0 : index
    %c0_121 = arith.constant 0 : index
    %247 = vector.load %arg10[%246, %c0_120, %c0_121] : memref<4x8x128xf32, #tpu.memory_space<vmem>>, vector<1x8x128xf32>
    tpu.vector_store %arg10[%246, %c0_120, %c0_121], %245 {strides = array<i32>} : memref<4x8x128xf32, #tpu.memory_space<vmem>>, vector<1x8x128xf32>,
    %248 = arith.index_cast %194 : i32 to index
    %249 = memref.load %arg2[%248] : memref<8xi32, #tpu.memory_space<smem>>
    %c1_i32_122 = arith.constant 1 : i32
    %250 = arith.cmpi eq, %249, %c1_i32_122 : i32
    %251 = arith.extui %250 : i1 to i32
    %c0_i32_123 = arith.constant 0 : i32
    %252 = arith.cmpi ne, %251, %c0_i32_123 : i32
    scf.if %252 {
      %c8_i32 = arith.constant 8 : i32
      %259 = arith.muli %194, %c8_i32 : i32
      %c0_i32_129 = arith.constant 0 : i32
      %260 = arith.addi %259, %c0_i32_129 : i32
      %261 = arith.index_cast %260 : i32 to index
      %262 = memref.load %arg3[%261] : memref<64xi32, #tpu.memory_space<smem>>
      %263 = arith.index_cast %262 : i32 to index
      %c0_130 = arith.constant 0 : index
      %264 = vector.load %arg5[%263, %c0_130] : memref<128x128xf32, #tpu.memory_space<vmem>>, vector<1x128xf32>
      %c0_131 = arith.constant 0 : index
      %c0_132 = arith.constant 0 : index
      %265 = vector.load %arg13[%c0_131, %c0_132] : memref<8x256xf32, #tpu.memory_space<vmem>>, vector<1x128xf32>
      tpu.vector_store %arg13[%c0_131, %c0_132], %264 {strides = array<i32>} : memref<8x256xf32, #tpu.memory_space<vmem>>, vector<1x128xf32>,
      %c8_i32_133 = arith.constant 8 : i32
      %266 = arith.muli %194, %c8_i32_133 : i32
      %c1_i32_134 = arith.constant 1 : i32
      %267 = arith.addi %266, %c1_i32_134 : i32
      %268 = arith.index_cast %267 : i32 to index
      %269 = memref.load %arg3[%268] : memref<64xi32, #tpu.memory_space<smem>>
      %270 = arith.index_cast %269 : i32 to index
      %c0_135 = arith.constant 0 : index
      %271 = vector.load %arg5[%270, %c0_135] : memref<128x128xf32, #tpu.memory_space<vmem>>, vector<1x128xf32>
      %c1 = arith.constant 1 : index
      %c0_136 = arith.constant 0 : index
      %272 = vector.load %arg13[%c1, %c0_136] : memref<8x256xf32, #tpu.memory_space<vmem>>, vector<1x128xf32>
      tpu.vector_store %arg13[%c1, %c0_136], %271 {strides = array<i32>} : memref<8x256xf32, #tpu.memory_space<vmem>>, vector<1x128xf32>,
      %c8_i32_137 = arith.constant 8 : i32
      %273 = arith.muli %194, %c8_i32_137 : i32
      %c2_i32_138 = arith.constant 2 : i32
      %274 = arith.addi %273, %c2_i32_138 : i32
      %275 = arith.index_cast %274 : i32 to index
      %276 = memref.load %arg3[%275] : memref<64xi32, #tpu.memory_space<smem>>
      %277 = arith.index_cast %276 : i32 to index
      %c0_139 = arith.constant 0 : index
      %278 = vector.load %arg5[%277, %c0_139] : memref<128x128xf32, #tpu.memory_space<vmem>>, vector<1x128xf32>
      %c2 = arith.constant 2 : index
      %c0_140 = arith.constant 0 : index
      %279 = vector.load %arg13[%c2, %c0_140] : memref<8x256xf32, #tpu.memory_space<vmem>>, vector<1x128xf32>
      tpu.vector_store %arg13[%c2, %c0_140], %278 {strides = array<i32>} : memref<8x256xf32, #tpu.memory_space<vmem>>, vector<1x128xf32>,
      %c8_i32_141 = arith.constant 8 : i32
      %280 = arith.muli %194, %c8_i32_141 : i32
      %c3_i32_142 = arith.constant 3 : i32
      %281 = arith.addi %280, %c3_i32_142 : i32
      %282 = arith.index_cast %281 : i32 to index
      %283 = memref.load %arg3[%282] : memref<64xi32, #tpu.memory_space<smem>>
      %284 = arith.index_cast %283 : i32 to index
      %c0_143 = arith.constant 0 : index
      %285 = vector.load %arg5[%284, %c0_143] : memref<128x128xf32, #tpu.memory_space<vmem>>, vector<1x128xf32>
      %c3 = arith.constant 3 : index
      %c0_144 = arith.constant 0 : index
      %286 = vector.load %arg13[%c3, %c0_144] : memref<8x256xf32, #tpu.memory_space<vmem>>, vector<1x128xf32>
      tpu.vector_store %arg13[%c3, %c0_144], %285 {strides = array<i32>} : memref<8x256xf32, #tpu.memory_space<vmem>>, vector<1x128xf32>,
      %c8_i32_145 = arith.constant 8 : i32
      %287 = arith.muli %194, %c8_i32_145 : i32
      %c4_i32_146 = arith.constant 4 : i32
      %288 = arith.addi %287, %c4_i32_146 : i32
      %289 = arith.index_cast %288 : i32 to index
      %290 = memref.load %arg3[%289] : memref<64xi32, #tpu.memory_space<smem>>
      %291 = arith.index_cast %290 : i32 to index
      %c0_147 = arith.constant 0 : index
      %292 = vector.load %arg5[%291, %c0_147] : memref<128x128xf32, #tpu.memory_space<vmem>>, vector<1x128xf32>
      %c4 = arith.constant 4 : index
      %c0_148 = arith.constant 0 : index
      %293 = vector.load %arg13[%c4, %c0_148] : memref<8x256xf32, #tpu.memory_space<vmem>>, vector<1x128xf32>
      tpu.vector_store %arg13[%c4, %c0_148], %292 {strides = array<i32>} : memref<8x256xf32, #tpu.memory_space<vmem>>, vector<1x128xf32>,
      %c8_i32_149 = arith.constant 8 : i32
      %294 = arith.muli %194, %c8_i32_149 : i32
      %c5_i32 = arith.constant 5 : i32
      %295 = arith.addi %294, %c5_i32 : i32
      %296 = arith.index_cast %295 : i32 to index
      %297 = memref.load %arg3[%296] : memref<64xi32, #tpu.memory_space<smem>>
      %298 = arith.index_cast %297 : i32 to index
      %c0_150 = arith.constant 0 : index
      %299 = vector.load %arg5[%298, %c0_150] : memref<128x128xf32, #tpu.memory_space<vmem>>, vector<1x128xf32>
      %c5 = arith.constant 5 : index
      %c0_151 = arith.constant 0 : index
      %300 = vector.load %arg13[%c5, %c0_151] : memref<8x256xf32, #tpu.memory_space<vmem>>, vector<1x128xf32>
      tpu.vector_store %arg13[%c5, %c0_151], %299 {strides = array<i32>} : memref<8x256xf32, #tpu.memory_space<vmem>>, vector<1x128xf32>,
      %c8_i32_152 = arith.constant 8 : i32
      %301 = arith.muli %194, %c8_i32_152 : i32
      %c6_i32 = arith.constant 6 : i32
      %302 = arith.addi %301, %c6_i32 : i32
      %303 = arith.index_cast %302 : i32 to index
      %304 = memref.load %arg3[%303] : memref<64xi32, #tpu.memory_space<smem>>
      %305 = arith.index_cast %304 : i32 to index
      %c0_153 = arith.constant 0 : index
      %306 = vector.load %arg5[%305, %c0_153] : memref<128x128xf32, #tpu.memory_space<vmem>>, vector<1x128xf32>
      %c6 = arith.constant 6 : index
      %c0_154 = arith.constant 0 : index
      %307 = vector.load %arg13[%c6, %c0_154] : memref<8x256xf32, #tpu.memory_space<vmem>>, vector<1x128xf32>
      tpu.vector_store %arg13[%c6, %c0_154], %306 {strides = array<i32>} : memref<8x256xf32, #tpu.memory_space<vmem>>, vector<1x128xf32>,
      %c8_i32_155 = arith.constant 8 : i32
      %308 = arith.muli %194, %c8_i32_155 : i32
      %c7_i32 = arith.constant 7 : i32
      %309 = arith.addi %308, %c7_i32 : i32
      %310 = arith.index_cast %309 : i32 to index
      %311 = memref.load %arg3[%310] : memref<64xi32, #tpu.memory_space<smem>>
      %312 = arith.index_cast %311 : i32 to index
      %c0_156 = arith.constant 0 : index
      %313 = vector.load %arg5[%312, %c0_156] : memref<128x128xf32, #tpu.memory_space<vmem>>, vector<1x128xf32>
      %c7 = arith.constant 7 : index
      %c0_157 = arith.constant 0 : index
      %314 = vector.load %arg13[%c7, %c0_157] : memref<8x256xf32, #tpu.memory_space<vmem>>, vector<1x128xf32>
      tpu.vector_store %arg13[%c7, %c0_157], %313 {strides = array<i32>} : memref<8x256xf32, #tpu.memory_space<vmem>>, vector<1x128xf32>,
    } else {
    }
    %c0_i32_124 = arith.constant 0 : i32
    %253 = arith.cmpi eq, %249, %c0_i32_124 : i32
    %254 = arith.extui %253 : i1 to i32
    %c0_i32_125 = arith.constant 0 : i32
    %255 = arith.cmpi ne, %254, %c0_i32_125 : i32
    scf.if %255 {
      %259 = vector.broadcast %235 : vector<8x1xf32> to vector<8x128xf32>
      %260 = arith.cmpf oge, %233, %259 : vector<8x128xf32>
      %c128_i32 = arith.constant 128 : i32
      %261 = vector.broadcast %c128_i32 : i32 to vector<8x128xi32>
      %262 = arith.select %260, %3, %261 : vector<8x128xi1>, vector<8x128xi32>
      %cst_129 = arith.constant dense<2147483647> : vector<8xi32>
      %263 = vector.multi_reduction <minsi>, %262, %cst_129 [1] : vector<8x128xi32> to vector<8xi32>
      %264 = vector.shape_cast %263 : vector<8xi32> to vector<8x1xi32>
      %265 = vector.broadcast %264 : vector<8x1xi32> to vector<8x128xi32>
      %266 = arith.cmpi eq, %3, %265 : vector<8x128xi32>
      %267 = arith.extui %266 : vector<8x128xi1> to vector<8x128xi32>
      %268 = arith.sitofp %267 : vector<8x128xi32> to vector<8x128xf32>
      %c0_130 = arith.constant 0 : index
      %c0_131 = arith.constant 0 : index
      %269 = vector.load %arg5[%c0_130, %c0_131] : memref<128x128xf32, #tpu.memory_space<vmem>>, vector<128x128xf32>
      %cst_132 = arith.constant dense<0.000000e+00> : vector<8x128xf32>
      %270 = tpu.matmul %268, %269, %cst_132 {dimension_numbers = #tpu.dot_dimension_numbers<[1], [0], [0], [1], [0, 0, 1, 1], [], []>} : vector<8x128xf32>, vector<128x128xf32>, vector<8x128xf32> -> vector<8x128xf32>
      %c0_133 = arith.constant 0 : index
      %c0_134 = arith.constant 0 : index
      %271 = vector.load %arg13[%c0_133, %c0_134] : memref<8x256xf32, #tpu.memory_space<vmem>>, vector<8x128xf32>
      tpu.vector_store %arg13[%c0_133, %c0_134], %270 {strides = array<i32>} : memref<8x256xf32, #tpu.memory_space<vmem>>, vector<8x128xf32>,
    } else {
    }
    %c4_i32_126 = arith.constant 4 : i32
    %c1_i32_127 = arith.constant 1 : i32
    %256 = arith.cmpi eq, %arg0, %c1_i32_127 : i32
    %257 = arith.extui %256 : i1 to i32
    %c0_i32_128 = arith.constant 0 : i32
    %258 = arith.cmpi ne, %257, %c0_i32_128 : i32
    scf.if %258 {
      %c0_129 = arith.constant 0 : index
      %c0_130 = arith.constant 0 : index
      %259 = vector.load %arg12[%c0_129, %c0_130] : memref<8x128xf32, #tpu.memory_space<vmem>>, vector<8x128xf32>
      %c0_131 = arith.constant 0 : index
      %c0_132 = arith.constant 0 : index
      %260 = vector.load %arg11[%c0_131, %c0_132] : memref<8x128xf32, #tpu.memory_space<vmem>>, vector<8x128xf32>
      tpu.vector_store %arg11[%c0_131, %c0_132], %259 {strides = array<i32>} : memref<8x128xf32, #tpu.memory_space<vmem>>, vector<8x128xf32>,
    } else {
    }
    return
  }
  func.func @transform_0(%arg0: i32, %arg1: memref<1xi32, #tpu.memory_space<smem>>, %arg2: memref<8xi32, #tpu.memory_space<smem>>, %arg3: memref<64xi32, #tpu.memory_space<smem>>) -> (i32, i32) {
    %c0_i32 = arith.constant 0 : i32
    %c0_i32_0 = arith.constant 0 : i32
    %c0_i32_1 = arith.constant 0 : i32
    return %c0_i32, %c0_i32_0 : i32, i32
  }
  func.func @transform_1(%arg0: i32, %arg1: memref<1xi32, #tpu.memory_space<smem>>, %arg2: memref<8xi32, #tpu.memory_space<smem>>, %arg3: memref<64xi32, #tpu.memory_space<smem>>) -> (i32, i32) {
    %c0_i32 = arith.constant 0 : i32
    %c0_i32_0 = arith.constant 0 : i32
    %c0_i32_1 = arith.constant 0 : i32
    return %c0_i32, %c0_i32_0 : i32, i32
  }
  func.func @transform_2(%arg0: i32, %arg1: memref<1xi32, #tpu.memory_space<smem>>, %arg2: memref<8xi32, #tpu.memory_space<smem>>, %arg3: memref<64xi32, #tpu.memory_space<smem>>) -> (i32, i32) {
    %c0_i32 = arith.constant 0 : i32
    %c0_i32_0 = arith.constant 0 : i32
    %c0_i32_1 = arith.constant 0 : i32
    return %c0_i32, %c0_i32_0 : i32, i32
  }
  func.func @transform_3(%arg0: i32, %arg1: memref<1xi32, #tpu.memory_space<smem>>, %arg2: memref<8xi32, #tpu.memory_space<smem>>, %arg3: memref<64xi32, #tpu.memory_space<smem>>) -> (i32, i32) {
    %c0_i32 = arith.constant 0 : i32
    %c0_i32_0 = arith.constant 0 : i32
    %c0_i32_1 = arith.constant 0 : i32
    return %c0_i32, %c0_i32_0 : i32, i32
  }
  func.func @transform_4(%arg0: i32, %arg1: memref<1xi32, #tpu.memory_space<smem>>, %arg2: memref<8xi32, #tpu.memory_space<smem>>, %arg3: memref<64xi32, #tpu.memory_space<smem>>) -> (i32, i32) {
    %c0_i32 = arith.constant 0 : i32
    %c0_i32_0 = arith.constant 0 : i32
    %c0_i32_1 = arith.constant 0 : i32
    return %c0_i32, %c0_i32_0 : i32, i32
  }
  func.func @transform_5(%arg0: i32, %arg1: memref<1xi32, #tpu.memory_space<smem>>, %arg2: memref<8xi32, #tpu.memory_space<smem>>, %arg3: memref<64xi32, #tpu.memory_space<smem>>) -> (i32, i32) {
    %c0_i32 = arith.constant 0 : i32
    %c0_i32_0 = arith.constant 0 : i32
    %c0_i32_1 = arith.constant 0 : i32
    return %c0_i32, %c0_i32_0 : i32, i32
  }
  func.func @transform_6(%arg0: i32, %arg1: memref<1xi32, #tpu.memory_space<smem>>, %arg2: memref<8xi32, #tpu.memory_space<smem>>, %arg3: memref<64xi32, #tpu.memory_space<smem>>) -> (i32, i32, i32) {
    %c0_i32 = arith.constant 0 : i32
    %c0_i32_0 = arith.constant 0 : i32
    %c0_i32_1 = arith.constant 0 : i32
    return %arg0, %c0_i32, %c0_i32_0 : i32, i32, i32
  }
  func.func @transform_7(%arg0: i32, %arg1: memref<1xi32, #tpu.memory_space<smem>>, %arg2: memref<8xi32, #tpu.memory_space<smem>>, %arg3: memref<64xi32, #tpu.memory_space<smem>>) -> (i32, i32) {
    %c0_i32 = arith.constant 0 : i32
    %c0_i32_0 = arith.constant 0 : i32
    %c0_i32_1 = arith.constant 0 : i32
    return %c0_i32, %c0_i32_0 : i32, i32
  }
}

module attributes {stable_mosaic.version = 11 : i64} {
  func.func @decoder_seq_kernel(%arg0: i32, %arg1: memref<1xi32, #tpu.memory_space<smem>>, %arg2: memref<8xi32, #tpu.memory_space<smem>>, %arg3: memref<64xi32, #tpu.memory_space<smem>>, %arg4: memref<8x128xf32, #tpu.memory_space<vmem>>, %arg5: memref<128x128xf32, #tpu.memory_space<vmem>>, %arg6: memref<256x512xbf16, #tpu.memory_space<vmem>>, %arg7: memref<1x512xf32, #tpu.memory_space<vmem>>, %arg8: memref<128x128xbf16, #tpu.memory_space<vmem>>, %arg9: memref<1x128xf32, #tpu.memory_space<vmem>>, %arg10: memref<4x8x128xf32, #tpu.memory_space<vmem>>, %arg11: memref<8x128xf32, #tpu.memory_space<vmem>>, %arg12: memref<8x128xf32, #tpu.memory_space<vmem>>, %arg13: memref<8x256xf32, #tpu.memory_space<vmem>>) attributes {dimension_semantics = [#tpu.dimension_semantics<arbitrary>], iteration_bounds = array<i64: 2>, scalar_prefetch = 3 : i64, scratch_operands = 2 : i64, tpu.core_type = #tpu.core_type<tc>, window_params = [{pipeline_mode = #tpu.pipeline_mode<synchronous>, transform_indices = @transform_0, window_bounds = array<i64: 8, 128>}, {pipeline_mode = #tpu.pipeline_mode<synchronous>, transform_indices = @transform_1, window_bounds = array<i64: 128, 128>}, {pipeline_mode = #tpu.pipeline_mode<synchronous>, transform_indices = @transform_2, window_bounds = array<i64: 256, 512>}, {pipeline_mode = #tpu.pipeline_mode<synchronous>, transform_indices = @transform_3, window_bounds = array<i64: 1, 512>}, {pipeline_mode = #tpu.pipeline_mode<synchronous>, transform_indices = @transform_4, window_bounds = array<i64: 128, 128>}, {pipeline_mode = #tpu.pipeline_mode<synchronous>, transform_indices = @transform_5, window_bounds = array<i64: 1, 128>}, {transform_indices = @transform_6, window_bounds = array<i64: 4, 8, 128>}, {pipeline_mode = #tpu.pipeline_mode<synchronous>, transform_indices = @transform_7, window_bounds = array<i64: 8, 128>}]} {
    %c0_i32 = arith.constant 0 : i32
    %0 = arith.cmpi eq, %arg0, %c0_i32 : i32
    %1 = arith.extui %0 : i1 to i32
    %c0_i32_0 = arith.constant 0 : i32
    %2 = arith.cmpi ne, %1, %c0_i32_0 : i32
    scf.if %2 {
      %c0_129 = arith.constant 0 : index
      %c0_130 = arith.constant 0 : index
      %259 = vector.load %arg4[%c0_129, %c0_130] : memref<8x128xf32, #tpu.memory_space<vmem>>, vector<8x128xf32>
      %c0_131 = arith.constant 0 : index
      %c0_132 = arith.constant 0 : index
      %260 = vector.load %arg12[%c0_131, %c0_132] : memref<8x128xf32, #tpu.memory_space<vmem>>, vector<8x128xf32>
      tpu.vector_store %arg12[%c0_131, %c0_132], %259 {strides = array<i32>} : memref<8x128xf32, #tpu.memory_space<vmem>>, vector<8x128xf32>,
      %c0_133 = arith.constant 0 : index
      %261 = memref.load %arg1[%c0_133] : memref<1xi32, #tpu.memory_space<smem>>
      %262 = arith.index_cast %261 : i32 to index
      %c0_134 = arith.constant 0 : index
      %263 = vector.load %arg5[%262, %c0_134] : memref<128x128xf32, #tpu.memory_space<vmem>>, vector<1x128xf32>
      %264 = vector.shape_cast %263 : vector<1x128xf32> to vector<1x128xf32>
      %265 = vector.broadcast %264 : vector<1x128xf32> to vector<8x128xf32>
      %c0_135 = arith.constant 0 : index
      %c0_136 = arith.constant 0 : index
      %266 = vector.load %arg13[%c0_135, %c0_136] : memref<8x256xf32, #tpu.memory_space<vmem>>, vector<8x128xf32>
      tpu.vector_store %arg13[%c0_135, %c0_136], %265 {strides = array<i32>} : memref<8x256xf32, #tpu.memory_space<vmem>>, vector<8x128xf32>,
    } else {
    }
    %3 = tpu.iota {dimensions = array<i32: 1>} : vector<8x128xi32>
    %c0_i32_1 = arith.constant 0 : i32
    %c4_i32 = arith.constant 4 : i32
    %4 = arith.muli %arg0, %c4_i32 : i32
    %5 = arith.addi %4, %c0_i32_1 : i32
    %c0 = arith.constant 0 : index
    %c0_2 = arith.constant 0 : index
    %6 = vector.load %arg12[%c0, %c0_2] : memref<8x128xf32, #tpu.memory_space<vmem>>, vector<8x128xf32>
    %c0_3 = arith.constant 0 : index
    %c128 = arith.constant 128 : index
    %7 = vector.load %arg13[%c0_3, %c128] : memref<8x256xf32, #tpu.memory_space<vmem>>, vector<8x128xf32>
    tpu.vector_store %arg13[%c0_3, %c128], %6 {strides = array<i32>} : memref<8x256xf32, #tpu.memory_space<vmem>>, vector<8x128xf32>,
    %c0_4 = arith.constant 0 : index
    %c0_5 = arith.constant 0 : index
    %8 = vector.load %arg12[%c0_4, %c0_5] : memref<8x128xf32, #tpu.memory_space<vmem>>, vector<8x128xf32>
    %c0_6 = arith.constant 0 : index
    %c0_7 = arith.constant 0 : index
    %9 = vector.load %arg13[%c0_6, %c0_7] : memref<8x256xf32, #tpu.memory_space<vmem>>, vector<8x256xf32>
    %10 = arith.truncf %9 : vector<8x256xf32> to vector<8x256xbf16>
    %c0_8 = arith.constant 0 : index
    %c0_9 = arith.constant 0 : index
    %11 = vector.load %arg6[%c0_8, %c0_9] : memref<256x512xbf16, #tpu.memory_space<vmem>>, vector<256x512xbf16>
    %cst = arith.constant dense<0.000000e+00> : vector<8x512xf32>
    %12 = tpu.matmul %10, %11, %cst {dimension_numbers = #tpu.dot_dimension_numbers<[1], [0], [0], [1], [0, 0, 1, 1], [], []>} : vector<8x256xbf16>, vector<256x512xbf16>, vector<8x512xf32> -> vector<8x512xf32>
    %c0_10 = arith.constant 0 : index
    %c0_11 = arith.constant 0 : index
    %13 = vector.load %arg7[%c0_10, %c0_11] : memref<1x512xf32, #tpu.memory_space<vmem>>, vector<1x512xf32>
    %14 = vector.broadcast %13 : vector<1x512xf32> to vector<8x512xf32>
    %15 = arith.addf %12, %14 : vector<8x512xf32>
    %16 = vector.extract_strided_slice %15 {offsets = [0, 0], sizes = [8, 128], strides = [1, 1]} : vector<8x512xf32> to vector<8x128xf32>
    %17 = arith.negf %16 : vector<8x128xf32>
    %18 = math.exp %17 : vector<8x128xf32>
    %cst_12 = arith.constant 1.000000e+00 : f32
    %19 = vector.broadcast %cst_12 : f32 to vector<8x128xf32>
    %20 = arith.addf %19, %18 : vector<8x128xf32>
    %21 = arith.divf %19, %20 : vector<8x128xf32>
    %22 = vector.extract_strided_slice %15 {offsets = [0, 128], sizes = [8, 128], strides = [1, 1]} : vector<8x512xf32> to vector<8x128xf32>
    %23 = arith.negf %22 : vector<8x128xf32>
    %24 = math.exp %23 : vector<8x128xf32>
    %cst_13 = arith.constant 1.000000e+00 : f32
    %25 = vector.broadcast %cst_13 : f32 to vector<8x128xf32>
    %26 = arith.addf %25, %24 : vector<8x128xf32>
    %27 = arith.divf %25, %26 : vector<8x128xf32>
    %28 = vector.extract_strided_slice %15 {offsets = [0, 256], sizes = [8, 128], strides = [1, 1]} : vector<8x512xf32> to vector<8x128xf32>
    %29 = vector.extract_strided_slice %15 {offsets = [0, 384], sizes = [8, 128], strides = [1, 1]} : vector<8x512xf32> to vector<8x128xf32>
    %30 = arith.mulf %21, %29 : vector<8x128xf32>
    %31 = arith.addf %28, %30 : vector<8x128xf32>
    %32 = math.tanh %31 : vector<8x128xf32>
    %cst_14 = arith.constant 1.000000e+00 : f32
    %33 = vector.broadcast %cst_14 : f32 to vector<8x128xf32>
    %34 = arith.subf %33, %27 : vector<8x128xf32>
    %35 = arith.mulf %34, %32 : vector<8x128xf32>
    %36 = arith.mulf %27, %8 : vector<8x128xf32>
    %37 = arith.addf %35, %36 : vector<8x128xf32>
    %c0_15 = arith.constant 0 : index
    %c0_16 = arith.constant 0 : index
    %38 = vector.load %arg12[%c0_15, %c0_16] : memref<8x128xf32, #tpu.memory_space<vmem>>, vector<8x128xf32>
    tpu.vector_store %arg12[%c0_15, %c0_16], %37 {strides = array<i32>} : memref<8x128xf32, #tpu.memory_space<vmem>>, vector<8x128xf32>,
    %39 = arith.truncf %37 : vector<8x128xf32> to vector<8x128xbf16>
    %c0_17 = arith.constant 0 : index
    %c0_18 = arith.constant 0 : index
    %40 = vector.load %arg8[%c0_17, %c0_18] : memref<128x128xbf16, #tpu.memory_space<vmem>>, vector<128x128xbf16>
    %cst_19 = arith.constant dense<0.000000e+00> : vector<8x128xf32>
    %41 = tpu.matmul %39, %40, %cst_19 {dimension_numbers = #tpu.dot_dimension_numbers<[1], [0], [0], [1], [0, 0, 1, 1], [], []>} : vector<8x128xbf16>, vector<128x128xbf16>, vector<8x128xf32> -> vector<8x128xf32>
    %c0_20 = arith.constant 0 : index
    %c0_21 = arith.constant 0 : index
    %42 = vector.load %arg9[%c0_20, %c0_21] : memref<1x128xf32, #tpu.memory_space<vmem>>, vector<1x128xf32>
    %43 = vector.broadcast %42 : vector<1x128xf32> to vector<8x128xf32>
    %44 = arith.addf %41, %43 : vector<8x128xf32>
    %cst_22 = arith.constant dense<0xFF800000> : vector<8xf32>
    %45 = vector.multi_reduction <maximumf>, %44, %cst_22 [1] : vector<8x128xf32> to vector<8xf32>
    %46 = vector.shape_cast %45 : vector<8xf32> to vector<8x1xf32>
    %47 = vector.broadcast %46 : vector<8x1xf32> to vector<8x128xf32>
    %48 = arith.subf %44, %47 : vector<8x128xf32>
    %49 = math.exp %48 : vector<8x128xf32>
    %cst_23 = arith.constant dense<0.000000e+00> : vector<8xf32>
    %50 = vector.multi_reduction <add>, %49, %cst_23 [1] : vector<8x128xf32> to vector<8xf32>
    %51 = vector.shape_cast %50 : vector<8xf32> to vector<8x1xf32>
    %52 = math.log %51 : vector<8x1xf32>
    %53 = arith.addf %46, %52 : vector<8x1xf32>
    %54 = vector.broadcast %53 : vector<8x1xf32> to vector<8x128xf32>
    %55 = arith.subf %44, %54 : vector<8x128xf32>
    %56 = vector.shape_cast %55 : vector<8x128xf32> to vector<1x8x128xf32>
    %57 = arith.index_cast %c0_i32_1 : i32 to index
    %c0_24 = arith.constant 0 : index
    %c0_25 = arith.constant 0 : index
    %58 = vector.load %arg10[%57, %c0_24, %c0_25] : memref<4x8x128xf32, #tpu.memory_space<vmem>>, vector<1x8x128xf32>
    tpu.vector_store %arg10[%57, %c0_24, %c0_25], %56 {strides = array<i32>} : memref<4x8x128xf32, #tpu.memory_space<vmem>>, vector<1x8x128xf32>,
    %59 = arith.index_cast %5 : i32 to index
    %60 = memref.load %arg2[%59] : memref<8xi32, #tpu.memory_space<smem>>
    %c1_i32 = arith.constant 1 : i32
    %61 = arith.cmpi eq, %60, %c1_i32 : i32
    %62 = arith.extui %61 : i1 to i32
    %c0_i32_26 = arith.constant 0 : i32
    %63 = arith.cmpi ne, %62, %c0_i32_26 : i32
    scf.if %63 {
      %c8_i32 = arith.constant 8 : i32
      %259 = arith.muli %5, %c8_i32 : i32
      %c0_i32_129 = arith.constant 0 : i32
      %260 = arith.addi %259, %c0_i32_129 : i32
      %261 = arith.index_cast %260 : i32 to index
      %262 = memref.load %arg3[%261] : memref<64xi32, #tpu.memory_space<smem>>
      %263 = arith.index_cast %262 : i32 to index
      %c0_130 = arith.constant 0 : index
      %264 = vector.load %arg5[%263, %c0_130] : memref<128x128xf32, #tpu.memory_space<vmem>>, vector<1x128xf32>
      %c0_131 = arith.constant 0 : index
      %c0_132 = arith.constant 0 : index
      %265 = vector.load %arg13[%c0_131, %c0_132] : memref<8x256xf32, #tpu.memory_space<vmem>>, vector<1x128xf32>
      tpu.vector_store %arg13[%c0_131, %c0_132], %264 {strides = array<i32>} : memref<8x256xf32, #tpu.memory_space<vmem>>, vector<1x128xf32>,
      %c8_i32_133 = arith.constant 8 : i32
      %266 = arith.muli %5, %c8_i32_133 : i32
      %c1_i32_134 = arith.constant 1 : i32
      %267 = arith.addi %266, %c1_i32_134 : i32
      %268 = arith.index_cast %267 : i32 to index
      %269 = memref.load %arg3[%268] : memref<64xi32, #tpu.memory_space<smem>>
      %270 = arith.index_cast %269 : i32 to index
      %c0_135 = arith.constant 0 : index
      %271 = vector.load %arg5[%270, %c0_135] : memref<128x128xf32, #tpu.memory_space<vmem>>, vector<1x128xf32>
      %c1 = arith.constant 1 : index
      %c0_136 = arith.constant 0 : index
      %272 = vector.load %arg13[%c1, %c0_136] : memref<8x256xf32, #tpu.memory_space<vmem>>, vector<1x128xf32>
      tpu.vector_store %arg13[%c1, %c0_136], %271 {strides = array<i32>} : memref<8x256xf32, #tpu.memory_space<vmem>>, vector<1x128xf32>,
      %c8_i32_137 = arith.constant 8 : i32
      %273 = arith.muli %5, %c8_i32_137 : i32
      %c2_i32_138 = arith.constant 2 : i32
      %274 = arith.addi %273, %c2_i32_138 : i32
      %275 = arith.index_cast %274 : i32 to index
      %276 = memref.load %arg3[%275] : memref<64xi32, #tpu.memory_space<smem>>
      %277 = arith.index_cast %276 : i32 to index
      %c0_139 = arith.constant 0 : index
      %278 = vector.load %arg5[%277, %c0_139] : memref<128x128xf32, #tpu.memory_space<vmem>>, vector<1x128xf32>
      %c2 = arith.constant 2 : index
      %c0_140 = arith.constant 0 : index
      %279 = vector.load %arg13[%c2, %c0_140] : memref<8x256xf32, #tpu.memory_space<vmem>>, vector<1x128xf32>
      tpu.vector_store %arg13[%c2, %c0_140], %278 {strides = array<i32>} : memref<8x256xf32, #tpu.memory_space<vmem>>, vector<1x128xf32>,
      %c8_i32_141 = arith.constant 8 : i32
      %280 = arith.muli %5, %c8_i32_141 : i32
      %c3_i32_142 = arith.constant 3 : i32
      %281 = arith.addi %280, %c3_i32_142 : i32
      %282 = arith.index_cast %281 : i32 to index
      %283 = memref.load %arg3[%282] : memref<64xi32, #tpu.memory_space<smem>>
      %284 = arith.index_cast %283 : i32 to index
      %c0_143 = arith.constant 0 : index
      %285 = vector.load %arg5[%284, %c0_143] : memref<128x128xf32, #tpu.memory_space<vmem>>, vector<1x128xf32>
      %c3 = arith.constant 3 : index
      %c0_144 = arith.constant 0 : index
      %286 = vector.load %arg13[%c3, %c0_144] : memref<8x256xf32, #tpu.memory_space<vmem>>, vector<1x128xf32>
      tpu.vector_store %arg13[%c3, %c0_144], %285 {strides = array<i32>} : memref<8x256xf32, #tpu.memory_space<vmem>>, vector<1x128xf32>,
      %c8_i32_145 = arith.constant 8 : i32
      %287 = arith.muli %5, %c8_i32_145 : i32
      %c4_i32_146 = arith.constant 4 : i32
      %288 = arith.addi %287, %c4_i32_146 : i32
      %289 = arith.index_cast %288 : i32 to index
      %290 = memref.load %arg3[%289] : memref<64xi32, #tpu.memory_space<smem>>
      %291 = arith.index_cast %290 : i32 to index
      %c0_147 = arith.constant 0 : index
      %292 = vector.load %arg5[%291, %c0_147] : memref<128x128xf32, #tpu.memory_space<vmem>>, vector<1x128xf32>
      %c4 = arith.constant 4 : index
      %c0_148 = arith.constant 0 : index
      %293 = vector.load %arg13[%c4, %c0_148] : memref<8x256xf32, #tpu.memory_space<vmem>>, vector<1x128xf32>
      tpu.vector_store %arg13[%c4, %c0_148], %292 {strides = array<i32>} : memref<8x256xf32, #tpu.memory_space<vmem>>, vector<1x128xf32>,
      %c8_i32_149 = arith.constant 8 : i32
      %294 = arith.muli %5, %c8_i32_149 : i32
      %c5_i32 = arith.constant 5 : i32
      %295 = arith.addi %294, %c5_i32 : i32
      %296 = arith.index_cast %295 : i32 to index
      %297 = memref.load %arg3[%296] : memref<64xi32, #tpu.memory_space<smem>>
      %298 = arith.index_cast %297 : i32 to index
      %c0_150 = arith.constant 0 : index
      %299 = vector.load %arg5[%298, %c0_150] : memref<128x128xf32, #tpu.memory_space<vmem>>, vector<1x128xf32>
      %c5 = arith.constant 5 : index
      %c0_151 = arith.constant 0 : index
      %300 = vector.load %arg13[%c5, %c0_151] : memref<8x256xf32, #tpu.memory_space<vmem>>, vector<1x128xf32>
      tpu.vector_store %arg13[%c5, %c0_151], %299 {strides = array<i32>} : memref<8x256xf32, #tpu.memory_space<vmem>>, vector<1x128xf32>,
      %c8_i32_152 = arith.constant 8 : i32
      %301 = arith.muli %5, %c8_i32_152 : i32
      %c6_i32 = arith.constant 6 : i32
      %302 = arith.addi %301, %c6_i32 : i32
      %303 = arith.index_cast %302 : i32 to index
      %304 = memref.load %arg3[%303] : memref<64xi32, #tpu.memory_space<smem>>
      %305 = arith.index_cast %304 : i32 to index
      %c0_153 = arith.constant 0 : index
      %306 = vector.load %arg5[%305, %c0_153] : memref<128x128xf32, #tpu.memory_space<vmem>>, vector<1x128xf32>
      %c6 = arith.constant 6 : index
      %c0_154 = arith.constant 0 : index
      %307 = vector.load %arg13[%c6, %c0_154] : memref<8x256xf32, #tpu.memory_space<vmem>>, vector<1x128xf32>
      tpu.vector_store %arg13[%c6, %c0_154], %306 {strides = array<i32>} : memref<8x256xf32, #tpu.memory_space<vmem>>, vector<1x128xf32>,
      %c8_i32_155 = arith.constant 8 : i32
      %308 = arith.muli %5, %c8_i32_155 : i32
      %c7_i32 = arith.constant 7 : i32
      %309 = arith.addi %308, %c7_i32 : i32
      %310 = arith.index_cast %309 : i32 to index
      %311 = memref.load %arg3[%310] : memref<64xi32, #tpu.memory_space<smem>>
      %312 = arith.index_cast %311 : i32 to index
      %c0_156 = arith.constant 0 : index
      %313 = vector.load %arg5[%312, %c0_156] : memref<128x128xf32, #tpu.memory_space<vmem>>, vector<1x128xf32>
      %c7 = arith.constant 7 : index
      %c0_157 = arith.constant 0 : index
      %314 = vector.load %arg13[%c7, %c0_157] : memref<8x256xf32, #tpu.memory_space<vmem>>, vector<1x128xf32>
      tpu.vector_store %arg13[%c7, %c0_157], %313 {strides = array<i32>} : memref<8x256xf32, #tpu.memory_space<vmem>>, vector<1x128xf32>,
    } else {
    }
    %c0_i32_27 = arith.constant 0 : i32
    %64 = arith.cmpi eq, %60, %c0_i32_27 : i32
    %65 = arith.extui %64 : i1 to i32
    %c0_i32_28 = arith.constant 0 : i32
    %66 = arith.cmpi ne, %65, %c0_i32_28 : i32
    scf.if %66 {
      %259 = vector.broadcast %46 : vector<8x1xf32> to vector<8x128xf32>
      %260 = arith.cmpf oge, %44, %259 : vector<8x128xf32>
      %c128_i32 = arith.constant 128 : i32
      %261 = vector.broadcast %c128_i32 : i32 to vector<8x128xi32>
      %262 = arith.select %260, %3, %261 : vector<8x128xi1>, vector<8x128xi32>
      %cst_129 = arith.constant dense<2147483647> : vector<8xi32>
      %263 = vector.multi_reduction <minsi>, %262, %cst_129 [1] : vector<8x128xi32> to vector<8xi32>
      %264 = vector.shape_cast %263 : vector<8xi32> to vector<8x1xi32>
      %265 = vector.broadcast %264 : vector<8x1xi32> to vector<8x128xi32>
      %266 = arith.cmpi eq, %3, %265 : vector<8x128xi32>
      %267 = arith.extui %266 : vector<8x128xi1> to vector<8x128xi32>
      %268 = arith.sitofp %267 : vector<8x128xi32> to vector<8x128xf32>
      %c0_130 = arith.constant 0 : index
      %c0_131 = arith.constant 0 : index
      %269 = vector.load %arg5[%c0_130, %c0_131] : memref<128x128xf32, #tpu.memory_space<vmem>>, vector<128x128xf32>
      %cst_132 = arith.constant dense<0.000000e+00> : vector<8x128xf32>
      %270 = tpu.matmul %268, %269, %cst_132 {dimension_numbers = #tpu.dot_dimension_numbers<[1], [0], [0], [1], [0, 0, 1, 1], [], []>} : vector<8x128xf32>, vector<128x128xf32>, vector<8x128xf32> -> vector<8x128xf32>
      %c0_133 = arith.constant 0 : index
      %c0_134 = arith.constant 0 : index
      %271 = vector.load %arg13[%c0_133, %c0_134] : memref<8x256xf32, #tpu.memory_space<vmem>>, vector<8x128xf32>
      tpu.vector_store %arg13[%c0_133, %c0_134], %270 {strides = array<i32>} : memref<8x256xf32, #tpu.memory_space<vmem>>, vector<8x128xf32>,
    } else {
    }
    %c1_i32_29 = arith.constant 1 : i32
    %c4_i32_30 = arith.constant 4 : i32
    %67 = arith.muli %arg0, %c4_i32_30 : i32
    %68 = arith.addi %67, %c1_i32_29 : i32
    %c0_31 = arith.constant 0 : index
    %c0_32 = arith.constant 0 : index
    %69 = vector.load %arg12[%c0_31, %c0_32] : memref<8x128xf32, #tpu.memory_space<vmem>>, vector<8x128xf32>
    %c0_33 = arith.constant 0 : index
    %c128_34 = arith.constant 128 : index
    %70 = vector.load %arg13[%c0_33, %c128_34] : memref<8x256xf32, #tpu.memory_space<vmem>>, vector<8x128xf32>
    tpu.vector_store %arg13[%c0_33, %c128_34], %69 {strides = array<i32>} : memref<8x256xf32, #tpu.memory_space<vmem>>, vector<8x128xf32>,
    %c0_35 = arith.constant 0 : index
    %c0_36 = arith.constant 0 : index
    %71 = vector.load %arg12[%c0_35, %c0_36] : memref<8x128xf32, #tpu.memory_space<vmem>>, vector<8x128xf32>
    %c0_37 = arith.constant 0 : index
    %c0_38 = arith.constant 0 : index
    %72 = vector.load %arg13[%c0_37, %c0_38] : memref<8x256xf32, #tpu.memory_space<vmem>>, vector<8x256xf32>
    %73 = arith.truncf %72 : vector<8x256xf32> to vector<8x256xbf16>
    %c0_39 = arith.constant 0 : index
    %c0_40 = arith.constant 0 : index
    %74 = vector.load %arg6[%c0_39, %c0_40] : memref<256x512xbf16, #tpu.memory_space<vmem>>, vector<256x512xbf16>
    %cst_41 = arith.constant dense<0.000000e+00> : vector<8x512xf32>
    %75 = tpu.matmul %73, %74, %cst_41 {dimension_numbers = #tpu.dot_dimension_numbers<[1], [0], [0], [1], [0, 0, 1, 1], [], []>} : vector<8x256xbf16>, vector<256x512xbf16>, vector<8x512xf32> -> vector<8x512xf32>
    %c0_42 = arith.constant 0 : index
    %c0_43 = arith.constant 0 : index
    %76 = vector.load %arg7[%c0_42, %c0_43] : memref<1x512xf32, #tpu.memory_space<vmem>>, vector<1x512xf32>
    %77 = vector.broadcast %76 : vector<1x512xf32> to vector<8x512xf32>
    %78 = arith.addf %75, %77 : vector<8x512xf32>
    %79 = vector.extract_strided_slice %78 {offsets = [0, 0], sizes = [8, 128], strides = [1, 1]} : vector<8x512xf32> to vector<8x128xf32>
    %80 = arith.negf %79 : vector<8x128xf32>
    %81 = math.exp %80 : vector<8x128xf32>
    %cst_44 = arith.constant 1.000000e+00 : f32
    %82 = vector.broadcast %cst_44 : f32 to vector<8x128xf32>
    %83 = arith.addf %82, %81 : vector<8x128xf32>
    %84 = arith.divf %82, %83 : vector<8x128xf32>
    %85 = vector.extract_strided_slice %78 {offsets = [0, 128], sizes = [8, 128], strides = [1, 1]} : vector<8x512xf32> to vector<8x128xf32>
    %86 = arith.negf %85 : vector<8x128xf32>
    %87 = math.exp %86 : vector<8x128xf32>
    %cst_45 = arith.constant 1.000000e+00 : f32
    %88 = vector.broadcast %cst_45 : f32 to vector<8x128xf32>
    %89 = arith.addf %88, %87 : vector<8x128xf32>
    %90 = arith.divf %88, %89 : vector<8x128xf32>
    %91 = vector.extract_strided_slice %78 {offsets = [0, 256], sizes = [8, 128], strides = [1, 1]} : vector<8x512xf32> to vector<8x128xf32>
    %92 = vector.extract_strided_slice %78 {offsets = [0, 384], sizes = [8, 128], strides = [1, 1]} : vector<8x512xf32> to vector<8x128xf32>
    %93 = arith.mulf %84, %92 : vector<8x128xf32>
    %94 = arith.addf %91, %93 : vector<8x128xf32>
    %95 = math.tanh %94 : vector<8x128xf32>
    %cst_46 = arith.constant 1.000000e+00 : f32
    %96 = vector.broadcast %cst_46 : f32 to vector<8x128xf32>
    %97 = arith.subf %96, %90 : vector<8x128xf32>
    %98 = arith.mulf %97, %95 : vector<8x128xf32>
    %99 = arith.mulf %90, %71 : vector<8x128xf32>
    %100 = arith.addf %98, %99 : vector<8x128xf32>
    %c0_47 = arith.constant 0 : index
    %c0_48 = arith.constant 0 : index
    %101 = vector.load %arg12[%c0_47, %c0_48] : memref<8x128xf32, #tpu.memory_space<vmem>>, vector<8x128xf32>
    tpu.vector_store %arg12[%c0_47, %c0_48], %100 {strides = array<i32>} : memref<8x128xf32, #tpu.memory_space<vmem>>, vector<8x128xf32>,
    %102 = arith.truncf %100 : vector<8x128xf32> to vector<8x128xbf16>
    %c0_49 = arith.constant 0 : index
    %c0_50 = arith.constant 0 : index
    %103 = vector.load %arg8[%c0_49, %c0_50] : memref<128x128xbf16, #tpu.memory_space<vmem>>, vector<128x128xbf16>
    %cst_51 = arith.constant dense<0.000000e+00> : vector<8x128xf32>
    %104 = tpu.matmul %102, %103, %cst_51 {dimension_numbers = #tpu.dot_dimension_numbers<[1], [0], [0], [1], [0, 0, 1, 1], [], []>} : vector<8x128xbf16>, vector<128x128xbf16>, vector<8x128xf32> -> vector<8x128xf32>
    %c0_52 = arith.constant 0 : index
    %c0_53 = arith.constant 0 : index
    %105 = vector.load %arg9[%c0_52, %c0_53] : memref<1x128xf32, #tpu.memory_space<vmem>>, vector<1x128xf32>
    %106 = vector.broadcast %105 : vector<1x128xf32> to vector<8x128xf32>
    %107 = arith.addf %104, %106 : vector<8x128xf32>
    %cst_54 = arith.constant dense<0xFF800000> : vector<8xf32>
    %108 = vector.multi_reduction <maximumf>, %107, %cst_54 [1] : vector<8x128xf32> to vector<8xf32>
    %109 = vector.shape_cast %108 : vector<8xf32> to vector<8x1xf32>
    %110 = vector.broadcast %109 : vector<8x1xf32> to vector<8x128xf32>
    %111 = arith.subf %107, %110 : vector<8x128xf32>
    %112 = math.exp %111 : vector<8x128xf32>
    %cst_55 = arith.constant dense<0.000000e+00> : vector<8xf32>
    %113 = vector.multi_reduction <add>, %112, %cst_55 [1] : vector<8x128xf32> to vector<8xf32>
    %114 = vector.shape_cast %113 : vector<8xf32> to vector<8x1xf32>
    %115 = math.log %114 : vector<8x1xf32>
    %116 = arith.addf %109, %115 : vector<8x1xf32>
    %117 = vector.broadcast %116 : vector<8x1xf32> to vector<8x128xf32>
    %118 = arith.subf %107, %117 : vector<8x128xf32>
    %119 = vector.shape_cast %118 : vector<8x128xf32> to vector<1x8x128xf32>
    %120 = arith.index_cast %c1_i32_29 : i32 to index
    %c0_56 = arith.constant 0 : index
    %c0_57 = arith.constant 0 : index
    %121 = vector.load %arg10[%120, %c0_56, %c0_57] : memref<4x8x128xf32, #tpu.memory_space<vmem>>, vector<1x8x128xf32>
    tpu.vector_store %arg10[%120, %c0_56, %c0_57], %119 {strides = array<i32>} : memref<4x8x128xf32, #tpu.memory_space<vmem>>, vector<1x8x128xf32>,
    %122 = arith.index_cast %68 : i32 to index
    %123 = memref.load %arg2[%122] : memref<8xi32, #tpu.memory_space<smem>>
    %c1_i32_58 = arith.constant 1 : i32
    %124 = arith.cmpi eq, %123, %c1_i32_58 : i32
    %125 = arith.extui %124 : i1 to i32
    %c0_i32_59 = arith.constant 0 : i32
    %126 = arith.cmpi ne, %125, %c0_i32_59 : i32
    scf.if %126 {
      %c8_i32 = arith.constant 8 : i32
      %259 = arith.muli %68, %c8_i32 : i32
      %c0_i32_129 = arith.constant 0 : i32
      %260 = arith.addi %259, %c0_i32_129 : i32
      %261 = arith.index_cast %260 : i32 to index
      %262 = memref.load %arg3[%261] : memref<64xi32, #tpu.memory_space<smem>>
      %263 = arith.index_cast %262 : i32 to index
      %c0_130 = arith.constant 0 : index
      %264 = vector.load %arg5[%263, %c0_130] : memref<128x128xf32, #tpu.memory_space<vmem>>, vector<1x128xf32>
      %c0_131 = arith.constant 0 : index
      %c0_132 = arith.constant 0 : index
      %265 = vector.load %arg13[%c0_131, %c0_132] : memref<8x256xf32, #tpu.memory_space<vmem>>, vector<1x128xf32>
      tpu.vector_store %arg13[%c0_131, %c0_132], %264 {strides = array<i32>} : memref<8x256xf32, #tpu.memory_space<vmem>>, vector<1x128xf32>,
      %c8_i32_133 = arith.constant 8 : i32
      %266 = arith.muli %68, %c8_i32_133 : i32
      %c1_i32_134 = arith.constant 1 : i32
      %267 = arith.addi %266, %c1_i32_134 : i32
      %268 = arith.index_cast %267 : i32 to index
      %269 = memref.load %arg3[%268] : memref<64xi32, #tpu.memory_space<smem>>
      %270 = arith.index_cast %269 : i32 to index
      %c0_135 = arith.constant 0 : index
      %271 = vector.load %arg5[%270, %c0_135] : memref<128x128xf32, #tpu.memory_space<vmem>>, vector<1x128xf32>
      %c1 = arith.constant 1 : index
      %c0_136 = arith.constant 0 : index
      %272 = vector.load %arg13[%c1, %c0_136] : memref<8x256xf32, #tpu.memory_space<vmem>>, vector<1x128xf32>
      tpu.vector_store %arg13[%c1, %c0_136], %271 {strides = array<i32>} : memref<8x256xf32, #tpu.memory_space<vmem>>, vector<1x128xf32>,
      %c8_i32_137 = arith.constant 8 : i32
      %273 = arith.muli %68, %c8_i32_137 : i32
      %c2_i32_138 = arith.constant 2 : i32
      %274 = arith.addi %273, %c2_i32_138 : i32
      %275 = arith.index_cast %274 : i32 to index
      %276 = memref.load %arg3[%275] : memref<64xi32, #tpu.memory_space<smem>>
      %277 = arith.index_cast %276 : i32 to index
      %c0_139 = arith.constant 0 : index
      %278 = vector.load %arg5[%277, %c0_139] : memref<128x128xf32, #tpu.memory_space<vmem>>, vector<1x128xf32>
      %c2 = arith.constant 2 : index
      %c0_140 = arith.constant 0 : index
      %279 = vector.load %arg13[%c2, %c0_140] : memref<8x256xf32, #tpu.memory_space<vmem>>, vector<1x128xf32>
      tpu.vector_store %arg13[%c2, %c0_140], %278 {strides = array<i32>} : memref<8x256xf32, #tpu.memory_space<vmem>>, vector<1x128xf32>,
      %c8_i32_141 = arith.constant 8 : i32
      %280 = arith.muli %68, %c8_i32_141 : i32
      %c3_i32_142 = arith.constant 3 : i32
      %281 = arith.addi %280, %c3_i32_142 : i32
      %282 = arith.index_cast %281 : i32 to index
      %283 = memref.load %arg3[%282] : memref<64xi32, #tpu.memory_space<smem>>
      %284 = arith.index_cast %283 : i32 to index
      %c0_143 = arith.constant 0 : index
      %285 = vector.load %arg5[%284, %c0_143] : memref<128x128xf32, #tpu.memory_space<vmem>>, vector<1x128xf32>
      %c3 = arith.constant 3 : index
      %c0_144 = arith.constant 0 : index
      %286 = vector.load %arg13[%c3, %c0_144] : memref<8x256xf32, #tpu.memory_space<vmem>>, vector<1x128xf32>
      tpu.vector_store %arg13[%c3, %c0_144], %285 {strides = array<i32>} : memref<8x256xf32, #tpu.memory_space<vmem>>, vector<1x128xf32>,
      %c8_i32_145 = arith.constant 8 : i32
      %287 = arith.muli %68, %c8_i32_145 : i32
      %c4_i32_146 = arith.constant 4 : i32
      %288 = arith.addi %287, %c4_i32_146 : i32
      %289 = arith.index_cast %288 : i32 to index
      %290 = memref.load %arg3[%289] : memref<64xi32, #tpu.memory_space<smem>>
      %291 = arith.index_cast %290 : i32 to index
      %c0_147 = arith.constant 0 : index
      %292 = vector.load %arg5[%291, %c0_147] : memref<128x128xf32, #tpu.memory_space<vmem>>, vector<1x128xf32>
      %c4 = arith.constant 4 : index
      %c0_148 = arith.constant 0 : index
      %293 = vector.load %arg13[%c4, %c0_148] : memref<8x256xf32, #tpu.memory_space<vmem>>, vector<1x128xf32>
      tpu.vector_store %arg13[%c4, %c0_148], %292 {strides = array<i32>} : memref<8x256xf32, #tpu.memory_space<vmem>>, vector<1x128xf32>,
      %c8_i32_149 = arith.constant 8 : i32
      %294 = arith.muli %68, %c8_i32_149 : i32
      %c5_i32 = arith.constant 5 : i32
      %295 = arith.addi %294, %c5_i32 : i32
      %296 = arith.index_cast %295 : i32 to index
      %297 = memref.load %arg3[%296] : memref<64xi32, #tpu.memory_space<smem>>
      %298 = arith.index_cast %297 : i32 to index
      %c0_150 = arith.constant 0 : index
      %299 = vector.load %arg5[%298, %c0_150] : memref<128x128xf32, #tpu.memory_space<vmem>>, vector<1x128xf32>
      %c5 = arith.constant 5 : index
      %c0_151 = arith.constant 0 : index
      %300 = vector.load %arg13[%c5, %c0_151] : memref<8x256xf32, #tpu.memory_space<vmem>>, vector<1x128xf32>
      tpu.vector_store %arg13[%c5, %c0_151], %299 {strides = array<i32>} : memref<8x256xf32, #tpu.memory_space<vmem>>, vector<1x128xf32>,
      %c8_i32_152 = arith.constant 8 : i32
      %301 = arith.muli %68, %c8_i32_152 : i32
      %c6_i32 = arith.constant 6 : i32
      %302 = arith.addi %301, %c6_i32 : i32
      %303 = arith.index_cast %302 : i32 to index
      %304 = memref.load %arg3[%303] : memref<64xi32, #tpu.memory_space<smem>>
      %305 = arith.index_cast %304 : i32 to index
      %c0_153 = arith.constant 0 : index
      %306 = vector.load %arg5[%305, %c0_153] : memref<128x128xf32, #tpu.memory_space<vmem>>, vector<1x128xf32>
      %c6 = arith.constant 6 : index
      %c0_154 = arith.constant 0 : index
      %307 = vector.load %arg13[%c6, %c0_154] : memref<8x256xf32, #tpu.memory_space<vmem>>, vector<1x128xf32>
      tpu.vector_store %arg13[%c6, %c0_154], %306 {strides = array<i32>} : memref<8x256xf32, #tpu.memory_space<vmem>>, vector<1x128xf32>,
      %c8_i32_155 = arith.constant 8 : i32
      %308 = arith.muli %68, %c8_i32_155 : i32
      %c7_i32 = arith.constant 7 : i32
      %309 = arith.addi %308, %c7_i32 : i32
      %310 = arith.index_cast %309 : i32 to index
      %311 = memref.load %arg3[%310] : memref<64xi32, #tpu.memory_space<smem>>
      %312 = arith.index_cast %311 : i32 to index
      %c0_156 = arith.constant 0 : index
      %313 = vector.load %arg5[%312, %c0_156] : memref<128x128xf32, #tpu.memory_space<vmem>>, vector<1x128xf32>
      %c7 = arith.constant 7 : index
      %c0_157 = arith.constant 0 : index
      %314 = vector.load %arg13[%c7, %c0_157] : memref<8x256xf32, #tpu.memory_space<vmem>>, vector<1x128xf32>
      tpu.vector_store %arg13[%c7, %c0_157], %313 {strides = array<i32>} : memref<8x256xf32, #tpu.memory_space<vmem>>, vector<1x128xf32>,
    } else {
    }
    %c0_i32_60 = arith.constant 0 : i32
    %127 = arith.cmpi eq, %123, %c0_i32_60 : i32
    %128 = arith.extui %127 : i1 to i32
    %c0_i32_61 = arith.constant 0 : i32
    %129 = arith.cmpi ne, %128, %c0_i32_61 : i32
    scf.if %129 {
      %259 = vector.broadcast %109 : vector<8x1xf32> to vector<8x128xf32>
      %260 = arith.cmpf oge, %107, %259 : vector<8x128xf32>
      %c128_i32 = arith.constant 128 : i32
      %261 = vector.broadcast %c128_i32 : i32 to vector<8x128xi32>
      %262 = arith.select %260, %3, %261 : vector<8x128xi1>, vector<8x128xi32>
      %cst_129 = arith.constant dense<2147483647> : vector<8xi32>
      %263 = vector.multi_reduction <minsi>, %262, %cst_129 [1] : vector<8x128xi32> to vector<8xi32>
      %264 = vector.shape_cast %263 : vector<8xi32> to vector<8x1xi32>
      %265 = vector.broadcast %264 : vector<8x1xi32> to vector<8x128xi32>
      %266 = arith.cmpi eq, %3, %265 : vector<8x128xi32>
      %267 = arith.extui %266 : vector<8x128xi1> to vector<8x128xi32>
      %268 = arith.sitofp %267 : vector<8x128xi32> to vector<8x128xf32>
      %c0_130 = arith.constant 0 : index
      %c0_131 = arith.constant 0 : index
      %269 = vector.load %arg5[%c0_130, %c0_131] : memref<128x128xf32, #tpu.memory_space<vmem>>, vector<128x128xf32>
      %cst_132 = arith.constant dense<0.000000e+00> : vector<8x128xf32>
      %270 = tpu.matmul %268, %269, %cst_132 {dimension_numbers = #tpu.dot_dimension_numbers<[1], [0], [0], [1], [0, 0, 1, 1], [], []>} : vector<8x128xf32>, vector<128x128xf32>, vector<8x128xf32> -> vector<8x128xf32>
      %c0_133 = arith.constant 0 : index
      %c0_134 = arith.constant 0 : index
      %271 = vector.load %arg13[%c0_133, %c0_134] : memref<8x256xf32, #tpu.memory_space<vmem>>, vector<8x128xf32>
      tpu.vector_store %arg13[%c0_133, %c0_134], %270 {strides = array<i32>} : memref<8x256xf32, #tpu.memory_space<vmem>>, vector<8x128xf32>,
    } else {
    }
    %c2_i32 = arith.constant 2 : i32
    %c4_i32_62 = arith.constant 4 : i32
    %130 = arith.muli %arg0, %c4_i32_62 : i32
    %131 = arith.addi %130, %c2_i32 : i32
    %c0_63 = arith.constant 0 : index
    %c0_64 = arith.constant 0 : index
    %132 = vector.load %arg12[%c0_63, %c0_64] : memref<8x128xf32, #tpu.memory_space<vmem>>, vector<8x128xf32>
    %c0_65 = arith.constant 0 : index
    %c128_66 = arith.constant 128 : index
    %133 = vector.load %arg13[%c0_65, %c128_66] : memref<8x256xf32, #tpu.memory_space<vmem>>, vector<8x128xf32>
    tpu.vector_store %arg13[%c0_65, %c128_66], %132 {strides = array<i32>} : memref<8x256xf32, #tpu.memory_space<vmem>>, vector<8x128xf32>,
    %c0_67 = arith.constant 0 : index
    %c0_68 = arith.constant 0 : index
    %134 = vector.load %arg12[%c0_67, %c0_68] : memref<8x128xf32, #tpu.memory_space<vmem>>, vector<8x128xf32>
    %c0_69 = arith.constant 0 : index
    %c0_70 = arith.constant 0 : index
    %135 = vector.load %arg13[%c0_69, %c0_70] : memref<8x256xf32, #tpu.memory_space<vmem>>, vector<8x256xf32>
    %136 = arith.truncf %135 : vector<8x256xf32> to vector<8x256xbf16>
    %c0_71 = arith.constant 0 : index
    %c0_72 = arith.constant 0 : index
    %137 = vector.load %arg6[%c0_71, %c0_72] : memref<256x512xbf16, #tpu.memory_space<vmem>>, vector<256x512xbf16>
    %cst_73 = arith.constant dense<0.000000e+00> : vector<8x512xf32>
    %138 = tpu.matmul %136, %137, %cst_73 {dimension_numbers = #tpu.dot_dimension_numbers<[1], [0], [0], [1], [0, 0, 1, 1], [], []>} : vector<8x256xbf16>, vector<256x512xbf16>, vector<8x512xf32> -> vector<8x512xf32>
    %c0_74 = arith.constant 0 : index
    %c0_75 = arith.constant 0 : index
    %139 = vector.load %arg7[%c0_74, %c0_75] : memref<1x512xf32, #tpu.memory_space<vmem>>, vector<1x512xf32>
    %140 = vector.broadcast %139 : vector<1x512xf32> to vector<8x512xf32>
    %141 = arith.addf %138, %140 : vector<8x512xf32>
    %142 = vector.extract_strided_slice %141 {offsets = [0, 0], sizes = [8, 128], strides = [1, 1]} : vector<8x512xf32> to vector<8x128xf32>
    %143 = arith.negf %142 : vector<8x128xf32>
    %144 = math.exp %143 : vector<8x128xf32>
    %cst_76 = arith.constant 1.000000e+00 : f32
    %145 = vector.broadcast %cst_76 : f32 to vector<8x128xf32>
    %146 = arith.addf %145, %144 : vector<8x128xf32>
    %147 = arith.divf %145, %146 : vector<8x128xf32>
    %148 = vector.extract_strided_slice %141 {offsets = [0, 128], sizes = [8, 128], strides = [1, 1]} : vector<8x512xf32> to vector<8x128xf32>
    %149 = arith.negf %148 : vector<8x128xf32>
    %150 = math.exp %149 : vector<8x128xf32>
    %cst_77 = arith.constant 1.000000e+00 : f32
    %151 = vector.broadcast %cst_77 : f32 to vector<8x128xf32>
    %152 = arith.addf %151, %150 : vector<8x128xf32>
    %153 = arith.divf %151, %152 : vector<8x128xf32>
    %154 = vector.extract_strided_slice %141 {offsets = [0, 256], sizes = [8, 128], strides = [1, 1]} : vector<8x512xf32> to vector<8x128xf32>
    %155 = vector.extract_strided_slice %141 {offsets = [0, 384], sizes = [8, 128], strides = [1, 1]} : vector<8x512xf32> to vector<8x128xf32>
    %156 = arith.mulf %147, %155 : vector<8x128xf32>
    %157 = arith.addf %154, %156 : vector<8x128xf32>
    %158 = math.tanh %157 : vector<8x128xf32>
    %cst_78 = arith.constant 1.000000e+00 : f32
    %159 = vector.broadcast %cst_78 : f32 to vector<8x128xf32>
    %160 = arith.subf %159, %153 : vector<8x128xf32>
    %161 = arith.mulf %160, %158 : vector<8x128xf32>
    %162 = arith.mulf %153, %134 : vector<8x128xf32>
    %163 = arith.addf %161, %162 : vector<8x128xf32>
    %c0_79 = arith.constant 0 : index
    %c0_80 = arith.constant 0 : index
    %164 = vector.load %arg12[%c0_79, %c0_80] : memref<8x128xf32, #tpu.memory_space<vmem>>, vector<8x128xf32>
    tpu.vector_store %arg12[%c0_79, %c0_80], %163 {strides = array<i32>} : memref<8x128xf32, #tpu.memory_space<vmem>>, vector<8x128xf32>,
    %165 = arith.truncf %163 : vector<8x128xf32> to vector<8x128xbf16>
    %c0_81 = arith.constant 0 : index
    %c0_82 = arith.constant 0 : index
    %166 = vector.load %arg8[%c0_81, %c0_82] : memref<128x128xbf16, #tpu.memory_space<vmem>>, vector<128x128xbf16>
    %cst_83 = arith.constant dense<0.000000e+00> : vector<8x128xf32>
    %167 = tpu.matmul %165, %166, %cst_83 {dimension_numbers = #tpu.dot_dimension_numbers<[1], [0], [0], [1], [0, 0, 1, 1], [], []>} : vector<8x128xbf16>, vector<128x128xbf16>, vector<8x128xf32> -> vector<8x128xf32>
    %c0_84 = arith.constant 0 : index
    %c0_85 = arith.constant 0 : index
    %168 = vector.load %arg9[%c0_84, %c0_85] : memref<1x128xf32, #tpu.memory_space<vmem>>, vector<1x128xf32>
    %169 = vector.broadcast %168 : vector<1x128xf32> to vector<8x128xf32>
    %170 = arith.addf %167, %169 : vector<8x128xf32>
    %cst_86 = arith.constant dense<0xFF800000> : vector<8xf32>
    %171 = vector.multi_reduction <maximumf>, %170, %cst_86 [1] : vector<8x128xf32> to vector<8xf32>
    %172 = vector.shape_cast %171 : vector<8xf32> to vector<8x1xf32>
    %173 = vector.broadcast %172 : vector<8x1xf32> to vector<8x128xf32>
    %174 = arith.subf %170, %173 : vector<8x128xf32>
    %175 = math.exp %174 : vector<8x128xf32>
    %cst_87 = arith.constant dense<0.000000e+00> : vector<8xf32>
    %176 = vector.multi_reduction <add>, %175, %cst_87 [1] : vector<8x128xf32> to vector<8xf32>
    %177 = vector.shape_cast %176 : vector<8xf32> to vector<8x1xf32>
    %178 = math.log %177 : vector<8x1xf32>
    %179 = arith.addf %172, %178 : vector<8x1xf32>
    %180 = vector.broadcast %179 : vector<8x1xf32> to vector<8x128xf32>
    %181 = arith.subf %170, %180 : vector<8x128xf32>
    %182 = vector.shape_cast %181 : vector<8x128xf32> to vector<1x8x128xf32>
    %183 = arith.index_cast %c2_i32 : i32 to index
    %c0_88 = arith.constant 0 : index
    %c0_89 = arith.constant 0 : index
    %184 = vector.load %arg10[%183, %c0_88, %c0_89] : memref<4x8x128xf32, #tpu.memory_space<vmem>>, vector<1x8x128xf32>
    tpu.vector_store %arg10[%183, %c0_88, %c0_89], %182 {strides = array<i32>} : memref<4x8x128xf32, #tpu.memory_space<vmem>>, vector<1x8x128xf32>,
    %185 = arith.index_cast %131 : i32 to index
    %186 = memref.load %arg2[%185] : memref<8xi32, #tpu.memory_space<smem>>
    %c1_i32_90 = arith.constant 1 : i32
    %187 = arith.cmpi eq, %186, %c1_i32_90 : i32
    %188 = arith.extui %187 : i1 to i32
    %c0_i32_91 = arith.constant 0 : i32
    %189 = arith.cmpi ne, %188, %c0_i32_91 : i32
    scf.if %189 {
      %c8_i32 = arith.constant 8 : i32
      %259 = arith.muli %131, %c8_i32 : i32
      %c0_i32_129 = arith.constant 0 : i32
      %260 = arith.addi %259, %c0_i32_129 : i32
      %261 = arith.index_cast %260 : i32 to index
      %262 = memref.load %arg3[%261] : memref<64xi32, #tpu.memory_space<smem>>
      %263 = arith.index_cast %262 : i32 to index
      %c0_130 = arith.constant 0 : index
      %264 = vector.load %arg5[%263, %c0_130] : memref<128x128xf32, #tpu.memory_space<vmem>>, vector<1x128xf32>
      %c0_131 = arith.constant 0 : index
      %c0_132 = arith.constant 0 : index
      %265 = vector.load %arg13[%c0_131, %c0_132] : memref<8x256xf32, #tpu.memory_space<vmem>>, vector<1x128xf32>
      tpu.vector_store %arg13[%c0_131, %c0_132], %264 {strides = array<i32>} : memref<8x256xf32, #tpu.memory_space<vmem>>, vector<1x128xf32>,
      %c8_i32_133 = arith.constant 8 : i32
      %266 = arith.muli %131, %c8_i32_133 : i32
      %c1_i32_134 = arith.constant 1 : i32
      %267 = arith.addi %266, %c1_i32_134 : i32
      %268 = arith.index_cast %267 : i32 to index
      %269 = memref.load %arg3[%268] : memref<64xi32, #tpu.memory_space<smem>>
      %270 = arith.index_cast %269 : i32 to index
      %c0_135 = arith.constant 0 : index
      %271 = vector.load %arg5[%270, %c0_135] : memref<128x128xf32, #tpu.memory_space<vmem>>, vector<1x128xf32>
      %c1 = arith.constant 1 : index
      %c0_136 = arith.constant 0 : index
      %272 = vector.load %arg13[%c1, %c0_136] : memref<8x256xf32, #tpu.memory_space<vmem>>, vector<1x128xf32>
      tpu.vector_store %arg13[%c1, %c0_136], %271 {strides = array<i32>} : memref<8x256xf32, #tpu.memory_space<vmem>>, vector<1x128xf32>,
      %c8_i32_137 = arith.constant 8 : i32
      %273 = arith.muli %131, %c8_i32_137 : i32
      %c2_i32_138 = arith.constant 2 : i32
      %274 = arith.addi %273, %c2_i32_138 : i32
      %275 = arith.index_cast %274 : i32 to index
      %276 = memref.load %arg3[%275] : memref<64xi32, #tpu.memory_space<smem>>
      %277 = arith.index_cast %276 : i32 to index
      %c0_139 = arith.constant 0 : index
      %278 = vector.load %arg5[%277, %c0_139] : memref<128x128xf32, #tpu.memory_space<vmem>>, vector<1x128xf32>
      %c2 = arith.constant 2 : index
      %c0_140 = arith.constant 0 : index
      %279 = vector.load %arg13[%c2, %c0_140] : memref<8x256xf32, #tpu.memory_space<vmem>>, vector<1x128xf32>
      tpu.vector_store %arg13[%c2, %c0_140], %278 {strides = array<i32>} : memref<8x256xf32, #tpu.memory_space<vmem>>, vector<1x128xf32>,
      %c8_i32_141 = arith.constant 8 : i32
      %280 = arith.muli %131, %c8_i32_141 : i32
      %c3_i32_142 = arith.constant 3 : i32
      %281 = arith.addi %280, %c3_i32_142 : i32
      %282 = arith.index_cast %281 : i32 to index
      %283 = memref.load %arg3[%282] : memref<64xi32, #tpu.memory_space<smem>>
      %284 = arith.index_cast %283 : i32 to index
      %c0_143 = arith.constant 0 : index
      %285 = vector.load %arg5[%284, %c0_143] : memref<128x128xf32, #tpu.memory_space<vmem>>, vector<1x128xf32>
      %c3 = arith.constant 3 : index
      %c0_144 = arith.constant 0 : index
      %286 = vector.load %arg13[%c3, %c0_144] : memref<8x256xf32, #tpu.memory_space<vmem>>, vector<1x128xf32>
      tpu.vector_store %arg13[%c3, %c0_144], %285 {strides = array<i32>} : memref<8x256xf32, #tpu.memory_space<vmem>>, vector<1x128xf32>,
      %c8_i32_145 = arith.constant 8 : i32
      %287 = arith.muli %131, %c8_i32_145 : i32
      %c4_i32_146 = arith.constant 4 : i32
      %288 = arith.addi %287, %c4_i32_146 : i32
      %289 = arith.index_cast %288 : i32 to index
      %290 = memref.load %arg3[%289] : memref<64xi32, #tpu.memory_space<smem>>
      %291 = arith.index_cast %290 : i32 to index
      %c0_147 = arith.constant 0 : index
      %292 = vector.load %arg5[%291, %c0_147] : memref<128x128xf32, #tpu.memory_space<vmem>>, vector<1x128xf32>
      %c4 = arith.constant 4 : index
      %c0_148 = arith.constant 0 : index
      %293 = vector.load %arg13[%c4, %c0_148] : memref<8x256xf32, #tpu.memory_space<vmem>>, vector<1x128xf32>
      tpu.vector_store %arg13[%c4, %c0_148], %292 {strides = array<i32>} : memref<8x256xf32, #tpu.memory_space<vmem>>, vector<1x128xf32>,
      %c8_i32_149 = arith.constant 8 : i32
      %294 = arith.muli %131, %c8_i32_149 : i32
      %c5_i32 = arith.constant 5 : i32
      %295 = arith.addi %294, %c5_i32 : i32
      %296 = arith.index_cast %295 : i32 to index
      %297 = memref.load %arg3[%296] : memref<64xi32, #tpu.memory_space<smem>>
      %298 = arith.index_cast %297 : i32 to index
      %c0_150 = arith.constant 0 : index
      %299 = vector.load %arg5[%298, %c0_150] : memref<128x128xf32, #tpu.memory_space<vmem>>, vector<1x128xf32>
      %c5 = arith.constant 5 : index
      %c0_151 = arith.constant 0 : index
      %300 = vector.load %arg13[%c5, %c0_151] : memref<8x256xf32, #tpu.memory_space<vmem>>, vector<1x128xf32>
      tpu.vector_store %arg13[%c5, %c0_151], %299 {strides = array<i32>} : memref<8x256xf32, #tpu.memory_space<vmem>>, vector<1x128xf32>,
      %c8_i32_152 = arith.constant 8 : i32
      %301 = arith.muli %131, %c8_i32_152 : i32
      %c6_i32 = arith.constant 6 : i32
      %302 = arith.addi %301, %c6_i32 : i32
      %303 = arith.index_cast %302 : i32 to index
      %304 = memref.load %arg3[%303] : memref<64xi32, #tpu.memory_space<smem>>
      %305 = arith.index_cast %304 : i32 to index
      %c0_153 = arith.constant 0 : index
      %306 = vector.load %arg5[%305, %c0_153] : memref<128x128xf32, #tpu.memory_space<vmem>>, vector<1x128xf32>
      %c6 = arith.constant 6 : index
      %c0_154 = arith.constant 0 : index
      %307 = vector.load %arg13[%c6, %c0_154] : memref<8x256xf32, #tpu.memory_space<vmem>>, vector<1x128xf32>
      tpu.vector_store %arg13[%c6, %c0_154], %306 {strides = array<i32>} : memref<8x256xf32, #tpu.memory_space<vmem>>, vector<1x128xf32>,
      %c8_i32_155 = arith.constant 8 : i32
      %308 = arith.muli %131, %c8_i32_155 : i32
      %c7_i32 = arith.constant 7 : i32
      %309 = arith.addi %308, %c7_i32 : i32
      %310 = arith.index_cast %309 : i32 to index
      %311 = memref.load %arg3[%310] : memref<64xi32, #tpu.memory_space<smem>>
      %312 = arith.index_cast %311 : i32 to index
      %c0_156 = arith.constant 0 : index
      %313 = vector.load %arg5[%312, %c0_156] : memref<128x128xf32, #tpu.memory_space<vmem>>, vector<1x128xf32>
      %c7 = arith.constant 7 : index
      %c0_157 = arith.constant 0 : index
      %314 = vector.load %arg13[%c7, %c0_157] : memref<8x256xf32, #tpu.memory_space<vmem>>, vector<1x128xf32>
      tpu.vector_store %arg13[%c7, %c0_157], %313 {strides = array<i32>} : memref<8x256xf32, #tpu.memory_space<vmem>>, vector<1x128xf32>,
    } else {
    }
    %c0_i32_92 = arith.constant 0 : i32
    %190 = arith.cmpi eq, %186, %c0_i32_92 : i32
    %191 = arith.extui %190 : i1 to i32
    %c0_i32_93 = arith.constant 0 : i32
    %192 = arith.cmpi ne, %191, %c0_i32_93 : i32
    scf.if %192 {
      %259 = vector.broadcast %172 : vector<8x1xf32> to vector<8x128xf32>
      %260 = arith.cmpf oge, %170, %259 : vector<8x128xf32>
      %c128_i32 = arith.constant 128 : i32
      %261 = vector.broadcast %c128_i32 : i32 to vector<8x128xi32>
      %262 = arith.select %260, %3, %261 : vector<8x128xi1>, vector<8x128xi32>
      %cst_129 = arith.constant dense<2147483647> : vector<8xi32>
      %263 = vector.multi_reduction <minsi>, %262, %cst_129 [1] : vector<8x128xi32> to vector<8xi32>
      %264 = vector.shape_cast %263 : vector<8xi32> to vector<8x1xi32>
      %265 = vector.broadcast %264 : vector<8x1xi32> to vector<8x128xi32>
      %266 = arith.cmpi eq, %3, %265 : vector<8x128xi32>
      %267 = arith.extui %266 : vector<8x128xi1> to vector<8x128xi32>
      %268 = arith.sitofp %267 : vector<8x128xi32> to vector<8x128xf32>
      %c0_130 = arith.constant 0 : index
      %c0_131 = arith.constant 0 : index
      %269 = vector.load %arg5[%c0_130, %c0_131] : memref<128x128xf32, #tpu.memory_space<vmem>>, vector<128x128xf32>
      %cst_132 = arith.constant dense<0.000000e+00> : vector<8x128xf32>
      %270 = tpu.matmul %268, %269, %cst_132 {dimension_numbers = #tpu.dot_dimension_numbers<[1], [0], [0], [1], [0, 0, 1, 1], [], []>} : vector<8x128xf32>, vector<128x128xf32>, vector<8x128xf32> -> vector<8x128xf32>
      %c0_133 = arith.constant 0 : index
      %c0_134 = arith.constant 0 : index
      %271 = vector.load %arg13[%c0_133, %c0_134] : memref<8x256xf32, #tpu.memory_space<vmem>>, vector<8x128xf32>
      tpu.vector_store %arg13[%c0_133, %c0_134], %270 {strides = array<i32>} : memref<8x256xf32, #tpu.memory_space<vmem>>, vector<8x128xf32>,
    } else {
    }
    %c3_i32 = arith.constant 3 : i32
    %c4_i32_94 = arith.constant 4 : i32
    %193 = arith.muli %arg0, %c4_i32_94 : i32
    %194 = arith.addi %193, %c3_i32 : i32
    %c0_95 = arith.constant 0 : index
    %c0_96 = arith.constant 0 : index
    %195 = vector.load %arg12[%c0_95, %c0_96] : memref<8x128xf32, #tpu.memory_space<vmem>>, vector<8x128xf32>
    %c0_97 = arith.constant 0 : index
    %c128_98 = arith.constant 128 : index
    %196 = vector.load %arg13[%c0_97, %c128_98] : memref<8x256xf32, #tpu.memory_space<vmem>>, vector<8x128xf32>
    tpu.vector_store %arg13[%c0_97, %c128_98], %195 {strides = array<i32>} : memref<8x256xf32, #tpu.memory_space<vmem>>, vector<8x128xf32>,
    %c0_99 = arith.constant 0 : index
    %c0_100 = arith.constant 0 : index
    %197 = vector.load %arg12[%c0_99, %c0_100] : memref<8x128xf32, #tpu.memory_space<vmem>>, vector<8x128xf32>
    %c0_101 = arith.constant 0 : index
    %c0_102 = arith.constant 0 : index
    %198 = vector.load %arg13[%c0_101, %c0_102] : memref<8x256xf32, #tpu.memory_space<vmem>>, vector<8x256xf32>
    %199 = arith.truncf %198 : vector<8x256xf32> to vector<8x256xbf16>
    %c0_103 = arith.constant 0 : index
    %c0_104 = arith.constant 0 : index
    %200 = vector.load %arg6[%c0_103, %c0_104] : memref<256x512xbf16, #tpu.memory_space<vmem>>, vector<256x512xbf16>
    %cst_105 = arith.constant dense<0.000000e+00> : vector<8x512xf32>
    %201 = tpu.matmul %199, %200, %cst_105 {dimension_numbers = #tpu.dot_dimension_numbers<[1], [0], [0], [1], [0, 0, 1, 1], [], []>} : vector<8x256xbf16>, vector<256x512xbf16>, vector<8x512xf32> -> vector<8x512xf32>
    %c0_106 = arith.constant 0 : index
    %c0_107 = arith.constant 0 : index
    %202 = vector.load %arg7[%c0_106, %c0_107] : memref<1x512xf32, #tpu.memory_space<vmem>>, vector<1x512xf32>
    %203 = vector.broadcast %202 : vector<1x512xf32> to vector<8x512xf32>
    %204 = arith.addf %201, %203 : vector<8x512xf32>
    %205 = vector.extract_strided_slice %204 {offsets = [0, 0], sizes = [8, 128], strides = [1, 1]} : vector<8x512xf32> to vector<8x128xf32>
    %206 = arith.negf %205 : vector<8x128xf32>
    %207 = math.exp %206 : vector<8x128xf32>
    %cst_108 = arith.constant 1.000000e+00 : f32
    %208 = vector.broadcast %cst_108 : f32 to vector<8x128xf32>
    %209 = arith.addf %208, %207 : vector<8x128xf32>
    %210 = arith.divf %208, %209 : vector<8x128xf32>
    %211 = vector.extract_strided_slice %204 {offsets = [0, 128], sizes = [8, 128], strides = [1, 1]} : vector<8x512xf32> to vector<8x128xf32>
    %212 = arith.negf %211 : vector<8x128xf32>
    %213 = math.exp %212 : vector<8x128xf32>
    %cst_109 = arith.constant 1.000000e+00 : f32
    %214 = vector.broadcast %cst_109 : f32 to vector<8x128xf32>
    %215 = arith.addf %214, %213 : vector<8x128xf32>
    %216 = arith.divf %214, %215 : vector<8x128xf32>
    %217 = vector.extract_strided_slice %204 {offsets = [0, 256], sizes = [8, 128], strides = [1, 1]} : vector<8x512xf32> to vector<8x128xf32>
    %218 = vector.extract_strided_slice %204 {offsets = [0, 384], sizes = [8, 128], strides = [1, 1]} : vector<8x512xf32> to vector<8x128xf32>
    %219 = arith.mulf %210, %218 : vector<8x128xf32>
    %220 = arith.addf %217, %219 : vector<8x128xf32>
    %221 = math.tanh %220 : vector<8x128xf32>
    %cst_110 = arith.constant 1.000000e+00 : f32
    %222 = vector.broadcast %cst_110 : f32 to vector<8x128xf32>
    %223 = arith.subf %222, %216 : vector<8x128xf32>
    %224 = arith.mulf %223, %221 : vector<8x128xf32>
    %225 = arith.mulf %216, %197 : vector<8x128xf32>
    %226 = arith.addf %224, %225 : vector<8x128xf32>
    %c0_111 = arith.constant 0 : index
    %c0_112 = arith.constant 0 : index
    %227 = vector.load %arg12[%c0_111, %c0_112] : memref<8x128xf32, #tpu.memory_space<vmem>>, vector<8x128xf32>
    tpu.vector_store %arg12[%c0_111, %c0_112], %226 {strides = array<i32>} : memref<8x128xf32, #tpu.memory_space<vmem>>, vector<8x128xf32>,
    %228 = arith.truncf %226 : vector<8x128xf32> to vector<8x128xbf16>
    %c0_113 = arith.constant 0 : index
    %c0_114 = arith.constant 0 : index
    %229 = vector.load %arg8[%c0_113, %c0_114] : memref<128x128xbf16, #tpu.memory_space<vmem>>, vector<128x128xbf16>
    %cst_115 = arith.constant dense<0.000000e+00> : vector<8x128xf32>
    %230 = tpu.matmul %228, %229, %cst_115 {dimension_numbers = #tpu.dot_dimension_numbers<[1], [0], [0], [1], [0, 0, 1, 1], [], []>} : vector<8x128xbf16>, vector<128x128xbf16>, vector<8x128xf32> -> vector<8x128xf32>
    %c0_116 = arith.constant 0 : index
    %c0_117 = arith.constant 0 : index
    %231 = vector.load %arg9[%c0_116, %c0_117] : memref<1x128xf32, #tpu.memory_space<vmem>>, vector<1x128xf32>
    %232 = vector.broadcast %231 : vector<1x128xf32> to vector<8x128xf32>
    %233 = arith.addf %230, %232 : vector<8x128xf32>
    %cst_118 = arith.constant dense<0xFF800000> : vector<8xf32>
    %234 = vector.multi_reduction <maximumf>, %233, %cst_118 [1] : vector<8x128xf32> to vector<8xf32>
    %235 = vector.shape_cast %234 : vector<8xf32> to vector<8x1xf32>
    %236 = vector.broadcast %235 : vector<8x1xf32> to vector<8x128xf32>
    %237 = arith.subf %233, %236 : vector<8x128xf32>
    %238 = math.exp %237 : vector<8x128xf32>
    %cst_119 = arith.constant dense<0.000000e+00> : vector<8xf32>
    %239 = vector.multi_reduction <add>, %238, %cst_119 [1] : vector<8x128xf32> to vector<8xf32>
    %240 = vector.shape_cast %239 : vector<8xf32> to vector<8x1xf32>
    %241 = math.log %240 : vector<8x1xf32>
    %242 = arith.addf %235, %241 : vector<8x1xf32>
    %243 = vector.broadcast %242 : vector<8x1xf32> to vector<8x128xf32>
    %244 = arith.subf %233, %243 : vector<8x128xf32>
    %245 = vector.shape_cast %244 : vector<8x128xf32> to vector<1x8x128xf32>
    %246 = arith.index_cast %c3_i32 : i32 to index
    %c0_120 = arith.constant 0 : index
    %c0_121 = arith.constant 0 : index
    %247 = vector.load %arg10[%246, %c0_120, %c0_121] : memref<4x8x128xf32, #tpu.memory_space<vmem>>, vector<1x8x128xf32>
    tpu.vector_store %arg10[%246, %c0_120, %c0_121], %245 {strides = array<i32>} : memref<4x8x128xf32, #tpu.memory_space<vmem>>, vector<1x8x128xf32>,
    %248 = arith.index_cast %194 : i32 to index
    %249 = memref.load %arg2[%248] : memref<8xi32, #tpu.memory_space<smem>>
    %c1_i32_122 = arith.constant 1 : i32
    %250 = arith.cmpi eq, %249, %c1_i32_122 : i32
    %251 = arith.extui %250 : i1 to i32
    %c0_i32_123 = arith.constant 0 : i32
    %252 = arith.cmpi ne, %251, %c0_i32_123 : i32
    scf.if %252 {
      %c8_i32 = arith.constant 8 : i32
      %259 = arith.muli %194, %c8_i32 : i32
      %c0_i32_129 = arith.constant 0 : i32
      %260 = arith.addi %259, %c0_i32_129 : i32
      %261 = arith.index_cast %260 : i32 to index
      %262 = memref.load %arg3[%261] : memref<64xi32, #tpu.memory_space<smem>>
      %263 = arith.index_cast %262 : i32 to index
      %c0_130 = arith.constant 0 : index
      %264 = vector.load %arg5[%263, %c0_130] : memref<128x128xf32, #tpu.memory_space<vmem>>, vector<1x128xf32>
      %c0_131 = arith.constant 0 : index
      %c0_132 = arith.constant 0 : index
      %265 = vector.load %arg13[%c0_131, %c0_132] : memref<8x256xf32, #tpu.memory_space<vmem>>, vector<1x128xf32>
      tpu.vector_store %arg13[%c0_131, %c0_132], %264 {strides = array<i32>} : memref<8x256xf32, #tpu.memory_space<vmem>>, vector<1x128xf32>,
      %c8_i32_133 = arith.constant 8 : i32
      %266 = arith.muli %194, %c8_i32_133 : i32
      %c1_i32_134 = arith.constant 1 : i32
      %267 = arith.addi %266, %c1_i32_134 : i32
      %268 = arith.index_cast %267 : i32 to index
      %269 = memref.load %arg3[%268] : memref<64xi32, #tpu.memory_space<smem>>
      %270 = arith.index_cast %269 : i32 to index
      %c0_135 = arith.constant 0 : index
      %271 = vector.load %arg5[%270, %c0_135] : memref<128x128xf32, #tpu.memory_space<vmem>>, vector<1x128xf32>
      %c1 = arith.constant 1 : index
      %c0_136 = arith.constant 0 : index
      %272 = vector.load %arg13[%c1, %c0_136] : memref<8x256xf32, #tpu.memory_space<vmem>>, vector<1x128xf32>
      tpu.vector_store %arg13[%c1, %c0_136], %271 {strides = array<i32>} : memref<8x256xf32, #tpu.memory_space<vmem>>, vector<1x128xf32>,
      %c8_i32_137 = arith.constant 8 : i32
      %273 = arith.muli %194, %c8_i32_137 : i32
      %c2_i32_138 = arith.constant 2 : i32
      %274 = arith.addi %273, %c2_i32_138 : i32
      %275 = arith.index_cast %274 : i32 to index
      %276 = memref.load %arg3[%275] : memref<64xi32, #tpu.memory_space<smem>>
      %277 = arith.index_cast %276 : i32 to index
      %c0_139 = arith.constant 0 : index
      %278 = vector.load %arg5[%277, %c0_139] : memref<128x128xf32, #tpu.memory_space<vmem>>, vector<1x128xf32>
      %c2 = arith.constant 2 : index
      %c0_140 = arith.constant 0 : index
      %279 = vector.load %arg13[%c2, %c0_140] : memref<8x256xf32, #tpu.memory_space<vmem>>, vector<1x128xf32>
      tpu.vector_store %arg13[%c2, %c0_140], %278 {strides = array<i32>} : memref<8x256xf32, #tpu.memory_space<vmem>>, vector<1x128xf32>,
      %c8_i32_141 = arith.constant 8 : i32
      %280 = arith.muli %194, %c8_i32_141 : i32
      %c3_i32_142 = arith.constant 3 : i32
      %281 = arith.addi %280, %c3_i32_142 : i32
      %282 = arith.index_cast %281 : i32 to index
      %283 = memref.load %arg3[%282] : memref<64xi32, #tpu.memory_space<smem>>
      %284 = arith.index_cast %283 : i32 to index
      %c0_143 = arith.constant 0 : index
      %285 = vector.load %arg5[%284, %c0_143] : memref<128x128xf32, #tpu.memory_space<vmem>>, vector<1x128xf32>
      %c3 = arith.constant 3 : index
      %c0_144 = arith.constant 0 : index
      %286 = vector.load %arg13[%c3, %c0_144] : memref<8x256xf32, #tpu.memory_space<vmem>>, vector<1x128xf32>
      tpu.vector_store %arg13[%c3, %c0_144], %285 {strides = array<i32>} : memref<8x256xf32, #tpu.memory_space<vmem>>, vector<1x128xf32>,
      %c8_i32_145 = arith.constant 8 : i32
      %287 = arith.muli %194, %c8_i32_145 : i32
      %c4_i32_146 = arith.constant 4 : i32
      %288 = arith.addi %287, %c4_i32_146 : i32
      %289 = arith.index_cast %288 : i32 to index
      %290 = memref.load %arg3[%289] : memref<64xi32, #tpu.memory_space<smem>>
      %291 = arith.index_cast %290 : i32 to index
      %c0_147 = arith.constant 0 : index
      %292 = vector.load %arg5[%291, %c0_147] : memref<128x128xf32, #tpu.memory_space<vmem>>, vector<1x128xf32>
      %c4 = arith.constant 4 : index
      %c0_148 = arith.constant 0 : index
      %293 = vector.load %arg13[%c4, %c0_148] : memref<8x256xf32, #tpu.memory_space<vmem>>, vector<1x128xf32>
      tpu.vector_store %arg13[%c4, %c0_148], %292 {strides = array<i32>} : memref<8x256xf32, #tpu.memory_space<vmem>>, vector<1x128xf32>,
      %c8_i32_149 = arith.constant 8 : i32
      %294 = arith.muli %194, %c8_i32_149 : i32
      %c5_i32 = arith.constant 5 : i32
      %295 = arith.addi %294, %c5_i32 : i32
      %296 = arith.index_cast %295 : i32 to index
      %297 = memref.load %arg3[%296] : memref<64xi32, #tpu.memory_space<smem>>
      %298 = arith.index_cast %297 : i32 to index
      %c0_150 = arith.constant 0 : index
      %299 = vector.load %arg5[%298, %c0_150] : memref<128x128xf32, #tpu.memory_space<vmem>>, vector<1x128xf32>
      %c5 = arith.constant 5 : index
      %c0_151 = arith.constant 0 : index
      %300 = vector.load %arg13[%c5, %c0_151] : memref<8x256xf32, #tpu.memory_space<vmem>>, vector<1x128xf32>
      tpu.vector_store %arg13[%c5, %c0_151], %299 {strides = array<i32>} : memref<8x256xf32, #tpu.memory_space<vmem>>, vector<1x128xf32>,
      %c8_i32_152 = arith.constant 8 : i32
      %301 = arith.muli %194, %c8_i32_152 : i32
      %c6_i32 = arith.constant 6 : i32
      %302 = arith.addi %301, %c6_i32 : i32
      %303 = arith.index_cast %302 : i32 to index
      %304 = memref.load %arg3[%303] : memref<64xi32, #tpu.memory_space<smem>>
      %305 = arith.index_cast %304 : i32 to index
      %c0_153 = arith.constant 0 : index
      %306 = vector.load %arg5[%305, %c0_153] : memref<128x128xf32, #tpu.memory_space<vmem>>, vector<1x128xf32>
      %c6 = arith.constant 6 : index
      %c0_154 = arith.constant 0 : index
      %307 = vector.load %arg13[%c6, %c0_154] : memref<8x256xf32, #tpu.memory_space<vmem>>, vector<1x128xf32>
      tpu.vector_store %arg13[%c6, %c0_154], %306 {strides = array<i32>} : memref<8x256xf32, #tpu.memory_space<vmem>>, vector<1x128xf32>,
      %c8_i32_155 = arith.constant 8 : i32
      %308 = arith.muli %194, %c8_i32_155 : i32
      %c7_i32 = arith.constant 7 : i32
      %309 = arith.addi %308, %c7_i32 : i32
      %310 = arith.index_cast %309 : i32 to index
      %311 = memref.load %arg3[%310] : memref<64xi32, #tpu.memory_space<smem>>
      %312 = arith.index_cast %311 : i32 to index
      %c0_156 = arith.constant 0 : index
      %313 = vector.load %arg5[%312, %c0_156] : memref<128x128xf32, #tpu.memory_space<vmem>>, vector<1x128xf32>
      %c7 = arith.constant 7 : index
      %c0_157 = arith.constant 0 : index
      %314 = vector.load %arg13[%c7, %c0_157] : memref<8x256xf32, #tpu.memory_space<vmem>>, vector<1x128xf32>
      tpu.vector_store %arg13[%c7, %c0_157], %313 {strides = array<i32>} : memref<8x256xf32, #tpu.memory_space<vmem>>, vector<1x128xf32>,
    } else {
    }
    %c0_i32_124 = arith.constant 0 : i32
    %253 = arith.cmpi eq, %249, %c0_i32_124 : i32
    %254 = arith.extui %253 : i1 to i32
    %c0_i32_125 = arith.constant 0 : i32
    %255 = arith.cmpi ne, %254, %c0_i32_125 : i32
    scf.if %255 {
      %259 = vector.broadcast %235 : vector<8x1xf32> to vector<8x128xf32>
      %260 = arith.cmpf oge, %233, %259 : vector<8x128xf32>
      %c128_i32 = arith.constant 128 : i32
      %261 = vector.broadcast %c128_i32 : i32 to vector<8x128xi32>
      %262 = arith.select %260, %3, %261 : vector<8x128xi1>, vector<8x128xi32>
      %cst_129 = arith.constant dense<2147483647> : vector<8xi32>
      %263 = vector.multi_reduction <minsi>, %262, %cst_129 [1] : vector<8x128xi32> to vector<8xi32>
      %264 = vector.shape_cast %263 : vector<8xi32> to vector<8x1xi32>
      %265 = vector.broadcast %264 : vector<8x1xi32> to vector<8x128xi32>
      %266 = arith.cmpi eq, %3, %265 : vector<8x128xi32>
      %267 = arith.extui %266 : vector<8x128xi1> to vector<8x128xi32>
      %268 = arith.sitofp %267 : vector<8x128xi32> to vector<8x128xf32>
      %c0_130 = arith.constant 0 : index
      %c0_131 = arith.constant 0 : index
      %269 = vector.load %arg5[%c0_130, %c0_131] : memref<128x128xf32, #tpu.memory_space<vmem>>, vector<128x128xf32>
      %cst_132 = arith.constant dense<0.000000e+00> : vector<8x128xf32>
      %270 = tpu.matmul %268, %269, %cst_132 {dimension_numbers = #tpu.dot_dimension_numbers<[1], [0], [0], [1], [0, 0, 1, 1], [], []>} : vector<8x128xf32>, vector<128x128xf32>, vector<8x128xf32> -> vector<8x128xf32>
      %c0_133 = arith.constant 0 : index
      %c0_134 = arith.constant 0 : index
      %271 = vector.load %arg13[%c0_133, %c0_134] : memref<8x256xf32, #tpu.memory_space<vmem>>, vector<8x128xf32>
      tpu.vector_store %arg13[%c0_133, %c0_134], %270 {strides = array<i32>} : memref<8x256xf32, #tpu.memory_space<vmem>>, vector<8x128xf32>,
    } else {
    }
    %c4_i32_126 = arith.constant 4 : i32
    %c1_i32_127 = arith.constant 1 : i32
    %256 = arith.cmpi eq, %arg0, %c1_i32_127 : i32
    %257 = arith.extui %256 : i1 to i32
    %c0_i32_128 = arith.constant 0 : i32
    %258 = arith.cmpi ne, %257, %c0_i32_128 : i32
    scf.if %258 {
      %c0_129 = arith.constant 0 : index
      %c0_130 = arith.constant 0 : index
      %259 = vector.load %arg12[%c0_129, %c0_130] : memref<8x128xf32, #tpu.memory_space<vmem>>, vector<8x128xf32>
      %c0_131 = arith.constant 0 : index
      %c0_132 = arith.constant 0 : index
      %260 = vector.load %arg11[%c0_131, %c0_132] : memref<8x128xf32, #tpu.memory_space<vmem>>, vector<8x128xf32>
      tpu.vector_store %arg11[%c0_131, %c0_132], %259 {strides = array<i32>} : memref<8x128xf32, #tpu.memory_space<vmem>>, vector<8x128xf32>,
    } else {
    }
    return
  }
  func.func @transform_0(%arg0: i32, %arg1: memref<1xi32, #tpu.memory_space<smem>>, %arg2: memref<8xi32, #tpu.memory_space<smem>>, %arg3: memref<64xi32, #tpu.memory_space<smem>>) -> (i32, i32) {
    %c0_i32 = arith.constant 0 : i32
    %c0_i32_0 = arith.constant 0 : i32
    %c0_i32_1 = arith.constant 0 : i32
    return %c0_i32, %c0_i32_0 : i32, i32
  }
  func.func @transform_1(%arg0: i32, %arg1: memref<1xi32, #tpu.memory_space<smem>>, %arg2: memref<8xi32, #tpu.memory_space<smem>>, %arg3: memref<64xi32, #tpu.memory_space<smem>>) -> (i32, i32) {
    %c0_i32 = arith.constant 0 : i32
    %c0_i32_0 = arith.constant 0 : i32
    %c0_i32_1 = arith.constant 0 : i32
    return %c0_i32, %c0_i32_0 : i32, i32
  }
  func.func @transform_2(%arg0: i32, %arg1: memref<1xi32, #tpu.memory_space<smem>>, %arg2: memref<8xi32, #tpu.memory_space<smem>>, %arg3: memref<64xi32, #tpu.memory_space<smem>>) -> (i32, i32) {
    %c0_i32 = arith.constant 0 : i32
    %c0_i32_0 = arith.constant 0 : i32
    %c0_i32_1 = arith.constant 0 : i32
    return %c0_i32, %c0_i32_0 : i32, i32
  }
  func.func @transform_3(%arg0: i32, %arg1: memref<1xi32, #tpu.memory_space<smem>>, %arg2: memref<8xi32, #tpu.memory_space<smem>>, %arg3: memref<64xi32, #tpu.memory_space<smem>>) -> (i32, i32) {
    %c0_i32 = arith.constant 0 : i32
    %c0_i32_0 = arith.constant 0 : i32
    %c0_i32_1 = arith.constant 0 : i32
    return %c0_i32, %c0_i32_0 : i32, i32
  }
  func.func @transform_4(%arg0: i32, %arg1: memref<1xi32, #tpu.memory_space<smem>>, %arg2: memref<8xi32, #tpu.memory_space<smem>>, %arg3: memref<64xi32, #tpu.memory_space<smem>>) -> (i32, i32) {
    %c0_i32 = arith.constant 0 : i32
    %c0_i32_0 = arith.constant 0 : i32
    %c0_i32_1 = arith.constant 0 : i32
    return %c0_i32, %c0_i32_0 : i32, i32
  }
  func.func @transform_5(%arg0: i32, %arg1: memref<1xi32, #tpu.memory_space<smem>>, %arg2: memref<8xi32, #tpu.memory_space<smem>>, %arg3: memref<64xi32, #tpu.memory_space<smem>>) -> (i32, i32) {
    %c0_i32 = arith.constant 0 : i32
    %c0_i32_0 = arith.constant 0 : i32
    %c0_i32_1 = arith.constant 0 : i32
    return %c0_i32, %c0_i32_0 : i32, i32
  }
  func.func @transform_6(%arg0: i32, %arg1: memref<1xi32, #tpu.memory_space<smem>>, %arg2: memref<8xi32, #tpu.memory_space<smem>>, %arg3: memref<64xi32, #tpu.memory_space<smem>>) -> (i32, i32, i32) {
    %c0_i32 = arith.constant 0 : i32
    %c0_i32_0 = arith.constant 0 : i32
    %c0_i32_1 = arith.constant 0 : i32
    return %arg0, %c0_i32, %c0_i32_0 : i32, i32, i32
  }
  func.func @transform_7(%arg0: i32, %arg1: memref<1xi32, #tpu.memory_space<smem>>, %arg2: memref<8xi32, #tpu.memory_space<smem>>, %arg3: memref<64xi32, #tpu.memory_space<smem>>) -> (i32, i32) {
    %c0_i32 = arith.constant 0 : i32
    %c0_i32_0 = arith.constant 0 : i32
    %c0_i32_1 = arith.constant 0 : i32
    return %c0_i32, %c0_i32_0 : i32, i32
  }
}

</mosaic_0001>

<llo_original>
// kernel: tpu_custom_call.1
$region0: #{tpu_custom_call.1}
  #allocation0 [shape = 'u32[]', space=smem, size = 0x4, offset = 0x4, fixed_abs, tag = 'smem constant byte address 0x4 - core index']
  #allocation1 [shape = 'u32[144,128]{1,0:T(1,128)}', space=vmem, size = 0x12000, scoped, tag = 'internal scratch']
  #allocation2 [shape = 'f32[8,128]{1,0:T(8,128)}', space=vmem, size = 0x1000, scoped, tag = 'scratch operand']
  #allocation3 [shape = 'f32[8,256]{1,0:T(8,128)}', space=vmem, size = 0x2000, scoped, tag = 'scratch operand']
  #allocation4 [shape = 's32[1]{0}', space=sflag, size = 0x4, scoped, tag = 'scoped memory for tpu_custom_call.1']
  #allocation5 [shape = 's32[1]{0:T(128)S(6)}', space=smem, size = 0x200, scoped, tag = 'prefetched SMEM operand 0']
  #allocation6 [shape = 'u8[512]{0}', space=smem, size = 0x200, scoped, tag = 'prefetched SMEM operand 1']
  #allocation7 [shape = 'u8[512]{0}', space=smem, size = 0x200, scoped, tag = 'prefetched SMEM operand 2']
  %s0 = inlined_call_operand.<no memory space> [shape: s32[1], index: 0, kind: input, shape index: {}]
  %s1 = inlined_call_operand.vmem [shape: s32[8], index: 1, kind: input, shape index: {}]
  %s2 = inlined_call_operand.vmem [shape: s32[64], index: 2, kind: input, shape index: {}]
  %s3 = inlined_call_operand.vmem [shape: f32[8,128], index: 3, kind: input, shape index: {}]
  %s4 = inlined_call_operand.hbm [shape: f32[128,128], index: 4, kind: input, shape index: {}]
  %s5 = inlined_call_operand.hbm [shape: bf16[256,512], index: 5, kind: input, shape index: {}]
  %s6 = inlined_call_operand.vmem [shape: f32[1,512], index: 6, kind: input, shape index: {}]
  %s7 = inlined_call_operand.hbm [shape: bf16[128,128], index: 7, kind: input, shape index: {}]
  %s8 = inlined_call_operand.vmem [shape: f32[1,128], index: 8, kind: input, shape index: {}]
  %s9 = inlined_call_operand.hbm [shape: f32[8,8,128], index: 9, kind: output, shape index: {0}]
  %s10 = inlined_call_operand.hbm [shape: f32[8,128], index: 10, kind: output, shape index: {1}]
  %11 = xla_tuple %s9, %s10
  %s12 = sld [smem:[#allocation0]]
  $region117: #{tpu_custom_call.1} parent=0
    _
  %s14 = ssub.s32 1, %s12
  %s15 = scalar_select 0, %s14, %s12
  %16 = sst [smem:[#allocation5]] %s0
  %s17 = sshll.u32 %s1, 4
  %s18 = int_to_ptr.vmem [resolvable:$true] %s17
  %20 = dma.vmem_to_smem %s18, 16, [#allocation6], [#allocation4]
  %s21 = sshll.u32 %s2, 4
  %s22 = int_to_ptr.vmem [resolvable:$true] %s21
  %24 = dma.vmem_to_smem %s22, 16, [#allocation7], [#allocation4]
  %25 = dma.done [#allocation4], 32
  %26 = sfence
  $region1: #{tpu_custom_call.1} parent=0
    #allocation8 [shape = 'u8[65536]{0}', space=vmem, size = 0x10000, scoped, tag = 'input window, operand 4, single buffered']
    #allocation9 [shape = 's32[2]{0}', space=sflag, size = 0x8, scoped, tag = 'scoped memory for tpu_custom_call.1']
    #allocation10 [shape = 's32[2]{0}', space=sflag, size = 0x8, scoped, tag = 'scoped memory for tpu_custom_call.1']
    #allocation11 [shape = 'u8[262144]{0}', space=vmem, size = 0x40000, scoped, tag = 'input window, operand 5, single buffered']
    #allocation12 [shape = 's32[1]{0}', space=sflag, size = 0x4, scoped, tag = 'scoped memory for tpu_custom_call.1']
    #allocation13 [shape = 'u8[32768]{0}', space=vmem, size = 0x8000, scoped, tag = 'input window, operand 7, single buffered']
    #allocation14 [shape = 'u8[32768]{0}', space=vmem, size = 0x8000, scoped, tag = 'output window, operand 0']
    #allocation15 [shape = 'u8[4096]{0}', space=vmem, size = 0x1000, scoped, tag = 'output window, operand 1, single buffered']
    #allocation16 [shape = 's32[1]{0}', space=sflag, size = 0x4, scoped, tag = 'scoped memory for tpu_custom_call.1']
    %27 = vsyncpa [#allocation9], 0
    %28 = vsyncpa [#allocation12], 0
    %29 = vsyncpa [#allocation10], 0
    %s30 = scalar_lea.sflag [#allocation10], 1
    %31 = vsyncpa %s30, 0
    %32 = vsyncpa [#allocation16], 0
    loop: start=0, step=1, limit=4
    $region2: #{tpu_custom_call.1} parent=1 // loop_pre_header
      _
    $region3: #{tpu_custom_call.1} parent=1 // loop_header
      %s34 = sphi 0, %s38
      %p35 = scmp.ge.s32.totalorder %s34, 4
      %s42 = sphi 0, %s42
      %s44 = sphi 0, %s42
      %s45 = sphi 0, %s44
      %s59 = sphi 0, %s45
      %s63 = sphi 0, %s63
      %s65 = sphi 0, %s63
      %s66 = sphi 0, %s65
      %s80 = sphi 0, %s66
      %s84 = sphi 0, %s84
      %s86 = sphi 0, %s84
      %s87 = sphi 0, %s86
      %s101 = sphi 0, %s87
      %s105 = sphi 0, %s105
      %s107 = sphi 0, %s105
      %s108 = sphi 0, %s107
      %s122 = sphi 0, %s108
      %s126 = sphi 0, %s126
      %s128 = sphi 0, %s126
      %s129 = sphi 0, %s128
      %s143 = sphi 0, %s129
      %s147 = sphi 0, %s147
      %s149 = sphi 0, %s147
      %s150 = sphi 0, %s149
      %s164 = sphi 0, %s150
      %s170 = sphi 0, %s172
      %s173 = sphi 0, %s170
      %s174 = sphi 0, %s173
      %s190 = sphi 0, %s174
      %s194 = sphi 0, %s194
      %s196 = sphi 0, %s194
      %s197 = sphi 0, %s196
      %s211 = sphi 0, %s197
    $region4: #{tpu_custom_call.1} parent=1 // loop_header_branch
      %37 = sbr.rel (%p35) target = $region8
    $region5: #{tpu_custom_call.1} parent=1 // loop_body
      %s39 = ssub.s32 %s34, 1
      %s40 = ssub.s32 %s34, 2
      %s41 = sadd.s32 %s34, 1
      %s43 = sadd.s32 %s42, 1
      %p46 = scmp.eq.s32.totalorder %s34, 1
      %p47 = scmp.ne.s32.totalorder %s42, %s44
      %p48 = scmp.eq.s32.totalorder %s34, 0
      %p49 = por %p47, %p48
      %p50 = scmp.ne.s32.totalorder %s42, %s44
      %p51 = scmp.eq.s32.totalorder %s39, 1
      %p52 = por %p50, %p51
      %p53 = scmp.ne.s32.totalorder %s44, %s45
      %p54 = scmp.eq.s32.totalorder %s39, 0
      %p55 = por %p53, %p54
      %p56 = scmp.ne.s32.totalorder %s44, %s45
      %p57 = scmp.eq.s32.totalorder %s40, 1
      %p58 = por %p56, %p57
      %p60 = scmp.ne.s32.totalorder %s45, %s59
      %p61 = scmp.eq.s32.totalorder %s40, 0
      %p62 = por %p60, %p61
      %s64 = sadd.s32 %s63, 1
      %p67 = scmp.eq.s32.totalorder %s34, 1
      %p68 = scmp.ne.s32.totalorder %s63, %s65
      %p69 = scmp.eq.s32.totalorder %s34, 0
      %p70 = por %p68, %p69
      %p71 = scmp.ne.s32.totalorder %s63, %s65
      %p72 = scmp.eq.s32.totalorder %s39, 1
      %p73 = por %p71, %p72
      %p74 = scmp.ne.s32.totalorder %s65, %s66
      %p75 = scmp.eq.s32.totalorder %s39, 0
      %p76 = por %p74, %p75
      %p77 = scmp.ne.s32.totalorder %s65, %s66
      %p78 = scmp.eq.s32.totalorder %s40, 1
      %p79 = por %p77, %p78
      %p81 = scmp.ne.s32.totalorder %s66, %s80
      %p82 = scmp.eq.s32.totalorder %s40, 0
      %p83 = por %p81, %p82
      %s85 = sadd.s32 %s84, 1
      %p88 = scmp.eq.s32.totalorder %s34, 1
      %p89 = scmp.ne.s32.totalorder %s84, %s86
      %p90 = scmp.eq.s32.totalorder %s34, 0
      %p91 = por %p89, %p90
      %p92 = scmp.ne.s32.totalorder %s84, %s86
      %p93 = scmp.eq.s32.totalorder %s39, 1
      %p94 = por %p92, %p93
      %p95 = scmp.ne.s32.totalorder %s86, %s87
      %p96 = scmp.eq.s32.totalorder %s39, 0
      %p97 = por %p95, %p96
      %p98 = scmp.ne.s32.totalorder %s86, %s87
      %p99 = scmp.eq.s32.totalorder %s40, 1
      %p100 = por %p98, %p99
      %p102 = scmp.ne.s32.totalorder %s87, %s101
      %p103 = scmp.eq.s32.totalorder %s40, 0
      %p104 = por %p102, %p103
      %s106 = sadd.s32 %s105, 1
      %p109 = scmp.eq.s32.totalorder %s34, 1
      %p110 = scmp.ne.s32.totalorder %s105, %s107
      %p111 = scmp.eq.s32.totalorder %s34, 0
      %p112 = por %p110, %p111
      %p113 = scmp.ne.s32.totalorder %s105, %s107
      %p114 = scmp.eq.s32.totalorder %s39, 1
      %p115 = por %p113, %p114
      %p116 = scmp.ne.s32.totalorder %s107, %s108
      %p117 = scmp.eq.s32.totalorder %s39, 0
      %p118 = por %p116, %p117
      %p119 = scmp.ne.s32.totalorder %s107, %s108
      %p120 = scmp.eq.s32.totalorder %s40, 1
      %p121 = por %p119, %p120
      %p123 = scmp.ne.s32.totalorder %s108, %s122
      %p124 = scmp.eq.s32.totalorder %s40, 0
      %p125 = por %p123, %p124
      %s127 = sadd.s32 %s126, 1
      %p130 = scmp.eq.s32.totalorder %s34, 1
      %p131 = scmp.ne.s32.totalorder %s126, %s128
      %p132 = scmp.eq.s32.totalorder %s34, 0
      %p133 = por %p131, %p132
      %p134 = scmp.ne.s32.totalorder %s126, %s128
      %p135 = scmp.eq.s32.totalorder %s39, 1
      %p136 = por %p134, %p135
      %p137 = scmp.ne.s32.totalorder %s128, %s129
      %p138 = scmp.eq.s32.totalorder %s39, 0
      %p139 = por %p137, %p138
      %p140 = scmp.ne.s32.totalorder %s128, %s129
      %p141 = scmp.eq.s32.totalorder %s40, 1
      %p142 = por %p140, %p141
      %p144 = scmp.ne.s32.totalorder %s129, %s143
      %p145 = scmp.eq.s32.totalorder %s40, 0
      %p146 = por %p144, %p145
      %s148 = sadd.s32 %s147, 1
      %p151 = scmp.eq.s32.totalorder %s34, 1
      %p152 = scmp.ne.s32.totalorder %s147, %s149
      %p153 = scmp.eq.s32.totalorder %s34, 0
      %p154 = por %p152, %p153
      %p155 = scmp.ne.s32.totalorder %s147, %s149
      %p156 = scmp.eq.s32.totalorder %s39, 1
      %p157 = por %p155, %p156
      %p158 = scmp.ne.s32.totalorder %s149, %s150
      %p159 = scmp.eq.s32.totalorder %s39, 0
      %p160 = por %p158, %p159
      %p161 = scmp.ne.s32.totalorder %s149, %s150
      %p162 = scmp.eq.s32.totalorder %s40, 1
      %p163 = por %p161, %p162
      %p165 = scmp.ne.s32.totalorder %s150, %s164
      %p166 = scmp.eq.s32.totalorder %s40, 0
      %p167 = por %p165, %p166
      %s168 = ssub.s32 %s34, %s41
      %p169 = scmp.eq.s32.totalorder %s168, 0
      %s171 = sadd.s32 %s170, 1
      %s172 = scalar_select %p169, %s170, %s171
      %p175 = pneg %p169
      %p176 = scmp.eq.s32.totalorder %s34, 1
      %p177 = por %p175, %p176
      %p178 = scmp.ne.s32.totalorder %s170, %s173
      %p179 = scmp.eq.s32.totalorder %s34, 0
      %p180 = por %p178, %p179
      %p181 = scmp.ne.s32.totalorder %s170, %s173
      %p182 = scmp.eq.s32.totalorder %s39, 1
      %p183 = por %p181, %p182
      %p184 = scmp.ne.s32.totalorder %s173, %s174
      %p185 = scmp.eq.s32.totalorder %s39, 0
      %p186 = por %p184, %p185
      %p187 = scmp.ne.s32.totalorder %s173, %s174
      %p188 = scmp.eq.s32.totalorder %s40, 1
      %p189 = por %p187, %p188
      %p191 = scmp.ne.s32.totalorder %s174, %s190
      %p192 = scmp.eq.s32.totalorder %s40, 0
      %p193 = por %p191, %p192
      %s195 = sadd.s32 %s194, 1
      %p198 = scmp.eq.s32.totalorder %s34, 1
      %p199 = scmp.ne.s32.totalorder %s194, %s196
      %p200 = scmp.eq.s32.totalorder %s34, 0
      %p201 = por %p199, %p200
      %p202 = scmp.ne.s32.totalorder %s194, %s196
      %p203 = scmp.eq.s32.totalorder %s39, 1
      %p204 = por %p202, %p203
      %p205 = scmp.ne.s32.totalorder %s196, %s197
      %p206 = scmp.eq.s32.totalorder %s39, 0
      %p207 = por %p205, %p206
      %p208 = scmp.ne.s32.totalorder %s196, %s197
      %p209 = scmp.eq.s32.totalorder %s40, 1
      %p210 = por %p208, %p209
      %p212 = scmp.ne.s32.totalorder %s197, %s211
      %p213 = scmp.eq.s32.totalorder %s40, 0
      %p214 = por %p212, %p213
      %p215 = scmp.le.s32.totalorder 1, %s34
      %p216 = scmp.lt.s32.totalorder %s34, 3
      %p217 = pnand %p215, %p216
      %p218 = pneg %p217
      // Predicated region
      $region9: #{tpu_custom_call.1} parent=5 // pred_check
        _
      $region10: #{tpu_custom_call.1} parent=5 // pred_check_branch
        %220 = sbr.rel (%p217) target = $region12
      $region11: #{tpu_custom_call.1} parent=5 // pred_region
        %s221 = ssub.s32 %s34, 1
        // Predicated region
        $region13: #{tpu_custom_call.1} parent=11 // pred_check
          %p222 = pneg %p55
        $region14: #{tpu_custom_call.1} parent=11 // pred_check_branch
          %224 = sbr.rel (%p222) target = $region16
        $region15: #{tpu_custom_call.1} parent=11 // pred_region
          _
        $region16: #{tpu_custom_call.1} parent=11 // pred_fallthru
          _
        // Predicated region
        $region17: #{tpu_custom_call.1} parent=11 // pred_check
          %p225 = pneg %p76
        $region18: #{tpu_custom_call.1} parent=11 // pred_check_branch
          %227 = sbr.rel (%p225) target = $region20
        $region19: #{tpu_custom_call.1} parent=11 // pred_region
          %s229 = ssub.s32 2048, 2048
          %230 = vsyncadd [#allocation9], %s229
          %s231 = sshll.u32 [#allocation8], 4
          %s232 = int_to_ptr.vmem [resolvable:$true] %s231
          %237 = dma.hbm_to_vmem [thread:$0]  %s4, 2048, %s232, [#allocation9], 128, 128, 8
        $region20: #{tpu_custom_call.1} parent=11 // pred_fallthru
          _
        // Predicated region
        $region21: #{tpu_custom_call.1} parent=11 // pred_check
          %p238 = pneg %p97
        $region22: #{tpu_custom_call.1} parent=11 // pred_check_branch
          %240 = sbr.rel (%p238) target = $region24
        $region23: #{tpu_custom_call.1} parent=11 // pred_region
          %s242 = ssub.s32 8192, 8192
          %243 = vsyncadd [#allocation12], %s242
          %s244 = sshll.u32 [#allocation11], 4
          %s245 = int_to_ptr.vmem [resolvable:$true] %s244
          %250 = dma.hbm_to_vmem [thread:$0]  %s5, 8192, %s245, [#allocation12], 256, 256, 16
        $region24: #{tpu_custom_call.1} parent=11 // pred_fallthru
          _
        // Predicated region
        $region25: #{tpu_custom_call.1} parent=11 // pred_check
          %p251 = pneg %p118
        $region26: #{tpu_custom_call.1} parent=11 // pred_check_branch
          %253 = sbr.rel (%p251) target = $region28
        $region27: #{tpu_custom_call.1} parent=11 // pred_region
          _
        $region28: #{tpu_custom_call.1} parent=11 // pred_fallthru
          _
        // Predicated region
        $region29: #{tpu_custom_call.1} parent=11 // pred_check
          %p254 = pneg %p139
        $region30: #{tpu_custom_call.1} parent=11 // pred_check_branch
          %256 = sbr.rel (%p254) target = $region32
        $region31: #{tpu_custom_call.1} parent=11 // pred_region
          %s258 = ssub.s32 1024, 1024
          %259 = vsyncadd [#allocation12], %s258
          %s260 = sshll.u32 [#allocation13], 4
          %s261 = int_to_ptr.vmem [resolvable:$true] %s260
          %266 = dma.hbm_to_vmem [thread:$0]  %s7, 1024, %s261, [#allocation12], 64, 64, 4
        $region32: #{tpu_custom_call.1} parent=11 // pred_fallthru
          _
        // Predicated region
        $region33: #{tpu_custom_call.1} parent=11 // pred_check
          %p267 = pneg %p160
        $region34: #{tpu_custom_call.1} parent=11 // pred_check_branch
          %269 = sbr.rel (%p267) target = $region36
        $region35: #{tpu_custom_call.1} parent=11 // pred_region
          _
        $region36: #{tpu_custom_call.1} parent=11 // pred_fallthru
          _
      $region12: #{tpu_custom_call.1} parent=5 // pred_fallthru
        _
      %p270 = scmp.lt.s32.totalorder %s34, 2
      // Predicated region
      $region37: #{tpu_custom_call.1} parent=5 // pred_check
        %p271 = pneg %p270
      $region38: #{tpu_custom_call.1} parent=5 // pred_check_branch
        %273 = sbr.rel (%p271) target = $region40
      $region39: #{tpu_custom_call.1} parent=5 // pred_region
        _
      $region40: #{tpu_custom_call.1} parent=5 // pred_fallthru
        _
      %p274 = scmp.le.s32.totalorder 1, %s34
      %p275 = scmp.lt.s32.totalorder %s34, 3
      %p276 = pnand %p274, %p275
      %p277 = pneg %p276
      // Predicated region
      $region41: #{tpu_custom_call.1} parent=5 // pred_check
        _
      $region42: #{tpu_custom_call.1} parent=5 // pred_check_branch
        %279 = sbr.rel (%p276) target = $region44
      $region43: #{tpu_custom_call.1} parent=5 // pred_region
        %s280 = ssub.s32 %s34, 1
        // Predicated region
        $region45: #{tpu_custom_call.1} parent=43 // pred_check
          %p281 = pneg %p76
        $region46: #{tpu_custom_call.1} parent=43 // pred_check_branch
          %283 = sbr.rel (%p281) target = $region48
        $region47: #{tpu_custom_call.1} parent=43 // pred_region
          %284 = dma.done [#allocation9], 2048
        $region48: #{tpu_custom_call.1} parent=43 // pred_fallthru
          _
        // Predicated region
        $region49: #{tpu_custom_call.1} parent=43 // pred_check
          %p285 = pneg %p97
        $region50: #{tpu_custom_call.1} parent=43 // pred_check_branch
          %287 = sbr.rel (%p285) target = $region52
        $region51: #{tpu_custom_call.1} parent=43 // pred_region
          %288 = dma.done [#allocation12], 8192
        $region52: #{tpu_custom_call.1} parent=43 // pred_fallthru
          _
        // Predicated region
        $region53: #{tpu_custom_call.1} parent=43 // pred_check
          %p289 = pneg %p139
        $region54: #{tpu_custom_call.1} parent=43 // pred_check_branch
          %291 = sbr.rel (%p289) target = $region56
        $region55: #{tpu_custom_call.1} parent=43 // pred_region
          %292 = dma.done [#allocation12], 1024
        $region56: #{tpu_custom_call.1} parent=43 // pred_fallthru
          _
        %p293 = pneg %p55
        %p294 = pneg %p52
        %p295 = pneg %p76
        %p296 = pneg %p73
        %p297 = pneg %p97
        %p298 = pneg %p94
        %p299 = pneg %p118
        %p300 = pneg %p115
        %p301 = pneg %p139
        %p302 = pneg %p136
        %p303 = pneg %p160
        %p304 = pneg %p157
        %p305 = pneg %p186
        %p306 = pneg %p183
        %s307 = sand.u32 %s173, 1
        %s308 = scalar_lea.sflag [#allocation10], %s307
        %s309 = sand.u32 %s173, 1
        %s310 = smul.addr %s309, 32
        %s311 = scalar_lea.vmem [#allocation14], %s310
        %p312 = pneg %p207
        %p313 = pneg %p204
        %s314 = smul.u32 4, %s39
        %p316 = scmp.eq.s32.totalorder %s39, 0
        // Predicated region
        $region57: #{tpu_custom_call.1} parent=43 // pred_check
          %p317 = pneg %p316
        $region58: #{tpu_custom_call.1} parent=43 // pred_check_branch
          %319 = sbr.rel (%p317) target = $region60
        $region59: #{tpu_custom_call.1} parent=43 // pred_region
          %v320 = vld [vmem:[%s3] sm:$0xff]
          %321 = vst [vmem:[#allocation2] sm:$0xff] %v320
          %s322 = sld [smem:[#allocation5]]
          %s323 = scalar_lea.vmem [#allocation8], %s322
          %v324 = vld [vmem:[%s323] sm:$0x1]
          %v325 = vlaneseq
          %v326 = vshrl.u32 %v325, 7
          %v327 = vsub.s32 0, %v326
          %v328 = vrot.slane %v324, %v327
          %329 = vst [vmem:[#allocation3] sm:$0xff] %v328
        $region60: #{tpu_custom_call.1} parent=43 // pred_fallthru
          _
        %v330 = vlaneseq
        %v331 = vand.u32 %v330, 127
        %s332 = smul.u32 %s39, 4
        %v333 = vld [vmem:[#allocation2] sm:$0xff]
        %334 = vst [vmem:[#allocation3 + $0x8] sm:$0xff] %v333
        %v335 = vld [vmem:[#allocation2] sm:$0xff]
        %v336 = vld [vmem:[#allocation3] sm:$0xff]
        %v337 = vld [vmem:[#allocation3 + $0x8] sm:$0xff]
        %v338 = vpack.c.bf16 %v336, %v336
        %v339 = vpack.c.bf16 %v337, %v337
        %v340 = vld [vmem:[#allocation11] sm:$0xff]
        %v341 = vld [vmem:[#allocation11 + $0x8] sm:$0xff]
        %v342 = vld [vmem:[#allocation11 + $0x10] sm:$0xff]
        %v343 = vld [vmem:[#allocation11 + $0x18] sm:$0xff]
        %v344 = vld [vmem:[#allocation11 + $0x20] sm:$0xff]
        %v345 = vld [vmem:[#allocation11 + $0x28] sm:$0xff]
        %v346 = vld [vmem:[#allocation11 + $0x30] sm:$0xff]
        %v347 = vld [vmem:[#allocation11 + $0x38] sm:$0xff]
        %v348 = vld [vmem:[#allocation11 + $0x40] sm:$0xff]
        %v349 = vld [vmem:[#allocation11 + $0x48] sm:$0xff]
        %v350 = vld [vmem:[#allocation11 + $0x50] sm:$0xff]
        %v351 = vld [vmem:[#allocation11 + $0x58] sm:$0xff]
        %v352 = vld [vmem:[#allocation11 + $0x60] sm:$0xff]
        %v353 = vld [vmem:[#allocation11 + $0x68] sm:$0xff]
        %v354 = vld [vmem:[#allocation11 + $0x70] sm:$0xff]
        %v355 = vld [vmem:[#allocation11 + $0x78] sm:$0xff]
        %v356 = vld [vmem:[#allocation11 + $0x80] sm:$0xff]
        %v357 = vld [vmem:[#allocation11 + $0x88] sm:$0xff]
        %v358 = vld [vmem:[#allocation11 + $0x90] sm:$0xff]
        %v359 = vld [vmem:[#allocation11 + $0x98] sm:$0xff]
        %v360 = vld [vmem:[#allocation11 + $0xa0] sm:$0xff]
        %v361 = vld [vmem:[#allocation11 + $0xa8] sm:$0xff]
        %v362 = vld [vmem:[#allocation11 + $0xb0] sm:$0xff]
        %v363 = vld [vmem:[#allocation11 + $0xb8] sm:$0xff]
        %v364 = vld [vmem:[#allocation11 + $0xc0] sm:$0xff]
        %v365 = vld [vmem:[#allocation11 + $0xc8] sm:$0xff]
        %v366 = vld [vmem:[#allocation11 + $0xd0] sm:$0xff]
        %v367 = vld [vmem:[#allocation11 + $0xd8] sm:$0xff]
        %v368 = vld [vmem:[#allocation11 + $0xe0] sm:$0xff]
        %v369 = vld [vmem:[#allocation11 + $0xe8] sm:$0xff]
        %v370 = vld [vmem:[#allocation11 + $0xf0] sm:$0xff]
        %v371 = vld [vmem:[#allocation11 + $0xf8] sm:$0xff]
        %v372 = vld [vmem:[#allocation11 + $0x100] sm:$0xff]
        %v373 = vld [vmem:[#allocation11 + $0x108] sm:$0xff]
        %v374 = vld [vmem:[#allocation11 + $0x110] sm:$0xff]
        %v375 = vld [vmem:[#allocation11 + $0x118] sm:$0xff]
        %v376 = vld [vmem:[#allocation11 + $0x120] sm:$0xff]
        %v377 = vld [vmem:[#allocation11 + $0x128] sm:$0xff]
        %v378 = vld [vmem:[#allocation11 + $0x130] sm:$0xff]
        %v379 = vld [vmem:[#allocation11 + $0x138] sm:$0xff]
        %v380 = vld [vmem:[#allocation11 + $0x140] sm:$0xff]
        %v381 = vld [vmem:[#allocation11 + $0x148] sm:$0xff]
        %v382 = vld [vmem:[#allocation11 + $0x150] sm:$0xff]
        %v383 = vld [vmem:[#allocation11 + $0x158] sm:$0xff]
        %v384 = vld [vmem:[#allocation11 + $0x160] sm:$0xff]
        %v385 = vld [vmem:[#allocation11 + $0x168] sm:$0xff]
        %v386 = vld [vmem:[#allocation11 + $0x170] sm:$0xff]
        %v387 = vld [vmem:[#allocation11 + $0x178] sm:$0xff]
        %v388 = vld [vmem:[#allocation11 + $0x180] sm:$0xff]
        %v389 = vld [vmem:[#allocation11 + $0x188] sm:$0xff]
        %v390 = vld [vmem:[#allocation11 + $0x190] sm:$0xff]
        %v391 = vld [vmem:[#allocation11 + $0x198] sm:$0xff]
        %v392 = vld [vmem:[#allocation11 + $0x1a0] sm:$0xff]
        %v393 = vld [vmem:[#allocation11 + $0x1a8] sm:$0xff]
        %v394 = vld [vmem:[#allocation11 + $0x1b0] sm:$0xff]
        %v395 = vld [vmem:[#allocation11 + $0x1b8] sm:$0xff]
        %v396 = vld [vmem:[#allocation11 + $0x1c0] sm:$0xff]
        %v397 = vld [vmem:[#allocation11 + $0x1c8] sm:$0xff]
        %v398 = vld [vmem:[#allocation11 + $0x1d0] sm:$0xff]
        %v399 = vld [vmem:[#allocation11 + $0x1d8] sm:$0xff]
        %v400 = vld [vmem:[#allocation11 + $0x1e0] sm:$0xff]
        %v401 = vld [vmem:[#allocation11 + $0x1e8] sm:$0xff]
        %v402 = vld [vmem:[#allocation11 + $0x1f0] sm:$0xff]
        %v403 = vld [vmem:[#allocation11 + $0x1f8] sm:$0xff]
        %v404 = vld [vmem:[%s6] sm:$0xf]
        %v406 = vlaneseq
        %v407 = vshrl.u32 %v406, 7
        %v408 = vsub.s32 0, %v407
        %v409 = vrot.slane %v404, %v408
        %v410 = vlaneseq
        %v411 = vshrl.u32 %v410, 7
        %v412 = vsub.s32 1, %v411
        %v413 = vrot.slane %v404, %v412
        %v414 = vlaneseq
        %v415 = vshrl.u32 %v414, 7
        %v416 = vsub.s32 2, %v415
        %v417 = vrot.slane %v404, %v416
        %v418 = vlaneseq
        %v419 = vshrl.u32 %v418, 7
        %v420 = vsub.s32 3, %v419
        %v421 = vrot.slane %v404, %v420
        %v490 = vunpack.c.l.b16 %v340
        %v491 = vunpack.c.h.b16 %v340
        %v492 = vunpack.c.l.b16 %v341
        %v493 = vunpack.c.h.b16 %v341
        %v494 = vunpack.c.l.b16 %v342
        %v495 = vunpack.c.h.b16 %v342
        %v496 = vunpack.c.l.b16 %v343
        %v497 = vunpack.c.h.b16 %v343
        %v498 = vunpack.c.l.b16 %v344
        %v499 = vunpack.c.h.b16 %v344
        %v500 = vunpack.c.l.b16 %v345
        %v501 = vunpack.c.h.b16 %v345
        %v502 = vunpack.c.l.b16 %v346
        %v503 = vunpack.c.h.b16 %v346
        %v504 = vunpack.c.l.b16 %v347
        %v505 = vunpack.c.h.b16 %v347
        %v506 = vunpack.c.l.b16 %v348
        %v507 = vunpack.c.h.b16 %v348
        %v508 = vunpack.c.l.b16 %v349
        %v509 = vunpack.c.h.b16 %v349
        %v510 = vunpack.c.l.b16 %v350
        %v511 = vunpack.c.h.b16 %v350
        %v512 = vunpack.c.l.b16 %v351
        %v513 = vunpack.c.h.b16 %v351
        %v514 = vunpack.c.l.b16 %v352
        %v515 = vunpack.c.h.b16 %v352
        %v516 = vunpack.c.l.b16 %v353
        %v517 = vunpack.c.h.b16 %v353
        %v518 = vunpack.c.l.b16 %v354
        %v519 = vunpack.c.h.b16 %v354
        %v520 = vunpack.c.l.b16 %v355
        %v521 = vunpack.c.h.b16 %v355
        %v522 = vunpack.c.l.b16 %v356
        %v523 = vunpack.c.h.b16 %v356
        %v524 = vunpack.c.l.b16 %v357
        %v525 = vunpack.c.h.b16 %v357
        %v526 = vunpack.c.l.b16 %v358
        %v527 = vunpack.c.h.b16 %v358
        %v528 = vunpack.c.l.b16 %v359
        %v529 = vunpack.c.h.b16 %v359
        %v530 = vunpack.c.l.b16 %v360
        %v531 = vunpack.c.h.b16 %v360
        %v532 = vunpack.c.l.b16 %v361
        %v533 = vunpack.c.h.b16 %v361
        %v534 = vunpack.c.l.b16 %v362
        %v535 = vunpack.c.h.b16 %v362
        %v536 = vunpack.c.l.b16 %v363
        %v537 = vunpack.c.h.b16 %v363
        %v538 = vunpack.c.l.b16 %v364
        %v539 = vunpack.c.h.b16 %v364
        %v540 = vunpack.c.l.b16 %v365
        %v541 = vunpack.c.h.b16 %v365
        %v542 = vunpack.c.l.b16 %v366
        %v543 = vunpack.c.h.b16 %v366
        %v544 = vunpack.c.l.b16 %v367
        %v545 = vunpack.c.h.b16 %v367
        %v546 = vunpack.c.l.b16 %v368
        %v547 = vunpack.c.h.b16 %v368
        %v548 = vunpack.c.l.b16 %v369
        %v549 = vunpack.c.h.b16 %v369
        %v550 = vunpack.c.l.b16 %v370
        %v551 = vunpack.c.h.b16 %v370
        %v552 = vunpack.c.l.b16 %v371
        %v553 = vunpack.c.h.b16 %v371
        %v554 = vunpack.c.l.b16 %v372
        %v555 = vunpack.c.h.b16 %v372
        %v556 = vunpack.c.l.b16 %v373
        %v557 = vunpack.c.h.b16 %v373
        %v558 = vunpack.c.l.b16 %v374
        %v559 = vunpack.c.h.b16 %v374
        %v560 = vunpack.c.l.b16 %v375
        %v561 = vunpack.c.h.b16 %v375
        %v562 = vunpack.c.l.b16 %v376
        %v563 = vunpack.c.h.b16 %v376
        %v564 = vunpack.c.l.b16 %v377
        %v565 = vunpack.c.h.b16 %v377
        %v566 = vunpack.c.l.b16 %v378
        %v567 = vunpack.c.h.b16 %v378
        %v568 = vunpack.c.l.b16 %v379
        %v569 = vunpack.c.h.b16 %v379
        %v570 = vunpack.c.l.b16 %v380
        %v571 = vunpack.c.h.b16 %v380
        %v572 = vunpack.c.l.b16 %v381
        %v573 = vunpack.c.h.b16 %v381
        %v574 = vunpack.c.l.b16 %v382
        %v575 = vunpack.c.h.b16 %v382
        %v576 = vunpack.c.l.b16 %v383
        %v577 = vunpack.c.h.b16 %v383
        %v578 = vunpack.c.l.b16 %v384
        %v579 = vunpack.c.h.b16 %v384
        %v580 = vunpack.c.l.b16 %v385
        %v581 = vunpack.c.h.b16 %v385
        %v582 = vunpack.c.l.b16 %v386
        %v583 = vunpack.c.h.b16 %v386
        %v584 = vunpack.c.l.b16 %v387
        %v585 = vunpack.c.h.b16 %v387
        %v586 = vunpack.c.l.b16 %v388
        %v587 = vunpack.c.h.b16 %v388
        %v588 = vunpack.c.l.b16 %v389
        %v589 = vunpack.c.h.b16 %v389
        %v590 = vunpack.c.l.b16 %v390
        %v591 = vunpack.c.h.b16 %v390
        %v592 = vunpack.c.l.b16 %v391
        %v593 = vunpack.c.h.b16 %v391
        %v594 = vunpack.c.l.b16 %v392
        %v595 = vunpack.c.h.b16 %v392
        %v596 = vunpack.c.l.b16 %v393
        %v597 = vunpack.c.h.b16 %v393
        %v598 = vunpack.c.l.b16 %v394
        %v599 = vunpack.c.h.b16 %v394
        %v600 = vunpack.c.l.b16 %v395
        %v601 = vunpack.c.h.b16 %v395
        %v602 = vunpack.c.l.b16 %v396
        %v603 = vunpack.c.h.b16 %v396
        %v604 = vunpack.c.l.b16 %v397
        %v605 = vunpack.c.h.b16 %v397
        %v606 = vunpack.c.l.b16 %v398
        %v607 = vunpack.c.h.b16 %v398
        %v608 = vunpack.c.l.b16 %v399
        %v609 = vunpack.c.h.b16 %v399
        %v610 = vunpack.c.l.b16 %v400
        %v611 = vunpack.c.h.b16 %v400
        %v612 = vunpack.c.l.b16 %v401
        %v613 = vunpack.c.h.b16 %v401
        %v614 = vunpack.c.l.b16 %v402
        %v615 = vunpack.c.h.b16 %v402
        %v616 = vunpack.c.l.b16 %v403
        %v617 = vunpack.c.h.b16 %v403
        %v618 = vpack.c.b16 %v494, %v490
        %v619 = vpack.c.b16 %v495, %v491
        %v620 = vpack.c.b16 %v496, %v492
        %v621 = vpack.c.b16 %v497, %v493
        %v622 = vpack.c.b16 %v502, %v498
        %v623 = vpack.c.b16 %v503, %v499
        %v624 = vpack.c.b16 %v504, %v500
        %v625 = vpack.c.b16 %v505, %v501
        %v626 = vpack.c.b16 %v510, %v506
        %v627 = vpack.c.b16 %v511, %v507
        %v628 = vpack.c.b16 %v512, %v508
        %v629 = vpack.c.b16 %v513, %v509
        %v630 = vpack.c.b16 %v518, %v514
        %v631 = vpack.c.b16 %v519, %v515
        %v632 = vpack.c.b16 %v520, %v516
        %v633 = vpack.c.b16 %v521, %v517
        %v634 = vpack.c.b16 %v526, %v522
        %v635 = vpack.c.b16 %v527, %v523
        %v636 = vpack.c.b16 %v528, %v524
        %v637 = vpack.c.b16 %v529, %v525
        %v638 = vpack.c.b16 %v534, %v530
        %v639 = vpack.c.b16 %v535, %v531
        %v640 = vpack.c.b16 %v536, %v532
        %v641 = vpack.c.b16 %v537, %v533
        %v642 = vpack.c.b16 %v542, %v538
        %v643 = vpack.c.b16 %v543, %v539
        %v644 = vpack.c.b16 %v544, %v540
        %v645 = vpack.c.b16 %v545, %v541
        %v646 = vpack.c.b16 %v550, %v546
        %v647 = vpack.c.b16 %v551, %v547
        %v648 = vpack.c.b16 %v552, %v548
        %v649 = vpack.c.b16 %v553, %v549
        %v650 = vpack.c.b16 %v558, %v554
        %v651 = vpack.c.b16 %v559, %v555
        %v652 = vpack.c.b16 %v560, %v556
        %v653 = vpack.c.b16 %v561, %v557
        %v654 = vpack.c.b16 %v566, %v562
        %v655 = vpack.c.b16 %v567, %v563
        %v656 = vpack.c.b16 %v568, %v564
        %v657 = vpack.c.b16 %v569, %v565
        %v658 = vpack.c.b16 %v574, %v570
        %v659 = vpack.c.b16 %v575, %v571
        %v660 = vpack.c.b16 %v576, %v572
        %v661 = vpack.c.b16 %v577, %v573
        %v662 = vpack.c.b16 %v582, %v578
        %v663 = vpack.c.b16 %v583, %v579
        %v664 = vpack.c.b16 %v584, %v580
        %v665 = vpack.c.b16 %v585, %v581
        %v666 = vpack.c.b16 %v590, %v586
        %v667 = vpack.c.b16 %v591, %v587
        %v668 = vpack.c.b16 %v592, %v588
        %v669 = vpack.c.b16 %v593, %v589
        %v670 = vpack.c.b16 %v598, %v594
        %v671 = vpack.c.b16 %v599, %v595
        %v672 = vpack.c.b16 %v600, %v596
        %v673 = vpack.c.b16 %v601, %v597
        %v674 = vpack.c.b16 %v606, %v602
        %v675 = vpack.c.b16 %v607, %v603
        %v676 = vpack.c.b16 %v608, %v604
        %v677 = vpack.c.b16 %v609, %v605
        %v678 = vpack.c.b16 %v614, %v610
        %v679 = vpack.c.b16 %v615, %v611
        %v680 = vpack.c.b16 %v616, %v612
        %v681 = vpack.c.b16 %v617, %v613
        %746 = vmatprep.subr.bf16.mxu0 %v619
        %747 = vmatpush1.bf16.msra.mxu0 %v618
        %748 = vmatprep.subr.bf16.mxu0 %v623
        %749 = vmatpush1.bf16.msra.mxu0 %v622
        %750 = vmatprep.subr.bf16.mxu0 %v627
        %751 = vmatpush1.bf16.msra.mxu0 %v626
        %752 = vmatprep.subr.bf16.mxu0 %v631
        %753 = vmatpush1.bf16.msra.mxu0 %v630
        %754 = vmatprep.subr.bf16.mxu0 %v635
        %755 = vmatpush1.bf16.msra.mxu0 %v634
        %756 = vmatprep.subr.bf16.mxu0 %v639
        %757 = vmatpush1.bf16.msra.mxu0 %v638
        %758 = vmatprep.subr.bf16.mxu0 %v643
        %759 = vmatpush1.bf16.msra.mxu0 %v642
        %760 = vmatprep.subr.bf16.mxu0 %v647
        %761 = vmatpush1.bf16.msra.mxu0 %v646
        %762 = vmatprep.subr.bf16.mxu0 %v651
        %763 = vmatpush1.bf16.msra.mxu0 %v650
        %764 = vmatprep.subr.bf16.mxu0 %v655
        %765 = vmatpush1.bf16.msra.mxu0 %v654
        %766 = vmatprep.subr.bf16.mxu0 %v659
        %767 = vmatpush1.bf16.msra.mxu0 %v658
        %768 = vmatprep.subr.bf16.mxu0 %v663
        %769 = vmatpush1.bf16.msra.mxu0 %v662
        %770 = vmatprep.subr.bf16.mxu0 %v667
        %771 = vmatpush1.bf16.msra.mxu0 %v666
        %772 = vmatprep.subr.bf16.mxu0 %v671
        %773 = vmatpush1.bf16.msra.mxu0 %v670
        %774 = vmatprep.subr.bf16.mxu0 %v675
        %775 = vmatpush1.bf16.msra.mxu0 %v674
        %776 = vmatprep.subr.bf16.mxu0 %v679
        %777 = vmatpush1.bf16.msra.mxu0 %v678
        %778 = vmatprep.mubr.bf16.mxu0 %v339
        %779 = vmatmul.mubr.bf16.gmra.mrb[0].mxu0 %v338
        %v780 = vpop.f32.mrb[0].mxu0
        %v781 = vadd.f32 %v409, %v780
        %v782 = vpop.f32.mrb[0].mxu0
        %v783 = vadd.f32 %v413, %v782
        %v784 = vpop.f32.mrb[0].mxu0
        %v785 = vpop.f32.mrb[0].mxu0
        %786 = vdwg.mxu0
        %787 = vmatprep.subr.bf16.mxu0 %v621
        %788 = vmatpush1.bf16.msra.mxu0 %v620
        %789 = vmatprep.subr.bf16.mxu0 %v625
        %790 = vmatpush1.bf16.msra.mxu0 %v624
        %791 = vmatprep.subr.bf16.mxu0 %v629
        %792 = vmatpush1.bf16.msra.mxu0 %v628
        %793 = vmatprep.subr.bf16.mxu0 %v633
        %794 = vmatpush1.bf16.msra.mxu0 %v632
        %795 = vmatprep.subr.bf16.mxu0 %v637
        %796 = vmatpush1.bf16.msra.mxu0 %v636
        %797 = vmatprep.subr.bf16.mxu0 %v641
        %798 = vmatpush1.bf16.msra.mxu0 %v640
        %799 = vmatprep.subr.bf16.mxu0 %v645
        %800 = vmatpush1.bf16.msra.mxu0 %v644
        %801 = vmatprep.subr.bf16.mxu0 %v649
        %802 = vmatpush1.bf16.msra.mxu0 %v648
        %803 = vmatprep.subr.bf16.mxu0 %v653
        %804 = vmatpush1.bf16.msra.mxu0 %v652
        %805 = vmatprep.subr.bf16.mxu0 %v657
        %806 = vmatpush1.bf16.msra.mxu0 %v656
        %807 = vmatprep.subr.bf16.mxu0 %v661
        %808 = vmatpush1.bf16.msra.mxu0 %v660
        %809 = vmatprep.subr.bf16.mxu0 %v665
        %810 = vmatpush1.bf16.msra.mxu0 %v664
        %811 = vmatprep.subr.bf16.mxu0 %v669
        %812 = vmatpush1.bf16.msra.mxu0 %v668
        %813 = vmatprep.subr.bf16.mxu0 %v673
        %814 = vmatpush1.bf16.msra.mxu0 %v672
        %815 = vmatprep.subr.bf16.mxu0 %v677
        %816 = vmatpush1.bf16.msra.mxu0 %v676
        %817 = vmatprep.subr.bf16.mxu0 %v681
        %818 = vmatpush1.bf16.msra.mxu0 %v680
        %819 = vmatprep.mubr.bf16.mxu0 %v339
        %820 = vmatmul.mubr.bf16.gmra.mrb[0].mxu0 %v338
        %v821 = vpop.f32.mrb[0].mxu0
        %v822 = vadd.f32 %v417, %v821
        %v823 = vpop.f32.mrb[0].mxu0
        %v824 = vadd.f32 %v421, %v823
        %v825 = vpop.f32.mrb[0].mxu0
        %v826 = vpop.f32.mrb[0].mxu0
        %827 = vdwg.mxu0
        %v828 = vxor.u32 %v781, 2147483648
        %v829 = vmul.f32 %v828, 1.442695
        %v830 = vpow.pop %v829
        %v831 = vadd.f32 %v830, 1.0
        %v832 = vrcp.pop %v831
        %v833 = vmul.f32 1.0, %v832
        %v834 = vxor.u32 %v783, 2147483648
        %v835 = vmul.f32 %v834, 1.442695
        %v836 = vpow.pop %v835
        %v837 = vadd.f32 %v836, 1.0
        %v838 = vrcp.pop %v837
        %v839 = vmul.f32 1.0, %v838
        %v840 = vmul.f32 %v833, %v824
        %v841 = vadd.f32 %v822, %v840
        %v842 = vtanh.pop %v841
        %v843 = vsub.f32 1.0, %v839
        %v844 = vmul.f32 %v843, %v842
        %v845 = vmul.f32 %v839, %v335
        %v846 = vadd.f32 %v844, %v845
        %847 = vst [vmem:[#allocation2] sm:$0xff] %v846
        %v848 = vpack.c.bf16 %v846, %v846
        %v849 = vld [vmem:[#allocation13] sm:$0xf]
        %v850 = vld [vmem:[#allocation13 + $0x4] sm:$0xf]
        %v851 = vld [vmem:[#allocation13 + $0x8] sm:$0xf]
        %v852 = vld [vmem:[#allocation13 + $0xc] sm:$0xf]
        %v853 = vld [vmem:[#allocation13 + $0x10] sm:$0xf]
        %v854 = vld [vmem:[#allocation13 + $0x14] sm:$0xf]
        %v855 = vld [vmem:[#allocation13 + $0x18] sm:$0xf]
        %v856 = vld [vmem:[#allocation13 + $0x1c] sm:$0xf]
        %v857 = vld [vmem:[#allocation13 + $0x20] sm:$0xf]
        %v858 = vld [vmem:[#allocation13 + $0x24] sm:$0xf]
        %v859 = vld [vmem:[#allocation13 + $0x28] sm:$0xf]
        %v860 = vld [vmem:[#allocation13 + $0x2c] sm:$0xf]
        %v861 = vld [vmem:[#allocation13 + $0x30] sm:$0xf]
        %v862 = vld [vmem:[#allocation13 + $0x34] sm:$0xf]
        %v863 = vld [vmem:[#allocation13 + $0x38] sm:$0xf]
        %v864 = vld [vmem:[#allocation13 + $0x3c] sm:$0xf]
        %v865 = vld [vmem:[%s8] sm:$0x1]
        %v867 = vlaneseq
        %v868 = vshrl.u32 %v867, 7
        %v869 = vsub.s32 0, %v868
        %v870 = vrot.slane %v865, %v869
        %v888 = vunpack.c.l.b16 %v849
        %v889 = vunpack.c.l.b16 %v850
        %v890 = vunpack.c.l.b16 %v851
        %v891 = vunpack.c.l.b16 %v852
        %v892 = vunpack.c.l.b16 %v853
        %v893 = vunpack.c.l.b16 %v854
        %v894 = vunpack.c.l.b16 %v855
        %v895 = vunpack.c.l.b16 %v856
        %v896 = vunpack.c.l.b16 %v857
        %v897 = vunpack.c.l.b16 %v858
        %v898 = vunpack.c.l.b16 %v859
        %v899 = vunpack.c.l.b16 %v860
        %v900 = vunpack.c.l.b16 %v861
        %v901 = vunpack.c.l.b16 %v862
        %v902 = vunpack.c.l.b16 %v863
        %v903 = vunpack.c.l.b16 %v864
        %v904 = vpack.c.b16 %v889, %v888
        %v905 = vpack.c.b16 %v891, %v890
        %v906 = vpack.c.b16 %v893, %v892
        %v907 = vpack.c.b16 %v895, %v894
        %v908 = vpack.c.b16 %v897, %v896
        %v909 = vpack.c.b16 %v899, %v898
        %v910 = vpack.c.b16 %v901, %v900
        %v911 = vpack.c.b16 %v903, %v902
        %920 = vmatprep.subr.bf16.mxu0 0
        %921 = vmatpush1.bf16.msra.mxu0 %v904
        %922 = vmatprep.subr.bf16.mxu0 0
        %923 = vmatpush1.bf16.msra.mxu0 %v905
        %924 = vmatprep.subr.bf16.mxu0 0
        %925 = vmatpush1.bf16.msra.mxu0 %v906
        %926 = vmatprep.subr.bf16.mxu0 0
        %927 = vmatpush1.bf16.msra.mxu0 %v907
        %928 = vmatprep.subr.bf16.mxu0 0
        %929 = vmatpush1.bf16.msra.mxu0 %v908
        %930 = vmatprep.subr.bf16.mxu0 0
        %931 = vmatpush1.bf16.msra.mxu0 %v909
        %932 = vmatprep.subr.bf16.mxu0 0
        %933 = vmatpush1.bf16.msra.mxu0 %v910
        %934 = vmatprep.subr.bf16.mxu0 0
        %935 = vmatpush1.bf16.msra.mxu0 %v911
        %936 = vmatprep.subr.bf16.mxu0 0
        %937 = vmatpush1.bf16.msra.mxu0 0
        %938 = vmatprep.subr.bf16.mxu0 0
        %939 = vmatpush1.bf16.msra.mxu0 0
        %940 = vmatprep.subr.bf16.mxu0 0
        %941 = vmatpush1.bf16.msra.mxu0 0
        %942 = vmatprep.subr.bf16.mxu0 0
        %943 = vmatpush1.bf16.msra.mxu0 0
        %944 = vmatprep.subr.bf16.mxu0 0
        %945 = vmatpush1.bf16.msra.mxu0 0
        %946 = vmatprep.subr.bf16.mxu0 0
        %947 = vmatpush1.bf16.msra.mxu0 0
        %948 = vmatprep.subr.bf16.mxu0 0
        %949 = vmatpush1.bf16.msra.mxu0 0
        %950 = vmatprep.subr.bf16.mxu0 0
        %951 = vmatpush1.bf16.msra.mxu0 0
        %952 = vmatprep.mubr.bf16.mxu0 0
        %953 = vmatmul.mubr.bf16.gmra.mrb[0].mxu0 %v848
        %v954 = vpop.f32.mrb[0].mxu0
        %v955 = vadd.f32 %v870, %v954
        %v956 = vpop.f32.mrb[0].mxu0
        %v957 = vpop.f32.mrb[0].mxu0
        %v958 = vpop.f32.mrb[0].mxu0
        %959 = vdwg.mxu0
        %960 = vmax.xlane.f32.xlu0 %v955
        %v961 = vpop.xlane.xlu0 %960
        %v962 = vsub.f32 %v955, %v961
        %v963 = vmul.f32 %v962, 1.442695
        %v964 = vpow.pop %v963
        %965 = vadd.xlane.f32.xlu0 %v964
        %v966 = vpop.xlane.xlu0 %965
        %v967 = vlog2.pop %v966
        %v968 = vmul.f32 %v967, 0.6931472
        %v969 = vadd.f32 %v961, %v968
        %v970 = vsub.f32 %v955, %v969
        %971 = vst [vmem:[%s311] sm:$0xff] %v970
        %s972 = sld [smem:[#allocation6 + %s332]]
        %p973 = scmp.eq.s32.totalorder %s972, 1
        // Predicated region
        $region61: #{tpu_custom_call.1} parent=43 // pred_check
          %p974 = pneg %p973
        $region62: #{tpu_custom_call.1} parent=43 // pred_check_branch
          %976 = sbr.rel (%p974) target = $region64
        $region63: #{tpu_custom_call.1} parent=43 // pred_region
          %s977 = smul.u32 %s39, 32
          %s978 = sld [smem:[#allocation7 + %s977]]
          %s979 = scalar_lea.vmem [#allocation8], %s978
          %v980 = vld [vmem:[%s979] sm:$0x1]
          %981 = vst [vmem:[#allocation3] sm:$0x1] %v980
          %s982 = sadd.s32 %s977, 1
          %s983 = sld [smem:[#allocation7 + %s982]]
          %s984 = scalar_lea.vmem [#allocation8], %s983
          %v985 = vld [vmem:[%s984] sm:$0x1]
          %986 = vst [vmem:[#allocation3 + $0x1] sm:$0x1] %v985
          %s987 = sadd.s32 %s977, 2
          %s988 = sld [smem:[#allocation7 + %s987]]
          %s989 = scalar_lea.vmem [#allocation8], %s988
          %v990 = vld [vmem:[%s989] sm:$0x1]
          %991 = vst [vmem:[#allocation3 + $0x2] sm:$0x1] %v990
          %s992 = sadd.s32 %s977, 3
          %s993 = sld [smem:[#allocation7 + %s992]]
          %s994 = scalar_lea.vmem [#allocation8], %s993
          %v995 = vld [vmem:[%s994] sm:$0x1]
          %996 = vst [vmem:[#allocation3 + $0x3] sm:$0x1] %v995
          %s997 = sadd.s32 %s977, 4
          %s998 = sld [smem:[#allocation7 + %s997]]
          %s999 = scalar_lea.vmem [#allocation8], %s998
          %v1000 = vld [vmem:[%s999] sm:$0x1]
          %1001 = vst [vmem:[#allocation3 + $0x4] sm:$0x1] %v1000
          %s1002 = sadd.s32 %s977, 5
          %s1003 = sld [smem:[#allocation7 + %s1002]]
          %s1004 = scalar_lea.vmem [#allocation8], %s1003
          %v1005 = vld [vmem:[%s1004] sm:$0x1]
          %1006 = vst [vmem:[#allocation3 + $0x5] sm:$0x1] %v1005
          %s1007 = sadd.s32 %s977, 6
          %s1008 = sld [smem:[#allocation7 + %s1007]]
          %s1009 = scalar_lea.vmem [#allocation8], %s1008
          %v1010 = vld [vmem:[%s1009] sm:$0x1]
          %1011 = vst [vmem:[#allocation3 + $0x6] sm:$0x1] %v1010
          %s1012 = sadd.s32 %s977, 7
          %s1013 = sld [smem:[#allocation7 + %s1012]]
          %s1014 = scalar_lea.vmem [#allocation8], %s1013
          %v1015 = vld [vmem:[%s1014] sm:$0x1]
          %1016 = vst [vmem:[#allocation3 + $0x7] sm:$0x1] %v1015
        $region64: #{tpu_custom_call.1} parent=43 // pred_fallthru
          _
        %p1017 = scmp.eq.s32.totalorder %s972, 0
        // Predicated region
        $region65: #{tpu_custom_call.1} parent=43 // pred_check
          %p1018 = pneg %p1017
        $region66: #{tpu_custom_call.1} parent=43 // pred_check_branch
          %1020 = sbr.rel (%p1018) target = $region68
        $region67: #{tpu_custom_call.1} parent=43 // pred_region
          %vm1021 = vcmp.ge.f32.partialorder %v955, %v961
          %v1022 = vsel %vm1021, %v331, 128
          %v1023 = vand.u32 %v1022, 65535
          %v1024 = vshra.s32 %v1022, 16
          %v1025 = vcvt.s32.f32 %v1023
          %v1026 = vcvt.s32.f32 %v1024
          %1027 = vmin.xlane.f32.xlu0 %v1026
          %v1028 = vpop.xlane.xlu0 %1027
          %vm1029 = vcmp.eq.f32.partialorder %v1026, %v1028
          %v1030 = vsel %vm1029, %v1025, inf
          %1031 = vmin.xlane.f32.xlu0 %v1030
          %v1032 = vpop.xlane.xlu0 %1031
          %v1033 = vcvt.f32.s32 %v1032
          %v1034 = vcvt.f32.s32 %v1028
          %v1035 = vshll.u32 %v1034, 16
          %v1036 = vadd.s32 %v1035, %v1033
          %vm1037 = vcmp.eq.s32.totalorder %v331, %v1036
          %v1038 = vsel %vm1037, 1, 0
          %v1039 = vcvt.s32.f32 %v1038
          %v1040 = vld [vmem:[#allocation8] sm:$0xff]
          %v1041 = vld [vmem:[#allocation8 + $0x8] sm:$0xff]
          %v1042 = vld [vmem:[#allocation8 + $0x10] sm:$0xff]
          %v1043 = vld [vmem:[#allocation8 + $0x18] sm:$0xff]
          %v1044 = vld [vmem:[#allocation8 + $0x20] sm:$0xff]
          %v1045 = vld [vmem:[#allocation8 + $0x28] sm:$0xff]
          %v1046 = vld [vmem:[#allocation8 + $0x30] sm:$0xff]
          %v1047 = vld [vmem:[#allocation8 + $0x38] sm:$0xff]
          %v1048 = vld [vmem:[#allocation8 + $0x40] sm:$0xff]
          %v1049 = vld [vmem:[#allocation8 + $0x48] sm:$0xff]
          %v1050 = vld [vmem:[#allocation8 + $0x50] sm:$0xff]
          %v1051 = vld [vmem:[#allocation8 + $0x58] sm:$0xff]
          %v1052 = vld [vmem:[#allocation8 + $0x60] sm:$0xff]
          %v1053 = vld [vmem:[#allocation8 + $0x68] sm:$0xff]
          %v1054 = vld [vmem:[#allocation8 + $0x70] sm:$0xff]
          %v1055 = vld [vmem:[#allocation8 + $0x78] sm:$0xff]
          %1056 = vmatprep.subr.mxu0 0.0
          %1057 = vmatpush1.msra.mxu0 %v1040
          %1058 = vmatprep.subr.mxu0 0.0
          %1059 = vmatpush1.msra.mxu0 %v1041
          %1060 = vmatprep.subr.mxu0 0.0
          %1061 = vmatpush1.msra.mxu0 %v1042
          %1062 = vmatprep.subr.mxu0 0.0
          %1063 = vmatpush1.msra.mxu0 %v1043
          %1064 = vmatprep.subr.mxu0 0.0
          %1065 = vmatpush1.msra.mxu0 %v1044
          %1066 = vmatprep.subr.mxu0 0.0
          %1067 = vmatpush1.msra.mxu0 %v1045
          %1068 = vmatprep.subr.mxu0 0.0
          %1069 = vmatpush1.msra.mxu0 %v1046
          %1070 = vmatprep.subr.mxu0 0.0
          %1071 = vmatpush1.msra.mxu0 %v1047
          %1072 = vmatprep.subr.mxu0 0.0
          %1073 = vmatpush1.msra.mxu0 %v1048
          %1074 = vmatprep.subr.mxu0 0.0
          %1075 = vmatpush1.msra.mxu0 %v1049
          %1076 = vmatprep.subr.mxu0 0.0
          %1077 = vmatpush1.msra.mxu0 %v1050
          %1078 = vmatprep.subr.mxu0 0.0
          %1079 = vmatpush1.msra.mxu0 %v1051
          %1080 = vmatprep.subr.mxu0 0.0
          %1081 = vmatpush1.msra.mxu0 %v1052
          %1082 = vmatprep.subr.mxu0 0.0
          %1083 = vmatpush1.msra.mxu0 %v1053
          %1084 = vmatprep.subr.mxu0 0.0
          %1085 = vmatpush1.msra.mxu0 %v1054
          %1086 = vmatprep.subr.mxu0 0.0
          %1087 = vmatpush1.msra.mxu0 %v1055
          %1088 = vmatprep.subr.mxu0 0.0
          %1089 = vmatpush1.msra.mxu0 0.0
          %1090 = vmatprep.subr.mxu0 0.0
          %1091 = vmatpush1.msra.mxu0 0.0
          %1092 = vmatprep.subr.mxu0 0.0
          %1093 = vmatpush1.msra.mxu0 0.0
          %1094 = vmatprep.subr.mxu0 0.0
          %1095 = vmatpush1.msra.mxu0 0.0
          %1096 = vmatprep.subr.mxu0 0.0
          %1097 = vmatpush1.msra.mxu0 0.0
          %1098 = vmatprep.subr.mxu0 0.0
          %1099 = vmatpush1.msra.mxu0 0.0
          %1100 = vmatprep.subr.mxu0 0.0
          %1101 = vmatpush1.msra.mxu0 0.0
          %1102 = vmatprep.subr.mxu0 0.0
          %1103 = vmatpush1.msra.mxu0 0.0
          %1104 = vmatprep.subr.mxu0 0.0
          %1105 = vmatpush1.msra.mxu0 0.0
          %1106 = vmatprep.subr.mxu0 0.0
          %1107 = vmatpush1.msra.mxu0 0.0
          %1108 = vmatprep.subr.mxu0 0.0
          %1109 = vmatpush1.msra.mxu0 0.0
          %1110 = vmatprep.subr.mxu0 0.0
          %1111 = vmatpush1.msra.mxu0 0.0
          %1112 = vmatprep.subr.mxu0 0.0
          %1113 = vmatpush1.msra.mxu0 0.0
          %1114 = vmatprep.subr.mxu0 0.0
          %1115 = vmatpush1.msra.mxu0 0.0
          %1116 = vmatprep.subr.mxu0 0.0
          %1117 = vmatpush1.msra.mxu0 0.0
          %1118 = vmatprep.subr.mxu0 0.0
          %1119 = vmatpush1.msra.mxu0 0.0
          %1120 = vmatprep.mubr.f32.mxu0 0.0
          %1121 = vmatmul.mubr.f32.gmra.mrb[0].mxu0 %v1039
          %v1122 = vpop.f32.mrb[0].mxu0
          %v1123 = vadd.f32 0.0, %v1122
          %v1124 = vpop.f32.mrb[0].mxu0
          %1125 = vdwg.mxu0
          %1126 = vst [vmem:[#allocation3] sm:$0xff] %v1123
        $region68: #{tpu_custom_call.1} parent=43 // pred_fallthru
          _
        %s1127 = sadd.s32 %s332, 1
        %v1128 = vld [vmem:[#allocation2] sm:$0xff]
        %1129 = vst [vmem:[#allocation3 + $0x8] sm:$0xff] %v1128
        %v1130 = vld [vmem:[#allocation2] sm:$0xff]
        %v1131 = vld [vmem:[#allocation3] sm:$0xff]
        %v1132 = vld [vmem:[#allocation3 + $0x8] sm:$0xff]
        %v1133 = vpack.c.bf16 %v1131, %v1131
        %v1134 = vpack.c.bf16 %v1132, %v1132
        %v1135 = vld [vmem:[#allocation11] sm:$0xff]
        %v1136 = vld [vmem:[#allocation11 + $0x8] sm:$0xff]
        %v1137 = vld [vmem:[#allocation11 + $0x10] sm:$0xff]
        %v1138 = vld [vmem:[#allocation11 + $0x18] sm:$0xff]
        %v1139 = vld [vmem:[#allocation11 + $0x20] sm:$0xff]
        %v1140 = vld [vmem:[#allocation11 + $0x28] sm:$0xff]
        %v1141 = vld [vmem:[#allocation11 + $0x30] sm:$0xff]
        %v1142 = vld [vmem:[#allocation11 + $0x38] sm:$0xff]
        %v1143 = vld [vmem:[#allocation11 + $0x40] sm:$0xff]
        %v1144 = vld [vmem:[#allocation11 + $0x48] sm:$0xff]
        %v1145 = vld [vmem:[#allocation11 + $0x50] sm:$0xff]
        %v1146 = vld [vmem:[#allocation11 + $0x58] sm:$0xff]
        %v1147 = vld [vmem:[#allocation11 + $0x60] sm:$0xff]
        %v1148 = vld [vmem:[#allocation11 + $0x68] sm:$0xff]
        %v1149 = vld [vmem:[#allocation11 + $0x70] sm:$0xff]
        %v1150 = vld [vmem:[#allocation11 + $0x78] sm:$0xff]
        %v1151 = vld [vmem:[#allocation11 + $0x80] sm:$0xff]
        %v1152 = vld [vmem:[#allocation11 + $0x88] sm:$0xff]
        %v1153 = vld [vmem:[#allocation11 + $0x90] sm:$0xff]
        %v1154 = vld [vmem:[#allocation11 + $0x98] sm:$0xff]
        %v1155 = vld [vmem:[#allocation11 + $0xa0] sm:$0xff]
        %v1156 = vld [vmem:[#allocation11 + $0xa8] sm:$0xff]
        %v1157 = vld [vmem:[#allocation11 + $0xb0] sm:$0xff]
        %v1158 = vld [vmem:[#allocation11 + $0xb8] sm:$0xff]
        %v1159 = vld [vmem:[#allocation11 + $0xc0] sm:$0xff]
        %v1160 = vld [vmem:[#allocation11 + $0xc8] sm:$0xff]
        %v1161 = vld [vmem:[#allocation11 + $0xd0] sm:$0xff]
        %v1162 = vld [vmem:[#allocation11 + $0xd8] sm:$0xff]
        %v1163 = vld [vmem:[#allocation11 + $0xe0] sm:$0xff]
        %v1164 = vld [vmem:[#allocation11 + $0xe8] sm:$0xff]
        %v1165 = vld [vmem:[#allocation11 + $0xf0] sm:$0xff]
        %v1166 = vld [vmem:[#allocation11 + $0xf8] sm:$0xff]
        %v1167 = vld [vmem:[#allocation11 + $0x100] sm:$0xff]
        %v1168 = vld [vmem:[#allocation11 + $0x108] sm:$0xff]
        %v1169 = vld [vmem:[#allocation11 + $0x110] sm:$0xff]
        %v1170 = vld [vmem:[#allocation11 + $0x118] sm:$0xff]
        %v1171 = vld [vmem:[#allocation11 + $0x120] sm:$0xff]
        %v1172 = vld [vmem:[#allocation11 + $0x128] sm:$0xff]
        %v1173 = vld [vmem:[#allocation11 + $0x130] sm:$0xff]
        %v1174 = vld [vmem:[#allocation11 + $0x138] sm:$0xff]
        %v1175 = vld [vmem:[#allocation11 + $0x140] sm:$0xff]
        %v1176 = vld [vmem:[#allocation11 + $0x148] sm:$0xff]
        %v1177 = vld [vmem:[#allocation11 + $0x150] sm:$0xff]
        %v1178 = vld [vmem:[#allocation11 + $0x158] sm:$0xff]
        %v1179 = vld [vmem:[#allocation11 + $0x160] sm:$0xff]
        %v1180 = vld [vmem:[#allocation11 + $0x168] sm:$0xff]
        %v1181 = vld [vmem:[#allocation11 + $0x170] sm:$0xff]
        %v1182 = vld [vmem:[#allocation11 + $0x178] sm:$0xff]
        %v1183 = vld [vmem:[#allocation11 + $0x180] sm:$0xff]
        %v1184 = vld [vmem:[#allocation11 + $0x188] sm:$0xff]
        %v1185 = vld [vmem:[#allocation11 + $0x190] sm:$0xff]
        %v1186 = vld [vmem:[#allocation11 + $0x198] sm:$0xff]
        %v1187 = vld [vmem:[#allocation11 + $0x1a0] sm:$0xff]
        %v1188 = vld [vmem:[#allocation11 + $0x1a8] sm:$0xff]
        %v1189 = vld [vmem:[#allocation11 + $0x1b0] sm:$0xff]
        %v1190 = vld [vmem:[#allocation11 + $0x1b8] sm:$0xff]
        %v1191 = vld [vmem:[#allocation11 + $0x1c0] sm:$0xff]
        %v1192 = vld [vmem:[#allocation11 + $0x1c8] sm:$0xff]
        %v1193 = vld [vmem:[#allocation11 + $0x1d0] sm:$0xff]
        %v1194 = vld [vmem:[#allocation11 + $0x1d8] sm:$0xff]
        %v1195 = vld [vmem:[#allocation11 + $0x1e0] sm:$0xff]
        %v1196 = vld [vmem:[#allocation11 + $0x1e8] sm:$0xff]
        %v1197 = vld [vmem:[#allocation11 + $0x1f0] sm:$0xff]
        %v1198 = vld [vmem:[#allocation11 + $0x1f8] sm:$0xff]
        %v1199 = vld [vmem:[%s6] sm:$0xf]
        %v1201 = vlaneseq
        %v1202 = vshrl.u32 %v1201, 7
        %v1203 = vsub.s32 0, %v1202
        %v1204 = vrot.slane %v1199, %v1203
        %v1205 = vlaneseq
        %v1206 = vshrl.u32 %v1205, 7
        %v1207 = vsub.s32 1, %v1206
        %v1208 = vrot.slane %v1199, %v1207
        %v1209 = vlaneseq
        %v1210 = vshrl.u32 %v1209, 7
        %v1211 = vsub.s32 2, %v1210
        %v1212 = vrot.slane %v1199, %v1211
        %v1213 = vlaneseq
        %v1214 = vshrl.u32 %v1213, 7
        %v1215 = vsub.s32 3, %v1214
        %v1216 = vrot.slane %v1199, %v1215
        %v1285 = vunpack.c.l.b16 %v1135
        %v1286 = vunpack.c.h.b16 %v1135
        %v1287 = vunpack.c.l.b16 %v1136
        %v1288 = vunpack.c.h.b16 %v1136
        %v1289 = vunpack.c.l.b16 %v1137
        %v1290 = vunpack.c.h.b16 %v1137
        %v1291 = vunpack.c.l.b16 %v1138
        %v1292 = vunpack.c.h.b16 %v1138
        %v1293 = vunpack.c.l.b16 %v1139
        %v1294 = vunpack.c.h.b16 %v1139
        %v1295 = vunpack.c.l.b16 %v1140
        %v1296 = vunpack.c.h.b16 %v1140
        %v1297 = vunpack.c.l.b16 %v1141
        %v1298 = vunpack.c.h.b16 %v1141
        %v1299 = vunpack.c.l.b16 %v1142
        %v1300 = vunpack.c.h.b16 %v1142
        %v1301 = vunpack.c.l.b16 %v1143
        %v1302 = vunpack.c.h.b16 %v1143
        %v1303 = vunpack.c.l.b16 %v1144
        %v1304 = vunpack.c.h.b16 %v1144
        %v1305 = vunpack.c.l.b16 %v1145
        %v1306 = vunpack.c.h.b16 %v1145
        %v1307 = vunpack.c.l.b16 %v1146
        %v1308 = vunpack.c.h.b16 %v1146
        %v1309 = vunpack.c.l.b16 %v1147
        %v1310 = vunpack.c.h.b16 %v1147
        %v1311 = vunpack.c.l.b16 %v1148
        %v1312 = vunpack.c.h.b16 %v1148
        %v1313 = vunpack.c.l.b16 %v1149
        %v1314 = vunpack.c.h.b16 %v1149
        %v1315 = vunpack.c.l.b16 %v1150
        %v1316 = vunpack.c.h.b16 %v1150
        %v1317 = vunpack.c.l.b16 %v1151
        %v1318 = vunpack.c.h.b16 %v1151
        %v1319 = vunpack.c.l.b16 %v1152
        %v1320 = vunpack.c.h.b16 %v1152
        %v1321 = vunpack.c.l.b16 %v1153
        %v1322 = vunpack.c.h.b16 %v1153
        %v1323 = vunpack.c.l.b16 %v1154
        %v1324 = vunpack.c.h.b16 %v1154
        %v1325 = vunpack.c.l.b16 %v1155
        %v1326 = vunpack.c.h.b16 %v1155
        %v1327 = vunpack.c.l.b16 %v1156
        %v1328 = vunpack.c.h.b16 %v1156
        %v1329 = vunpack.c.l.b16 %v1157
        %v1330 = vunpack.c.h.b16 %v1157
        %v1331 = vunpack.c.l.b16 %v1158
        %v1332 = vunpack.c.h.b16 %v1158
        %v1333 = vunpack.c.l.b16 %v1159
        %v1334 = vunpack.c.h.b16 %v1159
        %v1335 = vunpack.c.l.b16 %v1160
        %v1336 = vunpack.c.h.b16 %v1160
        %v1337 = vunpack.c.l.b16 %v1161
        %v1338 = vunpack.c.h.b16 %v1161
        %v1339 = vunpack.c.l.b16 %v1162
        %v1340 = vunpack.c.h.b16 %v1162
        %v1341 = vunpack.c.l.b16 %v1163
        %v1342 = vunpack.c.h.b16 %v1163
        %v1343 = vunpack.c.l.b16 %v1164
        %v1344 = vunpack.c.h.b16 %v1164
        %v1345 = vunpack.c.l.b16 %v1165
        %v1346 = vunpack.c.h.b16 %v1165
        %v1347 = vunpack.c.l.b16 %v1166
        %v1348 = vunpack.c.h.b16 %v1166
        %v1349 = vunpack.c.l.b16 %v1167
        %v1350 = vunpack.c.h.b16 %v1167
        %v1351 = vunpack.c.l.b16 %v1168
        %v1352 = vunpack.c.h.b16 %v1168
        %v1353 = vunpack.c.l.b16 %v1169
        %v1354 = vunpack.c.h.b16 %v1169
        %v1355 = vunpack.c.l.b16 %v1170
        %v1356 = vunpack.c.h.b16 %v1170
        %v1357 = vunpack.c.l.b16 %v1171
        %v1358 = vunpack.c.h.b16 %v1171
        %v1359 = vunpack.c.l.b16 %v1172
        %v1360 = vunpack.c.h.b16 %v1172
        %v1361 = vunpack.c.l.b16 %v1173
        %v1362 = vunpack.c.h.b16 %v1173
        %v1363 = vunpack.c.l.b16 %v1174
        %v1364 = vunpack.c.h.b16 %v1174
        %v1365 = vunpack.c.l.b16 %v1175
        %v1366 = vunpack.c.h.b16 %v1175
        %v1367 = vunpack.c.l.b16 %v1176
        %v1368 = vunpack.c.h.b16 %v1176
        %v1369 = vunpack.c.l.b16 %v1177
        %v1370 = vunpack.c.h.b16 %v1177
        %v1371 = vunpack.c.l.b16 %v1178
        %v1372 = vunpack.c.h.b16 %v1178
        %v1373 = vunpack.c.l.b16 %v1179
        %v1374 = vunpack.c.h.b16 %v1179
        %v1375 = vunpack.c.l.b16 %v1180
        %v1376 = vunpack.c.h.b16 %v1180
        %v1377 = vunpack.c.l.b16 %v1181
        %v1378 = vunpack.c.h.b16 %v1181
        %v1379 = vunpack.c.l.b16 %v1182
        %v1380 = vunpack.c.h.b16 %v1182
        %v1381 = vunpack.c.l.b16 %v1183
        %v1382 = vunpack.c.h.b16 %v1183
        %v1383 = vunpack.c.l.b16 %v1184
        %v1384 = vunpack.c.h.b16 %v1184
        %v1385 = vunpack.c.l.b16 %v1185
        %v1386 = vunpack.c.h.b16 %v1185
        %v1387 = vunpack.c.l.b16 %v1186
        %v1388 = vunpack.c.h.b16 %v1186
        %v1389 = vunpack.c.l.b16 %v1187
        %v1390 = vunpack.c.h.b16 %v1187
        %v1391 = vunpack.c.l.b16 %v1188
        %v1392 = vunpack.c.h.b16 %v1188
        %v1393 = vunpack.c.l.b16 %v1189
        %v1394 = vunpack.c.h.b16 %v1189
        %v1395 = vunpack.c.l.b16 %v1190
        %v1396 = vunpack.c.h.b16 %v1190
        %v1397 = vunpack.c.l.b16 %v1191
        %v1398 = vunpack.c.h.b16 %v1191
        %v1399 = vunpack.c.l.b16 %v1192
        %v1400 = vunpack.c.h.b16 %v1192
        %v1401 = vunpack.c.l.b16 %v1193
        %v1402 = vunpack.c.h.b16 %v1193
        %v1403 = vunpack.c.l.b16 %v1194
        %v1404 = vunpack.c.h.b16 %v1194
        %v1405 = vunpack.c.l.b16 %v1195
        %v1406 = vunpack.c.h.b16 %v1195
        %v1407 = vunpack.c.l.b16 %v1196
        %v1408 = vunpack.c.h.b16 %v1196
        %v1409 = vunpack.c.l.b16 %v1197
        %v1410 = vunpack.c.h.b16 %v1197
        %v1411 = vunpack.c.l.b16 %v1198
        %v1412 = vunpack.c.h.b16 %v1198
        %v1413 = vpack.c.b16 %v1289, %v1285
        %v1414 = vpack.c.b16 %v1290, %v1286
        %v1415 = vpack.c.b16 %v1291, %v1287
        %v1416 = vpack.c.b16 %v1292, %v1288
        %v1417 = vpack.c.b16 %v1297, %v1293
        %v1418 = vpack.c.b16 %v1298, %v1294
        %v1419 = vpack.c.b16 %v1299, %v1295
        %v1420 = vpack.c.b16 %v1300, %v1296
        %v1421 = vpack.c.b16 %v1305, %v1301
        %v1422 = vpack.c.b16 %v1306, %v1302
        %v1423 = vpack.c.b16 %v1307, %v1303
        %v1424 = vpack.c.b16 %v1308, %v1304
        %v1425 = vpack.c.b16 %v1313, %v1309
        %v1426 = vpack.c.b16 %v1314, %v1310
        %v1427 = vpack.c.b16 %v1315, %v1311
        %v1428 = vpack.c.b16 %v1316, %v1312
        %v1429 = vpack.c.b16 %v1321, %v1317
        %v1430 = vpack.c.b16 %v1322, %v1318
        %v1431 = vpack.c.b16 %v1323, %v1319
        %v1432 = vpack.c.b16 %v1324, %v1320
        %v1433 = vpack.c.b16 %v1329, %v1325
        %v1434 = vpack.c.b16 %v1330, %v1326
        %v1435 = vpack.c.b16 %v1331, %v1327
        %v1436 = vpack.c.b16 %v1332, %v1328
        %v1437 = vpack.c.b16 %v1337, %v1333
        %v1438 = vpack.c.b16 %v1338, %v1334
        %v1439 = vpack.c.b16 %v1339, %v1335
        %v1440 = vpack.c.b16 %v1340, %v1336
        %v1441 = vpack.c.b16 %v1345, %v1341
        %v1442 = vpack.c.b16 %v1346, %v1342
        %v1443 = vpack.c.b16 %v1347, %v1343
        %v1444 = vpack.c.b16 %v1348, %v1344
        %v1445 = vpack.c.b16 %v1353, %v1349
        %v1446 = vpack.c.b16 %v1354, %v1350
        %v1447 = vpack.c.b16 %v1355, %v1351
        %v1448 = vpack.c.b16 %v1356, %v1352
        %v1449 = vpack.c.b16 %v1361, %v1357
        %v1450 = vpack.c.b16 %v1362, %v1358
        %v1451 = vpack.c.b16 %v1363, %v1359
        %v1452 = vpack.c.b16 %v1364, %v1360
        %v1453 = vpack.c.b16 %v1369, %v1365
        %v1454 = vpack.c.b16 %v1370, %v1366
        %v1455 = vpack.c.b16 %v1371, %v1367
        %v1456 = vpack.c.b16 %v1372, %v1368
        %v1457 = vpack.c.b16 %v1377, %v1373
        %v1458 = vpack.c.b16 %v1378, %v1374
        %v1459 = vpack.c.b16 %v1379, %v1375
        %v1460 = vpack.c.b16 %v1380, %v1376
        %v1461 = vpack.c.b16 %v1385, %v1381
        %v1462 = vpack.c.b16 %v1386, %v1382
        %v1463 = vpack.c.b16 %v1387, %v1383
        %v1464 = vpack.c.b16 %v1388, %v1384
        %v1465 = vpack.c.b16 %v1393, %v1389
        %v1466 = vpack.c.b16 %v1394, %v1390
        %v1467 = vpack.c.b16 %v1395, %v1391
        %v1468 = vpack.c.b16 %v1396, %v1392
        %v1469 = vpack.c.b16 %v1401, %v1397
        %v1470 = vpack.c.b16 %v1402, %v1398
        %v1471 = vpack.c.b16 %v1403, %v1399
        %v1472 = vpack.c.b16 %v1404, %v1400
        %v1473 = vpack.c.b16 %v1409, %v1405
        %v1474 = vpack.c.b16 %v1410, %v1406
        %v1475 = vpack.c.b16 %v1411, %v1407
        %v1476 = vpack.c.b16 %v1412, %v1408
        %1541 = vmatprep.subr.bf16.mxu0 %v1414
        %1542 = vmatpush1.bf16.msra.mxu0 %v1413
        %1543 = vmatprep.subr.bf16.mxu0 %v1418
        %1544 = vmatpush1.bf16.msra.mxu0 %v1417
        %1545 = vmatprep.subr.bf16.mxu0 %v1422
        %1546 = vmatpush1.bf16.msra.mxu0 %v1421
        %1547 = vmatprep.subr.bf16.mxu0 %v1426
        %1548 = vmatpush1.bf16.msra.mxu0 %v1425
        %1549 = vmatprep.subr.bf16.mxu0 %v1430
        %1550 = vmatpush1.bf16.msra.mxu0 %v1429
        %1551 = vmatprep.subr.bf16.mxu0 %v1434
        %1552 = vmatpush1.bf16.msra.mxu0 %v1433
        %1553 = vmatprep.subr.bf16.mxu0 %v1438
        %1554 = vmatpush1.bf16.msra.mxu0 %v1437
        %1555 = vmatprep.subr.bf16.mxu0 %v1442
        %1556 = vmatpush1.bf16.msra.mxu0 %v1441
        %1557 = vmatprep.subr.bf16.mxu0 %v1446
        %1558 = vmatpush1.bf16.msra.mxu0 %v1445
        %1559 = vmatprep.subr.bf16.mxu0 %v1450
        %1560 = vmatpush1.bf16.msra.mxu0 %v1449
        %1561 = vmatprep.subr.bf16.mxu0 %v1454
        %1562 = vmatpush1.bf16.msra.mxu0 %v1453
        %1563 = vmatprep.subr.bf16.mxu0 %v1458
        %1564 = vmatpush1.bf16.msra.mxu0 %v1457
        %1565 = vmatprep.subr.bf16.mxu0 %v1462
        %1566 = vmatpush1.bf16.msra.mxu0 %v1461
        %1567 = vmatprep.subr.bf16.mxu0 %v1466
        %1568 = vmatpush1.bf16.msra.mxu0 %v1465
        %1569 = vmatprep.subr.bf16.mxu0 %v1470
        %1570 = vmatpush1.bf16.msra.mxu0 %v1469
        %1571 = vmatprep.subr.bf16.mxu0 %v1474
        %1572 = vmatpush1.bf16.msra.mxu0 %v1473
        %1573 = vmatprep.mubr.bf16.mxu0 %v1134
        %1574 = vmatmul.mubr.bf16.gmra.mrb[0].mxu0 %v1133
        %v1575 = vpop.f32.mrb[0].mxu0
        %v1576 = vadd.f32 %v1204, %v1575
        %v1577 = vpop.f32.mrb[0].mxu0
        %v1578 = vadd.f32 %v1208, %v1577
        %v1579 = vpop.f32.mrb[0].mxu0
        %v1580 = vpop.f32.mrb[0].mxu0
        %1581 = vdwg.mxu0
        %1582 = vmatprep.subr.bf16.mxu0 %v1416
        %1583 = vmatpush1.bf16.msra.mxu0 %v1415
        %1584 = vmatprep.subr.bf16.mxu0 %v1420
        %1585 = vmatpush1.bf16.msra.mxu0 %v1419
        %1586 = vmatprep.subr.bf16.mxu0 %v1424
        %1587 = vmatpush1.bf16.msra.mxu0 %v1423
        %1588 = vmatprep.subr.bf16.mxu0 %v1428
        %1589 = vmatpush1.bf16.msra.mxu0 %v1427
        %1590 = vmatprep.subr.bf16.mxu0 %v1432
        %1591 = vmatpush1.bf16.msra.mxu0 %v1431
        %1592 = vmatprep.subr.bf16.mxu0 %v1436
        %1593 = vmatpush1.bf16.msra.mxu0 %v1435
        %1594 = vmatprep.subr.bf16.mxu0 %v1440
        %1595 = vmatpush1.bf16.msra.mxu0 %v1439
        %1596 = vmatprep.subr.bf16.mxu0 %v1444
        %1597 = vmatpush1.bf16.msra.mxu0 %v1443
        %1598 = vmatprep.subr.bf16.mxu0 %v1448
        %1599 = vmatpush1.bf16.msra.mxu0 %v1447
        %1600 = vmatprep.subr.bf16.mxu0 %v1452
        %1601 = vmatpush1.bf16.msra.mxu0 %v1451
        %1602 = vmatprep.subr.bf16.mxu0 %v1456
        %1603 = vmatpush1.bf16.msra.mxu0 %v1455
        %1604 = vmatprep.subr.bf16.mxu0 %v1460
        %1605 = vmatpush1.bf16.msra.mxu0 %v1459
        %1606 = vmatprep.subr.bf16.mxu0 %v1464
        %1607 = vmatpush1.bf16.msra.mxu0 %v1463
        %1608 = vmatprep.subr.bf16.mxu0 %v1468
        %1609 = vmatpush1.bf16.msra.mxu0 %v1467
        %1610 = vmatprep.subr.bf16.mxu0 %v1472
        %1611 = vmatpush1.bf16.msra.mxu0 %v1471
        %1612 = vmatprep.subr.bf16.mxu0 %v1476
        %1613 = vmatpush1.bf16.msra.mxu0 %v1475
        %1614 = vmatprep.mubr.bf16.mxu0 %v1134
        %1615 = vmatmul.mubr.bf16.gmra.mrb[0].mxu0 %v1133
        %v1616 = vpop.f32.mrb[0].mxu0
        %v1617 = vadd.f32 %v1212, %v1616
        %v1618 = vpop.f32.mrb[0].mxu0
        %v1619 = vadd.f32 %v1216, %v1618
        %v1620 = vpop.f32.mrb[0].mxu0
        %v1621 = vpop.f32.mrb[0].mxu0
        %1622 = vdwg.mxu0
        %v1623 = vxor.u32 %v1576, 2147483648
        %v1624 = vmul.f32 %v1623, 1.442695
        %v1625 = vpow.pop %v1624
        %v1626 = vadd.f32 %v1625, 1.0
        %v1627 = vrcp.pop %v1626
        %v1628 = vmul.f32 1.0, %v1627
        %v1629 = vxor.u32 %v1578, 2147483648
        %v1630 = vmul.f32 %v1629, 1.442695
        %v1631 = vpow.pop %v1630
        %v1632 = vadd.f32 %v1631, 1.0
        %v1633 = vrcp.pop %v1632
        %v1634 = vmul.f32 1.0, %v1633
        %v1635 = vmul.f32 %v1628, %v1619
        %v1636 = vadd.f32 %v1617, %v1635
        %v1637 = vtanh.pop %v1636
        %v1638 = vsub.f32 1.0, %v1634
        %v1639 = vmul.f32 %v1638, %v1637
        %v1640 = vmul.f32 %v1634, %v1130
        %v1641 = vadd.f32 %v1639, %v1640
        %1642 = vst [vmem:[#allocation2] sm:$0xff] %v1641
        %v1643 = vpack.c.bf16 %v1641, %v1641
        %v1644 = vld [vmem:[#allocation13] sm:$0xf]
        %v1645 = vld [vmem:[#allocation13 + $0x4] sm:$0xf]
        %v1646 = vld [vmem:[#allocation13 + $0x8] sm:$0xf]
        %v1647 = vld [vmem:[#allocation13 + $0xc] sm:$0xf]
        %v1648 = vld [vmem:[#allocation13 + $0x10] sm:$0xf]
        %v1649 = vld [vmem:[#allocation13 + $0x14] sm:$0xf]
        %v1650 = vld [vmem:[#allocation13 + $0x18] sm:$0xf]
        %v1651 = vld [vmem:[#allocation13 + $0x1c] sm:$0xf]
        %v1652 = vld [vmem:[#allocation13 + $0x20] sm:$0xf]
        %v1653 = vld [vmem:[#allocation13 + $0x24] sm:$0xf]
        %v1654 = vld [vmem:[#allocation13 + $0x28] sm:$0xf]
        %v1655 = vld [vmem:[#allocation13 + $0x2c] sm:$0xf]
        %v1656 = vld [vmem:[#allocation13 + $0x30] sm:$0xf]
        %v1657 = vld [vmem:[#allocation13 + $0x34] sm:$0xf]
        %v1658 = vld [vmem:[#allocation13 + $0x38] sm:$0xf]
        %v1659 = vld [vmem:[#allocation13 + $0x3c] sm:$0xf]
        %v1660 = vld [vmem:[%s8] sm:$0x1]
        %v1662 = vlaneseq
        %v1663 = vshrl.u32 %v1662, 7
        %v1664 = vsub.s32 0, %v1663
        %v1665 = vrot.slane %v1660, %v1664
        %v1683 = vunpack.c.l.b16 %v1644
        %v1684 = vunpack.c.l.b16 %v1645
        %v1685 = vunpack.c.l.b16 %v1646
        %v1686 = vunpack.c.l.b16 %v1647
        %v1687 = vunpack.c.l.b16 %v1648
        %v1688 = vunpack.c.l.b16 %v1649
        %v1689 = vunpack.c.l.b16 %v1650
        %v1690 = vunpack.c.l.b16 %v1651
        %v1691 = vunpack.c.l.b16 %v1652
        %v1692 = vunpack.c.l.b16 %v1653
        %v1693 = vunpack.c.l.b16 %v1654
        %v1694 = vunpack.c.l.b16 %v1655
        %v1695 = vunpack.c.l.b16 %v1656
        %v1696 = vunpack.c.l.b16 %v1657
        %v1697 = vunpack.c.l.b16 %v1658
        %v1698 = vunpack.c.l.b16 %v1659
        %v1699 = vpack.c.b16 %v1684, %v1683
        %v1700 = vpack.c.b16 %v1686, %v1685
        %v1701 = vpack.c.b16 %v1688, %v1687
        %v1702 = vpack.c.b16 %v1690, %v1689
        %v1703 = vpack.c.b16 %v1692, %v1691
        %v1704 = vpack.c.b16 %v1694, %v1693
        %v1705 = vpack.c.b16 %v1696, %v1695
        %v1706 = vpack.c.b16 %v1698, %v1697
        %1715 = vmatprep.subr.bf16.mxu0 0
        %1716 = vmatpush1.bf16.msra.mxu0 %v1699
        %1717 = vmatprep.subr.bf16.mxu0 0
        %1718 = vmatpush1.bf16.msra.mxu0 %v1700
        %1719 = vmatprep.subr.bf16.mxu0 0
        %1720 = vmatpush1.bf16.msra.mxu0 %v1701
        %1721 = vmatprep.subr.bf16.mxu0 0
        %1722 = vmatpush1.bf16.msra.mxu0 %v1702
        %1723 = vmatprep.subr.bf16.mxu0 0
        %1724 = vmatpush1.bf16.msra.mxu0 %v1703
        %1725 = vmatprep.subr.bf16.mxu0 0
        %1726 = vmatpush1.bf16.msra.mxu0 %v1704
        %1727 = vmatprep.subr.bf16.mxu0 0
        %1728 = vmatpush1.bf16.msra.mxu0 %v1705
        %1729 = vmatprep.subr.bf16.mxu0 0
        %1730 = vmatpush1.bf16.msra.mxu0 %v1706
        %1731 = vmatprep.subr.bf16.mxu0 0
        %1732 = vmatpush1.bf16.msra.mxu0 0
        %1733 = vmatprep.subr.bf16.mxu0 0
        %1734 = vmatpush1.bf16.msra.mxu0 0
        %1735 = vmatprep.subr.bf16.mxu0 0
        %1736 = vmatpush1.bf16.msra.mxu0 0
        %1737 = vmatprep.subr.bf16.mxu0 0
        %1738 = vmatpush1.bf16.msra.mxu0 0
        %1739 = vmatprep.subr.bf16.mxu0 0
        %1740 = vmatpush1.bf16.msra.mxu0 0
        %1741 = vmatprep.subr.bf16.mxu0 0
        %1742 = vmatpush1.bf16.msra.mxu0 0
        %1743 = vmatprep.subr.bf16.mxu0 0
        %1744 = vmatpush1.bf16.msra.mxu0 0
        %1745 = vmatprep.subr.bf16.mxu0 0
        %1746 = vmatpush1.bf16.msra.mxu0 0
        %1747 = vmatprep.mubr.bf16.mxu0 0
        %1748 = vmatmul.mubr.bf16.gmra.mrb[0].mxu0 %v1643
        %v1749 = vpop.f32.mrb[0].mxu0
        %v1750 = vadd.f32 %v1665, %v1749
        %v1751 = vpop.f32.mrb[0].mxu0
        %v1752 = vpop.f32.mrb[0].mxu0
        %v1753 = vpop.f32.mrb[0].mxu0
        %1754 = vdwg.mxu0
        %1755 = vmax.xlane.f32.xlu0 %v1750
        %v1756 = vpop.xlane.xlu0 %1755
        %v1757 = vsub.f32 %v1750, %v1756
        %v1758 = vmul.f32 %v1757, 1.442695
        %v1759 = vpow.pop %v1758
        %1760 = vadd.xlane.f32.xlu0 %v1759
        %v1761 = vpop.xlane.xlu0 %1760
        %v1762 = vlog2.pop %v1761
        %v1763 = vmul.f32 %v1762, 0.6931472
        %v1764 = vadd.f32 %v1756, %v1763
        %v1765 = vsub.f32 %v1750, %v1764
        %s1766 = scalar_lea.vmem %s311, 8 [#allocation14]
        %1767 = vst [vmem:[%s1766] sm:$0xff] %v1765
        %s1768 = sld [smem:[#allocation6 + %s1127]]
        %p1769 = scmp.eq.s32.totalorder %s1768, 1
        // Predicated region
        $region69: #{tpu_custom_call.1} parent=43 // pred_check
          %p1770 = pneg %p1769
        $region70: #{tpu_custom_call.1} parent=43 // pred_check_branch
          %1772 = sbr.rel (%p1770) target = $region72
        $region71: #{tpu_custom_call.1} parent=43 // pred_region
          %s1773 = smul.u32 %s1127, 8
          %s1774 = sld [smem:[#allocation7 + %s1773]]
          %s1775 = scalar_lea.vmem [#allocation8], %s1774
          %v1776 = vld [vmem:[%s1775] sm:$0x1]
          %1777 = vst [vmem:[#allocation3] sm:$0x1] %v1776
          %s1778 = sadd.s32 %s1773, 1
          %s1779 = sld [smem:[#allocation7 + %s1778]]
          %s1780 = scalar_lea.vmem [#allocation8], %s1779
          %v1781 = vld [vmem:[%s1780] sm:$0x1]
          %1782 = vst [vmem:[#allocation3 + $0x1] sm:$0x1] %v1781
          %s1783 = sadd.s32 %s1773, 2
          %s1784 = sld [smem:[#allocation7 + %s1783]]
          %s1785 = scalar_lea.vmem [#allocation8], %s1784
          %v1786 = vld [vmem:[%s1785] sm:$0x1]
          %1787 = vst [vmem:[#allocation3 + $0x2] sm:$0x1] %v1786
          %s1788 = sadd.s32 %s1773, 3
          %s1789 = sld [smem:[#allocation7 + %s1788]]
          %s1790 = scalar_lea.vmem [#allocation8], %s1789
          %v1791 = vld [vmem:[%s1790] sm:$0x1]
          %1792 = vst [vmem:[#allocation3 + $0x3] sm:$0x1] %v1791
          %s1793 = sadd.s32 %s1773, 4
          %s1794 = sld [smem:[#allocation7 + %s1793]]
          %s1795 = scalar_lea.vmem [#allocation8], %s1794
          %v1796 = vld [vmem:[%s1795] sm:$0x1]
          %1797 = vst [vmem:[#allocation3 + $0x4] sm:$0x1] %v1796
          %s1798 = sadd.s32 %s1773, 5
          %s1799 = sld [smem:[#allocation7 + %s1798]]
          %s1800 = scalar_lea.vmem [#allocation8], %s1799
          %v1801 = vld [vmem:[%s1800] sm:$0x1]
          %1802 = vst [vmem:[#allocation3 + $0x5] sm:$0x1] %v1801
          %s1803 = sadd.s32 %s1773, 6
          %s1804 = sld [smem:[#allocation7 + %s1803]]
          %s1805 = scalar_lea.vmem [#allocation8], %s1804
          %v1806 = vld [vmem:[%s1805] sm:$0x1]
          %1807 = vst [vmem:[#allocation3 + $0x6] sm:$0x1] %v1806
          %s1808 = sadd.s32 %s1773, 7
          %s1809 = sld [smem:[#allocation7 + %s1808]]
          %s1810 = scalar_lea.vmem [#allocation8], %s1809
          %v1811 = vld [vmem:[%s1810] sm:$0x1]
          %1812 = vst [vmem:[#allocation3 + $0x7] sm:$0x1] %v1811
        $region72: #{tpu_custom_call.1} parent=43 // pred_fallthru
          _
        %p1813 = scmp.eq.s32.totalorder %s1768, 0
        // Predicated region
        $region73: #{tpu_custom_call.1} parent=43 // pred_check
          %p1814 = pneg %p1813
        $region74: #{tpu_custom_call.1} parent=43 // pred_check_branch
          %1816 = sbr.rel (%p1814) target = $region76
        $region75: #{tpu_custom_call.1} parent=43 // pred_region
          %vm1817 = vcmp.ge.f32.partialorder %v1750, %v1756
          %v1818 = vsel %vm1817, %v331, 128
          %v1819 = vand.u32 %v1818, 65535
          %v1820 = vshra.s32 %v1818, 16
          %v1821 = vcvt.s32.f32 %v1819
          %v1822 = vcvt.s32.f32 %v1820
          %1823 = vmin.xlane.f32.xlu0 %v1822
          %v1824 = vpop.xlane.xlu0 %1823
          %vm1825 = vcmp.eq.f32.partialorder %v1822, %v1824
          %v1826 = vsel %vm1825, %v1821, inf
          %1827 = vmin.xlane.f32.xlu0 %v1826
          %v1828 = vpop.xlane.xlu0 %1827
          %v1829 = vcvt.f32.s32 %v1828
          %v1830 = vcvt.f32.s32 %v1824
          %v1831 = vshll.u32 %v1830, 16
          %v1832 = vadd.s32 %v1831, %v1829
          %vm1833 = vcmp.eq.s32.totalorder %v331, %v1832
          %v1834 = vsel %vm1833, 1, 0
          %v1835 = vcvt.s32.f32 %v1834
          %v1836 = vld [vmem:[#allocation8] sm:$0xff]
          %v1837 = vld [vmem:[#allocation8 + $0x8] sm:$0xff]
          %v1838 = vld [vmem:[#allocation8 + $0x10] sm:$0xff]
          %v1839 = vld [vmem:[#allocation8 + $0x18] sm:$0xff]
          %v1840 = vld [vmem:[#allocation8 + $0x20] sm:$0xff]
          %v1841 = vld [vmem:[#allocation8 + $0x28] sm:$0xff]
          %v1842 = vld [vmem:[#allocation8 + $0x30] sm:$0xff]
          %v1843 = vld [vmem:[#allocation8 + $0x38] sm:$0xff]
          %v1844 = vld [vmem:[#allocation8 + $0x40] sm:$0xff]
          %v1845 = vld [vmem:[#allocation8 + $0x48] sm:$0xff]
          %v1846 = vld [vmem:[#allocation8 + $0x50] sm:$0xff]
          %v1847 = vld [vmem:[#allocation8 + $0x58] sm:$0xff]
          %v1848 = vld [vmem:[#allocation8 + $0x60] sm:$0xff]
          %v1849 = vld [vmem:[#allocation8 + $0x68] sm:$0xff]
          %v1850 = vld [vmem:[#allocation8 + $0x70] sm:$0xff]
          %v1851 = vld [vmem:[#allocation8 + $0x78] sm:$0xff]
          %1852 = vmatprep.subr.mxu0 0.0
          %1853 = vmatpush1.msra.mxu0 %v1836
          %1854 = vmatprep.subr.mxu0 0.0
          %1855 = vmatpush1.msra.mxu0 %v1837
          %1856 = vmatprep.subr.mxu0 0.0
          %1857 = vmatpush1.msra.mxu0 %v1838
          %1858 = vmatprep.subr.mxu0 0.0
          %1859 = vmatpush1.msra.mxu0 %v1839
          %1860 = vmatprep.subr.mxu0 0.0
          %1861 = vmatpush1.msra.mxu0 %v1840
          %1862 = vmatprep.subr.mxu0 0.0
          %1863 = vmatpush1.msra.mxu0 %v1841
          %1864 = vmatprep.subr.mxu0 0.0
          %1865 = vmatpush1.msra.mxu0 %v1842
          %1866 = vmatprep.subr.mxu0 0.0
          %1867 = vmatpush1.msra.mxu0 %v1843
          %1868 = vmatprep.subr.mxu0 0.0
          %1869 = vmatpush1.msra.mxu0 %v1844
          %1870 = vmatprep.subr.mxu0 0.0
          %1871 = vmatpush1.msra.mxu0 %v1845
          %1872 = vmatprep.subr.mxu0 0.0
          %1873 = vmatpush1.msra.mxu0 %v1846
          %1874 = vmatprep.subr.mxu0 0.0
          %1875 = vmatpush1.msra.mxu0 %v1847
          %1876 = vmatprep.subr.mxu0 0.0
          %1877 = vmatpush1.msra.mxu0 %v1848
          %1878 = vmatprep.subr.mxu0 0.0
          %1879 = vmatpush1.msra.mxu0 %v1849
          %1880 = vmatprep.subr.mxu0 0.0
          %1881 = vmatpush1.msra.mxu0 %v1850
          %1882 = vmatprep.subr.mxu0 0.0
          %1883 = vmatpush1.msra.mxu0 %v1851
          %1884 = vmatprep.subr.mxu0 0.0
          %1885 = vmatpush1.msra.mxu0 0.0
          %1886 = vmatprep.subr.mxu0 0.0
          %1887 = vmatpush1.msra.mxu0 0.0
          %1888 = vmatprep.subr.mxu0 0.0
          %1889 = vmatpush1.msra.mxu0 0.0
          %1890 = vmatprep.subr.mxu0 0.0
          %1891 = vmatpush1.msra.mxu0 0.0
          %1892 = vmatprep.subr.mxu0 0.0
          %1893 = vmatpush1.msra.mxu0 0.0
          %1894 = vmatprep.subr.mxu0 0.0
          %1895 = vmatpush1.msra.mxu0 0.0
          %1896 = vmatprep.subr.mxu0 0.0
          %1897 = vmatpush1.msra.mxu0 0.0
          %1898 = vmatprep.subr.mxu0 0.0
          %1899 = vmatpush1.msra.mxu0 0.0
          %1900 = vmatprep.subr.mxu0 0.0
          %1901 = vmatpush1.msra.mxu0 0.0
          %1902 = vmatprep.subr.mxu0 0.0
          %1903 = vmatpush1.msra.mxu0 0.0
          %1904 = vmatprep.subr.mxu0 0.0
          %1905 = vmatpush1.msra.mxu0 0.0
          %1906 = vmatprep.subr.mxu0 0.0
          %1907 = vmatpush1.msra.mxu0 0.0
          %1908 = vmatprep.subr.mxu0 0.0
          %1909 = vmatpush1.msra.mxu0 0.0
          %1910 = vmatprep.subr.mxu0 0.0
          %1911 = vmatpush1.msra.mxu0 0.0
          %1912 = vmatprep.subr.mxu0 0.0
          %1913 = vmatpush1.msra.mxu0 0.0
          %1914 = vmatprep.subr.mxu0 0.0
          %1915 = vmatpush1.msra.mxu0 0.0
          %1916 = vmatprep.mubr.f32.mxu0 0.0
          %1917 = vmatmul.mubr.f32.gmra.mrb[0].mxu0 %v1835
          %v1918 = vpop.f32.mrb[0].mxu0
          %v1919 = vadd.f32 0.0, %v1918
          %v1920 = vpop.f32.mrb[0].mxu0
          %1921 = vdwg.mxu0
          %1922 = vst [vmem:[#allocation3] sm:$0xff] %v1919
        $region76: #{tpu_custom_call.1} parent=43 // pred_fallthru
          _
        %s1923 = sadd.s32 %s332, 2
        %v1924 = vld [vmem:[#allocation2] sm:$0xff]
        %1925 = vst [vmem:[#allocation3 + $0x8] sm:$0xff] %v1924
        %v1926 = vld [vmem:[#allocation2] sm:$0xff]
        %v1927 = vld [vmem:[#allocation3] sm:$0xff]
        %v1928 = vld [vmem:[#allocation3 + $0x8] sm:$0xff]
        %v1929 = vpack.c.bf16 %v1927, %v1927
        %v1930 = vpack.c.bf16 %v1928, %v1928
        %v1931 = vld [vmem:[#allocation11] sm:$0xff]
        %v1932 = vld [vmem:[#allocation11 + $0x8] sm:$0xff]
        %v1933 = vld [vmem:[#allocation11 + $0x10] sm:$0xff]
        %v1934 = vld [vmem:[#allocation11 + $0x18] sm:$0xff]
        %v1935 = vld [vmem:[#allocation11 + $0x20] sm:$0xff]
        %v1936 = vld [vmem:[#allocation11 + $0x28] sm:$0xff]
        %v1937 = vld [vmem:[#allocation11 + $0x30] sm:$0xff]
        %v1938 = vld [vmem:[#allocation11 + $0x38] sm:$0xff]
        %v1939 = vld [vmem:[#allocation11 + $0x40] sm:$0xff]
        %v1940 = vld [vmem:[#allocation11 + $0x48] sm:$0xff]
        %v1941 = vld [vmem:[#allocation11 + $0x50] sm:$0xff]
        %v1942 = vld [vmem:[#allocation11 + $0x58] sm:$0xff]
        %v1943 = vld [vmem:[#allocation11 + $0x60] sm:$0xff]
        %v1944 = vld [vmem:[#allocation11 + $0x68] sm:$0xff]
        %v1945 = vld [vmem:[#allocation11 + $0x70] sm:$0xff]
        %v1946 = vld [vmem:[#allocation11 + $0x78] sm:$0xff]
        %v1947 = vld [vmem:[#allocation11 + $0x80] sm:$0xff]
        %v1948 = vld [vmem:[#allocation11 + $0x88] sm:$0xff]
        %v1949 = vld [vmem:[#allocation11 + $0x90] sm:$0xff]
        %v1950 = vld [vmem:[#allocation11 + $0x98] sm:$0xff]
        %v1951 = vld [vmem:[#allocation11 + $0xa0] sm:$0xff]
        %v1952 = vld [vmem:[#allocation11 + $0xa8] sm:$0xff]
        %v1953 = vld [vmem:[#allocation11 + $0xb0] sm:$0xff]
        %v1954 = vld [vmem:[#allocation11 + $0xb8] sm:$0xff]
        %v1955 = vld [vmem:[#allocation11 + $0xc0] sm:$0xff]
        %v1956 = vld [vmem:[#allocation11 + $0xc8] sm:$0xff]
        %v1957 = vld [vmem:[#allocation11 + $0xd0] sm:$0xff]
        %v1958 = vld [vmem:[#allocation11 + $0xd8] sm:$0xff]
        %v1959 = vld [vmem:[#allocation11 + $0xe0] sm:$0xff]
        %v1960 = vld [vmem:[#allocation11 + $0xe8] sm:$0xff]
        %v1961 = vld [vmem:[#allocation11 + $0xf0] sm:$0xff]
        %v1962 = vld [vmem:[#allocation11 + $0xf8] sm:$0xff]
        %v1963 = vld [vmem:[#allocation11 + $0x100] sm:$0xff]
        %v1964 = vld [vmem:[#allocation11 + $0x108] sm:$0xff]
        %v1965 = vld [vmem:[#allocation11 + $0x110] sm:$0xff]
        %v1966 = vld [vmem:[#allocation11 + $0x118] sm:$0xff]
        %v1967 = vld [vmem:[#allocation11 + $0x120] sm:$0xff]
        %v1968 = vld [vmem:[#allocation11 + $0x128] sm:$0xff]
        %v1969 = vld [vmem:[#allocation11 + $0x130] sm:$0xff]
        %v1970 = vld [vmem:[#allocation11 + $0x138] sm:$0xff]
        %v1971 = vld [vmem:[#allocation11 + $0x140] sm:$0xff]
        %v1972 = vld [vmem:[#allocation11 + $0x148] sm:$0xff]
        %v1973 = vld [vmem:[#allocation11 + $0x150] sm:$0xff]
        %v1974 = vld [vmem:[#allocation11 + $0x158] sm:$0xff]
        %v1975 = vld [vmem:[#allocation11 + $0x160] sm:$0xff]
        %v1976 = vld [vmem:[#allocation11 + $0x168] sm:$0xff]
        %v1977 = vld [vmem:[#allocation11 + $0x170] sm:$0xff]
        %v1978 = vld [vmem:[#allocation11 + $0x178] sm:$0xff]
        %v1979 = vld [vmem:[#allocation11 + $0x180] sm:$0xff]
        %v1980 = vld [vmem:[#allocation11 + $0x188] sm:$0xff]
        %v1981 = vld [vmem:[#allocation11 + $0x190] sm:$0xff]
        %v1982 = vld [vmem:[#allocation11 + $0x198] sm:$0xff]
        %v1983 = vld [vmem:[#allocation11 + $0x1a0] sm:$0xff]
        %v1984 = vld [vmem:[#allocation11 + $0x1a8] sm:$0xff]
        %v1985 = vld [vmem:[#allocation11 + $0x1b0] sm:$0xff]
        %v1986 = vld [vmem:[#allocation11 + $0x1b8] sm:$0xff]
        %v1987 = vld [vmem:[#allocation11 + $0x1c0] sm:$0xff]
        %v1988 = vld [vmem:[#allocation11 + $0x1c8] sm:$0xff]
        %v1989 = vld [vmem:[#allocation11 + $0x1d0] sm:$0xff]
        %v1990 = vld [vmem:[#allocation11 + $0x1d8] sm:$0xff]
        %v1991 = vld [vmem:[#allocation11 + $0x1e0] sm:$0xff]
        %v1992 = vld [vmem:[#allocation11 + $0x1e8] sm:$0xff]
        %v1993 = vld [vmem:[#allocation11 + $0x1f0] sm:$0xff]
        %v1994 = vld [vmem:[#allocation11 + $0x1f8] sm:$0xff]
        %v1995 = vld [vmem:[%s6] sm:$0xf]
        %v1997 = vlaneseq
        %v1998 = vshrl.u32 %v1997, 7
        %v1999 = vsub.s32 0, %v1998
        %v2000 = vrot.slane %v1995, %v1999
        %v2001 = vlaneseq
        %v2002 = vshrl.u32 %v2001, 7
        %v2003 = vsub.s32 1, %v2002
        %v2004 = vrot.slane %v1995, %v2003
        %v2005 = vlaneseq
        %v2006 = vshrl.u32 %v2005, 7
        %v2007 = vsub.s32 2, %v2006
        %v2008 = vrot.slane %v1995, %v2007
        %v2009 = vlaneseq
        %v2010 = vshrl.u32 %v2009, 7
        %v2011 = vsub.s32 3, %v2010
        %v2012 = vrot.slane %v1995, %v2011
        %v2081 = vunpack.c.l.b16 %v1931
        %v2082 = vunpack.c.h.b16 %v1931
        %v2083 = vunpack.c.l.b16 %v1932
        %v2084 = vunpack.c.h.b16 %v1932
        %v2085 = vunpack.c.l.b16 %v1933
        %v2086 = vunpack.c.h.b16 %v1933
        %v2087 = vunpack.c.l.b16 %v1934
        %v2088 = vunpack.c.h.b16 %v1934
        %v2089 = vunpack.c.l.b16 %v1935
        %v2090 = vunpack.c.h.b16 %v1935
        %v2091 = vunpack.c.l.b16 %v1936
        %v2092 = vunpack.c.h.b16 %v1936
        %v2093 = vunpack.c.l.b16 %v1937
        %v2094 = vunpack.c.h.b16 %v1937
        %v2095 = vunpack.c.l.b16 %v1938
        %v2096 = vunpack.c.h.b16 %v1938
        %v2097 = vunpack.c.l.b16 %v1939
        %v2098 = vunpack.c.h.b16 %v1939
        %v2099 = vunpack.c.l.b16 %v1940
        %v2100 = vunpack.c.h.b16 %v1940
        %v2101 = vunpack.c.l.b16 %v1941
        %v2102 = vunpack.c.h.b16 %v1941
        %v2103 = vunpack.c.l.b16 %v1942
        %v2104 = vunpack.c.h.b16 %v1942
        %v2105 = vunpack.c.l.b16 %v1943
        %v2106 = vunpack.c.h.b16 %v1943
        %v2107 = vunpack.c.l.b16 %v1944
        %v2108 = vunpack.c.h.b16 %v1944
        %v2109 = vunpack.c.l.b16 %v1945
        %v2110 = vunpack.c.h.b16 %v1945
        %v2111 = vunpack.c.l.b16 %v1946
        %v2112 = vunpack.c.h.b16 %v1946
        %v2113 = vunpack.c.l.b16 %v1947
        %v2114 = vunpack.c.h.b16 %v1947
        %v2115 = vunpack.c.l.b16 %v1948
        %v2116 = vunpack.c.h.b16 %v1948
        %v2117 = vunpack.c.l.b16 %v1949
        %v2118 = vunpack.c.h.b16 %v1949
        %v2119 = vunpack.c.l.b16 %v1950
        %v2120 = vunpack.c.h.b16 %v1950
        %v2121 = vunpack.c.l.b16 %v1951
        %v2122 = vunpack.c.h.b16 %v1951
        %v2123 = vunpack.c.l.b16 %v1952
        %v2124 = vunpack.c.h.b16 %v1952
        %v2125 = vunpack.c.l.b16 %v1953
        %v2126 = vunpack.c.h.b16 %v1953
        %v2127 = vunpack.c.l.b16 %v1954
        %v2128 = vunpack.c.h.b16 %v1954
        %v2129 = vunpack.c.l.b16 %v1955
        %v2130 = vunpack.c.h.b16 %v1955
        %v2131 = vunpack.c.l.b16 %v1956
        %v2132 = vunpack.c.h.b16 %v1956
        %v2133 = vunpack.c.l.b16 %v1957
        %v2134 = vunpack.c.h.b16 %v1957
        %v2135 = vunpack.c.l.b16 %v1958
        %v2136 = vunpack.c.h.b16 %v1958
        %v2137 = vunpack.c.l.b16 %v1959
        %v2138 = vunpack.c.h.b16 %v1959
        %v2139 = vunpack.c.l.b16 %v1960
        %v2140 = vunpack.c.h.b16 %v1960
        %v2141 = vunpack.c.l.b16 %v1961
        %v2142 = vunpack.c.h.b16 %v1961
        %v2143 = vunpack.c.l.b16 %v1962
        %v2144 = vunpack.c.h.b16 %v1962
        %v2145 = vunpack.c.l.b16 %v1963
        %v2146 = vunpack.c.h.b16 %v1963
        %v2147 = vunpack.c.l.b16 %v1964
        %v2148 = vunpack.c.h.b16 %v1964
        %v2149 = vunpack.c.l.b16 %v1965
        %v2150 = vunpack.c.h.b16 %v1965
        %v2151 = vunpack.c.l.b16 %v1966
        %v2152 = vunpack.c.h.b16 %v1966
        %v2153 = vunpack.c.l.b16 %v1967
        %v2154 = vunpack.c.h.b16 %v1967
        %v2155 = vunpack.c.l.b16 %v1968
        %v2156 = vunpack.c.h.b16 %v1968
        %v2157 = vunpack.c.l.b16 %v1969
        %v2158 = vunpack.c.h.b16 %v1969
        %v2159 = vunpack.c.l.b16 %v1970
        %v2160 = vunpack.c.h.b16 %v1970
        %v2161 = vunpack.c.l.b16 %v1971
        %v2162 = vunpack.c.h.b16 %v1971
        %v2163 = vunpack.c.l.b16 %v1972
        %v2164 = vunpack.c.h.b16 %v1972
        %v2165 = vunpack.c.l.b16 %v1973
        %v2166 = vunpack.c.h.b16 %v1973
        %v2167 = vunpack.c.l.b16 %v1974
        %v2168 = vunpack.c.h.b16 %v1974
        %v2169 = vunpack.c.l.b16 %v1975
        %v2170 = vunpack.c.h.b16 %v1975
        %v2171 = vunpack.c.l.b16 %v1976
        %v2172 = vunpack.c.h.b16 %v1976
        %v2173 = vunpack.c.l.b16 %v1977
        %v2174 = vunpack.c.h.b16 %v1977
        %v2175 = vunpack.c.l.b16 %v1978
        %v2176 = vunpack.c.h.b16 %v1978
        %v2177 = vunpack.c.l.b16 %v1979
        %v2178 = vunpack.c.h.b16 %v1979
        %v2179 = vunpack.c.l.b16 %v1980
        %v2180 = vunpack.c.h.b16 %v1980
        %v2181 = vunpack.c.l.b16 %v1981
        %v2182 = vunpack.c.h.b16 %v1981
        %v2183 = vunpack.c.l.b16 %v1982
        %v2184 = vunpack.c.h.b16 %v1982
        %v2185 = vunpack.c.l.b16 %v1983
        %v2186 = vunpack.c.h.b16 %v1983
        %v2187 = vunpack.c.l.b16 %v1984
        %v2188 = vunpack.c.h.b16 %v1984
        %v2189 = vunpack.c.l.b16 %v1985
        %v2190 = vunpack.c.h.b16 %v1985
        %v2191 = vunpack.c.l.b16 %v1986
        %v2192 = vunpack.c.h.b16 %v1986
        %v2193 = vunpack.c.l.b16 %v1987
        %v2194 = vunpack.c.h.b16 %v1987
        %v2195 = vunpack.c.l.b16 %v1988
        %v2196 = vunpack.c.h.b16 %v1988
        %v2197 = vunpack.c.l.b16 %v1989
        %v2198 = vunpack.c.h.b16 %v1989
        %v2199 = vunpack.c.l.b16 %v1990
        %v2200 = vunpack.c.h.b16 %v1990
        %v2201 = vunpack.c.l.b16 %v1991
        %v2202 = vunpack.c.h.b16 %v1991
        %v2203 = vunpack.c.l.b16 %v1992
        %v2204 = vunpack.c.h.b16 %v1992
        %v2205 = vunpack.c.l.b16 %v1993
        %v2206 = vunpack.c.h.b16 %v1993
        %v2207 = vunpack.c.l.b16 %v1994
        %v2208 = vunpack.c.h.b16 %v1994
        %v2209 = vpack.c.b16 %v2085, %v2081
        %v2210 = vpack.c.b16 %v2086, %v2082
        %v2211 = vpack.c.b16 %v2087, %v2083
        %v2212 = vpack.c.b16 %v2088, %v2084
        %v2213 = vpack.c.b16 %v2093, %v2089
        %v2214 = vpack.c.b16 %v2094, %v2090
        %v2215 = vpack.c.b16 %v2095, %v2091
        %v2216 = vpack.c.b16 %v2096, %v2092
        %v2217 = vpack.c.b16 %v2101, %v2097
        %v2218 = vpack.c.b16 %v2102, %v2098
        %v2219 = vpack.c.b16 %v2103, %v2099
        %v2220 = vpack.c.b16 %v2104, %v2100
        %v2221 = vpack.c.b16 %v2109, %v2105
        %v2222 = vpack.c.b16 %v2110, %v2106
        %v2223 = vpack.c.b16 %v2111, %v2107
        %v2224 = vpack.c.b16 %v2112, %v2108
        %v2225 = vpack.c.b16 %v2117, %v2113
        %v2226 = vpack.c.b16 %v2118, %v2114
        %v2227 = vpack.c.b16 %v2119, %v2115
        %v2228 = vpack.c.b16 %v2120, %v2116
        %v2229 = vpack.c.b16 %v2125, %v2121
        %v2230 = vpack.c.b16 %v2126, %v2122
        %v2231 = vpack.c.b16 %v2127, %v2123
        %v2232 = vpack.c.b16 %v2128, %v2124
        %v2233 = vpack.c.b16 %v2133, %v2129
        %v2234 = vpack.c.b16 %v2134, %v2130
        %v2235 = vpack.c.b16 %v2135, %v2131
        %v2236 = vpack.c.b16 %v2136, %v2132
        %v2237 = vpack.c.b16 %v2141, %v2137
        %v2238 = vpack.c.b16 %v2142, %v2138
        %v2239 = vpack.c.b16 %v2143, %v2139
        %v2240 = vpack.c.b16 %v2144, %v2140
        %v2241 = vpack.c.b16 %v2149, %v2145
        %v2242 = vpack.c.b16 %v2150, %v2146
        %v2243 = vpack.c.b16 %v2151, %v2147
        %v2244 = vpack.c.b16 %v2152, %v2148
        %v2245 = vpack.c.b16 %v2157, %v2153
        %v2246 = vpack.c.b16 %v2158, %v2154
        %v2247 = vpack.c.b16 %v2159, %v2155
        %v2248 = vpack.c.b16 %v2160, %v2156
        %v2249 = vpack.c.b16 %v2165, %v2161
        %v2250 = vpack.c.b16 %v2166, %v2162
        %v2251 = vpack.c.b16 %v2167, %v2163
        %v2252 = vpack.c.b16 %v2168, %v2164
        %v2253 = vpack.c.b16 %v2173, %v2169
        %v2254 = vpack.c.b16 %v2174, %v2170
        %v2255 = vpack.c.b16 %v2175, %v2171
        %v2256 = vpack.c.b16 %v2176, %v2172
        %v2257 = vpack.c.b16 %v2181, %v2177
        %v2258 = vpack.c.b16 %v2182, %v2178
        %v2259 = vpack.c.b16 %v2183, %v2179
        %v2260 = vpack.c.b16 %v2184, %v2180
        %v2261 = vpack.c.b16 %v2189, %v2185
        %v2262 = vpack.c.b16 %v2190, %v2186
        %v2263 = vpack.c.b16 %v2191, %v2187
        %v2264 = vpack.c.b16 %v2192, %v2188
        %v2265 = vpack.c.b16 %v2197, %v2193
        %v2266 = vpack.c.b16 %v2198, %v2194
        %v2267 = vpack.c.b16 %v2199, %v2195
        %v2268 = vpack.c.b16 %v2200, %v2196
        %v2269 = vpack.c.b16 %v2205, %v2201
        %v2270 = vpack.c.b16 %v2206, %v2202
        %v2271 = vpack.c.b16 %v2207, %v2203
        %v2272 = vpack.c.b16 %v2208, %v2204
        %2337 = vmatprep.subr.bf16.mxu0 %v2210
        %2338 = vmatpush1.bf16.msra.mxu0 %v2209
        %2339 = vmatprep.subr.bf16.mxu0 %v2214
        %2340 = vmatpush1.bf16.msra.mxu0 %v2213
        %2341 = vmatprep.subr.bf16.mxu0 %v2218
        %2342 = vmatpush1.bf16.msra.mxu0 %v2217
        %2343 = vmatprep.subr.bf16.mxu0 %v2222
        %2344 = vmatpush1.bf16.msra.mxu0 %v2221
        %2345 = vmatprep.subr.bf16.mxu0 %v2226
        %2346 = vmatpush1.bf16.msra.mxu0 %v2225
        %2347 = vmatprep.subr.bf16.mxu0 %v2230
        %2348 = vmatpush1.bf16.msra.mxu0 %v2229
        %2349 = vmatprep.subr.bf16.mxu0 %v2234
        %2350 = vmatpush1.bf16.msra.mxu0 %v2233
        %2351 = vmatprep.subr.bf16.mxu0 %v2238
        %2352 = vmatpush1.bf16.msra.mxu0 %v2237
        %2353 = vmatprep.subr.bf16.mxu0 %v2242
        %2354 = vmatpush1.bf16.msra.mxu0 %v2241
        %2355 = vmatprep.subr.bf16.mxu0 %v2246
        %2356 = vmatpush1.bf16.msra.mxu0 %v2245
        %2357 = vmatprep.subr.bf16.mxu0 %v2250
        %2358 = vmatpush1.bf16.msra.mxu0 %v2249
        %2359 = vmatprep.subr.bf16.mxu0 %v2254
        %2360 = vmatpush1.bf16.msra.mxu0 %v2253
        %2361 = vmatprep.subr.bf16.mxu0 %v2258
        %2362 = vmatpush1.bf16.msra.mxu0 %v2257
        %2363 = vmatprep.subr.bf16.mxu0 %v2262
        %2364 = vmatpush1.bf16.msra.mxu0 %v2261
        %2365 = vmatprep.subr.bf16.mxu0 %v2266
        %2366 = vmatpush1.bf16.msra.mxu0 %v2265
        %2367 = vmatprep.subr.bf16.mxu0 %v2270
        %2368 = vmatpush1.bf16.msra.mxu0 %v2269
        %2369 = vmatprep.mubr.bf16.mxu0 %v1930
        %2370 = vmatmul.mubr.bf16.gmra.mrb[0].mxu0 %v1929
        %v2371 = vpop.f32.mrb[0].mxu0
        %v2372 = vadd.f32 %v2000, %v2371
        %v2373 = vpop.f32.mrb[0].mxu0
        %v2374 = vadd.f32 %v2004, %v2373
        %v2375 = vpop.f32.mrb[0].mxu0
        %v2376 = vpop.f32.mrb[0].mxu0
        %2377 = vdwg.mxu0
        %2378 = vmatprep.subr.bf16.mxu0 %v2212
        %2379 = vmatpush1.bf16.msra.mxu0 %v2211
        %2380 = vmatprep.subr.bf16.mxu0 %v2216
        %2381 = vmatpush1.bf16.msra.mxu0 %v2215
        %2382 = vmatprep.subr.bf16.mxu0 %v2220
        %2383 = vmatpush1.bf16.msra.mxu0 %v2219
        %2384 = vmatprep.subr.bf16.mxu0 %v2224
        %2385 = vmatpush1.bf16.msra.mxu0 %v2223
        %2386 = vmatprep.subr.bf16.mxu0 %v2228
        %2387 = vmatpush1.bf16.msra.mxu0 %v2227
        %2388 = vmatprep.subr.bf16.mxu0 %v2232
        %2389 = vmatpush1.bf16.msra.mxu0 %v2231
        %2390 = vmatprep.subr.bf16.mxu0 %v2236
        %2391 = vmatpush1.bf16.msra.mxu0 %v2235
        %2392 = vmatprep.subr.bf16.mxu0 %v2240
        %2393 = vmatpush1.bf16.msra.mxu0 %v2239
        %2394 = vmatprep.subr.bf16.mxu0 %v2244
        %2395 = vmatpush1.bf16.msra.mxu0 %v2243
        %2396 = vmatprep.subr.bf16.mxu0 %v2248
        %2397 = vmatpush1.bf16.msra.mxu0 %v2247
        %2398 = vmatprep.subr.bf16.mxu0 %v2252
        %2399 = vmatpush1.bf16.msra.mxu0 %v2251
        %2400 = vmatprep.subr.bf16.mxu0 %v2256
        %2401 = vmatpush1.bf16.msra.mxu0 %v2255
        %2402 = vmatprep.subr.bf16.mxu0 %v2260
        %2403 = vmatpush1.bf16.msra.mxu0 %v2259
        %2404 = vmatprep.subr.bf16.mxu0 %v2264
        %2405 = vmatpush1.bf16.msra.mxu0 %v2263
        %2406 = vmatprep.subr.bf16.mxu0 %v2268
        %2407 = vmatpush1.bf16.msra.mxu0 %v2267
        %2408 = vmatprep.subr.bf16.mxu0 %v2272
        %2409 = vmatpush1.bf16.msra.mxu0 %v2271
        %2410 = vmatprep.mubr.bf16.mxu0 %v1930
        %2411 = vmatmul.mubr.bf16.gmra.mrb[0].mxu0 %v1929
        %v2412 = vpop.f32.mrb[0].mxu0
        %v2413 = vadd.f32 %v2008, %v2412
        %v2414 = vpop.f32.mrb[0].mxu0
        %v2415 = vadd.f32 %v2012, %v2414
        %v2416 = vpop.f32.mrb[0].mxu0
        %v2417 = vpop.f32.mrb[0].mxu0
        %2418 = vdwg.mxu0
        %v2419 = vxor.u32 %v2372, 2147483648
        %v2420 = vmul.f32 %v2419, 1.442695
        %v2421 = vpow.pop %v2420
        %v2422 = vadd.f32 %v2421, 1.0
        %v2423 = vrcp.pop %v2422
        %v2424 = vmul.f32 1.0, %v2423
        %v2425 = vxor.u32 %v2374, 2147483648
        %v2426 = vmul.f32 %v2425, 1.442695
        %v2427 = vpow.pop %v2426
        %v2428 = vadd.f32 %v2427, 1.0
        %v2429 = vrcp.pop %v2428
        %v2430 = vmul.f32 1.0, %v2429
        %v2431 = vmul.f32 %v2424, %v2415
        %v2432 = vadd.f32 %v2413, %v2431
        %v2433 = vtanh.pop %v2432
        %v2434 = vsub.f32 1.0, %v2430
        %v2435 = vmul.f32 %v2434, %v2433
        %v2436 = vmul.f32 %v2430, %v1926
        %v2437 = vadd.f32 %v2435, %v2436
        %2438 = vst [vmem:[#allocation2] sm:$0xff] %v2437
        %v2439 = vpack.c.bf16 %v2437, %v2437
        %v2440 = vld [vmem:[#allocation13] sm:$0xf]
        %v2441 = vld [vmem:[#allocation13 + $0x4] sm:$0xf]
        %v2442 = vld [vmem:[#allocation13 + $0x8] sm:$0xf]
        %v2443 = vld [vmem:[#allocation13 + $0xc] sm:$0xf]
        %v2444 = vld [vmem:[#allocation13 + $0x10] sm:$0xf]
        %v2445 = vld [vmem:[#allocation13 + $0x14] sm:$0xf]
        %v2446 = vld [vmem:[#allocation13 + $0x18] sm:$0xf]
        %v2447 = vld [vmem:[#allocation13 + $0x1c] sm:$0xf]
        %v2448 = vld [vmem:[#allocation13 + $0x20] sm:$0xf]
        %v2449 = vld [vmem:[#allocation13 + $0x24] sm:$0xf]
        %v2450 = vld [vmem:[#allocation13 + $0x28] sm:$0xf]
        %v2451 = vld [vmem:[#allocation13 + $0x2c] sm:$0xf]
        %v2452 = vld [vmem:[#allocation13 + $0x30] sm:$0xf]
        %v2453 = vld [vmem:[#allocation13 + $0x34] sm:$0xf]
        %v2454 = vld [vmem:[#allocation13 + $0x38] sm:$0xf]
        %v2455 = vld [vmem:[#allocation13 + $0x3c] sm:$0xf]
        %v2456 = vld [vmem:[%s8] sm:$0x1]
        %v2458 = vlaneseq
        %v2459 = vshrl.u32 %v2458, 7
        %v2460 = vsub.s32 0, %v2459
        %v2461 = vrot.slane %v2456, %v2460
        %v2479 = vunpack.c.l.b16 %v2440
        %v2480 = vunpack.c.l.b16 %v2441
        %v2481 = vunpack.c.l.b16 %v2442
        %v2482 = vunpack.c.l.b16 %v2443
        %v2483 = vunpack.c.l.b16 %v2444
        %v2484 = vunpack.c.l.b16 %v2445
        %v2485 = vunpack.c.l.b16 %v2446
        %v2486 = vunpack.c.l.b16 %v2447
        %v2487 = vunpack.c.l.b16 %v2448
        %v2488 = vunpack.c.l.b16 %v2449
        %v2489 = vunpack.c.l.b16 %v2450
        %v2490 = vunpack.c.l.b16 %v2451
        %v2491 = vunpack.c.l.b16 %v2452
        %v2492 = vunpack.c.l.b16 %v2453
        %v2493 = vunpack.c.l.b16 %v2454
        %v2494 = vunpack.c.l.b16 %v2455
        %v2495 = vpack.c.b16 %v2480, %v2479
        %v2496 = vpack.c.b16 %v2482, %v2481
        %v2497 = vpack.c.b16 %v2484, %v2483
        %v2498 = vpack.c.b16 %v2486, %v2485
        %v2499 = vpack.c.b16 %v2488, %v2487
        %v2500 = vpack.c.b16 %v2490, %v2489
        %v2501 = vpack.c.b16 %v2492, %v2491
        %v2502 = vpack.c.b16 %v2494, %v2493
        %2511 = vmatprep.subr.bf16.mxu0 0
        %2512 = vmatpush1.bf16.msra.mxu0 %v2495
        %2513 = vmatprep.subr.bf16.mxu0 0
        %2514 = vmatpush1.bf16.msra.mxu0 %v2496
        %2515 = vmatprep.subr.bf16.mxu0 0
        %2516 = vmatpush1.bf16.msra.mxu0 %v2497
        %2517 = vmatprep.subr.bf16.mxu0 0
        %2518 = vmatpush1.bf16.msra.mxu0 %v2498
        %2519 = vmatprep.subr.bf16.mxu0 0
        %2520 = vmatpush1.bf16.msra.mxu0 %v2499
        %2521 = vmatprep.subr.bf16.mxu0 0
        %2522 = vmatpush1.bf16.msra.mxu0 %v2500
        %2523 = vmatprep.subr.bf16.mxu0 0
        %2524 = vmatpush1.bf16.msra.mxu0 %v2501
        %2525 = vmatprep.subr.bf16.mxu0 0
        %2526 = vmatpush1.bf16.msra.mxu0 %v2502
        %2527 = vmatprep.subr.bf16.mxu0 0
        %2528 = vmatpush1.bf16.msra.mxu0 0
        %2529 = vmatprep.subr.bf16.mxu0 0
        %2530 = vmatpush1.bf16.msra.mxu0 0
        %2531 = vmatprep.subr.bf16.mxu0 0
        %2532 = vmatpush1.bf16.msra.mxu0 0
        %2533 = vmatprep.subr.bf16.mxu0 0
        %2534 = vmatpush1.bf16.msra.mxu0 0
        %2535 = vmatprep.subr.bf16.mxu0 0
        %2536 = vmatpush1.bf16.msra.mxu0 0
        %2537 = vmatprep.subr.bf16.mxu0 0
        %2538 = vmatpush1.bf16.msra.mxu0 0
        %2539 = vmatprep.subr.bf16.mxu0 0
        %2540 = vmatpush1.bf16.msra.mxu0 0
        %2541 = vmatprep.subr.bf16.mxu0 0
        %2542 = vmatpush1.bf16.msra.mxu0 0
        %2543 = vmatprep.mubr.bf16.mxu0 0
        %2544 = vmatmul.mubr.bf16.gmra.mrb[0].mxu0 %v2439
        %v2545 = vpop.f32.mrb[0].mxu0
        %v2546 = vadd.f32 %v2461, %v2545
        %v2547 = vpop.f32.mrb[0].mxu0
        %v2548 = vpop.f32.mrb[0].mxu0
        %v2549 = vpop.f32.mrb[0].mxu0
        %2550 = vdwg.mxu0
        %2551 = vmax.xlane.f32.xlu0 %v2546
        %v2552 = vpop.xlane.xlu0 %2551
        %v2553 = vsub.f32 %v2546, %v2552
        %v2554 = vmul.f32 %v2553, 1.442695
        %v2555 = vpow.pop %v2554
        %2556 = vadd.xlane.f32.xlu0 %v2555
        %v2557 = vpop.xlane.xlu0 %2556
        %v2558 = vlog2.pop %v2557
        %v2559 = vmul.f32 %v2558, 0.6931472
        %v2560 = vadd.f32 %v2552, %v2559
        %v2561 = vsub.f32 %v2546, %v2560
        %s2562 = scalar_lea.vmem %s311, 16 [#allocation14]
        %2563 = vst [vmem:[%s2562] sm:$0xff] %v2561
        %s2564 = sld [smem:[#allocation6 + %s1923]]
        %p2565 = scmp.eq.s32.totalorder %s2564, 1
        // Predicated region
        $region77: #{tpu_custom_call.1} parent=43 // pred_check
          %p2566 = pneg %p2565
        $region78: #{tpu_custom_call.1} parent=43 // pred_check_branch
          %2568 = sbr.rel (%p2566) target = $region80
        $region79: #{tpu_custom_call.1} parent=43 // pred_region
          %s2569 = smul.u32 %s1923, 8
          %s2570 = sld [smem:[#allocation7 + %s2569]]
          %s2571 = scalar_lea.vmem [#allocation8], %s2570
          %v2572 = vld [vmem:[%s2571] sm:$0x1]
          %2573 = vst [vmem:[#allocation3] sm:$0x1] %v2572
          %s2574 = sadd.s32 %s2569, 1
          %s2575 = sld [smem:[#allocation7 + %s2574]]
          %s2576 = scalar_lea.vmem [#allocation8], %s2575
          %v2577 = vld [vmem:[%s2576] sm:$0x1]
          %2578 = vst [vmem:[#allocation3 + $0x1] sm:$0x1] %v2577
          %s2579 = sadd.s32 %s2569, 2
          %s2580 = sld [smem:[#allocation7 + %s2579]]
          %s2581 = scalar_lea.vmem [#allocation8], %s2580
          %v2582 = vld [vmem:[%s2581] sm:$0x1]
          %2583 = vst [vmem:[#allocation3 + $0x2] sm:$0x1] %v2582
          %s2584 = sadd.s32 %s2569, 3
          %s2585 = sld [smem:[#allocation7 + %s2584]]
          %s2586 = scalar_lea.vmem [#allocation8], %s2585
          %v2587 = vld [vmem:[%s2586] sm:$0x1]
          %2588 = vst [vmem:[#allocation3 + $0x3] sm:$0x1] %v2587
          %s2589 = sadd.s32 %s2569, 4
          %s2590 = sld [smem:[#allocation7 + %s2589]]
          %s2591 = scalar_lea.vmem [#allocation8], %s2590
          %v2592 = vld [vmem:[%s2591] sm:$0x1]
          %2593 = vst [vmem:[#allocation3 + $0x4] sm:$0x1] %v2592
          %s2594 = sadd.s32 %s2569, 5
          %s2595 = sld [smem:[#allocation7 + %s2594]]
          %s2596 = scalar_lea.vmem [#allocation8], %s2595
          %v2597 = vld [vmem:[%s2596] sm:$0x1]
          %2598 = vst [vmem:[#allocation3 + $0x5] sm:$0x1] %v2597
          %s2599 = sadd.s32 %s2569, 6
          %s2600 = sld [smem:[#allocation7 + %s2599]]
          %s2601 = scalar_lea.vmem [#allocation8], %s2600
          %v2602 = vld [vmem:[%s2601] sm:$0x1]
          %2603 = vst [vmem:[#allocation3 + $0x6] sm:$0x1] %v2602
          %s2604 = sadd.s32 %s2569, 7
          %s2605 = sld [smem:[#allocation7 + %s2604]]
          %s2606 = scalar_lea.vmem [#allocation8], %s2605
          %v2607 = vld [vmem:[%s2606] sm:$0x1]
          %2608 = vst [vmem:[#allocation3 + $0x7] sm:$0x1] %v2607
        $region80: #{tpu_custom_call.1} parent=43 // pred_fallthru
          _
        %p2609 = scmp.eq.s32.totalorder %s2564, 0
        // Predicated region
        $region81: #{tpu_custom_call.1} parent=43 // pred_check
          %p2610 = pneg %p2609
        $region82: #{tpu_custom_call.1} parent=43 // pred_check_branch
          %2612 = sbr.rel (%p2610) target = $region84
        $region83: #{tpu_custom_call.1} parent=43 // pred_region
          %vm2613 = vcmp.ge.f32.partialorder %v2546, %v2552
          %v2614 = vsel %vm2613, %v331, 128
          %v2615 = vand.u32 %v2614, 65535
          %v2616 = vshra.s32 %v2614, 16
          %v2617 = vcvt.s32.f32 %v2615
          %v2618 = vcvt.s32.f32 %v2616
          %2619 = vmin.xlane.f32.xlu0 %v2618
          %v2620 = vpop.xlane.xlu0 %2619
          %vm2621 = vcmp.eq.f32.partialorder %v2618, %v2620
          %v2622 = vsel %vm2621, %v2617, inf
          %2623 = vmin.xlane.f32.xlu0 %v2622
          %v2624 = vpop.xlane.xlu0 %2623
          %v2625 = vcvt.f32.s32 %v2624
          %v2626 = vcvt.f32.s32 %v2620
          %v2627 = vshll.u32 %v2626, 16
          %v2628 = vadd.s32 %v2627, %v2625
          %vm2629 = vcmp.eq.s32.totalorder %v331, %v2628
          %v2630 = vsel %vm2629, 1, 0
          %v2631 = vcvt.s32.f32 %v2630
          %v2632 = vld [vmem:[#allocation8] sm:$0xff]
          %v2633 = vld [vmem:[#allocation8 + $0x8] sm:$0xff]
          %v2634 = vld [vmem:[#allocation8 + $0x10] sm:$0xff]
          %v2635 = vld [vmem:[#allocation8 + $0x18] sm:$0xff]
          %v2636 = vld [vmem:[#allocation8 + $0x20] sm:$0xff]
          %v2637 = vld [vmem:[#allocation8 + $0x28] sm:$0xff]
          %v2638 = vld [vmem:[#allocation8 + $0x30] sm:$0xff]
          %v2639 = vld [vmem:[#allocation8 + $0x38] sm:$0xff]
          %v2640 = vld [vmem:[#allocation8 + $0x40] sm:$0xff]
          %v2641 = vld [vmem:[#allocation8 + $0x48] sm:$0xff]
          %v2642 = vld [vmem:[#allocation8 + $0x50] sm:$0xff]
          %v2643 = vld [vmem:[#allocation8 + $0x58] sm:$0xff]
          %v2644 = vld [vmem:[#allocation8 + $0x60] sm:$0xff]
          %v2645 = vld [vmem:[#allocation8 + $0x68] sm:$0xff]
          %v2646 = vld [vmem:[#allocation8 + $0x70] sm:$0xff]
          %v2647 = vld [vmem:[#allocation8 + $0x78] sm:$0xff]
          %2648 = vmatprep.subr.mxu0 0.0
          %2649 = vmatpush1.msra.mxu0 %v2632
          %2650 = vmatprep.subr.mxu0 0.0
          %2651 = vmatpush1.msra.mxu0 %v2633
          %2652 = vmatprep.subr.mxu0 0.0
          %2653 = vmatpush1.msra.mxu0 %v2634
          %2654 = vmatprep.subr.mxu0 0.0
          %2655 = vmatpush1.msra.mxu0 %v2635
          %2656 = vmatprep.subr.mxu0 0.0
          %2657 = vmatpush1.msra.mxu0 %v2636
          %2658 = vmatprep.subr.mxu0 0.0
          %2659 = vmatpush1.msra.mxu0 %v2637
          %2660 = vmatprep.subr.mxu0 0.0
          %2661 = vmatpush1.msra.mxu0 %v2638
          %2662 = vmatprep.subr.mxu0 0.0
          %2663 = vmatpush1.msra.mxu0 %v2639
          %2664 = vmatprep.subr.mxu0 0.0
          %2665 = vmatpush1.msra.mxu0 %v2640
          %2666 = vmatprep.subr.mxu0 0.0
          %2667 = vmatpush1.msra.mxu0 %v2641
          %2668 = vmatprep.subr.mxu0 0.0
          %2669 = vmatpush1.msra.mxu0 %v2642
          %2670 = vmatprep.subr.mxu0 0.0
          %2671 = vmatpush1.msra.mxu0 %v2643
          %2672 = vmatprep.subr.mxu0 0.0
          %2673 = vmatpush1.msra.mxu0 %v2644
          %2674 = vmatprep.subr.mxu0 0.0
          %2675 = vmatpush1.msra.mxu0 %v2645
          %2676 = vmatprep.subr.mxu0 0.0
          %2677 = vmatpush1.msra.mxu0 %v2646
          %2678 = vmatprep.subr.mxu0 0.0
          %2679 = vmatpush1.msra.mxu0 %v2647
          %2680 = vmatprep.subr.mxu0 0.0
          %2681 = vmatpush1.msra.mxu0 0.0
          %2682 = vmatprep.subr.mxu0 0.0
          %2683 = vmatpush1.msra.mxu0 0.0
          %2684 = vmatprep.subr.mxu0 0.0
          %2685 = vmatpush1.msra.mxu0 0.0
          %2686 = vmatprep.subr.mxu0 0.0
          %2687 = vmatpush1.msra.mxu0 0.0
          %2688 = vmatprep.subr.mxu0 0.0
          %2689 = vmatpush1.msra.mxu0 0.0
          %2690 = vmatprep.subr.mxu0 0.0
          %2691 = vmatpush1.msra.mxu0 0.0
          %2692 = vmatprep.subr.mxu0 0.0
          %2693 = vmatpush1.msra.mxu0 0.0
          %2694 = vmatprep.subr.mxu0 0.0
          %2695 = vmatpush1.msra.mxu0 0.0
          %2696 = vmatprep.subr.mxu0 0.0
          %2697 = vmatpush1.msra.mxu0 0.0
          %2698 = vmatprep.subr.mxu0 0.0
          %2699 = vmatpush1.msra.mxu0 0.0
          %2700 = vmatprep.subr.mxu0 0.0
          %2701 = vmatpush1.msra.mxu0 0.0
          %2702 = vmatprep.subr.mxu0 0.0
          %2703 = vmatpush1.msra.mxu0 0.0
          %2704 = vmatprep.subr.mxu0 0.0
          %2705 = vmatpush1.msra.mxu0 0.0
          %2706 = vmatprep.subr.mxu0 0.0
          %2707 = vmatpush1.msra.mxu0 0.0
          %2708 = vmatprep.subr.mxu0 0.0
          %2709 = vmatpush1.msra.mxu0 0.0
          %2710 = vmatprep.subr.mxu0 0.0
          %2711 = vmatpush1.msra.mxu0 0.0
          %2712 = vmatprep.mubr.f32.mxu0 0.0
          %2713 = vmatmul.mubr.f32.gmra.mrb[0].mxu0 %v2631
          %v2714 = vpop.f32.mrb[0].mxu0
          %v2715 = vadd.f32 0.0, %v2714
          %v2716 = vpop.f32.mrb[0].mxu0
          %2717 = vdwg.mxu0
          %2718 = vst [vmem:[#allocation3] sm:$0xff] %v2715
        $region84: #{tpu_custom_call.1} parent=43 // pred_fallthru
          _
        %s2719 = sadd.s32 %s332, 3
        %v2720 = vld [vmem:[#allocation2] sm:$0xff]
        %2721 = vst [vmem:[#allocation3 + $0x8] sm:$0xff] %v2720
        %v2722 = vld [vmem:[#allocation2] sm:$0xff]
        %v2723 = vld [vmem:[#allocation3] sm:$0xff]
        %v2724 = vld [vmem:[#allocation3 + $0x8] sm:$0xff]
        %v2725 = vpack.c.bf16 %v2723, %v2723
        %v2726 = vpack.c.bf16 %v2724, %v2724
        %v2727 = vld [vmem:[#allocation11] sm:$0xff]
        %v2728 = vld [vmem:[#allocation11 + $0x8] sm:$0xff]
        %v2729 = vld [vmem:[#allocation11 + $0x10] sm:$0xff]
        %v2730 = vld [vmem:[#allocation11 + $0x18] sm:$0xff]
        %v2731 = vld [vmem:[#allocation11 + $0x20] sm:$0xff]
        %v2732 = vld [vmem:[#allocation11 + $0x28] sm:$0xff]
        %v2733 = vld [vmem:[#allocation11 + $0x30] sm:$0xff]
        %v2734 = vld [vmem:[#allocation11 + $0x38] sm:$0xff]
        %v2735 = vld [vmem:[#allocation11 + $0x40] sm:$0xff]
        %v2736 = vld [vmem:[#allocation11 + $0x48] sm:$0xff]
        %v2737 = vld [vmem:[#allocation11 + $0x50] sm:$0xff]
        %v2738 = vld [vmem:[#allocation11 + $0x58] sm:$0xff]
        %v2739 = vld [vmem:[#allocation11 + $0x60] sm:$0xff]
        %v2740 = vld [vmem:[#allocation11 + $0x68] sm:$0xff]
        %v2741 = vld [vmem:[#allocation11 + $0x70] sm:$0xff]
        %v2742 = vld [vmem:[#allocation11 + $0x78] sm:$0xff]
        %v2743 = vld [vmem:[#allocation11 + $0x80] sm:$0xff]
        %v2744 = vld [vmem:[#allocation11 + $0x88] sm:$0xff]
        %v2745 = vld [vmem:[#allocation11 + $0x90] sm:$0xff]
        %v2746 = vld [vmem:[#allocation11 + $0x98] sm:$0xff]
        %v2747 = vld [vmem:[#allocation11 + $0xa0] sm:$0xff]
        %v2748 = vld [vmem:[#allocation11 + $0xa8] sm:$0xff]
        %v2749 = vld [vmem:[#allocation11 + $0xb0] sm:$0xff]
        %v2750 = vld [vmem:[#allocation11 + $0xb8] sm:$0xff]
        %v2751 = vld [vmem:[#allocation11 + $0xc0] sm:$0xff]
        %v2752 = vld [vmem:[#allocation11 + $0xc8] sm:$0xff]
        %v2753 = vld [vmem:[#allocation11 + $0xd0] sm:$0xff]
        %v2754 = vld [vmem:[#allocation11 + $0xd8] sm:$0xff]
        %v2755 = vld [vmem:[#allocation11 + $0xe0] sm:$0xff]
        %v2756 = vld [vmem:[#allocation11 + $0xe8] sm:$0xff]
        %v2757 = vld [vmem:[#allocation11 + $0xf0] sm:$0xff]
        %v2758 = vld [vmem:[#allocation11 + $0xf8] sm:$0xff]
        %v2759 = vld [vmem:[#allocation11 + $0x100] sm:$0xff]
        %v2760 = vld [vmem:[#allocation11 + $0x108] sm:$0xff]
        %v2761 = vld [vmem:[#allocation11 + $0x110] sm:$0xff]
        %v2762 = vld [vmem:[#allocation11 + $0x118] sm:$0xff]
        %v2763 = vld [vmem:[#allocation11 + $0x120] sm:$0xff]
        %v2764 = vld [vmem:[#allocation11 + $0x128] sm:$0xff]
        %v2765 = vld [vmem:[#allocation11 + $0x130] sm:$0xff]
        %v2766 = vld [vmem:[#allocation11 + $0x138] sm:$0xff]
        %v2767 = vld [vmem:[#allocation11 + $0x140] sm:$0xff]
        %v2768 = vld [vmem:[#allocation11 + $0x148] sm:$0xff]
        %v2769 = vld [vmem:[#allocation11 + $0x150] sm:$0xff]
        %v2770 = vld [vmem:[#allocation11 + $0x158] sm:$0xff]
        %v2771 = vld [vmem:[#allocation11 + $0x160] sm:$0xff]
        %v2772 = vld [vmem:[#allocation11 + $0x168] sm:$0xff]
        %v2773 = vld [vmem:[#allocation11 + $0x170] sm:$0xff]
        %v2774 = vld [vmem:[#allocation11 + $0x178] sm:$0xff]
        %v2775 = vld [vmem:[#allocation11 + $0x180] sm:$0xff]
        %v2776 = vld [vmem:[#allocation11 + $0x188] sm:$0xff]
        %v2777 = vld [vmem:[#allocation11 + $0x190] sm:$0xff]
        %v2778 = vld [vmem:[#allocation11 + $0x198] sm:$0xff]
        %v2779 = vld [vmem:[#allocation11 + $0x1a0] sm:$0xff]
        %v2780 = vld [vmem:[#allocation11 + $0x1a8] sm:$0xff]
        %v2781 = vld [vmem:[#allocation11 + $0x1b0] sm:$0xff]
        %v2782 = vld [vmem:[#allocation11 + $0x1b8] sm:$0xff]
        %v2783 = vld [vmem:[#allocation11 + $0x1c0] sm:$0xff]
        %v2784 = vld [vmem:[#allocation11 + $0x1c8] sm:$0xff]
        %v2785 = vld [vmem:[#allocation11 + $0x1d0] sm:$0xff]
        %v2786 = vld [vmem:[#allocation11 + $0x1d8] sm:$0xff]
        %v2787 = vld [vmem:[#allocation11 + $0x1e0] sm:$0xff]
        %v2788 = vld [vmem:[#allocation11 + $0x1e8] sm:$0xff]
        %v2789 = vld [vmem:[#allocation11 + $0x1f0] sm:$0xff]
        %v2790 = vld [vmem:[#allocation11 + $0x1f8] sm:$0xff]
        %v2791 = vld [vmem:[%s6] sm:$0xf]
        %v2793 = vlaneseq
        %v2794 = vshrl.u32 %v2793, 7
        %v2795 = vsub.s32 0, %v2794
        %v2796 = vrot.slane %v2791, %v2795
        %v2797 = vlaneseq
        %v2798 = vshrl.u32 %v2797, 7
        %v2799 = vsub.s32 1, %v2798
        %v2800 = vrot.slane %v2791, %v2799
        %v2801 = vlaneseq
        %v2802 = vshrl.u32 %v2801, 7
        %v2803 = vsub.s32 2, %v2802
        %v2804 = vrot.slane %v2791, %v2803
        %v2805 = vlaneseq
        %v2806 = vshrl.u32 %v2805, 7
        %v2807 = vsub.s32 3, %v2806
        %v2808 = vrot.slane %v2791, %v2807
        %v2877 = vunpack.c.l.b16 %v2727
        %v2878 = vunpack.c.h.b16 %v2727
        %v2879 = vunpack.c.l.b16 %v2728
        %v2880 = vunpack.c.h.b16 %v2728
        %v2881 = vunpack.c.l.b16 %v2729
        %v2882 = vunpack.c.h.b16 %v2729
        %v2883 = vunpack.c.l.b16 %v2730
        %v2884 = vunpack.c.h.b16 %v2730
        %v2885 = vunpack.c.l.b16 %v2731
        %v2886 = vunpack.c.h.b16 %v2731
        %v2887 = vunpack.c.l.b16 %v2732
        %v2888 = vunpack.c.h.b16 %v2732
        %v2889 = vunpack.c.l.b16 %v2733
        %v2890 = vunpack.c.h.b16 %v2733
        %v2891 = vunpack.c.l.b16 %v2734
        %v2892 = vunpack.c.h.b16 %v2734
        %v2893 = vunpack.c.l.b16 %v2735
        %v2894 = vunpack.c.h.b16 %v2735
        %v2895 = vunpack.c.l.b16 %v2736
        %v2896 = vunpack.c.h.b16 %v2736
        %v2897 = vunpack.c.l.b16 %v2737
        %v2898 = vunpack.c.h.b16 %v2737
        %v2899 = vunpack.c.l.b16 %v2738
        %v2900 = vunpack.c.h.b16 %v2738
        %v2901 = vunpack.c.l.b16 %v2739
        %v2902 = vunpack.c.h.b16 %v2739
        %v2903 = vunpack.c.l.b16 %v2740
        %v2904 = vunpack.c.h.b16 %v2740
        %v2905 = vunpack.c.l.b16 %v2741
        %v2906 = vunpack.c.h.b16 %v2741
        %v2907 = vunpack.c.l.b16 %v2742
        %v2908 = vunpack.c.h.b16 %v2742
        %v2909 = vunpack.c.l.b16 %v2743
        %v2910 = vunpack.c.h.b16 %v2743
        %v2911 = vunpack.c.l.b16 %v2744
        %v2912 = vunpack.c.h.b16 %v2744
        %v2913 = vunpack.c.l.b16 %v2745
        %v2914 = vunpack.c.h.b16 %v2745
        %v2915 = vunpack.c.l.b16 %v2746
        %v2916 = vunpack.c.h.b16 %v2746
        %v2917 = vunpack.c.l.b16 %v2747
        %v2918 = vunpack.c.h.b16 %v2747
        %v2919 = vunpack.c.l.b16 %v2748
        %v2920 = vunpack.c.h.b16 %v2748
        %v2921 = vunpack.c.l.b16 %v2749
        %v2922 = vunpack.c.h.b16 %v2749
        %v2923 = vunpack.c.l.b16 %v2750
        %v2924 = vunpack.c.h.b16 %v2750
        %v2925 = vunpack.c.l.b16 %v2751
        %v2926 = vunpack.c.h.b16 %v2751
        %v2927 = vunpack.c.l.b16 %v2752
        %v2928 = vunpack.c.h.b16 %v2752
        %v2929 = vunpack.c.l.b16 %v2753
        %v2930 = vunpack.c.h.b16 %v2753
        %v2931 = vunpack.c.l.b16 %v2754
        %v2932 = vunpack.c.h.b16 %v2754
        %v2933 = vunpack.c.l.b16 %v2755
        %v2934 = vunpack.c.h.b16 %v2755
        %v2935 = vunpack.c.l.b16 %v2756
        %v2936 = vunpack.c.h.b16 %v2756
        %v2937 = vunpack.c.l.b16 %v2757
        %v2938 = vunpack.c.h.b16 %v2757
        %v2939 = vunpack.c.l.b16 %v2758
        %v2940 = vunpack.c.h.b16 %v2758
        %v2941 = vunpack.c.l.b16 %v2759
        %v2942 = vunpack.c.h.b16 %v2759
        %v2943 = vunpack.c.l.b16 %v2760
        %v2944 = vunpack.c.h.b16 %v2760
        %v2945 = vunpack.c.l.b16 %v2761
        %v2946 = vunpack.c.h.b16 %v2761
        %v2947 = vunpack.c.l.b16 %v2762
        %v2948 = vunpack.c.h.b16 %v2762
        %v2949 = vunpack.c.l.b16 %v2763
        %v2950 = vunpack.c.h.b16 %v2763
        %v2951 = vunpack.c.l.b16 %v2764
        %v2952 = vunpack.c.h.b16 %v2764
        %v2953 = vunpack.c.l.b16 %v2765
        %v2954 = vunpack.c.h.b16 %v2765
        %v2955 = vunpack.c.l.b16 %v2766
        %v2956 = vunpack.c.h.b16 %v2766
        %v2957 = vunpack.c.l.b16 %v2767
        %v2958 = vunpack.c.h.b16 %v2767
        %v2959 = vunpack.c.l.b16 %v2768
        %v2960 = vunpack.c.h.b16 %v2768
        %v2961 = vunpack.c.l.b16 %v2769
        %v2962 = vunpack.c.h.b16 %v2769
        %v2963 = vunpack.c.l.b16 %v2770
        %v2964 = vunpack.c.h.b16 %v2770
        %v2965 = vunpack.c.l.b16 %v2771
        %v2966 = vunpack.c.h.b16 %v2771
        %v2967 = vunpack.c.l.b16 %v2772
        %v2968 = vunpack.c.h.b16 %v2772
        %v2969 = vunpack.c.l.b16 %v2773
        %v2970 = vunpack.c.h.b16 %v2773
        %v2971 = vunpack.c.l.b16 %v2774
        %v2972 = vunpack.c.h.b16 %v2774
        %v2973 = vunpack.c.l.b16 %v2775
        %v2974 = vunpack.c.h.b16 %v2775
        %v2975 = vunpack.c.l.b16 %v2776
        %v2976 = vunpack.c.h.b16 %v2776
        %v2977 = vunpack.c.l.b16 %v2777
        %v2978 = vunpack.c.h.b16 %v2777
        %v2979 = vunpack.c.l.b16 %v2778
        %v2980 = vunpack.c.h.b16 %v2778
        %v2981 = vunpack.c.l.b16 %v2779
        %v2982 = vunpack.c.h.b16 %v2779
        %v2983 = vunpack.c.l.b16 %v2780
        %v2984 = vunpack.c.h.b16 %v2780
        %v2985 = vunpack.c.l.b16 %v2781
        %v2986 = vunpack.c.h.b16 %v2781
        %v2987 = vunpack.c.l.b16 %v2782
        %v2988 = vunpack.c.h.b16 %v2782
        %v2989 = vunpack.c.l.b16 %v2783
        %v2990 = vunpack.c.h.b16 %v2783
        %v2991 = vunpack.c.l.b16 %v2784
        %v2992 = vunpack.c.h.b16 %v2784
        %v2993 = vunpack.c.l.b16 %v2785
        %v2994 = vunpack.c.h.b16 %v2785
        %v2995 = vunpack.c.l.b16 %v2786
        %v2996 = vunpack.c.h.b16 %v2786
        %v2997 = vunpack.c.l.b16 %v2787
        %v2998 = vunpack.c.h.b16 %v2787
        %v2999 = vunpack.c.l.b16 %v2788
        %v3000 = vunpack.c.h.b16 %v2788
        %v3001 = vunpack.c.l.b16 %v2789
        %v3002 = vunpack.c.h.b16 %v2789
        %v3003 = vunpack.c.l.b16 %v2790
        %v3004 = vunpack.c.h.b16 %v2790
        %v3005 = vpack.c.b16 %v2881, %v2877
        %v3006 = vpack.c.b16 %v2882, %v2878
        %v3007 = vpack.c.b16 %v2883, %v2879
        %v3008 = vpack.c.b16 %v2884, %v2880
        %v3009 = vpack.c.b16 %v2889, %v2885
        %v3010 = vpack.c.b16 %v2890, %v2886
        %v3011 = vpack.c.b16 %v2891, %v2887
        %v3012 = vpack.c.b16 %v2892, %v2888
        %v3013 = vpack.c.b16 %v2897, %v2893
        %v3014 = vpack.c.b16 %v2898, %v2894
        %v3015 = vpack.c.b16 %v2899, %v2895
        %v3016 = vpack.c.b16 %v2900, %v2896
        %v3017 = vpack.c.b16 %v2905, %v2901
        %v3018 = vpack.c.b16 %v2906, %v2902
        %v3019 = vpack.c.b16 %v2907, %v2903
        %v3020 = vpack.c.b16 %v2908, %v2904
        %v3021 = vpack.c.b16 %v2913, %v2909
        %v3022 = vpack.c.b16 %v2914, %v2910
        %v3023 = vpack.c.b16 %v2915, %v2911
        %v3024 = vpack.c.b16 %v2916, %v2912
        %v3025 = vpack.c.b16 %v2921, %v2917
        %v3026 = vpack.c.b16 %v2922, %v2918
        %v3027 = vpack.c.b16 %v2923, %v2919
        %v3028 = vpack.c.b16 %v2924, %v2920
        %v3029 = vpack.c.b16 %v2929, %v2925
        %v3030 = vpack.c.b16 %v2930, %v2926
        %v3031 = vpack.c.b16 %v2931, %v2927
        %v3032 = vpack.c.b16 %v2932, %v2928
        %v3033 = vpack.c.b16 %v2937, %v2933
        %v3034 = vpack.c.b16 %v2938, %v2934
        %v3035 = vpack.c.b16 %v2939, %v2935
        %v3036 = vpack.c.b16 %v2940, %v2936
        %v3037 = vpack.c.b16 %v2945, %v2941
        %v3038 = vpack.c.b16 %v2946, %v2942
        %v3039 = vpack.c.b16 %v2947, %v2943
        %v3040 = vpack.c.b16 %v2948, %v2944
        %v3041 = vpack.c.b16 %v2953, %v2949
        %v3042 = vpack.c.b16 %v2954, %v2950
        %v3043 = vpack.c.b16 %v2955, %v2951
        %v3044 = vpack.c.b16 %v2956, %v2952
        %v3045 = vpack.c.b16 %v2961, %v2957
        %v3046 = vpack.c.b16 %v2962, %v2958
        %v3047 = vpack.c.b16 %v2963, %v2959
        %v3048 = vpack.c.b16 %v2964, %v2960
        %v3049 = vpack.c.b16 %v2969, %v2965
        %v3050 = vpack.c.b16 %v2970, %v2966
        %v3051 = vpack.c.b16 %v2971, %v2967
        %v3052 = vpack.c.b16 %v2972, %v2968
        %v3053 = vpack.c.b16 %v2977, %v2973
        %v3054 = vpack.c.b16 %v2978, %v2974
        %v3055 = vpack.c.b16 %v2979, %v2975
        %v3056 = vpack.c.b16 %v2980, %v2976
        %v3057 = vpack.c.b16 %v2985, %v2981
        %v3058 = vpack.c.b16 %v2986, %v2982
        %v3059 = vpack.c.b16 %v2987, %v2983
        %v3060 = vpack.c.b16 %v2988, %v2984
        %v3061 = vpack.c.b16 %v2993, %v2989
        %v3062 = vpack.c.b16 %v2994, %v2990
        %v3063 = vpack.c.b16 %v2995, %v2991
        %v3064 = vpack.c.b16 %v2996, %v2992
        %v3065 = vpack.c.b16 %v3001, %v2997
        %v3066 = vpack.c.b16 %v3002, %v2998
        %v3067 = vpack.c.b16 %v3003, %v2999
        %v3068 = vpack.c.b16 %v3004, %v3000
        %3133 = vmatprep.subr.bf16.mxu0 %v3006
        %3134 = vmatpush1.bf16.msra.mxu0 %v3005
        %3135 = vmatprep.subr.bf16.mxu0 %v3010
        %3136 = vmatpush1.bf16.msra.mxu0 %v3009
        %3137 = vmatprep.subr.bf16.mxu0 %v3014
        %3138 = vmatpush1.bf16.msra.mxu0 %v3013
        %3139 = vmatprep.subr.bf16.mxu0 %v3018
        %3140 = vmatpush1.bf16.msra.mxu0 %v3017
        %3141 = vmatprep.subr.bf16.mxu0 %v3022
        %3142 = vmatpush1.bf16.msra.mxu0 %v3021
        %3143 = vmatprep.subr.bf16.mxu0 %v3026
        %3144 = vmatpush1.bf16.msra.mxu0 %v3025
        %3145 = vmatprep.subr.bf16.mxu0 %v3030
        %3146 = vmatpush1.bf16.msra.mxu0 %v3029
        %3147 = vmatprep.subr.bf16.mxu0 %v3034
        %3148 = vmatpush1.bf16.msra.mxu0 %v3033
        %3149 = vmatprep.subr.bf16.mxu0 %v3038
        %3150 = vmatpush1.bf16.msra.mxu0 %v3037
        %3151 = vmatprep.subr.bf16.mxu0 %v3042
        %3152 = vmatpush1.bf16.msra.mxu0 %v3041
        %3153 = vmatprep.subr.bf16.mxu0 %v3046
        %3154 = vmatpush1.bf16.msra.mxu0 %v3045
        %3155 = vmatprep.subr.bf16.mxu0 %v3050
        %3156 = vmatpush1.bf16.msra.mxu0 %v3049
        %3157 = vmatprep.subr.bf16.mxu0 %v3054
        %3158 = vmatpush1.bf16.msra.mxu0 %v3053
        %3159 = vmatprep.subr.bf16.mxu0 %v3058
        %3160 = vmatpush1.bf16.msra.mxu0 %v3057
        %3161 = vmatprep.subr.bf16.mxu0 %v3062
        %3162 = vmatpush1.bf16.msra.mxu0 %v3061
        %3163 = vmatprep.subr.bf16.mxu0 %v3066
        %3164 = vmatpush1.bf16.msra.mxu0 %v3065
        %3165 = vmatprep.mubr.bf16.mxu0 %v2726
        %3166 = vmatmul.mubr.bf16.gmra.mrb[0].mxu0 %v2725
        %v3167 = vpop.f32.mrb[0].mxu0
        %v3168 = vadd.f32 %v2796, %v3167
        %v3169 = vpop.f32.mrb[0].mxu0
        %v3170 = vadd.f32 %v2800, %v3169
        %v3171 = vpop.f32.mrb[0].mxu0
        %v3172 = vpop.f32.mrb[0].mxu0
        %3173 = vdwg.mxu0
        %3174 = vmatprep.subr.bf16.mxu0 %v3008
        %3175 = vmatpush1.bf16.msra.mxu0 %v3007
        %3176 = vmatprep.subr.bf16.mxu0 %v3012
        %3177 = vmatpush1.bf16.msra.mxu0 %v3011
        %3178 = vmatprep.subr.bf16.mxu0 %v3016
        %3179 = vmatpush1.bf16.msra.mxu0 %v3015
        %3180 = vmatprep.subr.bf16.mxu0 %v3020
        %3181 = vmatpush1.bf16.msra.mxu0 %v3019
        %3182 = vmatprep.subr.bf16.mxu0 %v3024
        %3183 = vmatpush1.bf16.msra.mxu0 %v3023
        %3184 = vmatprep.subr.bf16.mxu0 %v3028
        %3185 = vmatpush1.bf16.msra.mxu0 %v3027
        %3186 = vmatprep.subr.bf16.mxu0 %v3032
        %3187 = vmatpush1.bf16.msra.mxu0 %v3031
        %3188 = vmatprep.subr.bf16.mxu0 %v3036
        %3189 = vmatpush1.bf16.msra.mxu0 %v3035
        %3190 = vmatprep.subr.bf16.mxu0 %v3040
        %3191 = vmatpush1.bf16.msra.mxu0 %v3039
        %3192 = vmatprep.subr.bf16.mxu0 %v3044
        %3193 = vmatpush1.bf16.msra.mxu0 %v3043
        %3194 = vmatprep.subr.bf16.mxu0 %v3048
        %3195 = vmatpush1.bf16.msra.mxu0 %v3047
        %3196 = vmatprep.subr.bf16.mxu0 %v3052
        %3197 = vmatpush1.bf16.msra.mxu0 %v3051
        %3198 = vmatprep.subr.bf16.mxu0 %v3056
        %3199 = vmatpush1.bf16.msra.mxu0 %v3055
        %3200 = vmatprep.subr.bf16.mxu0 %v3060
        %3201 = vmatpush1.bf16.msra.mxu0 %v3059
        %3202 = vmatprep.subr.bf16.mxu0 %v3064
        %3203 = vmatpush1.bf16.msra.mxu0 %v3063
        %3204 = vmatprep.subr.bf16.mxu0 %v3068
        %3205 = vmatpush1.bf16.msra.mxu0 %v3067
        %3206 = vmatprep.mubr.bf16.mxu0 %v2726
        %3207 = vmatmul.mubr.bf16.gmra.mrb[0].mxu0 %v2725
        %v3208 = vpop.f32.mrb[0].mxu0
        %v3209 = vadd.f32 %v2804, %v3208
        %v3210 = vpop.f32.mrb[0].mxu0
        %v3211 = vadd.f32 %v2808, %v3210
        %v3212 = vpop.f32.mrb[0].mxu0
        %v3213 = vpop.f32.mrb[0].mxu0
        %3214 = vdwg.mxu0
        %v3215 = vxor.u32 %v3168, 2147483648
        %v3216 = vmul.f32 %v3215, 1.442695
        %v3217 = vpow.pop %v3216
        %v3218 = vadd.f32 %v3217, 1.0
        %v3219 = vrcp.pop %v3218
        %v3220 = vmul.f32 1.0, %v3219
        %v3221 = vxor.u32 %v3170, 2147483648
        %v3222 = vmul.f32 %v3221, 1.442695
        %v3223 = vpow.pop %v3222
        %v3224 = vadd.f32 %v3223, 1.0
        %v3225 = vrcp.pop %v3224
        %v3226 = vmul.f32 1.0, %v3225
        %v3227 = vmul.f32 %v3220, %v3211
        %v3228 = vadd.f32 %v3209, %v3227
        %v3229 = vtanh.pop %v3228
        %v3230 = vsub.f32 1.0, %v3226
        %v3231 = vmul.f32 %v3230, %v3229
        %v3232 = vmul.f32 %v3226, %v2722
        %v3233 = vadd.f32 %v3231, %v3232
        %3234 = vst [vmem:[#allocation2] sm:$0xff] %v3233
        %v3235 = vpack.c.bf16 %v3233, %v3233
        %v3236 = vld [vmem:[#allocation13] sm:$0xf]
        %v3237 = vld [vmem:[#allocation13 + $0x4] sm:$0xf]
        %v3238 = vld [vmem:[#allocation13 + $0x8] sm:$0xf]
        %v3239 = vld [vmem:[#allocation13 + $0xc] sm:$0xf]
        %v3240 = vld [vmem:[#allocation13 + $0x10] sm:$0xf]
        %v3241 = vld [vmem:[#allocation13 + $0x14] sm:$0xf]
        %v3242 = vld [vmem:[#allocation13 + $0x18] sm:$0xf]
        %v3243 = vld [vmem:[#allocation13 + $0x1c] sm:$0xf]
        %v3244 = vld [vmem:[#allocation13 + $0x20] sm:$0xf]
        %v3245 = vld [vmem:[#allocation13 + $0x24] sm:$0xf]
        %v3246 = vld [vmem:[#allocation13 + $0x28] sm:$0xf]
        %v3247 = vld [vmem:[#allocation13 + $0x2c] sm:$0xf]
        %v3248 = vld [vmem:[#allocation13 + $0x30] sm:$0xf]
        %v3249 = vld [vmem:[#allocation13 + $0x34] sm:$0xf]
        %v3250 = vld [vmem:[#allocation13 + $0x38] sm:$0xf]
        %v3251 = vld [vmem:[#allocation13 + $0x3c] sm:$0xf]
        %v3252 = vld [vmem:[%s8] sm:$0x1]
        %v3254 = vlaneseq
        %v3255 = vshrl.u32 %v3254, 7
        %v3256 = vsub.s32 0, %v3255
        %v3257 = vrot.slane %v3252, %v3256
        %v3275 = vunpack.c.l.b16 %v3236
        %v3276 = vunpack.c.l.b16 %v3237
        %v3277 = vunpack.c.l.b16 %v3238
        %v3278 = vunpack.c.l.b16 %v3239
        %v3279 = vunpack.c.l.b16 %v3240
        %v3280 = vunpack.c.l.b16 %v3241
        %v3281 = vunpack.c.l.b16 %v3242
        %v3282 = vunpack.c.l.b16 %v3243
        %v3283 = vunpack.c.l.b16 %v3244
        %v3284 = vunpack.c.l.b16 %v3245
        %v3285 = vunpack.c.l.b16 %v3246
        %v3286 = vunpack.c.l.b16 %v3247
        %v3287 = vunpack.c.l.b16 %v3248
        %v3288 = vunpack.c.l.b16 %v3249
        %v3289 = vunpack.c.l.b16 %v3250
        %v3290 = vunpack.c.l.b16 %v3251
        %v3291 = vpack.c.b16 %v3276, %v3275
        %v3292 = vpack.c.b16 %v3278, %v3277
        %v3293 = vpack.c.b16 %v3280, %v3279
        %v3294 = vpack.c.b16 %v3282, %v3281
        %v3295 = vpack.c.b16 %v3284, %v3283
        %v3296 = vpack.c.b16 %v3286, %v3285
        %v3297 = vpack.c.b16 %v3288, %v3287
        %v3298 = vpack.c.b16 %v3290, %v3289
        %3307 = vmatprep.subr.bf16.mxu0 0
        %3308 = vmatpush1.bf16.msra.mxu0 %v3291
        %3309 = vmatprep.subr.bf16.mxu0 0
        %3310 = vmatpush1.bf16.msra.mxu0 %v3292
        %3311 = vmatprep.subr.bf16.mxu0 0
        %3312 = vmatpush1.bf16.msra.mxu0 %v3293
        %3313 = vmatprep.subr.bf16.mxu0 0
        %3314 = vmatpush1.bf16.msra.mxu0 %v3294
        %3315 = vmatprep.subr.bf16.mxu0 0
        %3316 = vmatpush1.bf16.msra.mxu0 %v3295
        %3317 = vmatprep.subr.bf16.mxu0 0
        %3318 = vmatpush1.bf16.msra.mxu0 %v3296
        %3319 = vmatprep.subr.bf16.mxu0 0
        %3320 = vmatpush1.bf16.msra.mxu0 %v3297
        %3321 = vmatprep.subr.bf16.mxu0 0
        %3322 = vmatpush1.bf16.msra.mxu0 %v3298
        %3323 = vmatprep.subr.bf16.mxu0 0
        %3324 = vmatpush1.bf16.msra.mxu0 0
        %3325 = vmatprep.subr.bf16.mxu0 0
        %3326 = vmatpush1.bf16.msra.mxu0 0
        %3327 = vmatprep.subr.bf16.mxu0 0
        %3328 = vmatpush1.bf16.msra.mxu0 0
        %3329 = vmatprep.subr.bf16.mxu0 0
        %3330 = vmatpush1.bf16.msra.mxu0 0
        %3331 = vmatprep.subr.bf16.mxu0 0
        %3332 = vmatpush1.bf16.msra.mxu0 0
        %3333 = vmatprep.subr.bf16.mxu0 0
        %3334 = vmatpush1.bf16.msra.mxu0 0
        %3335 = vmatprep.subr.bf16.mxu0 0
        %3336 = vmatpush1.bf16.msra.mxu0 0
        %3337 = vmatprep.subr.bf16.mxu0 0
        %3338 = vmatpush1.bf16.msra.mxu0 0
        %3339 = vmatprep.mubr.bf16.mxu0 0
        %3340 = vmatmul.mubr.bf16.gmra.mrb[0].mxu0 %v3235
        %v3341 = vpop.f32.mrb[0].mxu0
        %v3342 = vadd.f32 %v3257, %v3341
        %v3343 = vpop.f32.mrb[0].mxu0
        %v3344 = vpop.f32.mrb[0].mxu0
        %v3345 = vpop.f32.mrb[0].mxu0
        %3346 = vdwg.mxu0
        %3347 = vmax.xlane.f32.xlu0 %v3342
        %v3348 = vpop.xlane.xlu0 %3347
        %v3349 = vsub.f32 %v3342, %v3348
        %v3350 = vmul.f32 %v3349, 1.442695
        %v3351 = vpow.pop %v3350
        %3352 = vadd.xlane.f32.xlu0 %v3351
        %v3353 = vpop.xlane.xlu0 %3352
        %v3354 = vlog2.pop %v3353
        %v3355 = vmul.f32 %v3354, 0.6931472
        %v3356 = vadd.f32 %v3348, %v3355
        %v3357 = vsub.f32 %v3342, %v3356
        %s3358 = scalar_lea.vmem %s311, 24 [#allocation14]
        %3359 = vst [vmem:[%s3358] sm:$0xff] %v3357
        %s3360 = sld [smem:[#allocation6 + %s2719]]
        %p3361 = scmp.eq.s32.totalorder %s3360, 1
        // Predicated region
        $region85: #{tpu_custom_call.1} parent=43 // pred_check
          %p3362 = pneg %p3361
        $region86: #{tpu_custom_call.1} parent=43 // pred_check_branch
          %3364 = sbr.rel (%p3362) target = $region88
        $region87: #{tpu_custom_call.1} parent=43 // pred_region
          %s3365 = smul.u32 %s2719, 8
          %s3366 = sld [smem:[#allocation7 + %s3365]]
          %s3367 = scalar_lea.vmem [#allocation8], %s3366
          %v3368 = vld [vmem:[%s3367] sm:$0x1]
          %3369 = vst [vmem:[#allocation3] sm:$0x1] %v3368
          %s3370 = sadd.s32 %s3365, 1
          %s3371 = sld [smem:[#allocation7 + %s3370]]
          %s3372 = scalar_lea.vmem [#allocation8], %s3371
          %v3373 = vld [vmem:[%s3372] sm:$0x1]
          %3374 = vst [vmem:[#allocation3 + $0x1] sm:$0x1] %v3373
          %s3375 = sadd.s32 %s3365, 2
          %s3376 = sld [smem:[#allocation7 + %s3375]]
          %s3377 = scalar_lea.vmem [#allocation8], %s3376
          %v3378 = vld [vmem:[%s3377] sm:$0x1]
          %3379 = vst [vmem:[#allocation3 + $0x2] sm:$0x1] %v3378
          %s3380 = sadd.s32 %s3365, 3
          %s3381 = sld [smem:[#allocation7 + %s3380]]
          %s3382 = scalar_lea.vmem [#allocation8], %s3381
          %v3383 = vld [vmem:[%s3382] sm:$0x1]
          %3384 = vst [vmem:[#allocation3 + $0x3] sm:$0x1] %v3383
          %s3385 = sadd.s32 %s3365, 4
          %s3386 = sld [smem:[#allocation7 + %s3385]]
          %s3387 = scalar_lea.vmem [#allocation8], %s3386
          %v3388 = vld [vmem:[%s3387] sm:$0x1]
          %3389 = vst [vmem:[#allocation3 + $0x4] sm:$0x1] %v3388
          %s3390 = sadd.s32 %s3365, 5
          %s3391 = sld [smem:[#allocation7 + %s3390]]
          %s3392 = scalar_lea.vmem [#allocation8], %s3391
          %v3393 = vld [vmem:[%s3392] sm:$0x1]
          %3394 = vst [vmem:[#allocation3 + $0x5] sm:$0x1] %v3393
          %s3395 = sadd.s32 %s3365, 6
          %s3396 = sld [smem:[#allocation7 + %s3395]]
          %s3397 = scalar_lea.vmem [#allocation8], %s3396
          %v3398 = vld [vmem:[%s3397] sm:$0x1]
          %3399 = vst [vmem:[#allocation3 + $0x6] sm:$0x1] %v3398
          %s3400 = sadd.s32 %s3365, 7
          %s3401 = sld [smem:[#allocation7 + %s3400]]
          %s3402 = scalar_lea.vmem [#allocation8], %s3401
          %v3403 = vld [vmem:[%s3402] sm:$0x1]
          %3404 = vst [vmem:[#allocation3 + $0x7] sm:$0x1] %v3403
        $region88: #{tpu_custom_call.1} parent=43 // pred_fallthru
          _
        %p3405 = scmp.eq.s32.totalorder %s3360, 0
        // Predicated region
        $region89: #{tpu_custom_call.1} parent=43 // pred_check
          %p3406 = pneg %p3405
        $region90: #{tpu_custom_call.1} parent=43 // pred_check_branch
          %3408 = sbr.rel (%p3406) target = $region92
        $region91: #{tpu_custom_call.1} parent=43 // pred_region
          %vm3409 = vcmp.ge.f32.partialorder %v3342, %v3348
          %v3410 = vsel %vm3409, %v331, 128
          %v3411 = vand.u32 %v3410, 65535
          %v3412 = vshra.s32 %v3410, 16
          %v3413 = vcvt.s32.f32 %v3411
          %v3414 = vcvt.s32.f32 %v3412
          %3415 = vmin.xlane.f32.xlu0 %v3414
          %v3416 = vpop.xlane.xlu0 %3415
          %vm3417 = vcmp.eq.f32.partialorder %v3414, %v3416
          %v3418 = vsel %vm3417, %v3413, inf
          %3419 = vmin.xlane.f32.xlu0 %v3418
          %v3420 = vpop.xlane.xlu0 %3419
          %v3421 = vcvt.f32.s32 %v3420
          %v3422 = vcvt.f32.s32 %v3416
          %v3423 = vshll.u32 %v3422, 16
          %v3424 = vadd.s32 %v3423, %v3421
          %vm3425 = vcmp.eq.s32.totalorder %v331, %v3424
          %v3426 = vsel %vm3425, 1, 0
          %v3427 = vcvt.s32.f32 %v3426
          %v3428 = vld [vmem:[#allocation8] sm:$0xff]
          %v3429 = vld [vmem:[#allocation8 + $0x8] sm:$0xff]
          %v3430 = vld [vmem:[#allocation8 + $0x10] sm:$0xff]
          %v3431 = vld [vmem:[#allocation8 + $0x18] sm:$0xff]
          %v3432 = vld [vmem:[#allocation8 + $0x20] sm:$0xff]
          %v3433 = vld [vmem:[#allocation8 + $0x28] sm:$0xff]
          %v3434 = vld [vmem:[#allocation8 + $0x30] sm:$0xff]
          %v3435 = vld [vmem:[#allocation8 + $0x38] sm:$0xff]
          %v3436 = vld [vmem:[#allocation8 + $0x40] sm:$0xff]
          %v3437 = vld [vmem:[#allocation8 + $0x48] sm:$0xff]
          %v3438 = vld [vmem:[#allocation8 + $0x50] sm:$0xff]
          %v3439 = vld [vmem:[#allocation8 + $0x58] sm:$0xff]
          %v3440 = vld [vmem:[#allocation8 + $0x60] sm:$0xff]
          %v3441 = vld [vmem:[#allocation8 + $0x68] sm:$0xff]
          %v3442 = vld [vmem:[#allocation8 + $0x70] sm:$0xff]
          %v3443 = vld [vmem:[#allocation8 + $0x78] sm:$0xff]
          %3444 = vmatprep.subr.mxu0 0.0
          %3445 = vmatpush1.msra.mxu0 %v3428
          %3446 = vmatprep.subr.mxu0 0.0
          %3447 = vmatpush1.msra.mxu0 %v3429
          %3448 = vmatprep.subr.mxu0 0.0
          %3449 = vmatpush1.msra.mxu0 %v3430
          %3450 = vmatprep.subr.mxu0 0.0
          %3451 = vmatpush1.msra.mxu0 %v3431
          %3452 = vmatprep.subr.mxu0 0.0
          %3453 = vmatpush1.msra.mxu0 %v3432
          %3454 = vmatprep.subr.mxu0 0.0
          %3455 = vmatpush1.msra.mxu0 %v3433
          %3456 = vmatprep.subr.mxu0 0.0
          %3457 = vmatpush1.msra.mxu0 %v3434
          %3458 = vmatprep.subr.mxu0 0.0
          %3459 = vmatpush1.msra.mxu0 %v3435
          %3460 = vmatprep.subr.mxu0 0.0
          %3461 = vmatpush1.msra.mxu0 %v3436
          %3462 = vmatprep.subr.mxu0 0.0
          %3463 = vmatpush1.msra.mxu0 %v3437
          %3464 = vmatprep.subr.mxu0 0.0
          %3465 = vmatpush1.msra.mxu0 %v3438
          %3466 = vmatprep.subr.mxu0 0.0
          %3467 = vmatpush1.msra.mxu0 %v3439
          %3468 = vmatprep.subr.mxu0 0.0
          %3469 = vmatpush1.msra.mxu0 %v3440
          %3470 = vmatprep.subr.mxu0 0.0
          %3471 = vmatpush1.msra.mxu0 %v3441
          %3472 = vmatprep.subr.mxu0 0.0
          %3473 = vmatpush1.msra.mxu0 %v3442
          %3474 = vmatprep.subr.mxu0 0.0
          %3475 = vmatpush1.msra.mxu0 %v3443
          %3476 = vmatprep.subr.mxu0 0.0
          %3477 = vmatpush1.msra.mxu0 0.0
          %3478 = vmatprep.subr.mxu0 0.0
          %3479 = vmatpush1.msra.mxu0 0.0
          %3480 = vmatprep.subr.mxu0 0.0
          %3481 = vmatpush1.msra.mxu0 0.0
          %3482 = vmatprep.subr.mxu0 0.0
          %3483 = vmatpush1.msra.mxu0 0.0
          %3484 = vmatprep.subr.mxu0 0.0
          %3485 = vmatpush1.msra.mxu0 0.0
          %3486 = vmatprep.subr.mxu0 0.0
          %3487 = vmatpush1.msra.mxu0 0.0
          %3488 = vmatprep.subr.mxu0 0.0
          %3489 = vmatpush1.msra.mxu0 0.0
          %3490 = vmatprep.subr.mxu0 0.0
          %3491 = vmatpush1.msra.mxu0 0.0
          %3492 = vmatprep.subr.mxu0 0.0
          %3493 = vmatpush1.msra.mxu0 0.0
          %3494 = vmatprep.subr.mxu0 0.0
          %3495 = vmatpush1.msra.mxu0 0.0
          %3496 = vmatprep.subr.mxu0 0.0
          %3497 = vmatpush1.msra.mxu0 0.0
          %3498 = vmatprep.subr.mxu0 0.0
          %3499 = vmatpush1.msra.mxu0 0.0
          %3500 = vmatprep.subr.mxu0 0.0
          %3501 = vmatpush1.msra.mxu0 0.0
          %3502 = vmatprep.subr.mxu0 0.0
          %3503 = vmatpush1.msra.mxu0 0.0
          %3504 = vmatprep.subr.mxu0 0.0
          %3505 = vmatpush1.msra.mxu0 0.0
          %3506 = vmatprep.subr.mxu0 0.0
          %3507 = vmatpush1.msra.mxu0 0.0
          %3508 = vmatprep.mubr.f32.mxu0 0.0
          %3509 = vmatmul.mubr.f32.gmra.mrb[0].mxu0 %v3427
          %v3510 = vpop.f32.mrb[0].mxu0
          %v3511 = vadd.f32 0.0, %v3510
          %v3512 = vpop.f32.mrb[0].mxu0
          %3513 = vdwg.mxu0
          %3514 = vst [vmem:[#allocation3] sm:$0xff] %v3511
        $region92: #{tpu_custom_call.1} parent=43 // pred_fallthru
          _
        %p3515 = scmp.eq.s32.totalorder %s39, 1
        // Predicated region
        $region93: #{tpu_custom_call.1} parent=43 // pred_check
          %p3516 = pneg %p3515
        $region94: #{tpu_custom_call.1} parent=43 // pred_check_branch
          %3518 = sbr.rel (%p3516) target = $region96
        $region95: #{tpu_custom_call.1} parent=43 // pred_region
          %v3519 = vld [vmem:[#allocation2] sm:$0xff]
          %3520 = vst [vmem:[#allocation15] sm:$0xff] %v3519
        $region96: #{tpu_custom_call.1} parent=43 // pred_fallthru
          _
        %s3521 = sand.u32 %s173, 1
        %s3522 = scalar_lea.sflag [#allocation10], %s3521
        %s3523 = sand.u32 %s173, 1
        %s3524 = smul.addr %s3523, 32
        %s3525 = scalar_lea.vmem [#allocation14], %s3524
        // Predicated region
        $region97: #{tpu_custom_call.1} parent=43 // pred_check
          %p3526 = pneg %p183
        $region98: #{tpu_custom_call.1} parent=43 // pred_check_branch
          %3528 = sbr.rel (%p3526) target = $region100
        $region99: #{tpu_custom_call.1} parent=43 // pred_region
          %s3529 = smul.u32 4, %s39
          %s3531 = ssub.s32 512, 512
          %3532 = vsyncadd %s3522, %s3531
          %s3533 = smul.addr %s3529, 128
          %s3534 = scalar_lea.hbm %s9, %s3533
          %s3535 = sshll.u32 %s3525, 4
          %s3536 = int_to_ptr.vmem [resolvable:$true] %s3535
          %3541 = dma.vmem_to_hbm [thread:$0]  %s3536, 512, %s3534, %s3522, 128, 128, 8
        $region100: #{tpu_custom_call.1} parent=43 // pred_fallthru
          _
        // Predicated region
        $region101: #{tpu_custom_call.1} parent=43 // pred_check
          %p3542 = pneg %p204
        $region102: #{tpu_custom_call.1} parent=43 // pred_check_branch
          %3544 = sbr.rel (%p3542) target = $region104
        $region103: #{tpu_custom_call.1} parent=43 // pred_region
          %s3546 = ssub.s32 128, 128
          %3547 = vsyncadd [#allocation16], %s3546
          %s3549 = sshll.u32 [#allocation15], 4
          %s3550 = int_to_ptr.vmem [resolvable:$true] %s3549
          %3552 = dma.vmem_to_hbm [thread:$0]  %s3550, 128, %s10, [#allocation16]
        $region104: #{tpu_custom_call.1} parent=43 // pred_fallthru
          _
        // Predicated region
        $region105: #{tpu_custom_call.1} parent=43 // pred_check
          %p3553 = pneg %p204
        $region106: #{tpu_custom_call.1} parent=43 // pred_check_branch
          %3555 = sbr.rel (%p3553) target = $region108
        $region107: #{tpu_custom_call.1} parent=43 // pred_region
          %3556 = dma.done [#allocation16], 128
        $region108: #{tpu_custom_call.1} parent=43 // pred_fallthru
          _
      $region44: #{tpu_custom_call.1} parent=5 // pred_fallthru
        _
      %p3557 = scmp.le.s32.totalorder 2, %s34
      // Predicated region
      $region109: #{tpu_custom_call.1} parent=5 // pred_check
        %p3558 = pneg %p3557
      $region110: #{tpu_custom_call.1} parent=5 // pred_check_branch
        %3560 = sbr.rel (%p3558) target = $region112
      $region111: #{tpu_custom_call.1} parent=5 // pred_region
        %s3561 = ssub.s32 %s34, 2
        // Predicated region
        $region113: #{tpu_custom_call.1} parent=111 // pred_check
          %p3562 = pneg %p189
        $region114: #{tpu_custom_call.1} parent=111 // pred_check_branch
          %3564 = sbr.rel (%p3562) target = $region116
        $region115: #{tpu_custom_call.1} parent=111 // pred_region
          %s3565 = sand.u32 %s174, 1
          %s3566 = scalar_lea.sflag [#allocation10], %s3565
          %s3567 = sand.u32 %s174, 1
          %s3568 = smul.addr %s3567, 32
          %s3569 = scalar_lea.vmem [#allocation14], %s3568
          %3570 = dma.done %s3566, 512
        $region116: #{tpu_custom_call.1} parent=111 // pred_fallthru
          _
      $region112: #{tpu_custom_call.1} parent=5 // pred_fallthru
        _
    $region6: #{tpu_custom_call.1} parent=1 // loop_footer
      %s38 = sadd.s32 1, %s34
    $region7: #{tpu_custom_call.1} parent=1 // loop_footer_branch
      %33 = sbr.rel target = $region3
    $region8: #{tpu_custom_call.1} parent=1 // loop_exit
      _
    %3571 = vsyncpa [#allocation9], 1
    %s3572 = scalar_lea.sflag [#allocation9], 1
    %3573 = vsyncpa %s3572, 1
    %3574 = vsyncpa [#allocation12], 1
    %3575 = vsyncpa [#allocation10], 1
    %s3576 = scalar_lea.sflag [#allocation10], 1
    %3577 = vsyncpa %s3576, 1
    %3578 = vsyncpa [#allocation16], 1

// kernel: tpu_custom_call.1
$region0: #{tpu_custom_call.1}
  #allocation0 [shape = 'u32[]', space=smem, size = 0x4, offset = 0x4, fixed_abs, tag = 'smem constant byte address 0x4 - core index']
  #allocation1 [shape = 'u32[144,128]{1,0:T(1,128)}', space=vmem, size = 0x12000, scoped, tag = 'internal scratch']
  #allocation2 [shape = 'f32[8,128]{1,0:T(8,128)}', space=vmem, size = 0x1000, scoped, tag = 'scratch operand']
  #allocation3 [shape = 'f32[8,256]{1,0:T(8,128)}', space=vmem, size = 0x2000, scoped, tag = 'scratch operand']
  #allocation4 [shape = 's32[1]{0}', space=sflag, size = 0x4, scoped, tag = 'scoped memory for tpu_custom_call.1']
  #allocation5 [shape = 's32[1]{0:T(128)S(6)}', space=smem, size = 0x200, scoped, tag = 'prefetched SMEM operand 0']
  #allocation6 [shape = 'u8[512]{0}', space=smem, size = 0x200, scoped, tag = 'prefetched SMEM operand 1']
  #allocation7 [shape = 'u8[512]{0}', space=smem, size = 0x200, scoped, tag = 'prefetched SMEM operand 2']
  %s0 = inlined_call_operand.<no memory space> [shape: s32[1], index: 0, kind: input, shape index: {}]
  %s1 = inlined_call_operand.vmem [shape: s32[8], index: 1, kind: input, shape index: {}]
  %s2 = inlined_call_operand.vmem [shape: s32[64], index: 2, kind: input, shape index: {}]
  %s3 = inlined_call_operand.vmem [shape: f32[8,128], index: 3, kind: input, shape index: {}]
  %s4 = inlined_call_operand.hbm [shape: f32[128,128], index: 4, kind: input, shape index: {}]
  %s5 = inlined_call_operand.hbm [shape: bf16[256,512], index: 5, kind: input, shape index: {}]
  %s6 = inlined_call_operand.vmem [shape: f32[1,512], index: 6, kind: input, shape index: {}]
  %s7 = inlined_call_operand.hbm [shape: bf16[128,128], index: 7, kind: input, shape index: {}]
  %s8 = inlined_call_operand.vmem [shape: f32[1,128], index: 8, kind: input, shape index: {}]
  %s9 = inlined_call_operand.hbm [shape: f32[8,8,128], index: 9, kind: output, shape index: {0}]
  %s10 = inlined_call_operand.hbm [shape: f32[8,128], index: 10, kind: output, shape index: {1}]
  %11 = xla_tuple %s9, %s10
  %s12 = sld [smem:[#allocation0]]
  $region117: #{tpu_custom_call.1} parent=0
    _
  %s14 = ssub.s32 1, %s12
  %s15 = scalar_select 0, %s14, %s12
  %16 = sst [smem:[#allocation5]] %s0
  %s17 = sshll.u32 %s1, 4
  %s18 = int_to_ptr.vmem [resolvable:$true] %s17
  %20 = dma.vmem_to_smem %s18, 16, [#allocation6], [#allocation4]
  %s21 = sshll.u32 %s2, 4
  %s22 = int_to_ptr.vmem [resolvable:$true] %s21
  %24 = dma.vmem_to_smem %s22, 16, [#allocation7], [#allocation4]
  %25 = dma.done [#allocation4], 32
  %26 = sfence
  $region1: #{tpu_custom_call.1} parent=0
    #allocation8 [shape = 'u8[65536]{0}', space=vmem, size = 0x10000, scoped, tag = 'input window, operand 4, single buffered']
    #allocation9 [shape = 's32[2]{0}', space=sflag, size = 0x8, scoped, tag = 'scoped memory for tpu_custom_call.1']
    #allocation10 [shape = 's32[2]{0}', space=sflag, size = 0x8, scoped, tag = 'scoped memory for tpu_custom_call.1']
    #allocation11 [shape = 'u8[262144]{0}', space=vmem, size = 0x40000, scoped, tag = 'input window, operand 5, single buffered']
    #allocation12 [shape = 's32[1]{0}', space=sflag, size = 0x4, scoped, tag = 'scoped memory for tpu_custom_call.1']
    #allocation13 [shape = 'u8[32768]{0}', space=vmem, size = 0x8000, scoped, tag = 'input window, operand 7, single buffered']
    #allocation14 [shape = 'u8[32768]{0}', space=vmem, size = 0x8000, scoped, tag = 'output window, operand 0']
    #allocation15 [shape = 'u8[4096]{0}', space=vmem, size = 0x1000, scoped, tag = 'output window, operand 1, single buffered']
    #allocation16 [shape = 's32[1]{0}', space=sflag, size = 0x4, scoped, tag = 'scoped memory for tpu_custom_call.1']
    %27 = vsyncpa [#allocation9], 0
    %28 = vsyncpa [#allocation12], 0
    %29 = vsyncpa [#allocation10], 0
    %s30 = scalar_lea.sflag [#allocation10], 1
    %31 = vsyncpa %s30, 0
    %32 = vsyncpa [#allocation16], 0
    loop: start=0, step=1, limit=4
    $region2: #{tpu_custom_call.1} parent=1 // loop_pre_header
      _
    $region3: #{tpu_custom_call.1} parent=1 // loop_header
      %s34 = sphi 0, %s38
      %p35 = scmp.ge.s32.totalorder %s34, 4
      %s42 = sphi 0, %s42
      %s44 = sphi 0, %s42
      %s45 = sphi 0, %s44
      %s59 = sphi 0, %s45
      %s63 = sphi 0, %s63
      %s65 = sphi 0, %s63
      %s66 = sphi 0, %s65
      %s80 = sphi 0, %s66
      %s84 = sphi 0, %s84
      %s86 = sphi 0, %s84
      %s87 = sphi 0, %s86
      %s101 = sphi 0, %s87
      %s105 = sphi 0, %s105
      %s107 = sphi 0, %s105
      %s108 = sphi 0, %s107
      %s122 = sphi 0, %s108
      %s126 = sphi 0, %s126
      %s128 = sphi 0, %s126
      %s129 = sphi 0, %s128
      %s143 = sphi 0, %s129
      %s147 = sphi 0, %s147
      %s149 = sphi 0, %s147
      %s150 = sphi 0, %s149
      %s164 = sphi 0, %s150
      %s170 = sphi 0, %s172
      %s173 = sphi 0, %s170
      %s174 = sphi 0, %s173
      %s190 = sphi 0, %s174
      %s194 = sphi 0, %s194
      %s196 = sphi 0, %s194
      %s197 = sphi 0, %s196
      %s211 = sphi 0, %s197
    $region4: #{tpu_custom_call.1} parent=1 // loop_header_branch
      %37 = sbr.rel (%p35) target = $region8
    $region5: #{tpu_custom_call.1} parent=1 // loop_body
      %s39 = ssub.s32 %s34, 1
      %s40 = ssub.s32 %s34, 2
      %s41 = sadd.s32 %s34, 1
      %s43 = sadd.s32 %s42, 1
      %p46 = scmp.eq.s32.totalorder %s34, 1
      %p47 = scmp.ne.s32.totalorder %s42, %s44
      %p48 = scmp.eq.s32.totalorder %s34, 0
      %p49 = por %p47, %p48
      %p50 = scmp.ne.s32.totalorder %s42, %s44
      %p51 = scmp.eq.s32.totalorder %s39, 1
      %p52 = por %p50, %p51
      %p53 = scmp.ne.s32.totalorder %s44, %s45
      %p54 = scmp.eq.s32.totalorder %s39, 0
      %p55 = por %p53, %p54
      %p56 = scmp.ne.s32.totalorder %s44, %s45
      %p57 = scmp.eq.s32.totalorder %s40, 1
      %p58 = por %p56, %p57
      %p60 = scmp.ne.s32.totalorder %s45, %s59
      %p61 = scmp.eq.s32.totalorder %s40, 0
      %p62 = por %p60, %p61
      %s64 = sadd.s32 %s63, 1
      %p67 = scmp.eq.s32.totalorder %s34, 1
      %p68 = scmp.ne.s32.totalorder %s63, %s65
      %p69 = scmp.eq.s32.totalorder %s34, 0
      %p70 = por %p68, %p69
      %p71 = scmp.ne.s32.totalorder %s63, %s65
      %p72 = scmp.eq.s32.totalorder %s39, 1
      %p73 = por %p71, %p72
      %p74 = scmp.ne.s32.totalorder %s65, %s66
      %p75 = scmp.eq.s32.totalorder %s39, 0
      %p76 = por %p74, %p75
      %p77 = scmp.ne.s32.totalorder %s65, %s66
      %p78 = scmp.eq.s32.totalorder %s40, 1
      %p79 = por %p77, %p78
      %p81 = scmp.ne.s32.totalorder %s66, %s80
      %p82 = scmp.eq.s32.totalorder %s40, 0
      %p83 = por %p81, %p82
      %s85 = sadd.s32 %s84, 1
      %p88 = scmp.eq.s32.totalorder %s34, 1
      %p89 = scmp.ne.s32.totalorder %s84, %s86
      %p90 = scmp.eq.s32.totalorder %s34, 0
      %p91 = por %p89, %p90
      %p92 = scmp.ne.s32.totalorder %s84, %s86
      %p93 = scmp.eq.s32.totalorder %s39, 1
      %p94 = por %p92, %p93
      %p95 = scmp.ne.s32.totalorder %s86, %s87
      %p96 = scmp.eq.s32.totalorder %s39, 0
      %p97 = por %p95, %p96
      %p98 = scmp.ne.s32.totalorder %s86, %s87
      %p99 = scmp.eq.s32.totalorder %s40, 1
      %p100 = por %p98, %p99
      %p102 = scmp.ne.s32.totalorder %s87, %s101
      %p103 = scmp.eq.s32.totalorder %s40, 0
      %p104 = por %p102, %p103
      %s106 = sadd.s32 %s105, 1
      %p109 = scmp.eq.s32.totalorder %s34, 1
      %p110 = scmp.ne.s32.totalorder %s105, %s107
      %p111 = scmp.eq.s32.totalorder %s34, 0
      %p112 = por %p110, %p111
      %p113 = scmp.ne.s32.totalorder %s105, %s107
      %p114 = scmp.eq.s32.totalorder %s39, 1
      %p115 = por %p113, %p114
      %p116 = scmp.ne.s32.totalorder %s107, %s108
      %p117 = scmp.eq.s32.totalorder %s39, 0
      %p118 = por %p116, %p117
      %p119 = scmp.ne.s32.totalorder %s107, %s108
      %p120 = scmp.eq.s32.totalorder %s40, 1
      %p121 = por %p119, %p120
      %p123 = scmp.ne.s32.totalorder %s108, %s122
      %p124 = scmp.eq.s32.totalorder %s40, 0
      %p125 = por %p123, %p124
      %s127 = sadd.s32 %s126, 1
      %p130 = scmp.eq.s32.totalorder %s34, 1
      %p131 = scmp.ne.s32.totalorder %s126, %s128
      %p132 = scmp.eq.s32.totalorder %s34, 0
      %p133 = por %p131, %p132
      %p134 = scmp.ne.s32.totalorder %s126, %s128
      %p135 = scmp.eq.s32.totalorder %s39, 1
      %p136 = por %p134, %p135
      %p137 = scmp.ne.s32.totalorder %s128, %s129
      %p138 = scmp.eq.s32.totalorder %s39, 0
      %p139 = por %p137, %p138
      %p140 = scmp.ne.s32.totalorder %s128, %s129
      %p141 = scmp.eq.s32.totalorder %s40, 1
      %p142 = por %p140, %p141
      %p144 = scmp.ne.s32.totalorder %s129, %s143
      %p145 = scmp.eq.s32.totalorder %s40, 0
      %p146 = por %p144, %p145
      %s148 = sadd.s32 %s147, 1
      %p151 = scmp.eq.s32.totalorder %s34, 1
      %p152 = scmp.ne.s32.totalorder %s147, %s149
      %p153 = scmp.eq.s32.totalorder %s34, 0
      %p154 = por %p152, %p153
      %p155 = scmp.ne.s32.totalorder %s147, %s149
      %p156 = scmp.eq.s32.totalorder %s39, 1
      %p157 = por %p155, %p156
      %p158 = scmp.ne.s32.totalorder %s149, %s150
      %p159 = scmp.eq.s32.totalorder %s39, 0
      %p160 = por %p158, %p159
      %p161 = scmp.ne.s32.totalorder %s149, %s150
      %p162 = scmp.eq.s32.totalorder %s40, 1
      %p163 = por %p161, %p162
      %p165 = scmp.ne.s32.totalorder %s150, %s164
      %p166 = scmp.eq.s32.totalorder %s40, 0
      %p167 = por %p165, %p166
      %s168 = ssub.s32 %s34, %s41
      %p169 = scmp.eq.s32.totalorder %s168, 0
      %s171 = sadd.s32 %s170, 1
      %s172 = scalar_select %p169, %s170, %s171
      %p175 = pneg %p169
      %p176 = scmp.eq.s32.totalorder %s34, 1
      %p177 = por %p175, %p176
      %p178 = scmp.ne.s32.totalorder %s170, %s173
      %p179 = scmp.eq.s32.totalorder %s34, 0
      %p180 = por %p178, %p179
      %p181 = scmp.ne.s32.totalorder %s170, %s173
      %p182 = scmp.eq.s32.totalorder %s39, 1
      %p183 = por %p181, %p182
      %p184 = scmp.ne.s32.totalorder %s173, %s174
      %p185 = scmp.eq.s32.totalorder %s39, 0
      %p186 = por %p184, %p185
      %p187 = scmp.ne.s32.totalorder %s173, %s174
      %p188 = scmp.eq.s32.totalorder %s40, 1
      %p189 = por %p187, %p188
      %p191 = scmp.ne.s32.totalorder %s174, %s190
      %p192 = scmp.eq.s32.totalorder %s40, 0
      %p193 = por %p191, %p192
      %s195 = sadd.s32 %s194, 1
      %p198 = scmp.eq.s32.totalorder %s34, 1
      %p199 = scmp.ne.s32.totalorder %s194, %s196
      %p200 = scmp.eq.s32.totalorder %s34, 0
      %p201 = por %p199, %p200
      %p202 = scmp.ne.s32.totalorder %s194, %s196
      %p203 = scmp.eq.s32.totalorder %s39, 1
      %p204 = por %p202, %p203
      %p205 = scmp.ne.s32.totalorder %s196, %s197
      %p206 = scmp.eq.s32.totalorder %s39, 0
      %p207 = por %p205, %p206
      %p208 = scmp.ne.s32.totalorder %s196, %s197
      %p209 = scmp.eq.s32.totalorder %s40, 1
      %p210 = por %p208, %p209
      %p212 = scmp.ne.s32.totalorder %s197, %s211
      %p213 = scmp.eq.s32.totalorder %s40, 0
      %p214 = por %p212, %p213
      %p215 = scmp.le.s32.totalorder 1, %s34
      %p216 = scmp.lt.s32.totalorder %s34, 3
      %p217 = pnand %p215, %p216
      %p218 = pneg %p217
      // Predicated region
      $region9: #{tpu_custom_call.1} parent=5 // pred_check
        _
      $region10: #{tpu_custom_call.1} parent=5 // pred_check_branch
        %220 = sbr.rel (%p217) target = $region12
      $region11: #{tpu_custom_call.1} parent=5 // pred_region
        %s221 = ssub.s32 %s34, 1
        // Predicated region
        $region13: #{tpu_custom_call.1} parent=11 // pred_check
          %p222 = pneg %p55
        $region14: #{tpu_custom_call.1} parent=11 // pred_check_branch
          %224 = sbr.rel (%p222) target = $region16
        $region15: #{tpu_custom_call.1} parent=11 // pred_region
          _
        $region16: #{tpu_custom_call.1} parent=11 // pred_fallthru
          _
        // Predicated region
        $region17: #{tpu_custom_call.1} parent=11 // pred_check
          %p225 = pneg %p76
        $region18: #{tpu_custom_call.1} parent=11 // pred_check_branch
          %227 = sbr.rel (%p225) target = $region20
        $region19: #{tpu_custom_call.1} parent=11 // pred_region
          %s229 = ssub.s32 2048, 2048
          %230 = vsyncadd [#allocation9], %s229
          %s231 = sshll.u32 [#allocation8], 4
          %s232 = int_to_ptr.vmem [resolvable:$true] %s231
          %237 = dma.hbm_to_vmem [thread:$0]  %s4, 2048, %s232, [#allocation9], 128, 128, 8
        $region20: #{tpu_custom_call.1} parent=11 // pred_fallthru
          _
        // Predicated region
        $region21: #{tpu_custom_call.1} parent=11 // pred_check
          %p238 = pneg %p97
        $region22: #{tpu_custom_call.1} parent=11 // pred_check_branch
          %240 = sbr.rel (%p238) target = $region24
        $region23: #{tpu_custom_call.1} parent=11 // pred_region
          %s242 = ssub.s32 8192, 8192
          %243 = vsyncadd [#allocation12], %s242
          %s244 = sshll.u32 [#allocation11], 4
          %s245 = int_to_ptr.vmem [resolvable:$true] %s244
          %250 = dma.hbm_to_vmem [thread:$0]  %s5, 8192, %s245, [#allocation12], 256, 256, 16
        $region24: #{tpu_custom_call.1} parent=11 // pred_fallthru
          _
        // Predicated region
        $region25: #{tpu_custom_call.1} parent=11 // pred_check
          %p251 = pneg %p118
        $region26: #{tpu_custom_call.1} parent=11 // pred_check_branch
          %253 = sbr.rel (%p251) target = $region28
        $region27: #{tpu_custom_call.1} parent=11 // pred_region
          _
        $region28: #{tpu_custom_call.1} parent=11 // pred_fallthru
          _
        // Predicated region
        $region29: #{tpu_custom_call.1} parent=11 // pred_check
          %p254 = pneg %p139
        $region30: #{tpu_custom_call.1} parent=11 // pred_check_branch
          %256 = sbr.rel (%p254) target = $region32
        $region31: #{tpu_custom_call.1} parent=11 // pred_region
          %s258 = ssub.s32 1024, 1024
          %259 = vsyncadd [#allocation12], %s258
          %s260 = sshll.u32 [#allocation13], 4
          %s261 = int_to_ptr.vmem [resolvable:$true] %s260
          %266 = dma.hbm_to_vmem [thread:$0]  %s7, 1024, %s261, [#allocation12], 64, 64, 4
        $region32: #{tpu_custom_call.1} parent=11 // pred_fallthru
          _
        // Predicated region
        $region33: #{tpu_custom_call.1} parent=11 // pred_check
          %p267 = pneg %p160
        $region34: #{tpu_custom_call.1} parent=11 // pred_check_branch
          %269 = sbr.rel (%p267) target = $region36
        $region35: #{tpu_custom_call.1} parent=11 // pred_region
          _
        $region36: #{tpu_custom_call.1} parent=11 // pred_fallthru
          _
      $region12: #{tpu_custom_call.1} parent=5 // pred_fallthru
        _
      %p270 = scmp.lt.s32.totalorder %s34, 2
      // Predicated region
      $region37: #{tpu_custom_call.1} parent=5 // pred_check
        %p271 = pneg %p270
      $region38: #{tpu_custom_call.1} parent=5 // pred_check_branch
        %273 = sbr.rel (%p271) target = $region40
      $region39: #{tpu_custom_call.1} parent=5 // pred_region
        _
      $region40: #{tpu_custom_call.1} parent=5 // pred_fallthru
        _
      %p274 = scmp.le.s32.totalorder 1, %s34
      %p275 = scmp.lt.s32.totalorder %s34, 3
      %p276 = pnand %p274, %p275
      %p277 = pneg %p276
      // Predicated region
      $region41: #{tpu_custom_call.1} parent=5 // pred_check
        _
      $region42: #{tpu_custom_call.1} parent=5 // pred_check_branch
        %279 = sbr.rel (%p276) target = $region44
      $region43: #{tpu_custom_call.1} parent=5 // pred_region
        %s280 = ssub.s32 %s34, 1
        // Predicated region
        $region45: #{tpu_custom_call.1} parent=43 // pred_check
          %p281 = pneg %p76
        $region46: #{tpu_custom_call.1} parent=43 // pred_check_branch
          %283 = sbr.rel (%p281) target = $region48
        $region47: #{tpu_custom_call.1} parent=43 // pred_region
          %284 = dma.done [#allocation9], 2048
        $region48: #{tpu_custom_call.1} parent=43 // pred_fallthru
          _
        // Predicated region
        $region49: #{tpu_custom_call.1} parent=43 // pred_check
          %p285 = pneg %p97
        $region50: #{tpu_custom_call.1} parent=43 // pred_check_branch
          %287 = sbr.rel (%p285) target = $region52
        $region51: #{tpu_custom_call.1} parent=43 // pred_region
          %288 = dma.done [#allocation12], 8192
        $region52: #{tpu_custom_call.1} parent=43 // pred_fallthru
          _
        // Predicated region
        $region53: #{tpu_custom_call.1} parent=43 // pred_check
          %p289 = pneg %p139
        $region54: #{tpu_custom_call.1} parent=43 // pred_check_branch
          %291 = sbr.rel (%p289) target = $region56
        $region55: #{tpu_custom_call.1} parent=43 // pred_region
          %292 = dma.done [#allocation12], 1024
        $region56: #{tpu_custom_call.1} parent=43 // pred_fallthru
          _
        %p293 = pneg %p55
        %p294 = pneg %p52
        %p295 = pneg %p76
        %p296 = pneg %p73
        %p297 = pneg %p97
        %p298 = pneg %p94
        %p299 = pneg %p118
        %p300 = pneg %p115
        %p301 = pneg %p139
        %p302 = pneg %p136
        %p303 = pneg %p160
        %p304 = pneg %p157
        %p305 = pneg %p186
        %p306 = pneg %p183
        %s307 = sand.u32 %s173, 1
        %s308 = scalar_lea.sflag [#allocation10], %s307
        %s309 = sand.u32 %s173, 1
        %s310 = smul.addr %s309, 32
        %s311 = scalar_lea.vmem [#allocation14], %s310
        %p312 = pneg %p207
        %p313 = pneg %p204
        %s314 = smul.u32 4, %s39
        %p316 = scmp.eq.s32.totalorder %s39, 0
        // Predicated region
        $region57: #{tpu_custom_call.1} parent=43 // pred_check
          %p317 = pneg %p316
        $region58: #{tpu_custom_call.1} parent=43 // pred_check_branch
          %319 = sbr.rel (%p317) target = $region60
        $region59: #{tpu_custom_call.1} parent=43 // pred_region
          %v320 = vld [vmem:[%s3] sm:$0xff]
          %321 = vst [vmem:[#allocation2] sm:$0xff] %v320
          %s322 = sld [smem:[#allocation5]]
          %s323 = scalar_lea.vmem [#allocation8], %s322
          %v324 = vld [vmem:[%s323] sm:$0x1]
          %v325 = vlaneseq
          %v326 = vshrl.u32 %v325, 7
          %v327 = vsub.s32 0, %v326
          %v328 = vrot.slane %v324, %v327
          %329 = vst [vmem:[#allocation3] sm:$0xff] %v328
        $region60: #{tpu_custom_call.1} parent=43 // pred_fallthru
          _
        %v330 = vlaneseq
        %v331 = vand.u32 %v330, 127
        %s332 = smul.u32 %s39, 4
        %v333 = vld [vmem:[#allocation2] sm:$0xff]
        %334 = vst [vmem:[#allocation3 + $0x8] sm:$0xff] %v333
        %v335 = vld [vmem:[#allocation2] sm:$0xff]
        %v336 = vld [vmem:[#allocation3] sm:$0xff]
        %v337 = vld [vmem:[#allocation3 + $0x8] sm:$0xff]
        %v338 = vpack.c.bf16 %v336, %v336
        %v339 = vpack.c.bf16 %v337, %v337
        %v340 = vld [vmem:[#allocation11] sm:$0xff]
        %v341 = vld [vmem:[#allocation11 + $0x8] sm:$0xff]
        %v342 = vld [vmem:[#allocation11 + $0x10] sm:$0xff]
        %v343 = vld [vmem:[#allocation11 + $0x18] sm:$0xff]
        %v344 = vld [vmem:[#allocation11 + $0x20] sm:$0xff]
        %v345 = vld [vmem:[#allocation11 + $0x28] sm:$0xff]
        %v346 = vld [vmem:[#allocation11 + $0x30] sm:$0xff]
        %v347 = vld [vmem:[#allocation11 + $0x38] sm:$0xff]
        %v348 = vld [vmem:[#allocation11 + $0x40] sm:$0xff]
        %v349 = vld [vmem:[#allocation11 + $0x48] sm:$0xff]
        %v350 = vld [vmem:[#allocation11 + $0x50] sm:$0xff]
        %v351 = vld [vmem:[#allocation11 + $0x58] sm:$0xff]
        %v352 = vld [vmem:[#allocation11 + $0x60] sm:$0xff]
        %v353 = vld [vmem:[#allocation11 + $0x68] sm:$0xff]
        %v354 = vld [vmem:[#allocation11 + $0x70] sm:$0xff]
        %v355 = vld [vmem:[#allocation11 + $0x78] sm:$0xff]
        %v356 = vld [vmem:[#allocation11 + $0x80] sm:$0xff]
        %v357 = vld [vmem:[#allocation11 + $0x88] sm:$0xff]
        %v358 = vld [vmem:[#allocation11 + $0x90] sm:$0xff]
        %v359 = vld [vmem:[#allocation11 + $0x98] sm:$0xff]
        %v360 = vld [vmem:[#allocation11 + $0xa0] sm:$0xff]
        %v361 = vld [vmem:[#allocation11 + $0xa8] sm:$0xff]
        %v362 = vld [vmem:[#allocation11 + $0xb0] sm:$0xff]
        %v363 = vld [vmem:[#allocation11 + $0xb8] sm:$0xff]
        %v364 = vld [vmem:[#allocation11 + $0xc0] sm:$0xff]
        %v365 = vld [vmem:[#allocation11 + $0xc8] sm:$0xff]
        %v366 = vld [vmem:[#allocation11 + $0xd0] sm:$0xff]
        %v367 = vld [vmem:[#allocation11 + $0xd8] sm:$0xff]
        %v368 = vld [vmem:[#allocation11 + $0xe0] sm:$0xff]
        %v369 = vld [vmem:[#allocation11 + $0xe8] sm:$0xff]
        %v370 = vld [vmem:[#allocation11 + $0xf0] sm:$0xff]
        %v371 = vld [vmem:[#allocation11 + $0xf8] sm:$0xff]
        %v372 = vld [vmem:[#allocation11 + $0x100] sm:$0xff]
        %v373 = vld [vmem:[#allocation11 + $0x108] sm:$0xff]
        %v374 = vld [vmem:[#allocation11 + $0x110] sm:$0xff]
        %v375 = vld [vmem:[#allocation11 + $0x118] sm:$0xff]
        %v376 = vld [vmem:[#allocation11 + $0x120] sm:$0xff]
        %v377 = vld [vmem:[#allocation11 + $0x128] sm:$0xff]
        %v378 = vld [vmem:[#allocation11 + $0x130] sm:$0xff]
        %v379 = vld [vmem:[#allocation11 + $0x138] sm:$0xff]
        %v380 = vld [vmem:[#allocation11 + $0x140] sm:$0xff]
        %v381 = vld [vmem:[#allocation11 + $0x148] sm:$0xff]
        %v382 = vld [vmem:[#allocation11 + $0x150] sm:$0xff]
        %v383 = vld [vmem:[#allocation11 + $0x158] sm:$0xff]
        %v384 = vld [vmem:[#allocation11 + $0x160] sm:$0xff]
        %v385 = vld [vmem:[#allocation11 + $0x168] sm:$0xff]
        %v386 = vld [vmem:[#allocation11 + $0x170] sm:$0xff]
        %v387 = vld [vmem:[#allocation11 + $0x178] sm:$0xff]
        %v388 = vld [vmem:[#allocation11 + $0x180] sm:$0xff]
        %v389 = vld [vmem:[#allocation11 + $0x188] sm:$0xff]
        %v390 = vld [vmem:[#allocation11 + $0x190] sm:$0xff]
        %v391 = vld [vmem:[#allocation11 + $0x198] sm:$0xff]
        %v392 = vld [vmem:[#allocation11 + $0x1a0] sm:$0xff]
        %v393 = vld [vmem:[#allocation11 + $0x1a8] sm:$0xff]
        %v394 = vld [vmem:[#allocation11 + $0x1b0] sm:$0xff]
        %v395 = vld [vmem:[#allocation11 + $0x1b8] sm:$0xff]
        %v396 = vld [vmem:[#allocation11 + $0x1c0] sm:$0xff]
        %v397 = vld [vmem:[#allocation11 + $0x1c8] sm:$0xff]
        %v398 = vld [vmem:[#allocation11 + $0x1d0] sm:$0xff]
        %v399 = vld [vmem:[#allocation11 + $0x1d8] sm:$0xff]
        %v400 = vld [vmem:[#allocation11 + $0x1e0] sm:$0xff]
        %v401 = vld [vmem:[#allocation11 + $0x1e8] sm:$0xff]
        %v402 = vld [vmem:[#allocation11 + $0x1f0] sm:$0xff]
        %v403 = vld [vmem:[#allocation11 + $0x1f8] sm:$0xff]
        %v404 = vld [vmem:[%s6] sm:$0xf]
        %v406 = vlaneseq
        %v407 = vshrl.u32 %v406, 7
        %v408 = vsub.s32 0, %v407
        %v409 = vrot.slane %v404, %v408
        %v410 = vlaneseq
        %v411 = vshrl.u32 %v410, 7
        %v412 = vsub.s32 1, %v411
        %v413 = vrot.slane %v404, %v412
        %v414 = vlaneseq
        %v415 = vshrl.u32 %v414, 7
        %v416 = vsub.s32 2, %v415
        %v417 = vrot.slane %v404, %v416
        %v418 = vlaneseq
        %v419 = vshrl.u32 %v418, 7
        %v420 = vsub.s32 3, %v419
        %v421 = vrot.slane %v404, %v420
        %v490 = vunpack.c.l.b16 %v340
        %v491 = vunpack.c.h.b16 %v340
        %v492 = vunpack.c.l.b16 %v341
        %v493 = vunpack.c.h.b16 %v341
        %v494 = vunpack.c.l.b16 %v342
        %v495 = vunpack.c.h.b16 %v342
        %v496 = vunpack.c.l.b16 %v343
        %v497 = vunpack.c.h.b16 %v343
        %v498 = vunpack.c.l.b16 %v344
        %v499 = vunpack.c.h.b16 %v344
        %v500 = vunpack.c.l.b16 %v345
        %v501 = vunpack.c.h.b16 %v345
        %v502 = vunpack.c.l.b16 %v346
        %v503 = vunpack.c.h.b16 %v346
        %v504 = vunpack.c.l.b16 %v347
        %v505 = vunpack.c.h.b16 %v347
        %v506 = vunpack.c.l.b16 %v348
        %v507 = vunpack.c.h.b16 %v348
        %v508 = vunpack.c.l.b16 %v349
        %v509 = vunpack.c.h.b16 %v349
        %v510 = vunpack.c.l.b16 %v350
        %v511 = vunpack.c.h.b16 %v350
        %v512 = vunpack.c.l.b16 %v351
        %v513 = vunpack.c.h.b16 %v351
        %v514 = vunpack.c.l.b16 %v352
        %v515 = vunpack.c.h.b16 %v352
        %v516 = vunpack.c.l.b16 %v353
        %v517 = vunpack.c.h.b16 %v353
        %v518 = vunpack.c.l.b16 %v354
        %v519 = vunpack.c.h.b16 %v354
        %v520 = vunpack.c.l.b16 %v355
        %v521 = vunpack.c.h.b16 %v355
        %v522 = vunpack.c.l.b16 %v356
        %v523 = vunpack.c.h.b16 %v356
        %v524 = vunpack.c.l.b16 %v357
        %v525 = vunpack.c.h.b16 %v357
        %v526 = vunpack.c.l.b16 %v358
        %v527 = vunpack.c.h.b16 %v358
        %v528 = vunpack.c.l.b16 %v359
        %v529 = vunpack.c.h.b16 %v359
        %v530 = vunpack.c.l.b16 %v360
        %v531 = vunpack.c.h.b16 %v360
        %v532 = vunpack.c.l.b16 %v361
        %v533 = vunpack.c.h.b16 %v361
        %v534 = vunpack.c.l.b16 %v362
        %v535 = vunpack.c.h.b16 %v362
        %v536 = vunpack.c.l.b16 %v363
        %v537 = vunpack.c.h.b16 %v363
        %v538 = vunpack.c.l.b16 %v364
        %v539 = vunpack.c.h.b16 %v364
        %v540 = vunpack.c.l.b16 %v365
        %v541 = vunpack.c.h.b16 %v365
        %v542 = vunpack.c.l.b16 %v366
        %v543 = vunpack.c.h.b16 %v366
        %v544 = vunpack.c.l.b16 %v367
        %v545 = vunpack.c.h.b16 %v367
        %v546 = vunpack.c.l.b16 %v368
        %v547 = vunpack.c.h.b16 %v368
        %v548 = vunpack.c.l.b16 %v369
        %v549 = vunpack.c.h.b16 %v369
        %v550 = vunpack.c.l.b16 %v370
        %v551 = vunpack.c.h.b16 %v370
        %v552 = vunpack.c.l.b16 %v371
        %v553 = vunpack.c.h.b16 %v371
        %v554 = vunpack.c.l.b16 %v372
        %v555 = vunpack.c.h.b16 %v372
        %v556 = vunpack.c.l.b16 %v373
        %v557 = vunpack.c.h.b16 %v373
        %v558 = vunpack.c.l.b16 %v374
        %v559 = vunpack.c.h.b16 %v374
        %v560 = vunpack.c.l.b16 %v375
        %v561 = vunpack.c.h.b16 %v375
        %v562 = vunpack.c.l.b16 %v376
        %v563 = vunpack.c.h.b16 %v376
        %v564 = vunpack.c.l.b16 %v377
        %v565 = vunpack.c.h.b16 %v377
        %v566 = vunpack.c.l.b16 %v378
        %v567 = vunpack.c.h.b16 %v378
        %v568 = vunpack.c.l.b16 %v379
        %v569 = vunpack.c.h.b16 %v379
        %v570 = vunpack.c.l.b16 %v380
        %v571 = vunpack.c.h.b16 %v380
        %v572 = vunpack.c.l.b16 %v381
        %v573 = vunpack.c.h.b16 %v381
        %v574 = vunpack.c.l.b16 %v382
        %v575 = vunpack.c.h.b16 %v382
        %v576 = vunpack.c.l.b16 %v383
        %v577 = vunpack.c.h.b16 %v383
        %v578 = vunpack.c.l.b16 %v384
        %v579 = vunpack.c.h.b16 %v384
        %v580 = vunpack.c.l.b16 %v385
        %v581 = vunpack.c.h.b16 %v385
        %v582 = vunpack.c.l.b16 %v386
        %v583 = vunpack.c.h.b16 %v386
        %v584 = vunpack.c.l.b16 %v387
        %v585 = vunpack.c.h.b16 %v387
        %v586 = vunpack.c.l.b16 %v388
        %v587 = vunpack.c.h.b16 %v388
        %v588 = vunpack.c.l.b16 %v389
        %v589 = vunpack.c.h.b16 %v389
        %v590 = vunpack.c.l.b16 %v390
        %v591 = vunpack.c.h.b16 %v390
        %v592 = vunpack.c.l.b16 %v391
        %v593 = vunpack.c.h.b16 %v391
        %v594 = vunpack.c.l.b16 %v392
        %v595 = vunpack.c.h.b16 %v392
        %v596 = vunpack.c.l.b16 %v393
        %v597 = vunpack.c.h.b16 %v393
        %v598 = vunpack.c.l.b16 %v394
        %v599 = vunpack.c.h.b16 %v394
        %v600 = vunpack.c.l.b16 %v395
        %v601 = vunpack.c.h.b16 %v395
        %v602 = vunpack.c.l.b16 %v396
        %v603 = vunpack.c.h.b16 %v396
        %v604 = vunpack.c.l.b16 %v397
        %v605 = vunpack.c.h.b16 %v397
        %v606 = vunpack.c.l.b16 %v398
        %v607 = vunpack.c.h.b16 %v398
        %v608 = vunpack.c.l.b16 %v399
        %v609 = vunpack.c.h.b16 %v399
        %v610 = vunpack.c.l.b16 %v400
        %v611 = vunpack.c.h.b16 %v400
        %v612 = vunpack.c.l.b16 %v401
        %v613 = vunpack.c.h.b16 %v401
        %v614 = vunpack.c.l.b16 %v402
        %v615 = vunpack.c.h.b16 %v402
        %v616 = vunpack.c.l.b16 %v403
        %v617 = vunpack.c.h.b16 %v403
        %v618 = vpack.c.b16 %v494, %v490
        %v619 = vpack.c.b16 %v495, %v491
        %v620 = vpack.c.b16 %v496, %v492
        %v621 = vpack.c.b16 %v497, %v493
        %v622 = vpack.c.b16 %v502, %v498
        %v623 = vpack.c.b16 %v503, %v499
        %v624 = vpack.c.b16 %v504, %v500
        %v625 = vpack.c.b16 %v505, %v501
        %v626 = vpack.c.b16 %v510, %v506
        %v627 = vpack.c.b16 %v511, %v507
        %v628 = vpack.c.b16 %v512, %v508
        %v629 = vpack.c.b16 %v513, %v509
        %v630 = vpack.c.b16 %v518, %v514
        %v631 = vpack.c.b16 %v519, %v515
        %v632 = vpack.c.b16 %v520, %v516
        %v633 = vpack.c.b16 %v521, %v517
        %v634 = vpack.c.b16 %v526, %v522
        %v635 = vpack.c.b16 %v527, %v523
        %v636 = vpack.c.b16 %v528, %v524
        %v637 = vpack.c.b16 %v529, %v525
        %v638 = vpack.c.b16 %v534, %v530
        %v639 = vpack.c.b16 %v535, %v531
        %v640 = vpack.c.b16 %v536, %v532
        %v641 = vpack.c.b16 %v537, %v533
        %v642 = vpack.c.b16 %v542, %v538
        %v643 = vpack.c.b16 %v543, %v539
        %v644 = vpack.c.b16 %v544, %v540
        %v645 = vpack.c.b16 %v545, %v541
        %v646 = vpack.c.b16 %v550, %v546
        %v647 = vpack.c.b16 %v551, %v547
        %v648 = vpack.c.b16 %v552, %v548
        %v649 = vpack.c.b16 %v553, %v549
        %v650 = vpack.c.b16 %v558, %v554
        %v651 = vpack.c.b16 %v559, %v555
        %v652 = vpack.c.b16 %v560, %v556
        %v653 = vpack.c.b16 %v561, %v557
        %v654 = vpack.c.b16 %v566, %v562
        %v655 = vpack.c.b16 %v567, %v563
        %v656 = vpack.c.b16 %v568, %v564
        %v657 = vpack.c.b16 %v569, %v565
        %v658 = vpack.c.b16 %v574, %v570
        %v659 = vpack.c.b16 %v575, %v571
        %v660 = vpack.c.b16 %v576, %v572
        %v661 = vpack.c.b16 %v577, %v573
        %v662 = vpack.c.b16 %v582, %v578
        %v663 = vpack.c.b16 %v583, %v579
        %v664 = vpack.c.b16 %v584, %v580
        %v665 = vpack.c.b16 %v585, %v581
        %v666 = vpack.c.b16 %v590, %v586
        %v667 = vpack.c.b16 %v591, %v587
        %v668 = vpack.c.b16 %v592, %v588
        %v669 = vpack.c.b16 %v593, %v589
        %v670 = vpack.c.b16 %v598, %v594
        %v671 = vpack.c.b16 %v599, %v595
        %v672 = vpack.c.b16 %v600, %v596
        %v673 = vpack.c.b16 %v601, %v597
        %v674 = vpack.c.b16 %v606, %v602
        %v675 = vpack.c.b16 %v607, %v603
        %v676 = vpack.c.b16 %v608, %v604
        %v677 = vpack.c.b16 %v609, %v605
        %v678 = vpack.c.b16 %v614, %v610
        %v679 = vpack.c.b16 %v615, %v611
        %v680 = vpack.c.b16 %v616, %v612
        %v681 = vpack.c.b16 %v617, %v613
        %746 = vmatprep.subr.bf16.mxu0 %v619
        %747 = vmatpush1.bf16.msra.mxu0 %v618
        %748 = vmatprep.subr.bf16.mxu0 %v623
        %749 = vmatpush1.bf16.msra.mxu0 %v622
        %750 = vmatprep.subr.bf16.mxu0 %v627
        %751 = vmatpush1.bf16.msra.mxu0 %v626
        %752 = vmatprep.subr.bf16.mxu0 %v631
        %753 = vmatpush1.bf16.msra.mxu0 %v630
        %754 = vmatprep.subr.bf16.mxu0 %v635
        %755 = vmatpush1.bf16.msra.mxu0 %v634
        %756 = vmatprep.subr.bf16.mxu0 %v639
        %757 = vmatpush1.bf16.msra.mxu0 %v638
        %758 = vmatprep.subr.bf16.mxu0 %v643
        %759 = vmatpush1.bf16.msra.mxu0 %v642
        %760 = vmatprep.subr.bf16.mxu0 %v647
        %761 = vmatpush1.bf16.msra.mxu0 %v646
        %762 = vmatprep.subr.bf16.mxu0 %v651
        %763 = vmatpush1.bf16.msra.mxu0 %v650
        %764 = vmatprep.subr.bf16.mxu0 %v655
        %765 = vmatpush1.bf16.msra.mxu0 %v654
        %766 = vmatprep.subr.bf16.mxu0 %v659
        %767 = vmatpush1.bf16.msra.mxu0 %v658
        %768 = vmatprep.subr.bf16.mxu0 %v663
        %769 = vmatpush1.bf16.msra.mxu0 %v662
        %770 = vmatprep.subr.bf16.mxu0 %v667
        %771 = vmatpush1.bf16.msra.mxu0 %v666
        %772 = vmatprep.subr.bf16.mxu0 %v671
        %773 = vmatpush1.bf16.msra.mxu0 %v670
        %774 = vmatprep.subr.bf16.mxu0 %v675
        %775 = vmatpush1.bf16.msra.mxu0 %v674
        %776 = vmatprep.subr.bf16.mxu0 %v679
        %777 = vmatpush1.bf16.msra.mxu0 %v678
        %778 = vmatprep.mubr.bf16.mxu0 %v339
        %779 = vmatmul.mubr.bf16.gmra.mrb[0].mxu0 %v338
        %v780 = vpop.f32.mrb[0].mxu0
        %v781 = vadd.f32 %v409, %v780
        %v782 = vpop.f32.mrb[0].mxu0
        %v783 = vadd.f32 %v413, %v782
        %v784 = vpop.f32.mrb[0].mxu0
        %v785 = vpop.f32.mrb[0].mxu0
        %786 = vdwg.mxu0
        %787 = vmatprep.subr.bf16.mxu0 %v621
        %788 = vmatpush1.bf16.msra.mxu0 %v620
        %789 = vmatprep.subr.bf16.mxu0 %v625
        %790 = vmatpush1.bf16.msra.mxu0 %v624
        %791 = vmatprep.subr.bf16.mxu0 %v629
        %792 = vmatpush1.bf16.msra.mxu0 %v628
        %793 = vmatprep.subr.bf16.mxu0 %v633
        %794 = vmatpush1.bf16.msra.mxu0 %v632
        %795 = vmatprep.subr.bf16.mxu0 %v637
        %796 = vmatpush1.bf16.msra.mxu0 %v636
        %797 = vmatprep.subr.bf16.mxu0 %v641
        %798 = vmatpush1.bf16.msra.mxu0 %v640
        %799 = vmatprep.subr.bf16.mxu0 %v645
        %800 = vmatpush1.bf16.msra.mxu0 %v644
        %801 = vmatprep.subr.bf16.mxu0 %v649
        %802 = vmatpush1.bf16.msra.mxu0 %v648
        %803 = vmatprep.subr.bf16.mxu0 %v653
        %804 = vmatpush1.bf16.msra.mxu0 %v652
        %805 = vmatprep.subr.bf16.mxu0 %v657
        %806 = vmatpush1.bf16.msra.mxu0 %v656
        %807 = vmatprep.subr.bf16.mxu0 %v661
        %808 = vmatpush1.bf16.msra.mxu0 %v660
        %809 = vmatprep.subr.bf16.mxu0 %v665
        %810 = vmatpush1.bf16.msra.mxu0 %v664
        %811 = vmatprep.subr.bf16.mxu0 %v669
        %812 = vmatpush1.bf16.msra.mxu0 %v668
        %813 = vmatprep.subr.bf16.mxu0 %v673
        %814 = vmatpush1.bf16.msra.mxu0 %v672
        %815 = vmatprep.subr.bf16.mxu0 %v677
        %816 = vmatpush1.bf16.msra.mxu0 %v676
        %817 = vmatprep.subr.bf16.mxu0 %v681
        %818 = vmatpush1.bf16.msra.mxu0 %v680
        %819 = vmatprep.mubr.bf16.mxu0 %v339
        %820 = vmatmul.mubr.bf16.gmra.mrb[0].mxu0 %v338
        %v821 = vpop.f32.mrb[0].mxu0
        %v822 = vadd.f32 %v417, %v821
        %v823 = vpop.f32.mrb[0].mxu0
        %v824 = vadd.f32 %v421, %v823
        %v825 = vpop.f32.mrb[0].mxu0
        %v826 = vpop.f32.mrb[0].mxu0
        %827 = vdwg.mxu0
        %v828 = vxor.u32 %v781, 2147483648
        %v829 = vmul.f32 %v828, 1.442695
        %v830 = vpow.pop %v829
        %v831 = vadd.f32 %v830, 1.0
        %v832 = vrcp.pop %v831
        %v833 = vmul.f32 1.0, %v832
        %v834 = vxor.u32 %v783, 2147483648
        %v835 = vmul.f32 %v834, 1.442695
        %v836 = vpow.pop %v835
        %v837 = vadd.f32 %v836, 1.0
        %v838 = vrcp.pop %v837
        %v839 = vmul.f32 1.0, %v838
        %v840 = vmul.f32 %v833, %v824
        %v841 = vadd.f32 %v822, %v840
        %v842 = vtanh.pop %v841
        %v843 = vsub.f32 1.0, %v839
        %v844 = vmul.f32 %v843, %v842
        %v845 = vmul.f32 %v839, %v335
        %v846 = vadd.f32 %v844, %v845
        %847 = vst [vmem:[#allocation2] sm:$0xff] %v846
        %v848 = vpack.c.bf16 %v846, %v846
        %v849 = vld [vmem:[#allocation13] sm:$0xf]
        %v850 = vld [vmem:[#allocation13 + $0x4] sm:$0xf]
        %v851 = vld [vmem:[#allocation13 + $0x8] sm:$0xf]
        %v852 = vld [vmem:[#allocation13 + $0xc] sm:$0xf]
        %v853 = vld [vmem:[#allocation13 + $0x10] sm:$0xf]
        %v854 = vld [vmem:[#allocation13 + $0x14] sm:$0xf]
        %v855 = vld [vmem:[#allocation13 + $0x18] sm:$0xf]
        %v856 = vld [vmem:[#allocation13 + $0x1c] sm:$0xf]
        %v857 = vld [vmem:[#allocation13 + $0x20] sm:$0xf]
        %v858 = vld [vmem:[#allocation13 + $0x24] sm:$0xf]
        %v859 = vld [vmem:[#allocation13 + $0x28] sm:$0xf]
        %v860 = vld [vmem:[#allocation13 + $0x2c] sm:$0xf]
        %v861 = vld [vmem:[#allocation13 + $0x30] sm:$0xf]
        %v862 = vld [vmem:[#allocation13 + $0x34] sm:$0xf]
        %v863 = vld [vmem:[#allocation13 + $0x38] sm:$0xf]
        %v864 = vld [vmem:[#allocation13 + $0x3c] sm:$0xf]
        %v865 = vld [vmem:[%s8] sm:$0x1]
        %v867 = vlaneseq
        %v868 = vshrl.u32 %v867, 7
        %v869 = vsub.s32 0, %v868
        %v870 = vrot.slane %v865, %v869
        %v888 = vunpack.c.l.b16 %v849
        %v889 = vunpack.c.l.b16 %v850
        %v890 = vunpack.c.l.b16 %v851
        %v891 = vunpack.c.l.b16 %v852
        %v892 = vunpack.c.l.b16 %v853
        %v893 = vunpack.c.l.b16 %v854
        %v894 = vunpack.c.l.b16 %v855
        %v895 = vunpack.c.l.b16 %v856
        %v896 = vunpack.c.l.b16 %v857
        %v897 = vunpack.c.l.b16 %v858
        %v898 = vunpack.c.l.b16 %v859
        %v899 = vunpack.c.l.b16 %v860
        %v900 = vunpack.c.l.b16 %v861
        %v901 = vunpack.c.l.b16 %v862
        %v902 = vunpack.c.l.b16 %v863
        %v903 = vunpack.c.l.b16 %v864
        %v904 = vpack.c.b16 %v889, %v888
        %v905 = vpack.c.b16 %v891, %v890
        %v906 = vpack.c.b16 %v893, %v892
        %v907 = vpack.c.b16 %v895, %v894
        %v908 = vpack.c.b16 %v897, %v896
        %v909 = vpack.c.b16 %v899, %v898
        %v910 = vpack.c.b16 %v901, %v900
        %v911 = vpack.c.b16 %v903, %v902
        %920 = vmatprep.subr.bf16.mxu0 0
        %921 = vmatpush1.bf16.msra.mxu0 %v904
        %922 = vmatprep.subr.bf16.mxu0 0
        %923 = vmatpush1.bf16.msra.mxu0 %v905
        %924 = vmatprep.subr.bf16.mxu0 0
        %925 = vmatpush1.bf16.msra.mxu0 %v906
        %926 = vmatprep.subr.bf16.mxu0 0
        %927 = vmatpush1.bf16.msra.mxu0 %v907
        %928 = vmatprep.subr.bf16.mxu0 0
        %929 = vmatpush1.bf16.msra.mxu0 %v908
        %930 = vmatprep.subr.bf16.mxu0 0
        %931 = vmatpush1.bf16.msra.mxu0 %v909
        %932 = vmatprep.subr.bf16.mxu0 0
        %933 = vmatpush1.bf16.msra.mxu0 %v910
        %934 = vmatprep.subr.bf16.mxu0 0
        %935 = vmatpush1.bf16.msra.mxu0 %v911
        %936 = vmatprep.subr.bf16.mxu0 0
        %937 = vmatpush1.bf16.msra.mxu0 0
        %938 = vmatprep.subr.bf16.mxu0 0
        %939 = vmatpush1.bf16.msra.mxu0 0
        %940 = vmatprep.subr.bf16.mxu0 0
        %941 = vmatpush1.bf16.msra.mxu0 0
        %942 = vmatprep.subr.bf16.mxu0 0
        %943 = vmatpush1.bf16.msra.mxu0 0
        %944 = vmatprep.subr.bf16.mxu0 0
        %945 = vmatpush1.bf16.msra.mxu0 0
        %946 = vmatprep.subr.bf16.mxu0 0
        %947 = vmatpush1.bf16.msra.mxu0 0
        %948 = vmatprep.subr.bf16.mxu0 0
        %949 = vmatpush1.bf16.msra.mxu0 0
        %950 = vmatprep.subr.bf16.mxu0 0
        %951 = vmatpush1.bf16.msra.mxu0 0
        %952 = vmatprep.mubr.bf16.mxu0 0
        %953 = vmatmul.mubr.bf16.gmra.mrb[0].mxu0 %v848
        %v954 = vpop.f32.mrb[0].mxu0
        %v955 = vadd.f32 %v870, %v954
        %v956 = vpop.f32.mrb[0].mxu0
        %v957 = vpop.f32.mrb[0].mxu0
        %v958 = vpop.f32.mrb[0].mxu0
        %959 = vdwg.mxu0
        %960 = vmax.xlane.f32.xlu0 %v955
        %v961 = vpop.xlane.xlu0 %960
        %v962 = vsub.f32 %v955, %v961
        %v963 = vmul.f32 %v962, 1.442695
        %v964 = vpow.pop %v963
        %965 = vadd.xlane.f32.xlu0 %v964
        %v966 = vpop.xlane.xlu0 %965
        %v967 = vlog2.pop %v966
        %v968 = vmul.f32 %v967, 0.6931472
        %v969 = vadd.f32 %v961, %v968
        %v970 = vsub.f32 %v955, %v969
        %971 = vst [vmem:[%s311] sm:$0xff] %v970
        %s972 = sld [smem:[#allocation6 + %s332]]
        %p973 = scmp.eq.s32.totalorder %s972, 1
        // Predicated region
        $region61: #{tpu_custom_call.1} parent=43 // pred_check
          %p974 = pneg %p973
        $region62: #{tpu_custom_call.1} parent=43 // pred_check_branch
          %976 = sbr.rel (%p974) target = $region64
        $region63: #{tpu_custom_call.1} parent=43 // pred_region
          %s977 = smul.u32 %s39, 32
          %s978 = sld [smem:[#allocation7 + %s977]]
          %s979 = scalar_lea.vmem [#allocation8], %s978
          %v980 = vld [vmem:[%s979] sm:$0x1]
          %981 = vst [vmem:[#allocation3] sm:$0x1] %v980
          %s982 = sadd.s32 %s977, 1
          %s983 = sld [smem:[#allocation7 + %s982]]
          %s984 = scalar_lea.vmem [#allocation8], %s983
          %v985 = vld [vmem:[%s984] sm:$0x1]
          %986 = vst [vmem:[#allocation3 + $0x1] sm:$0x1] %v985
          %s987 = sadd.s32 %s977, 2
          %s988 = sld [smem:[#allocation7 + %s987]]
          %s989 = scalar_lea.vmem [#allocation8], %s988
          %v990 = vld [vmem:[%s989] sm:$0x1]
          %991 = vst [vmem:[#allocation3 + $0x2] sm:$0x1] %v990
          %s992 = sadd.s32 %s977, 3
          %s993 = sld [smem:[#allocation7 + %s992]]
          %s994 = scalar_lea.vmem [#allocation8], %s993
          %v995 = vld [vmem:[%s994] sm:$0x1]
          %996 = vst [vmem:[#allocation3 + $0x3] sm:$0x1] %v995
          %s997 = sadd.s32 %s977, 4
          %s998 = sld [smem:[#allocation7 + %s997]]
          %s999 = scalar_lea.vmem [#allocation8], %s998
          %v1000 = vld [vmem:[%s999] sm:$0x1]
          %1001 = vst [vmem:[#allocation3 + $0x4] sm:$0x1] %v1000
          %s1002 = sadd.s32 %s977, 5
          %s1003 = sld [smem:[#allocation7 + %s1002]]
          %s1004 = scalar_lea.vmem [#allocation8], %s1003
          %v1005 = vld [vmem:[%s1004] sm:$0x1]
          %1006 = vst [vmem:[#allocation3 + $0x5] sm:$0x1] %v1005
          %s1007 = sadd.s32 %s977, 6
          %s1008 = sld [smem:[#allocation7 + %s1007]]
          %s1009 = scalar_lea.vmem [#allocation8], %s1008
          %v1010 = vld [vmem:[%s1009] sm:$0x1]
          %1011 = vst [vmem:[#allocation3 + $0x6] sm:$0x1] %v1010
          %s1012 = sadd.s32 %s977, 7
          %s1013 = sld [smem:[#allocation7 + %s1012]]
          %s1014 = scalar_lea.vmem [#allocation8], %s1013
          %v1015 = vld [vmem:[%s1014] sm:$0x1]
          %1016 = vst [vmem:[#allocation3 + $0x7] sm:$0x1] %v1015
        $region64: #{tpu_custom_call.1} parent=43 // pred_fallthru
          _
        %p1017 = scmp.eq.s32.totalorder %s972, 0
        // Predicated region
        $region65: #{tpu_custom_call.1} parent=43 // pred_check
          %p1018 = pneg %p1017
        $region66: #{tpu_custom_call.1} parent=43 // pred_check_branch
          %1020 = sbr.rel (%p1018) target = $region68
        $region67: #{tpu_custom_call.1} parent=43 // pred_region
          %vm1021 = vcmp.ge.f32.partialorder %v955, %v961
          %v1022 = vsel %vm1021, %v331, 128
          %v1023 = vand.u32 %v1022, 65535
          %v1024 = vshra.s32 %v1022, 16
          %v1025 = vcvt.s32.f32 %v1023
          %v1026 = vcvt.s32.f32 %v1024
          %1027 = vmin.xlane.f32.xlu0 %v1026
          %v1028 = vpop.xlane.xlu0 %1027
          %vm1029 = vcmp.eq.f32.partialorder %v1026, %v1028
          %v1030 = vsel %vm1029, %v1025, inf
          %1031 = vmin.xlane.f32.xlu0 %v1030
          %v1032 = vpop.xlane.xlu0 %1031
          %v1033 = vcvt.f32.s32 %v1032
          %v1034 = vcvt.f32.s32 %v1028
          %v1035 = vshll.u32 %v1034, 16
          %v1036 = vadd.s32 %v1035, %v1033
          %vm1037 = vcmp.eq.s32.totalorder %v331, %v1036
          %v1038 = vsel %vm1037, 1, 0
          %v1039 = vcvt.s32.f32 %v1038
          %v1040 = vld [vmem:[#allocation8] sm:$0xff]
          %v1041 = vld [vmem:[#allocation8 + $0x8] sm:$0xff]
          %v1042 = vld [vmem:[#allocation8 + $0x10] sm:$0xff]
          %v1043 = vld [vmem:[#allocation8 + $0x18] sm:$0xff]
          %v1044 = vld [vmem:[#allocation8 + $0x20] sm:$0xff]
          %v1045 = vld [vmem:[#allocation8 + $0x28] sm:$0xff]
          %v1046 = vld [vmem:[#allocation8 + $0x30] sm:$0xff]
          %v1047 = vld [vmem:[#allocation8 + $0x38] sm:$0xff]
          %v1048 = vld [vmem:[#allocation8 + $0x40] sm:$0xff]
          %v1049 = vld [vmem:[#allocation8 + $0x48] sm:$0xff]
          %v1050 = vld [vmem:[#allocation8 + $0x50] sm:$0xff]
          %v1051 = vld [vmem:[#allocation8 + $0x58] sm:$0xff]
          %v1052 = vld [vmem:[#allocation8 + $0x60] sm:$0xff]
          %v1053 = vld [vmem:[#allocation8 + $0x68] sm:$0xff]
          %v1054 = vld [vmem:[#allocation8 + $0x70] sm:$0xff]
          %v1055 = vld [vmem:[#allocation8 + $0x78] sm:$0xff]
          %1056 = vmatprep.subr.mxu0 0.0
          %1057 = vmatpush1.msra.mxu0 %v1040
          %1058 = vmatprep.subr.mxu0 0.0
          %1059 = vmatpush1.msra.mxu0 %v1041
          %1060 = vmatprep.subr.mxu0 0.0
          %1061 = vmatpush1.msra.mxu0 %v1042
          %1062 = vmatprep.subr.mxu0 0.0
          %1063 = vmatpush1.msra.mxu0 %v1043
          %1064 = vmatprep.subr.mxu0 0.0
          %1065 = vmatpush1.msra.mxu0 %v1044
          %1066 = vmatprep.subr.mxu0 0.0
          %1067 = vmatpush1.msra.mxu0 %v1045
          %1068 = vmatprep.subr.mxu0 0.0
          %1069 = vmatpush1.msra.mxu0 %v1046
          %1070 = vmatprep.subr.mxu0 0.0
          %1071 = vmatpush1.msra.mxu0 %v1047
          %1072 = vmatprep.subr.mxu0 0.0
          %1073 = vmatpush1.msra.mxu0 %v1048
          %1074 = vmatprep.subr.mxu0 0.0
          %1075 = vmatpush1.msra.mxu0 %v1049
          %1076 = vmatprep.subr.mxu0 0.0
          %1077 = vmatpush1.msra.mxu0 %v1050
          %1078 = vmatprep.subr.mxu0 0.0
          %1079 = vmatpush1.msra.mxu0 %v1051
          %1080 = vmatprep.subr.mxu0 0.0
          %1081 = vmatpush1.msra.mxu0 %v1052
          %1082 = vmatprep.subr.mxu0 0.0
          %1083 = vmatpush1.msra.mxu0 %v1053
          %1084 = vmatprep.subr.mxu0 0.0
          %1085 = vmatpush1.msra.mxu0 %v1054
          %1086 = vmatprep.subr.mxu0 0.0
          %1087 = vmatpush1.msra.mxu0 %v1055
          %1088 = vmatprep.subr.mxu0 0.0
          %1089 = vmatpush1.msra.mxu0 0.0
          %1090 = vmatprep.subr.mxu0 0.0
          %1091 = vmatpush1.msra.mxu0 0.0
          %1092 = vmatprep.subr.mxu0 0.0
          %1093 = vmatpush1.msra.mxu0 0.0
          %1094 = vmatprep.subr.mxu0 0.0
          %1095 = vmatpush1.msra.mxu0 0.0
          %1096 = vmatprep.subr.mxu0 0.0
          %1097 = vmatpush1.msra.mxu0 0.0
          %1098 = vmatprep.subr.mxu0 0.0
          %1099 = vmatpush1.msra.mxu0 0.0
          %1100 = vmatprep.subr.mxu0 0.0
          %1101 = vmatpush1.msra.mxu0 0.0
          %1102 = vmatprep.subr.mxu0 0.0
          %1103 = vmatpush1.msra.mxu0 0.0
          %1104 = vmatprep.subr.mxu0 0.0
          %1105 = vmatpush1.msra.mxu0 0.0
          %1106 = vmatprep.subr.mxu0 0.0
          %1107 = vmatpush1.msra.mxu0 0.0
          %1108 = vmatprep.subr.mxu0 0.0
          %1109 = vmatpush1.msra.mxu0 0.0
          %1110 = vmatprep.subr.mxu0 0.0
          %1111 = vmatpush1.msra.mxu0 0.0
          %1112 = vmatprep.subr.mxu0 0.0
          %1113 = vmatpush1.msra.mxu0 0.0
          %1114 = vmatprep.subr.mxu0 0.0
          %1115 = vmatpush1.msra.mxu0 0.0
          %1116 = vmatprep.subr.mxu0 0.0
          %1117 = vmatpush1.msra.mxu0 0.0
          %1118 = vmatprep.subr.mxu0 0.0
          %1119 = vmatpush1.msra.mxu0 0.0
          %1120 = vmatprep.mubr.f32.mxu0 0.0
          %1121 = vmatmul.mubr.f32.gmra.mrb[0].mxu0 %v1039
          %v1122 = vpop.f32.mrb[0].mxu0
          %v1123 = vadd.f32 0.0, %v1122
          %v1124 = vpop.f32.mrb[0].mxu0
          %1125 = vdwg.mxu0
          %1126 = vst [vmem:[#allocation3] sm:$0xff] %v1123
        $region68: #{tpu_custom_call.1} parent=43 // pred_fallthru
          _
        %s1127 = sadd.s32 %s332, 1
        %v1128 = vld [vmem:[#allocation2] sm:$0xff]
        %1129 = vst [vmem:[#allocation3 + $0x8] sm:$0xff] %v1128
        %v1130 = vld [vmem:[#allocation2] sm:$0xff]
        %v1131 = vld [vmem:[#allocation3] sm:$0xff]
        %v1132 = vld [vmem:[#allocation3 + $0x8] sm:$0xff]
        %v1133 = vpack.c.bf16 %v1131, %v1131
        %v1134 = vpack.c.bf16 %v1132, %v1132
        %v1135 = vld [vmem:[#allocation11] sm:$0xff]
        %v1136 = vld [vmem:[#allocation11 + $0x8] sm:$0xff]
        %v1137 = vld [vmem:[#allocation11 + $0x10] sm:$0xff]
        %v1138 = vld [vmem:[#allocation11 + $0x18] sm:$0xff]
        %v1139 = vld [vmem:[#allocation11 + $0x20] sm:$0xff]
        %v1140 = vld [vmem:[#allocation11 + $0x28] sm:$0xff]
        %v1141 = vld [vmem:[#allocation11 + $0x30] sm:$0xff]
        %v1142 = vld [vmem:[#allocation11 + $0x38] sm:$0xff]
        %v1143 = vld [vmem:[#allocation11 + $0x40] sm:$0xff]
        %v1144 = vld [vmem:[#allocation11 + $0x48] sm:$0xff]
        %v1145 = vld [vmem:[#allocation11 + $0x50] sm:$0xff]
        %v1146 = vld [vmem:[#allocation11 + $0x58] sm:$0xff]
        %v1147 = vld [vmem:[#allocation11 + $0x60] sm:$0xff]
        %v1148 = vld [vmem:[#allocation11 + $0x68] sm:$0xff]
        %v1149 = vld [vmem:[#allocation11 + $0x70] sm:$0xff]
        %v1150 = vld [vmem:[#allocation11 + $0x78] sm:$0xff]
        %v1151 = vld [vmem:[#allocation11 + $0x80] sm:$0xff]
        %v1152 = vld [vmem:[#allocation11 + $0x88] sm:$0xff]
        %v1153 = vld [vmem:[#allocation11 + $0x90] sm:$0xff]
        %v1154 = vld [vmem:[#allocation11 + $0x98] sm:$0xff]
        %v1155 = vld [vmem:[#allocation11 + $0xa0] sm:$0xff]
        %v1156 = vld [vmem:[#allocation11 + $0xa8] sm:$0xff]
        %v1157 = vld [vmem:[#allocation11 + $0xb0] sm:$0xff]
        %v1158 = vld [vmem:[#allocation11 + $0xb8] sm:$0xff]
        %v1159 = vld [vmem:[#allocation11 + $0xc0] sm:$0xff]
        %v1160 = vld [vmem:[#allocation11 + $0xc8] sm:$0xff]
        %v1161 = vld [vmem:[#allocation11 + $0xd0] sm:$0xff]
        %v1162 = vld [vmem:[#allocation11 + $0xd8] sm:$0xff]
        %v1163 = vld [vmem:[#allocation11 + $0xe0] sm:$0xff]
        %v1164 = vld [vmem:[#allocation11 + $0xe8] sm:$0xff]
        %v1165 = vld [vmem:[#allocation11 + $0xf0] sm:$0xff]
        %v1166 = vld [vmem:[#allocation11 + $0xf8] sm:$0xff]
        %v1167 = vld [vmem:[#allocation11 + $0x100] sm:$0xff]
        %v1168 = vld [vmem:[#allocation11 + $0x108] sm:$0xff]
        %v1169 = vld [vmem:[#allocation11 + $0x110] sm:$0xff]
        %v1170 = vld [vmem:[#allocation11 + $0x118] sm:$0xff]
        %v1171 = vld [vmem:[#allocation11 + $0x120] sm:$0xff]
        %v1172 = vld [vmem:[#allocation11 + $0x128] sm:$0xff]
        %v1173 = vld [vmem:[#allocation11 + $0x130] sm:$0xff]
        %v1174 = vld [vmem:[#allocation11 + $0x138] sm:$0xff]
        %v1175 = vld [vmem:[#allocation11 + $0x140] sm:$0xff]
        %v1176 = vld [vmem:[#allocation11 + $0x148] sm:$0xff]
        %v1177 = vld [vmem:[#allocation11 + $0x150] sm:$0xff]
        %v1178 = vld [vmem:[#allocation11 + $0x158] sm:$0xff]
        %v1179 = vld [vmem:[#allocation11 + $0x160] sm:$0xff]
        %v1180 = vld [vmem:[#allocation11 + $0x168] sm:$0xff]
        %v1181 = vld [vmem:[#allocation11 + $0x170] sm:$0xff]
        %v1182 = vld [vmem:[#allocation11 + $0x178] sm:$0xff]
        %v1183 = vld [vmem:[#allocation11 + $0x180] sm:$0xff]
        %v1184 = vld [vmem:[#allocation11 + $0x188] sm:$0xff]
        %v1185 = vld [vmem:[#allocation11 + $0x190] sm:$0xff]
        %v1186 = vld [vmem:[#allocation11 + $0x198] sm:$0xff]
        %v1187 = vld [vmem:[#allocation11 + $0x1a0] sm:$0xff]
        %v1188 = vld [vmem:[#allocation11 + $0x1a8] sm:$0xff]
        %v1189 = vld [vmem:[#allocation11 + $0x1b0] sm:$0xff]
        %v1190 = vld [vmem:[#allocation11 + $0x1b8] sm:$0xff]
        %v1191 = vld [vmem:[#allocation11 + $0x1c0] sm:$0xff]
        %v1192 = vld [vmem:[#allocation11 + $0x1c8] sm:$0xff]
        %v1193 = vld [vmem:[#allocation11 + $0x1d0] sm:$0xff]
        %v1194 = vld [vmem:[#allocation11 + $0x1d8] sm:$0xff]
        %v1195 = vld [vmem:[#allocation11 + $0x1e0] sm:$0xff]
        %v1196 = vld [vmem:[#allocation11 + $0x1e8] sm:$0xff]
        %v1197 = vld [vmem:[#allocation11 + $0x1f0] sm:$0xff]
        %v1198 = vld [vmem:[#allocation11 + $0x1f8] sm:$0xff]
        %v1199 = vld [vmem:[%s6] sm:$0xf]
        %v1201 = vlaneseq
        %v1202 = vshrl.u32 %v1201, 7
        %v1203 = vsub.s32 0, %v1202
        %v1204 = vrot.slane %v1199, %v1203
        %v1205 = vlaneseq
        %v1206 = vshrl.u32 %v1205, 7
        %v1207 = vsub.s32 1, %v1206
        %v1208 = vrot.slane %v1199, %v1207
        %v1209 = vlaneseq
        %v1210 = vshrl.u32 %v1209, 7
        %v1211 = vsub.s32 2, %v1210
        %v1212 = vrot.slane %v1199, %v1211
        %v1213 = vlaneseq
        %v1214 = vshrl.u32 %v1213, 7
        %v1215 = vsub.s32 3, %v1214
        %v1216 = vrot.slane %v1199, %v1215
        %v1285 = vunpack.c.l.b16 %v1135
        %v1286 = vunpack.c.h.b16 %v1135
        %v1287 = vunpack.c.l.b16 %v1136
        %v1288 = vunpack.c.h.b16 %v1136
        %v1289 = vunpack.c.l.b16 %v1137
        %v1290 = vunpack.c.h.b16 %v1137
        %v1291 = vunpack.c.l.b16 %v1138
        %v1292 = vunpack.c.h.b16 %v1138
        %v1293 = vunpack.c.l.b16 %v1139
        %v1294 = vunpack.c.h.b16 %v1139
        %v1295 = vunpack.c.l.b16 %v1140
        %v1296 = vunpack.c.h.b16 %v1140
        %v1297 = vunpack.c.l.b16 %v1141
        %v1298 = vunpack.c.h.b16 %v1141
        %v1299 = vunpack.c.l.b16 %v1142
        %v1300 = vunpack.c.h.b16 %v1142
        %v1301 = vunpack.c.l.b16 %v1143
        %v1302 = vunpack.c.h.b16 %v1143
        %v1303 = vunpack.c.l.b16 %v1144
        %v1304 = vunpack.c.h.b16 %v1144
        %v1305 = vunpack.c.l.b16 %v1145
        %v1306 = vunpack.c.h.b16 %v1145
        %v1307 = vunpack.c.l.b16 %v1146
        %v1308 = vunpack.c.h.b16 %v1146
        %v1309 = vunpack.c.l.b16 %v1147
        %v1310 = vunpack.c.h.b16 %v1147
        %v1311 = vunpack.c.l.b16 %v1148
        %v1312 = vunpack.c.h.b16 %v1148
        %v1313 = vunpack.c.l.b16 %v1149
        %v1314 = vunpack.c.h.b16 %v1149
        %v1315 = vunpack.c.l.b16 %v1150
        %v1316 = vunpack.c.h.b16 %v1150
        %v1317 = vunpack.c.l.b16 %v1151
        %v1318 = vunpack.c.h.b16 %v1151
        %v1319 = vunpack.c.l.b16 %v1152
        %v1320 = vunpack.c.h.b16 %v1152
        %v1321 = vunpack.c.l.b16 %v1153
        %v1322 = vunpack.c.h.b16 %v1153
        %v1323 = vunpack.c.l.b16 %v1154
        %v1324 = vunpack.c.h.b16 %v1154
        %v1325 = vunpack.c.l.b16 %v1155
        %v1326 = vunpack.c.h.b16 %v1155
        %v1327 = vunpack.c.l.b16 %v1156
        %v1328 = vunpack.c.h.b16 %v1156
        %v1329 = vunpack.c.l.b16 %v1157
        %v1330 = vunpack.c.h.b16 %v1157
        %v1331 = vunpack.c.l.b16 %v1158
        %v1332 = vunpack.c.h.b16 %v1158
        %v1333 = vunpack.c.l.b16 %v1159
        %v1334 = vunpack.c.h.b16 %v1159
        %v1335 = vunpack.c.l.b16 %v1160
        %v1336 = vunpack.c.h.b16 %v1160
        %v1337 = vunpack.c.l.b16 %v1161
        %v1338 = vunpack.c.h.b16 %v1161
        %v1339 = vunpack.c.l.b16 %v1162
        %v1340 = vunpack.c.h.b16 %v1162
        %v1341 = vunpack.c.l.b16 %v1163
        %v1342 = vunpack.c.h.b16 %v1163
        %v1343 = vunpack.c.l.b16 %v1164
        %v1344 = vunpack.c.h.b16 %v1164
        %v1345 = vunpack.c.l.b16 %v1165
        %v1346 = vunpack.c.h.b16 %v1165
        %v1347 = vunpack.c.l.b16 %v1166
        %v1348 = vunpack.c.h.b16 %v1166
        %v1349 = vunpack.c.l.b16 %v1167
        %v1350 = vunpack.c.h.b16 %v1167
        %v1351 = vunpack.c.l.b16 %v1168
        %v1352 = vunpack.c.h.b16 %v1168
        %v1353 = vunpack.c.l.b16 %v1169
        %v1354 = vunpack.c.h.b16 %v1169
        %v1355 = vunpack.c.l.b16 %v1170
        %v1356 = vunpack.c.h.b16 %v1170
        %v1357 = vunpack.c.l.b16 %v1171
        %v1358 = vunpack.c.h.b16 %v1171
        %v1359 = vunpack.c.l.b16 %v1172
        %v1360 = vunpack.c.h.b16 %v1172
        %v1361 = vunpack.c.l.b16 %v1173
        %v1362 = vunpack.c.h.b16 %v1173
        %v1363 = vunpack.c.l.b16 %v1174
        %v1364 = vunpack.c.h.b16 %v1174
        %v1365 = vunpack.c.l.b16 %v1175
        %v1366 = vunpack.c.h.b16 %v1175
        %v1367 = vunpack.c.l.b16 %v1176
        %v1368 = vunpack.c.h.b16 %v1176
        %v1369 = vunpack.c.l.b16 %v1177
        %v1370 = vunpack.c.h.b16 %v1177
        %v1371 = vunpack.c.l.b16 %v1178
        %v1372 = vunpack.c.h.b16 %v1178
        %v1373 = vunpack.c.l.b16 %v1179
        %v1374 = vunpack.c.h.b16 %v1179
        %v1375 = vunpack.c.l.b16 %v1180
        %v1376 = vunpack.c.h.b16 %v1180
        %v1377 = vunpack.c.l.b16 %v1181
        %v1378 = vunpack.c.h.b16 %v1181
        %v1379 = vunpack.c.l.b16 %v1182
        %v1380 = vunpack.c.h.b16 %v1182
        %v1381 = vunpack.c.l.b16 %v1183
        %v1382 = vunpack.c.h.b16 %v1183
        %v1383 = vunpack.c.l.b16 %v1184
        %v1384 = vunpack.c.h.b16 %v1184
        %v1385 = vunpack.c.l.b16 %v1185
        %v1386 = vunpack.c.h.b16 %v1185
        %v1387 = vunpack.c.l.b16 %v1186
        %v1388 = vunpack.c.h.b16 %v1186
        %v1389 = vunpack.c.l.b16 %v1187
        %v1390 = vunpack.c.h.b16 %v1187
        %v1391 = vunpack.c.l.b16 %v1188
        %v1392 = vunpack.c.h.b16 %v1188
        %v1393 = vunpack.c.l.b16 %v1189
        %v1394 = vunpack.c.h.b16 %v1189
        %v1395 = vunpack.c.l.b16 %v1190
        %v1396 = vunpack.c.h.b16 %v1190
        %v1397 = vunpack.c.l.b16 %v1191
        %v1398 = vunpack.c.h.b16 %v1191
        %v1399 = vunpack.c.l.b16 %v1192
        %v1400 = vunpack.c.h.b16 %v1192
        %v1401 = vunpack.c.l.b16 %v1193
        %v1402 = vunpack.c.h.b16 %v1193
        %v1403 = vunpack.c.l.b16 %v1194
        %v1404 = vunpack.c.h.b16 %v1194
        %v1405 = vunpack.c.l.b16 %v1195
        %v1406 = vunpack.c.h.b16 %v1195
        %v1407 = vunpack.c.l.b16 %v1196
        %v1408 = vunpack.c.h.b16 %v1196
        %v1409 = vunpack.c.l.b16 %v1197
        %v1410 = vunpack.c.h.b16 %v1197
        %v1411 = vunpack.c.l.b16 %v1198
        %v1412 = vunpack.c.h.b16 %v1198
        %v1413 = vpack.c.b16 %v1289, %v1285
        %v1414 = vpack.c.b16 %v1290, %v1286
        %v1415 = vpack.c.b16 %v1291, %v1287
        %v1416 = vpack.c.b16 %v1292, %v1288
        %v1417 = vpack.c.b16 %v1297, %v1293
        %v1418 = vpack.c.b16 %v1298, %v1294
        %v1419 = vpack.c.b16 %v1299, %v1295
        %v1420 = vpack.c.b16 %v1300, %v1296
        %v1421 = vpack.c.b16 %v1305, %v1301
        %v1422 = vpack.c.b16 %v1306, %v1302
        %v1423 = vpack.c.b16 %v1307, %v1303
        %v1424 = vpack.c.b16 %v1308, %v1304
        %v1425 = vpack.c.b16 %v1313, %v1309
        %v1426 = vpack.c.b16 %v1314, %v1310
        %v1427 = vpack.c.b16 %v1315, %v1311
        %v1428 = vpack.c.b16 %v1316, %v1312
        %v1429 = vpack.c.b16 %v1321, %v1317
        %v1430 = vpack.c.b16 %v1322, %v1318
        %v1431 = vpack.c.b16 %v1323, %v1319
        %v1432 = vpack.c.b16 %v1324, %v1320
        %v1433 = vpack.c.b16 %v1329, %v1325
        %v1434 = vpack.c.b16 %v1330, %v1326
        %v1435 = vpack.c.b16 %v1331, %v1327
        %v1436 = vpack.c.b16 %v1332, %v1328
        %v1437 = vpack.c.b16 %v1337, %v1333
        %v1438 = vpack.c.b16 %v1338, %v1334
        %v1439 = vpack.c.b16 %v1339, %v1335
        %v1440 = vpack.c.b16 %v1340, %v1336
        %v1441 = vpack.c.b16 %v1345, %v1341
        %v1442 = vpack.c.b16 %v1346, %v1342
        %v1443 = vpack.c.b16 %v1347, %v1343
        %v1444 = vpack.c.b16 %v1348, %v1344
        %v1445 = vpack.c.b16 %v1353, %v1349
        %v1446 = vpack.c.b16 %v1354, %v1350
        %v1447 = vpack.c.b16 %v1355, %v1351
        %v1448 = vpack.c.b16 %v1356, %v1352
        %v1449 = vpack.c.b16 %v1361, %v1357
        %v1450 = vpack.c.b16 %v1362, %v1358
        %v1451 = vpack.c.b16 %v1363, %v1359
        %v1452 = vpack.c.b16 %v1364, %v1360
        %v1453 = vpack.c.b16 %v1369, %v1365
        %v1454 = vpack.c.b16 %v1370, %v1366
        %v1455 = vpack.c.b16 %v1371, %v1367
        %v1456 = vpack.c.b16 %v1372, %v1368
        %v1457 = vpack.c.b16 %v1377, %v1373
        %v1458 = vpack.c.b16 %v1378, %v1374
        %v1459 = vpack.c.b16 %v1379, %v1375
        %v1460 = vpack.c.b16 %v1380, %v1376
        %v1461 = vpack.c.b16 %v1385, %v1381
        %v1462 = vpack.c.b16 %v1386, %v1382
        %v1463 = vpack.c.b16 %v1387, %v1383
        %v1464 = vpack.c.b16 %v1388, %v1384
        %v1465 = vpack.c.b16 %v1393, %v1389
        %v1466 = vpack.c.b16 %v1394, %v1390
        %v1467 = vpack.c.b16 %v1395, %v1391
        %v1468 = vpack.c.b16 %v1396, %v1392
        %v1469 = vpack.c.b16 %v1401, %v1397
        %v1470 = vpack.c.b16 %v1402, %v1398
        %v1471 = vpack.c.b16 %v1403, %v1399
        %v1472 = vpack.c.b16 %v1404, %v1400
        %v1473 = vpack.c.b16 %v1409, %v1405
        %v1474 = vpack.c.b16 %v1410, %v1406
        %v1475 = vpack.c.b16 %v1411, %v1407
        %v1476 = vpack.c.b16 %v1412, %v1408
        %1541 = vmatprep.subr.bf16.mxu0 %v1414
        %1542 = vmatpush1.bf16.msra.mxu0 %v1413
        %1543 = vmatprep.subr.bf16.mxu0 %v1418
        %1544 = vmatpush1.bf16.msra.mxu0 %v1417
        %1545 = vmatprep.subr.bf16.mxu0 %v1422
        %1546 = vmatpush1.bf16.msra.mxu0 %v1421
        %1547 = vmatprep.subr.bf16.mxu0 %v1426
        %1548 = vmatpush1.bf16.msra.mxu0 %v1425
        %1549 = vmatprep.subr.bf16.mxu0 %v1430
        %1550 = vmatpush1.bf16.msra.mxu0 %v1429
        %1551 = vmatprep.subr.bf16.mxu0 %v1434
        %1552 = vmatpush1.bf16.msra.mxu0 %v1433
        %1553 = vmatprep.subr.bf16.mxu0 %v1438
        %1554 = vmatpush1.bf16.msra.mxu0 %v1437
        %1555 = vmatprep.subr.bf16.mxu0 %v1442
        %1556 = vmatpush1.bf16.msra.mxu0 %v1441
        %1557 = vmatprep.subr.bf16.mxu0 %v1446
        %1558 = vmatpush1.bf16.msra.mxu0 %v1445
        %1559 = vmatprep.subr.bf16.mxu0 %v1450
        %1560 = vmatpush1.bf16.msra.mxu0 %v1449
        %1561 = vmatprep.subr.bf16.mxu0 %v1454
        %1562 = vmatpush1.bf16.msra.mxu0 %v1453
        %1563 = vmatprep.subr.bf16.mxu0 %v1458
        %1564 = vmatpush1.bf16.msra.mxu0 %v1457
        %1565 = vmatprep.subr.bf16.mxu0 %v1462
        %1566 = vmatpush1.bf16.msra.mxu0 %v1461
        %1567 = vmatprep.subr.bf16.mxu0 %v1466
        %1568 = vmatpush1.bf16.msra.mxu0 %v1465
        %1569 = vmatprep.subr.bf16.mxu0 %v1470
        %1570 = vmatpush1.bf16.msra.mxu0 %v1469
        %1571 = vmatprep.subr.bf16.mxu0 %v1474
        %1572 = vmatpush1.bf16.msra.mxu0 %v1473
        %1573 = vmatprep.mubr.bf16.mxu0 %v1134
        %1574 = vmatmul.mubr.bf16.gmra.mrb[0].mxu0 %v1133
        %v1575 = vpop.f32.mrb[0].mxu0
        %v1576 = vadd.f32 %v1204, %v1575
        %v1577 = vpop.f32.mrb[0].mxu0
        %v1578 = vadd.f32 %v1208, %v1577
        %v1579 = vpop.f32.mrb[0].mxu0
        %v1580 = vpop.f32.mrb[0].mxu0
        %1581 = vdwg.mxu0
        %1582 = vmatprep.subr.bf16.mxu0 %v1416
        %1583 = vmatpush1.bf16.msra.mxu0 %v1415
        %1584 = vmatprep.subr.bf16.mxu0 %v1420
        %1585 = vmatpush1.bf16.msra.mxu0 %v1419
        %1586 = vmatprep.subr.bf16.mxu0 %v1424
        %1587 = vmatpush1.bf16.msra.mxu0 %v1423
        %1588 = vmatprep.subr.bf16.mxu0 %v1428
        %1589 = vmatpush1.bf16.msra.mxu0 %v1427
        %1590 = vmatprep.subr.bf16.mxu0 %v1432
        %1591 = vmatpush1.bf16.msra.mxu0 %v1431
        %1592 = vmatprep.subr.bf16.mxu0 %v1436
        %1593 = vmatpush1.bf16.msra.mxu0 %v1435
        %1594 = vmatprep.subr.bf16.mxu0 %v1440
        %1595 = vmatpush1.bf16.msra.mxu0 %v1439
        %1596 = vmatprep.subr.bf16.mxu0 %v1444
        %1597 = vmatpush1.bf16.msra.mxu0 %v1443
        %1598 = vmatprep.subr.bf16.mxu0 %v1448
        %1599 = vmatpush1.bf16.msra.mxu0 %v1447
        %1600 = vmatprep.subr.bf16.mxu0 %v1452
        %1601 = vmatpush1.bf16.msra.mxu0 %v1451
        %1602 = vmatprep.subr.bf16.mxu0 %v1456
        %1603 = vmatpush1.bf16.msra.mxu0 %v1455
        %1604 = vmatprep.subr.bf16.mxu0 %v1460
        %1605 = vmatpush1.bf16.msra.mxu0 %v1459
        %1606 = vmatprep.subr.bf16.mxu0 %v1464
        %1607 = vmatpush1.bf16.msra.mxu0 %v1463
        %1608 = vmatprep.subr.bf16.mxu0 %v1468
        %1609 = vmatpush1.bf16.msra.mxu0 %v1467
        %1610 = vmatprep.subr.bf16.mxu0 %v1472
        %1611 = vmatpush1.bf16.msra.mxu0 %v1471
        %1612 = vmatprep.subr.bf16.mxu0 %v1476
        %1613 = vmatpush1.bf16.msra.mxu0 %v1475
        %1614 = vmatprep.mubr.bf16.mxu0 %v1134
        %1615 = vmatmul.mubr.bf16.gmra.mrb[0].mxu0 %v1133
        %v1616 = vpop.f32.mrb[0].mxu0
        %v1617 = vadd.f32 %v1212, %v1616
        %v1618 = vpop.f32.mrb[0].mxu0
        %v1619 = vadd.f32 %v1216, %v1618
        %v1620 = vpop.f32.mrb[0].mxu0
        %v1621 = vpop.f32.mrb[0].mxu0
        %1622 = vdwg.mxu0
        %v1623 = vxor.u32 %v1576, 2147483648
        %v1624 = vmul.f32 %v1623, 1.442695
        %v1625 = vpow.pop %v1624
        %v1626 = vadd.f32 %v1625, 1.0
        %v1627 = vrcp.pop %v1626
        %v1628 = vmul.f32 1.0, %v1627
        %v1629 = vxor.u32 %v1578, 2147483648
        %v1630 = vmul.f32 %v1629, 1.442695
        %v1631 = vpow.pop %v1630
        %v1632 = vadd.f32 %v1631, 1.0
        %v1633 = vrcp.pop %v1632
        %v1634 = vmul.f32 1.0, %v1633
        %v1635 = vmul.f32 %v1628, %v1619
        %v1636 = vadd.f32 %v1617, %v1635
        %v1637 = vtanh.pop %v1636
        %v1638 = vsub.f32 1.0, %v1634
        %v1639 = vmul.f32 %v1638, %v1637
        %v1640 = vmul.f32 %v1634, %v1130
        %v1641 = vadd.f32 %v1639, %v1640
        %1642 = vst [vmem:[#allocation2] sm:$0xff] %v1641
        %v1643 = vpack.c.bf16 %v1641, %v1641
        %v1644 = vld [vmem:[#allocation13] sm:$0xf]
        %v1645 = vld [vmem:[#allocation13 + $0x4] sm:$0xf]
        %v1646 = vld [vmem:[#allocation13 + $0x8] sm:$0xf]
        %v1647 = vld [vmem:[#allocation13 + $0xc] sm:$0xf]
        %v1648 = vld [vmem:[#allocation13 + $0x10] sm:$0xf]
        %v1649 = vld [vmem:[#allocation13 + $0x14] sm:$0xf]
        %v1650 = vld [vmem:[#allocation13 + $0x18] sm:$0xf]
        %v1651 = vld [vmem:[#allocation13 + $0x1c] sm:$0xf]
        %v1652 = vld [vmem:[#allocation13 + $0x20] sm:$0xf]
        %v1653 = vld [vmem:[#allocation13 + $0x24] sm:$0xf]
        %v1654 = vld [vmem:[#allocation13 + $0x28] sm:$0xf]
        %v1655 = vld [vmem:[#allocation13 + $0x2c] sm:$0xf]
        %v1656 = vld [vmem:[#allocation13 + $0x30] sm:$0xf]
        %v1657 = vld [vmem:[#allocation13 + $0x34] sm:$0xf]
        %v1658 = vld [vmem:[#allocation13 + $0x38] sm:$0xf]
        %v1659 = vld [vmem:[#allocation13 + $0x3c] sm:$0xf]
        %v1660 = vld [vmem:[%s8] sm:$0x1]
        %v1662 = vlaneseq
        %v1663 = vshrl.u32 %v1662, 7
        %v1664 = vsub.s32 0, %v1663
        %v1665 = vrot.slane %v1660, %v1664
        %v1683 = vunpack.c.l.b16 %v1644
        %v1684 = vunpack.c.l.b16 %v1645
        %v1685 = vunpack.c.l.b16 %v1646
        %v1686 = vunpack.c.l.b16 %v1647
        %v1687 = vunpack.c.l.b16 %v1648
        %v1688 = vunpack.c.l.b16 %v1649
        %v1689 = vunpack.c.l.b16 %v1650
        %v1690 = vunpack.c.l.b16 %v1651
        %v1691 = vunpack.c.l.b16 %v1652
        %v1692 = vunpack.c.l.b16 %v1653
        %v1693 = vunpack.c.l.b16 %v1654
        %v1694 = vunpack.c.l.b16 %v1655
        %v1695 = vunpack.c.l.b16 %v1656
        %v1696 = vunpack.c.l.b16 %v1657
        %v1697 = vunpack.c.l.b16 %v1658
        %v1698 = vunpack.c.l.b16 %v1659
        %v1699 = vpack.c.b16 %v1684, %v1683
        %v1700 = vpack.c.b16 %v1686, %v1685
        %v1701 = vpack.c.b16 %v1688, %v1687
        %v1702 = vpack.c.b16 %v1690, %v1689
        %v1703 = vpack.c.b16 %v1692, %v1691
        %v1704 = vpack.c.b16 %v1694, %v1693
        %v1705 = vpack.c.b16 %v1696, %v1695
        %v1706 = vpack.c.b16 %v1698, %v1697
        %1715 = vmatprep.subr.bf16.mxu0 0
        %1716 = vmatpush1.bf16.msra.mxu0 %v1699
        %1717 = vmatprep.subr.bf16.mxu0 0
        %1718 = vmatpush1.bf16.msra.mxu0 %v1700
        %1719 = vmatprep.subr.bf16.mxu0 0
        %1720 = vmatpush1.bf16.msra.mxu0 %v1701
        %1721 = vmatprep.subr.bf16.mxu0 0
        %1722 = vmatpush1.bf16.msra.mxu0 %v1702
        %1723 = vmatprep.subr.bf16.mxu0 0
        %1724 = vmatpush1.bf16.msra.mxu0 %v1703
        %1725 = vmatprep.subr.bf16.mxu0 0
        %1726 = vmatpush1.bf16.msra.mxu0 %v1704
        %1727 = vmatprep.subr.bf16.mxu0 0
        %1728 = vmatpush1.bf16.msra.mxu0 %v1705
        %1729 = vmatprep.subr.bf16.mxu0 0
        %1730 = vmatpush1.bf16.msra.mxu0 %v1706
        %1731 = vmatprep.subr.bf16.mxu0 0
        %1732 = vmatpush1.bf16.msra.mxu0 0
        %1733 = vmatprep.subr.bf16.mxu0 0
        %1734 = vmatpush1.bf16.msra.mxu0 0
        %1735 = vmatprep.subr.bf16.mxu0 0
        %1736 = vmatpush1.bf16.msra.mxu0 0
        %1737 = vmatprep.subr.bf16.mxu0 0
        %1738 = vmatpush1.bf16.msra.mxu0 0
        %1739 = vmatprep.subr.bf16.mxu0 0
        %1740 = vmatpush1.bf16.msra.mxu0 0
        %1741 = vmatprep.subr.bf16.mxu0 0
        %1742 = vmatpush1.bf16.msra.mxu0 0
        %1743 = vmatprep.subr.bf16.mxu0 0
        %1744 = vmatpush1.bf16.msra.mxu0 0
        %1745 = vmatprep.subr.bf16.mxu0 0
        %1746 = vmatpush1.bf16.msra.mxu0 0
        %1747 = vmatprep.mubr.bf16.mxu0 0
        %1748 = vmatmul.mubr.bf16.gmra.mrb[0].mxu0 %v1643
        %v1749 = vpop.f32.mrb[0].mxu0
        %v1750 = vadd.f32 %v1665, %v1749
        %v1751 = vpop.f32.mrb[0].mxu0
        %v1752 = vpop.f32.mrb[0].mxu0
        %v1753 = vpop.f32.mrb[0].mxu0
        %1754 = vdwg.mxu0
        %1755 = vmax.xlane.f32.xlu0 %v1750
        %v1756 = vpop.xlane.xlu0 %1755
        %v1757 = vsub.f32 %v1750, %v1756
        %v1758 = vmul.f32 %v1757, 1.442695
        %v1759 = vpow.pop %v1758
        %1760 = vadd.xlane.f32.xlu0 %v1759
        %v1761 = vpop.xlane.xlu0 %1760
        %v1762 = vlog2.pop %v1761
        %v1763 = vmul.f32 %v1762, 0.6931472
        %v1764 = vadd.f32 %v1756, %v1763
        %v1765 = vsub.f32 %v1750, %v1764
        %s1766 = scalar_lea.vmem %s311, 8 [#allocation14]
        %1767 = vst [vmem:[%s1766] sm:$0xff] %v1765
        %s1768 = sld [smem:[#allocation6 + %s1127]]
        %p1769 = scmp.eq.s32.totalorder %s1768, 1
        // Predicated region
        $region69: #{tpu_custom_call.1} parent=43 // pred_check
          %p1770 = pneg %p1769
        $region70: #{tpu_custom_call.1} parent=43 // pred_check_branch
          %1772 = sbr.rel (%p1770) target = $region72
        $region71: #{tpu_custom_call.1} parent=43 // pred_region
          %s1773 = smul.u32 %s1127, 8
          %s1774 = sld [smem:[#allocation7 + %s1773]]
          %s1775 = scalar_lea.vmem [#allocation8], %s1774
          %v1776 = vld [vmem:[%s1775] sm:$0x1]
          %1777 = vst [vmem:[#allocation3] sm:$0x1] %v1776
          %s1778 = sadd.s32 %s1773, 1
          %s1779 = sld [smem:[#allocation7 + %s1778]]
          %s1780 = scalar_lea.vmem [#allocation8], %s1779
          %v1781 = vld [vmem:[%s1780] sm:$0x1]
          %1782 = vst [vmem:[#allocation3 + $0x1] sm:$0x1] %v1781
          %s1783 = sadd.s32 %s1773, 2
          %s1784 = sld [smem:[#allocation7 + %s1783]]
          %s1785 = scalar_lea.vmem [#allocation8], %s1784
          %v1786 = vld [vmem:[%s1785] sm:$0x1]
          %1787 = vst [vmem:[#allocation3 + $0x2] sm:$0x1] %v1786
          %s1788 = sadd.s32 %s1773, 3
          %s1789 = sld [smem:[#allocation7 + %s1788]]
          %s1790 = scalar_lea.vmem [#allocation8], %s1789
          %v1791 = vld [vmem:[%s1790] sm:$0x1]
          %1792 = vst [vmem:[#allocation3 + $0x3] sm:$0x1] %v1791
          %s1793 = sadd.s32 %s1773, 4
          %s1794 = sld [smem:[#allocation7 + %s1793]]
          %s1795 = scalar_lea.vmem [#allocation8], %s1794
          %v1796 = vld [vmem:[%s1795] sm:$0x1]
          %1797 = vst [vmem:[#allocation3 + $0x4] sm:$0x1] %v1796
          %s1798 = sadd.s32 %s1773, 5
          %s1799 = sld [smem:[#allocation7 + %s1798]]
          %s1800 = scalar_lea.vmem [#allocation8], %s1799
          %v1801 = vld [vmem:[%s1800] sm:$0x1]
          %1802 = vst [vmem:[#allocation3 + $0x5] sm:$0x1] %v1801
          %s1803 = sadd.s32 %s1773, 6
          %s1804 = sld [smem:[#allocation7 + %s1803]]
          %s1805 = scalar_lea.vmem [#allocation8], %s1804
          %v1806 = vld [vmem:[%s1805] sm:$0x1]
          %1807 = vst [vmem:[#allocation3 + $0x6] sm:$0x1] %v1806
          %s1808 = sadd.s32 %s1773, 7
          %s1809 = sld [smem:[#allocation7 + %s1808]]
          %s1810 = scalar_lea.vmem [#allocation8], %s1809
          %v1811 = vld [vmem:[%s1810] sm:$0x1]
          %1812 = vst [vmem:[#allocation3 + $0x7] sm:$0x1] %v1811
        $region72: #{tpu_custom_call.1} parent=43 // pred_fallthru
          _
        %p1813 = scmp.eq.s32.totalorder %s1768, 0
        // Predicated region
        $region73: #{tpu_custom_call.1} parent=43 // pred_check
          %p1814 = pneg %p1813
        $region74: #{tpu_custom_call.1} parent=43 // pred_check_branch
          %1816 = sbr.rel (%p1814) target = $region76
        $region75: #{tpu_custom_call.1} parent=43 // pred_region
          %vm1817 = vcmp.ge.f32.partialorder %v1750, %v1756
          %v1818 = vsel %vm1817, %v331, 128
          %v1819 = vand.u32 %v1818, 65535
          %v1820 = vshra.s32 %v1818, 16
          %v1821 = vcvt.s32.f32 %v1819
          %v1822 = vcvt.s32.f32 %v1820
          %1823 = vmin.xlane.f32.xlu0 %v1822
          %v1824 = vpop.xlane.xlu0 %1823
          %vm1825 = vcmp.eq.f32.partialorder %v1822, %v1824
          %v1826 = vsel %vm1825, %v1821, inf
          %1827 = vmin.xlane.f32.xlu0 %v1826
          %v1828 = vpop.xlane.xlu0 %1827
          %v1829 = vcvt.f32.s32 %v1828
          %v1830 = vcvt.f32.s32 %v1824
          %v1831 = vshll.u32 %v1830, 16
          %v1832 = vadd.s32 %v1831, %v1829
          %vm1833 = vcmp.eq.s32.totalorder %v331, %v1832
          %v1834 = vsel %vm1833, 1, 0
          %v1835 = vcvt.s32.f32 %v1834
          %v1836 = vld [vmem:[#allocation8] sm:$0xff]
          %v1837 = vld [vmem:[#allocation8 + $0x8] sm:$0xff]
          %v1838 = vld [vmem:[#allocation8 + $0x10] sm:$0xff]
          %v1839 = vld [vmem:[#allocation8 + $0x18] sm:$0xff]
          %v1840 = vld [vmem:[#allocation8 + $0x20] sm:$0xff]
          %v1841 = vld [vmem:[#allocation8 + $0x28] sm:$0xff]
          %v1842 = vld [vmem:[#allocation8 + $0x30] sm:$0xff]
          %v1843 = vld [vmem:[#allocation8 + $0x38] sm:$0xff]
          %v1844 = vld [vmem:[#allocation8 + $0x40] sm:$0xff]
          %v1845 = vld [vmem:[#allocation8 + $0x48] sm:$0xff]
          %v1846 = vld [vmem:[#allocation8 + $0x50] sm:$0xff]
          %v1847 = vld [vmem:[#allocation8 + $0x58] sm:$0xff]
          %v1848 = vld [vmem:[#allocation8 + $0x60] sm:$0xff]
          %v1849 = vld [vmem:[#allocation8 + $0x68] sm:$0xff]
          %v1850 = vld [vmem:[#allocation8 + $0x70] sm:$0xff]
          %v1851 = vld [vmem:[#allocation8 + $0x78] sm:$0xff]
          %1852 = vmatprep.subr.mxu0 0.0
          %1853 = vmatpush1.msra.mxu0 %v1836
          %1854 = vmatprep.subr.mxu0 0.0
          %1855 = vmatpush1.msra.mxu0 %v1837
          %1856 = vmatprep.subr.mxu0 0.0
          %1857 = vmatpush1.msra.mxu0 %v1838
          %1858 = vmatprep.subr.mxu0 0.0
          %1859 = vmatpush1.msra.mxu0 %v1839
          %1860 = vmatprep.subr.mxu0 0.0
          %1861 = vmatpush1.msra.mxu0 %v1840
          %1862 = vmatprep.subr.mxu0 0.0
          %1863 = vmatpush1.msra.mxu0 %v1841
          %1864 = vmatprep.subr.mxu0 0.0
          %1865 = vmatpush1.msra.mxu0 %v1842
          %1866 = vmatprep.subr.mxu0 0.0
          %1867 = vmatpush1.msra.mxu0 %v1843
          %1868 = vmatprep.subr.mxu0 0.0
          %1869 = vmatpush1.msra.mxu0 %v1844
          %1870 = vmatprep.subr.mxu0 0.0
          %1871 = vmatpush1.msra.mxu0 %v1845
          %1872 = vmatprep.subr.mxu0 0.0
          %1873 = vmatpush1.msra.mxu0 %v1846
          %1874 = vmatprep.subr.mxu0 0.0
          %1875 = vmatpush1.msra.mxu0 %v1847
          %1876 = vmatprep.subr.mxu0 0.0
          %1877 = vmatpush1.msra.mxu0 %v1848
          %1878 = vmatprep.subr.mxu0 0.0
          %1879 = vmatpush1.msra.mxu0 %v1849
          %1880 = vmatprep.subr.mxu0 0.0
          %1881 = vmatpush1.msra.mxu0 %v1850
          %1882 = vmatprep.subr.mxu0 0.0
          %1883 = vmatpush1.msra.mxu0 %v1851
          %1884 = vmatprep.subr.mxu0 0.0
          %1885 = vmatpush1.msra.mxu0 0.0
          %1886 = vmatprep.subr.mxu0 0.0
          %1887 = vmatpush1.msra.mxu0 0.0
          %1888 = vmatprep.subr.mxu0 0.0
          %1889 = vmatpush1.msra.mxu0 0.0
          %1890 = vmatprep.subr.mxu0 0.0
          %1891 = vmatpush1.msra.mxu0 0.0
          %1892 = vmatprep.subr.mxu0 0.0
          %1893 = vmatpush1.msra.mxu0 0.0
          %1894 = vmatprep.subr.mxu0 0.0
          %1895 = vmatpush1.msra.mxu0 0.0
          %1896 = vmatprep.subr.mxu0 0.0
          %1897 = vmatpush1.msra.mxu0 0.0
          %1898 = vmatprep.subr.mxu0 0.0
          %1899 = vmatpush1.msra.mxu0 0.0
          %1900 = vmatprep.subr.mxu0 0.0
          %1901 = vmatpush1.msra.mxu0 0.0
          %1902 = vmatprep.subr.mxu0 0.0
          %1903 = vmatpush1.msra.mxu0 0.0
          %1904 = vmatprep.subr.mxu0 0.0
          %1905 = vmatpush1.msra.mxu0 0.0
          %1906 = vmatprep.subr.mxu0 0.0
          %1907 = vmatpush1.msra.mxu0 0.0
          %1908 = vmatprep.subr.mxu0 0.0
          %1909 = vmatpush1.msra.mxu0 0.0
          %1910 = vmatprep.subr.mxu0 0.0
          %1911 = vmatpush1.msra.mxu0 0.0
          %1912 = vmatprep.subr.mxu0 0.0
          %1913 = vmatpush1.msra.mxu0 0.0
          %1914 = vmatprep.subr.mxu0 0.0
          %1915 = vmatpush1.msra.mxu0 0.0
          %1916 = vmatprep.mubr.f32.mxu0 0.0
          %1917 = vmatmul.mubr.f32.gmra.mrb[0].mxu0 %v1835
          %v1918 = vpop.f32.mrb[0].mxu0
          %v1919 = vadd.f32 0.0, %v1918
          %v1920 = vpop.f32.mrb[0].mxu0
          %1921 = vdwg.mxu0
          %1922 = vst [vmem:[#allocation3] sm:$0xff] %v1919
        $region76: #{tpu_custom_call.1} parent=43 // pred_fallthru
          _
        %s1923 = sadd.s32 %s332, 2
        %v1924 = vld [vmem:[#allocation2] sm:$0xff]
        %1925 = vst [vmem:[#allocation3 + $0x8] sm:$0xff] %v1924
        %v1926 = vld [vmem:[#allocation2] sm:$0xff]
        %v1927 = vld [vmem:[#allocation3] sm:$0xff]
        %v1928 = vld [vmem:[#allocation3 + $0x8] sm:$0xff]
        %v1929 = vpack.c.bf16 %v1927, %v1927
        %v1930 = vpack.c.bf16 %v1928, %v1928
        %v1931 = vld [vmem:[#allocation11] sm:$0xff]
        %v1932 = vld [vmem:[#allocation11 + $0x8] sm:$0xff]
        %v1933 = vld [vmem:[#allocation11 + $0x10] sm:$0xff]
        %v1934 = vld [vmem:[#allocation11 + $0x18] sm:$0xff]
        %v1935 = vld [vmem:[#allocation11 + $0x20] sm:$0xff]
        %v1936 = vld [vmem:[#allocation11 + $0x28] sm:$0xff]
        %v1937 = vld [vmem:[#allocation11 + $0x30] sm:$0xff]
        %v1938 = vld [vmem:[#allocation11 + $0x38] sm:$0xff]
        %v1939 = vld [vmem:[#allocation11 + $0x40] sm:$0xff]
        %v1940 = vld [vmem:[#allocation11 + $0x48] sm:$0xff]
        %v1941 = vld [vmem:[#allocation11 + $0x50] sm:$0xff]
        %v1942 = vld [vmem:[#allocation11 + $0x58] sm:$0xff]
        %v1943 = vld [vmem:[#allocation11 + $0x60] sm:$0xff]
        %v1944 = vld [vmem:[#allocation11 + $0x68] sm:$0xff]
        %v1945 = vld [vmem:[#allocation11 + $0x70] sm:$0xff]
        %v1946 = vld [vmem:[#allocation11 + $0x78] sm:$0xff]
        %v1947 = vld [vmem:[#allocation11 + $0x80] sm:$0xff]
        %v1948 = vld [vmem:[#allocation11 + $0x88] sm:$0xff]
        %v1949 = vld [vmem:[#allocation11 + $0x90] sm:$0xff]
        %v1950 = vld [vmem:[#allocation11 + $0x98] sm:$0xff]
        %v1951 = vld [vmem:[#allocation11 + $0xa0] sm:$0xff]
        %v1952 = vld [vmem:[#allocation11 + $0xa8] sm:$0xff]
        %v1953 = vld [vmem:[#allocation11 + $0xb0] sm:$0xff]
        %v1954 = vld [vmem:[#allocation11 + $0xb8] sm:$0xff]
        %v1955 = vld [vmem:[#allocation11 + $0xc0] sm:$0xff]
        %v1956 = vld [vmem:[#allocation11 + $0xc8] sm:$0xff]
        %v1957 = vld [vmem:[#allocation11 + $0xd0] sm:$0xff]
        %v1958 = vld [vmem:[#allocation11 + $0xd8] sm:$0xff]
        %v1959 = vld [vmem:[#allocation11 + $0xe0] sm:$0xff]
        %v1960 = vld [vmem:[#allocation11 + $0xe8] sm:$0xff]
        %v1961 = vld [vmem:[#allocation11 + $0xf0] sm:$0xff]
        %v1962 = vld [vmem:[#allocation11 + $0xf8] sm:$0xff]
        %v1963 = vld [vmem:[#allocation11 + $0x100] sm:$0xff]
        %v1964 = vld [vmem:[#allocation11 + $0x108] sm:$0xff]
        %v1965 = vld [vmem:[#allocation11 + $0x110] sm:$0xff]
        %v1966 = vld [vmem:[#allocation11 + $0x118] sm:$0xff]
        %v1967 = vld [vmem:[#allocation11 + $0x120] sm:$0xff]
        %v1968 = vld [vmem:[#allocation11 + $0x128] sm:$0xff]
        %v1969 = vld [vmem:[#allocation11 + $0x130] sm:$0xff]
        %v1970 = vld [vmem:[#allocation11 + $0x138] sm:$0xff]
        %v1971 = vld [vmem:[#allocation11 + $0x140] sm:$0xff]
        %v1972 = vld [vmem:[#allocation11 + $0x148] sm:$0xff]
        %v1973 = vld [vmem:[#allocation11 + $0x150] sm:$0xff]
        %v1974 = vld [vmem:[#allocation11 + $0x158] sm:$0xff]
        %v1975 = vld [vmem:[#allocation11 + $0x160] sm:$0xff]
        %v1976 = vld [vmem:[#allocation11 + $0x168] sm:$0xff]
        %v1977 = vld [vmem:[#allocation11 + $0x170] sm:$0xff]
        %v1978 = vld [vmem:[#allocation11 + $0x178] sm:$0xff]
        %v1979 = vld [vmem:[#allocation11 + $0x180] sm:$0xff]
        %v1980 = vld [vmem:[#allocation11 + $0x188] sm:$0xff]
        %v1981 = vld [vmem:[#allocation11 + $0x190] sm:$0xff]
        %v1982 = vld [vmem:[#allocation11 + $0x198] sm:$0xff]
        %v1983 = vld [vmem:[#allocation11 + $0x1a0] sm:$0xff]
        %v1984 = vld [vmem:[#allocation11 + $0x1a8] sm:$0xff]
        %v1985 = vld [vmem:[#allocation11 + $0x1b0] sm:$0xff]
        %v1986 = vld [vmem:[#allocation11 + $0x1b8] sm:$0xff]
        %v1987 = vld [vmem:[#allocation11 + $0x1c0] sm:$0xff]
        %v1988 = vld [vmem:[#allocation11 + $0x1c8] sm:$0xff]
        %v1989 = vld [vmem:[#allocation11 + $0x1d0] sm:$0xff]
        %v1990 = vld [vmem:[#allocation11 + $0x1d8] sm:$0xff]
        %v1991 = vld [vmem:[#allocation11 + $0x1e0] sm:$0xff]
        %v1992 = vld [vmem:[#allocation11 + $0x1e8] sm:$0xff]
        %v1993 = vld [vmem:[#allocation11 + $0x1f0] sm:$0xff]
        %v1994 = vld [vmem:[#allocation11 + $0x1f8] sm:$0xff]
        %v1995 = vld [vmem:[%s6] sm:$0xf]
        %v1997 = vlaneseq
        %v1998 = vshrl.u32 %v1997, 7
        %v1999 = vsub.s32 0, %v1998
        %v2000 = vrot.slane %v1995, %v1999
        %v2001 = vlaneseq
        %v2002 = vshrl.u32 %v2001, 7
        %v2003 = vsub.s32 1, %v2002
        %v2004 = vrot.slane %v1995, %v2003
        %v2005 = vlaneseq
        %v2006 = vshrl.u32 %v2005, 7
        %v2007 = vsub.s32 2, %v2006
        %v2008 = vrot.slane %v1995, %v2007
        %v2009 = vlaneseq
        %v2010 = vshrl.u32 %v2009, 7
        %v2011 = vsub.s32 3, %v2010
        %v2012 = vrot.slane %v1995, %v2011
        %v2081 = vunpack.c.l.b16 %v1931
        %v2082 = vunpack.c.h.b16 %v1931
        %v2083 = vunpack.c.l.b16 %v1932
        %v2084 = vunpack.c.h.b16 %v1932
        %v2085 = vunpack.c.l.b16 %v1933
        %v2086 = vunpack.c.h.b16 %v1933
        %v2087 = vunpack.c.l.b16 %v1934
        %v2088 = vunpack.c.h.b16 %v1934
        %v2089 = vunpack.c.l.b16 %v1935
        %v2090 = vunpack.c.h.b16 %v1935
        %v2091 = vunpack.c.l.b16 %v1936
        %v2092 = vunpack.c.h.b16 %v1936
        %v2093 = vunpack.c.l.b16 %v1937
        %v2094 = vunpack.c.h.b16 %v1937
        %v2095 = vunpack.c.l.b16 %v1938
        %v2096 = vunpack.c.h.b16 %v1938
        %v2097 = vunpack.c.l.b16 %v1939
        %v2098 = vunpack.c.h.b16 %v1939
        %v2099 = vunpack.c.l.b16 %v1940
        %v2100 = vunpack.c.h.b16 %v1940
        %v2101 = vunpack.c.l.b16 %v1941
        %v2102 = vunpack.c.h.b16 %v1941
        %v2103 = vunpack.c.l.b16 %v1942
        %v2104 = vunpack.c.h.b16 %v1942
        %v2105 = vunpack.c.l.b16 %v1943
        %v2106 = vunpack.c.h.b16 %v1943
        %v2107 = vunpack.c.l.b16 %v1944
        %v2108 = vunpack.c.h.b16 %v1944
        %v2109 = vunpack.c.l.b16 %v1945
        %v2110 = vunpack.c.h.b16 %v1945
        %v2111 = vunpack.c.l.b16 %v1946
        %v2112 = vunpack.c.h.b16 %v1946
        %v2113 = vunpack.c.l.b16 %v1947
        %v2114 = vunpack.c.h.b16 %v1947
        %v2115 = vunpack.c.l.b16 %v1948
        %v2116 = vunpack.c.h.b16 %v1948
        %v2117 = vunpack.c.l.b16 %v1949
        %v2118 = vunpack.c.h.b16 %v1949
        %v2119 = vunpack.c.l.b16 %v1950
        %v2120 = vunpack.c.h.b16 %v1950
        %v2121 = vunpack.c.l.b16 %v1951
        %v2122 = vunpack.c.h.b16 %v1951
        %v2123 = vunpack.c.l.b16 %v1952
        %v2124 = vunpack.c.h.b16 %v1952
        %v2125 = vunpack.c.l.b16 %v1953
        %v2126 = vunpack.c.h.b16 %v1953
        %v2127 = vunpack.c.l.b16 %v1954
        %v2128 = vunpack.c.h.b16 %v1954
        %v2129 = vunpack.c.l.b16 %v1955
        %v2130 = vunpack.c.h.b16 %v1955
        %v2131 = vunpack.c.l.b16 %v1956
        %v2132 = vunpack.c.h.b16 %v1956
        %v2133 = vunpack.c.l.b16 %v1957
        %v2134 = vunpack.c.h.b16 %v1957
        %v2135 = vunpack.c.l.b16 %v1958
        %v2136 = vunpack.c.h.b16 %v1958
        %v2137 = vunpack.c.l.b16 %v1959
        %v2138 = vunpack.c.h.b16 %v1959
        %v2139 = vunpack.c.l.b16 %v1960
        %v2140 = vunpack.c.h.b16 %v1960
        %v2141 = vunpack.c.l.b16 %v1961
        %v2142 = vunpack.c.h.b16 %v1961
        %v2143 = vunpack.c.l.b16 %v1962
        %v2144 = vunpack.c.h.b16 %v1962
        %v2145 = vunpack.c.l.b16 %v1963
        %v2146 = vunpack.c.h.b16 %v1963
        %v2147 = vunpack.c.l.b16 %v1964
        %v2148 = vunpack.c.h.b16 %v1964
        %v2149 = vunpack.c.l.b16 %v1965
        %v2150 = vunpack.c.h.b16 %v1965
        %v2151 = vunpack.c.l.b16 %v1966
        %v2152 = vunpack.c.h.b16 %v1966
        %v2153 = vunpack.c.l.b16 %v1967
        %v2154 = vunpack.c.h.b16 %v1967
        %v2155 = vunpack.c.l.b16 %v1968
        %v2156 = vunpack.c.h.b16 %v1968
        %v2157 = vunpack.c.l.b16 %v1969
        %v2158 = vunpack.c.h.b16 %v1969
        %v2159 = vunpack.c.l.b16 %v1970
        %v2160 = vunpack.c.h.b16 %v1970
        %v2161 = vunpack.c.l.b16 %v1971
        %v2162 = vunpack.c.h.b16 %v1971
        %v2163 = vunpack.c.l.b16 %v1972
        %v2164 = vunpack.c.h.b16 %v1972
        %v2165 = vunpack.c.l.b16 %v1973
        %v2166 = vunpack.c.h.b16 %v1973
        %v2167 = vunpack.c.l.b16 %v1974
        %v2168 = vunpack.c.h.b16 %v1974
        %v2169 = vunpack.c.l.b16 %v1975
        %v2170 = vunpack.c.h.b16 %v1975
        %v2171 = vunpack.c.l.b16 %v1976
        %v2172 = vunpack.c.h.b16 %v1976
        %v2173 = vunpack.c.l.b16 %v1977
        %v2174 = vunpack.c.h.b16 %v1977
        %v2175 = vunpack.c.l.b16 %v1978
        %v2176 = vunpack.c.h.b16 %v1978
        %v2177 = vunpack.c.l.b16 %v1979
        %v2178 = vunpack.c.h.b16 %v1979
        %v2179 = vunpack.c.l.b16 %v1980
        %v2180 = vunpack.c.h.b16 %v1980
        %v2181 = vunpack.c.l.b16 %v1981
        %v2182 = vunpack.c.h.b16 %v1981
        %v2183 = vunpack.c.l.b16 %v1982
        %v2184 = vunpack.c.h.b16 %v1982
        %v2185 = vunpack.c.l.b16 %v1983
        %v2186 = vunpack.c.h.b16 %v1983
        %v2187 = vunpack.c.l.b16 %v1984
        %v2188 = vunpack.c.h.b16 %v1984
        %v2189 = vunpack.c.l.b16 %v1985
        %v2190 = vunpack.c.h.b16 %v1985
        %v2191 = vunpack.c.l.b16 %v1986
        %v2192 = vunpack.c.h.b16 %v1986
        %v2193 = vunpack.c.l.b16 %v1987
        %v2194 = vunpack.c.h.b16 %v1987
        %v2195 = vunpack.c.l.b16 %v1988
        %v2196 = vunpack.c.h.b16 %v1988
        %v2197 = vunpack.c.l.b16 %v1989
        %v2198 = vunpack.c.h.b16 %v1989
        %v2199 = vunpack.c.l.b16 %v1990
        %v2200 = vunpack.c.h.b16 %v1990
        %v2201 = vunpack.c.l.b16 %v1991
        %v2202 = vunpack.c.h.b16 %v1991
        %v2203 = vunpack.c.l.b16 %v1992
        %v2204 = vunpack.c.h.b16 %v1992
        %v2205 = vunpack.c.l.b16 %v1993
        %v2206 = vunpack.c.h.b16 %v1993
        %v2207 = vunpack.c.l.b16 %v1994
        %v2208 = vunpack.c.h.b16 %v1994
        %v2209 = vpack.c.b16 %v2085, %v2081
        %v2210 = vpack.c.b16 %v2086, %v2082
        %v2211 = vpack.c.b16 %v2087, %v2083
        %v2212 = vpack.c.b16 %v2088, %v2084
        %v2213 = vpack.c.b16 %v2093, %v2089
        %v2214 = vpack.c.b16 %v2094, %v2090
        %v2215 = vpack.c.b16 %v2095, %v2091
        %v2216 = vpack.c.b16 %v2096, %v2092
        %v2217 = vpack.c.b16 %v2101, %v2097
        %v2218 = vpack.c.b16 %v2102, %v2098
        %v2219 = vpack.c.b16 %v2103, %v2099
        %v2220 = vpack.c.b16 %v2104, %v2100
        %v2221 = vpack.c.b16 %v2109, %v2105
        %v2222 = vpack.c.b16 %v2110, %v2106
        %v2223 = vpack.c.b16 %v2111, %v2107
        %v2224 = vpack.c.b16 %v2112, %v2108
        %v2225 = vpack.c.b16 %v2117, %v2113
        %v2226 = vpack.c.b16 %v2118, %v2114
        %v2227 = vpack.c.b16 %v2119, %v2115
        %v2228 = vpack.c.b16 %v2120, %v2116
        %v2229 = vpack.c.b16 %v2125, %v2121
        %v2230 = vpack.c.b16 %v2126, %v2122
        %v2231 = vpack.c.b16 %v2127, %v2123
        %v2232 = vpack.c.b16 %v2128, %v2124
        %v2233 = vpack.c.b16 %v2133, %v2129
        %v2234 = vpack.c.b16 %v2134, %v2130
        %v2235 = vpack.c.b16 %v2135, %v2131
        %v2236 = vpack.c.b16 %v2136, %v2132
        %v2237 = vpack.c.b16 %v2141, %v2137
        %v2238 = vpack.c.b16 %v2142, %v2138
        %v2239 = vpack.c.b16 %v2143, %v2139
        %v2240 = vpack.c.b16 %v2144, %v2140
        %v2241 = vpack.c.b16 %v2149, %v2145
        %v2242 = vpack.c.b16 %v2150, %v2146
        %v2243 = vpack.c.b16 %v2151, %v2147
        %v2244 = vpack.c.b16 %v2152, %v2148
        %v2245 = vpack.c.b16 %v2157, %v2153
        %v2246 = vpack.c.b16 %v2158, %v2154
        %v2247 = vpack.c.b16 %v2159, %v2155
        %v2248 = vpack.c.b16 %v2160, %v2156
        %v2249 = vpack.c.b16 %v2165, %v2161
        %v2250 = vpack.c.b16 %v2166, %v2162
        %v2251 = vpack.c.b16 %v2167, %v2163
        %v2252 = vpack.c.b16 %v2168, %v2164
        %v2253 = vpack.c.b16 %v2173, %v2169
        %v2254 = vpack.c.b16 %v2174, %v2170
        %v2255 = vpack.c.b16 %v2175, %v2171
        %v2256 = vpack.c.b16 %v2176, %v2172
        %v2257 = vpack.c.b16 %v2181, %v2177
        %v2258 = vpack.c.b16 %v2182, %v2178
        %v2259 = vpack.c.b16 %v2183, %v2179
        %v2260 = vpack.c.b16 %v2184, %v2180
        %v2261 = vpack.c.b16 %v2189, %v2185
        %v2262 = vpack.c.b16 %v2190, %v2186
        %v2263 = vpack.c.b16 %v2191, %v2187
        %v2264 = vpack.c.b16 %v2192, %v2188
        %v2265 = vpack.c.b16 %v2197, %v2193
        %v2266 = vpack.c.b16 %v2198, %v2194
        %v2267 = vpack.c.b16 %v2199, %v2195
        %v2268 = vpack.c.b16 %v2200, %v2196
        %v2269 = vpack.c.b16 %v2205, %v2201
        %v2270 = vpack.c.b16 %v2206, %v2202
        %v2271 = vpack.c.b16 %v2207, %v2203
        %v2272 = vpack.c.b16 %v2208, %v2204
        %2337 = vmatprep.subr.bf16.mxu0 %v2210
        %2338 = vmatpush1.bf16.msra.mxu0 %v2209
        %2339 = vmatprep.subr.bf16.mxu0 %v2214
        %2340 = vmatpush1.bf16.msra.mxu0 %v2213
        %2341 = vmatprep.subr.bf16.mxu0 %v2218
        %2342 = vmatpush1.bf16.msra.mxu0 %v2217
        %2343 = vmatprep.subr.bf16.mxu0 %v2222
        %2344 = vmatpush1.bf16.msra.mxu0 %v2221
        %2345 = vmatprep.subr.bf16.mxu0 %v2226
        %2346 = vmatpush1.bf16.msra.mxu0 %v2225
        %2347 = vmatprep.subr.bf16.mxu0 %v2230
        %2348 = vmatpush1.bf16.msra.mxu0 %v2229
        %2349 = vmatprep.subr.bf16.mxu0 %v2234
        %2350 = vmatpush1.bf16.msra.mxu0 %v2233
        %2351 = vmatprep.subr.bf16.mxu0 %v2238
        %2352 = vmatpush1.bf16.msra.mxu0 %v2237
        %2353 = vmatprep.subr.bf16.mxu0 %v2242
        %2354 = vmatpush1.bf16.msra.mxu0 %v2241
        %2355 = vmatprep.subr.bf16.mxu0 %v2246
        %2356 = vmatpush1.bf16.msra.mxu0 %v2245
        %2357 = vmatprep.subr.bf16.mxu0 %v2250
        %2358 = vmatpush1.bf16.msra.mxu0 %v2249
        %2359 = vmatprep.subr.bf16.mxu0 %v2254
        %2360 = vmatpush1.bf16.msra.mxu0 %v2253
        %2361 = vmatprep.subr.bf16.mxu0 %v2258
        %2362 = vmatpush1.bf16.msra.mxu0 %v2257
        %2363 = vmatprep.subr.bf16.mxu0 %v2262
        %2364 = vmatpush1.bf16.msra.mxu0 %v2261
        %2365 = vmatprep.subr.bf16.mxu0 %v2266
        %2366 = vmatpush1.bf16.msra.mxu0 %v2265
        %2367 = vmatprep.subr.bf16.mxu0 %v2270
        %2368 = vmatpush1.bf16.msra.mxu0 %v2269
        %2369 = vmatprep.mubr.bf16.mxu0 %v1930
        %2370 = vmatmul.mubr.bf16.gmra.mrb[0].mxu0 %v1929
        %v2371 = vpop.f32.mrb[0].mxu0
        %v2372 = vadd.f32 %v2000, %v2371
        %v2373 = vpop.f32.mrb[0].mxu0
        %v2374 = vadd.f32 %v2004, %v2373
        %v2375 = vpop.f32.mrb[0].mxu0
        %v2376 = vpop.f32.mrb[0].mxu0
        %2377 = vdwg.mxu0
        %2378 = vmatprep.subr.bf16.mxu0 %v2212
        %2379 = vmatpush1.bf16.msra.mxu0 %v2211
        %2380 = vmatprep.subr.bf16.mxu0 %v2216
        %2381 = vmatpush1.bf16.msra.mxu0 %v2215
        %2382 = vmatprep.subr.bf16.mxu0 %v2220
        %2383 = vmatpush1.bf16.msra.mxu0 %v2219
        %2384 = vmatprep.subr.bf16.mxu0 %v2224
        %2385 = vmatpush1.bf16.msra.mxu0 %v2223
        %2386 = vmatprep.subr.bf16.mxu0 %v2228
        %2387 = vmatpush1.bf16.msra.mxu0 %v2227
        %2388 = vmatprep.subr.bf16.mxu0 %v2232
        %2389 = vmatpush1.bf16.msra.mxu0 %v2231
        %2390 = vmatprep.subr.bf16.mxu0 %v2236
        %2391 = vmatpush1.bf16.msra.mxu0 %v2235
        %2392 = vmatprep.subr.bf16.mxu0 %v2240
        %2393 = vmatpush1.bf16.msra.mxu0 %v2239
        %2394 = vmatprep.subr.bf16.mxu0 %v2244
        %2395 = vmatpush1.bf16.msra.mxu0 %v2243
        %2396 = vmatprep.subr.bf16.mxu0 %v2248
        %2397 = vmatpush1.bf16.msra.mxu0 %v2247
        %2398 = vmatprep.subr.bf16.mxu0 %v2252
        %2399 = vmatpush1.bf16.msra.mxu0 %v2251
        %2400 = vmatprep.subr.bf16.mxu0 %v2256
        %2401 = vmatpush1.bf16.msra.mxu0 %v2255
        %2402 = vmatprep.subr.bf16.mxu0 %v2260
        %2403 = vmatpush1.bf16.msra.mxu0 %v2259
        %2404 = vmatprep.subr.bf16.mxu0 %v2264
        %2405 = vmatpush1.bf16.msra.mxu0 %v2263
        %2406 = vmatprep.subr.bf16.mxu0 %v2268
        %2407 = vmatpush1.bf16.msra.mxu0 %v2267
        %2408 = vmatprep.subr.bf16.mxu0 %v2272
        %2409 = vmatpush1.bf16.msra.mxu0 %v2271
        %2410 = vmatprep.mubr.bf16.mxu0 %v1930
        %2411 = vmatmul.mubr.bf16.gmra.mrb[0].mxu0 %v1929
        %v2412 = vpop.f32.mrb[0].mxu0
        %v2413 = vadd.f32 %v2008, %v2412
        %v2414 = vpop.f32.mrb[0].mxu0
        %v2415 = vadd.f32 %v2012, %v2414
        %v2416 = vpop.f32.mrb[0].mxu0
        %v2417 = vpop.f32.mrb[0].mxu0
        %2418 = vdwg.mxu0
        %v2419 = vxor.u32 %v2372, 2147483648
        %v2420 = vmul.f32 %v2419, 1.442695
        %v2421 = vpow.pop %v2420
        %v2422 = vadd.f32 %v2421, 1.0
        %v2423 = vrcp.pop %v2422
        %v2424 = vmul.f32 1.0, %v2423
        %v2425 = vxor.u32 %v2374, 2147483648
        %v2426 = vmul.f32 %v2425, 1.442695
        %v2427 = vpow.pop %v2426
        %v2428 = vadd.f32 %v2427, 1.0
        %v2429 = vrcp.pop %v2428
        %v2430 = vmul.f32 1.0, %v2429
        %v2431 = vmul.f32 %v2424, %v2415
        %v2432 = vadd.f32 %v2413, %v2431
        %v2433 = vtanh.pop %v2432
        %v2434 = vsub.f32 1.0, %v2430
        %v2435 = vmul.f32 %v2434, %v2433
        %v2436 = vmul.f32 %v2430, %v1926
        %v2437 = vadd.f32 %v2435, %v2436
        %2438 = vst [vmem:[#allocation2] sm:$0xff] %v2437
        %v2439 = vpack.c.bf16 %v2437, %v2437
        %v2440 = vld [vmem:[#allocation13] sm:$0xf]
        %v2441 = vld [vmem:[#allocation13 + $0x4] sm:$0xf]
        %v2442 = vld [vmem:[#allocation13 + $0x8] sm:$0xf]
        %v2443 = vld [vmem:[#allocation13 + $0xc] sm:$0xf]
        %v2444 = vld [vmem:[#allocation13 + $0x10] sm:$0xf]
        %v2445 = vld [vmem:[#allocation13 + $0x14] sm:$0xf]
        %v2446 = vld [vmem:[#allocation13 + $0x18] sm:$0xf]
        %v2447 = vld [vmem:[#allocation13 + $0x1c] sm:$0xf]
        %v2448 = vld [vmem:[#allocation13 + $0x20] sm:$0xf]
        %v2449 = vld [vmem:[#allocation13 + $0x24] sm:$0xf]
        %v2450 = vld [vmem:[#allocation13 + $0x28] sm:$0xf]
        %v2451 = vld [vmem:[#allocation13 + $0x2c] sm:$0xf]
        %v2452 = vld [vmem:[#allocation13 + $0x30] sm:$0xf]
        %v2453 = vld [vmem:[#allocation13 + $0x34] sm:$0xf]
        %v2454 = vld [vmem:[#allocation13 + $0x38] sm:$0xf]
        %v2455 = vld [vmem:[#allocation13 + $0x3c] sm:$0xf]
        %v2456 = vld [vmem:[%s8] sm:$0x1]
        %v2458 = vlaneseq
        %v2459 = vshrl.u32 %v2458, 7
        %v2460 = vsub.s32 0, %v2459
        %v2461 = vrot.slane %v2456, %v2460
        %v2479 = vunpack.c.l.b16 %v2440
        %v2480 = vunpack.c.l.b16 %v2441
        %v2481 = vunpack.c.l.b16 %v2442
        %v2482 = vunpack.c.l.b16 %v2443
        %v2483 = vunpack.c.l.b16 %v2444
        %v2484 = vunpack.c.l.b16 %v2445
        %v2485 = vunpack.c.l.b16 %v2446
        %v2486 = vunpack.c.l.b16 %v2447
        %v2487 = vunpack.c.l.b16 %v2448
        %v2488 = vunpack.c.l.b16 %v2449
        %v2489 = vunpack.c.l.b16 %v2450
        %v2490 = vunpack.c.l.b16 %v2451
        %v2491 = vunpack.c.l.b16 %v2452
        %v2492 = vunpack.c.l.b16 %v2453
        %v2493 = vunpack.c.l.b16 %v2454
        %v2494 = vunpack.c.l.b16 %v2455
        %v2495 = vpack.c.b16 %v2480, %v2479
        %v2496 = vpack.c.b16 %v2482, %v2481
        %v2497 = vpack.c.b16 %v2484, %v2483
        %v2498 = vpack.c.b16 %v2486, %v2485
        %v2499 = vpack.c.b16 %v2488, %v2487
        %v2500 = vpack.c.b16 %v2490, %v2489
        %v2501 = vpack.c.b16 %v2492, %v2491
        %v2502 = vpack.c.b16 %v2494, %v2493
        %2511 = vmatprep.subr.bf16.mxu0 0
        %2512 = vmatpush1.bf16.msra.mxu0 %v2495
        %2513 = vmatprep.subr.bf16.mxu0 0
        %2514 = vmatpush1.bf16.msra.mxu0 %v2496
        %2515 = vmatprep.subr.bf16.mxu0 0
        %2516 = vmatpush1.bf16.msra.mxu0 %v2497
        %2517 = vmatprep.subr.bf16.mxu0 0
        %2518 = vmatpush1.bf16.msra.mxu0 %v2498
        %2519 = vmatprep.subr.bf16.mxu0 0
        %2520 = vmatpush1.bf16.msra.mxu0 %v2499
        %2521 = vmatprep.subr.bf16.mxu0 0
        %2522 = vmatpush1.bf16.msra.mxu0 %v2500
        %2523 = vmatprep.subr.bf16.mxu0 0
        %2524 = vmatpush1.bf16.msra.mxu0 %v2501
        %2525 = vmatprep.subr.bf16.mxu0 0
        %2526 = vmatpush1.bf16.msra.mxu0 %v2502
        %2527 = vmatprep.subr.bf16.mxu0 0
        %2528 = vmatpush1.bf16.msra.mxu0 0
        %2529 = vmatprep.subr.bf16.mxu0 0
        %2530 = vmatpush1.bf16.msra.mxu0 0
        %2531 = vmatprep.subr.bf16.mxu0 0
        %2532 = vmatpush1.bf16.msra.mxu0 0
        %2533 = vmatprep.subr.bf16.mxu0 0
        %2534 = vmatpush1.bf16.msra.mxu0 0
        %2535 = vmatprep.subr.bf16.mxu0 0
        %2536 = vmatpush1.bf16.msra.mxu0 0
        %2537 = vmatprep.subr.bf16.mxu0 0
        %2538 = vmatpush1.bf16.msra.mxu0 0
        %2539 = vmatprep.subr.bf16.mxu0 0
        %2540 = vmatpush1.bf16.msra.mxu0 0
        %2541 = vmatprep.subr.bf16.mxu0 0
        %2542 = vmatpush1.bf16.msra.mxu0 0
        %2543 = vmatprep.mubr.bf16.mxu0 0
        %2544 = vmatmul.mubr.bf16.gmra.mrb[0].mxu0 %v2439
        %v2545 = vpop.f32.mrb[0].mxu0
        %v2546 = vadd.f32 %v2461, %v2545
        %v2547 = vpop.f32.mrb[0].mxu0
        %v2548 = vpop.f32.mrb[0].mxu0
        %v2549 = vpop.f32.mrb[0].mxu0
        %2550 = vdwg.mxu0
        %2551 = vmax.xlane.f32.xlu0 %v2546
        %v2552 = vpop.xlane.xlu0 %2551
        %v2553 = vsub.f32 %v2546, %v2552
        %v2554 = vmul.f32 %v2553, 1.442695
        %v2555 = vpow.pop %v2554
        %2556 = vadd.xlane.f32.xlu0 %v2555
        %v2557 = vpop.xlane.xlu0 %2556
        %v2558 = vlog2.pop %v2557
        %v2559 = vmul.f32 %v2558, 0.6931472
        %v2560 = vadd.f32 %v2552, %v2559
        %v2561 = vsub.f32 %v2546, %v2560
        %s2562 = scalar_lea.vmem %s311, 16 [#allocation14]
        %2563 = vst [vmem:[%s2562] sm:$0xff] %v2561
        %s2564 = sld [smem:[#allocation6 + %s1923]]
        %p2565 = scmp.eq.s32.totalorder %s2564, 1
        // Predicated region
        $region77: #{tpu_custom_call.1} parent=43 // pred_check
          %p2566 = pneg %p2565
        $region78: #{tpu_custom_call.1} parent=43 // pred_check_branch
          %2568 = sbr.rel (%p2566) target = $region80
        $region79: #{tpu_custom_call.1} parent=43 // pred_region
          %s2569 = smul.u32 %s1923, 8
          %s2570 = sld [smem:[#allocation7 + %s2569]]
          %s2571 = scalar_lea.vmem [#allocation8], %s2570
          %v2572 = vld [vmem:[%s2571] sm:$0x1]
          %2573 = vst [vmem:[#allocation3] sm:$0x1] %v2572
          %s2574 = sadd.s32 %s2569, 1
          %s2575 = sld [smem:[#allocation7 + %s2574]]
          %s2576 = scalar_lea.vmem [#allocation8], %s2575
          %v2577 = vld [vmem:[%s2576] sm:$0x1]
          %2578 = vst [vmem:[#allocation3 + $0x1] sm:$0x1] %v2577
          %s2579 = sadd.s32 %s2569, 2
          %s2580 = sld [smem:[#allocation7 + %s2579]]
          %s2581 = scalar_lea.vmem [#allocation8], %s2580
          %v2582 = vld [vmem:[%s2581] sm:$0x1]
          %2583 = vst [vmem:[#allocation3 + $0x2] sm:$0x1] %v2582
          %s2584 = sadd.s32 %s2569, 3
          %s2585 = sld [smem:[#allocation7 + %s2584]]
          %s2586 = scalar_lea.vmem [#allocation8], %s2585
          %v2587 = vld [vmem:[%s2586] sm:$0x1]
          %2588 = vst [vmem:[#allocation3 + $0x3] sm:$0x1] %v2587
          %s2589 = sadd.s32 %s2569, 4
          %s2590 = sld [smem:[#allocation7 + %s2589]]
          %s2591 = scalar_lea.vmem [#allocation8], %s2590
          %v2592 = vld [vmem:[%s2591] sm:$0x1]
          %2593 = vst [vmem:[#allocation3 + $0x4] sm:$0x1] %v2592
          %s2594 = sadd.s32 %s2569, 5
          %s2595 = sld [smem:[#allocation7 + %s2594]]
          %s2596 = scalar_lea.vmem [#allocation8], %s2595
          %v2597 = vld [vmem:[%s2596] sm:$0x1]
          %2598 = vst [vmem:[#allocation3 + $0x5] sm:$0x1] %v2597
          %s2599 = sadd.s32 %s2569, 6
          %s2600 = sld [smem:[#allocation7 + %s2599]]
          %s2601 = scalar_lea.vmem [#allocation8], %s2600
          %v2602 = vld [vmem:[%s2601] sm:$0x1]
          %2603 = vst [vmem:[#allocation3 + $0x6] sm:$0x1] %v2602
          %s2604 = sadd.s32 %s2569, 7
          %s2605 = sld [smem:[#allocation7 + %s2604]]
          %s2606 = scalar_lea.vmem [#allocation8], %s2605
          %v2607 = vld [vmem:[%s2606] sm:$0x1]
          %2608 = vst [vmem:[#allocation3 + $0x7] sm:$0x1] %v2607
        $region80: #{tpu_custom_call.1} parent=43 // pred_fallthru
          _
        %p2609 = scmp.eq.s32.totalorder %s2564, 0
        // Predicated region
        $region81: #{tpu_custom_call.1} parent=43 // pred_check
          %p2610 = pneg %p2609
        $region82: #{tpu_custom_call.1} parent=43 // pred_check_branch
          %2612 = sbr.rel (%p2610) target = $region84
        $region83: #{tpu_custom_call.1} parent=43 // pred_region
          %vm2613 = vcmp.ge.f32.partialorder %v2546, %v2552
          %v2614 = vsel %vm2613, %v331, 128
          %v2615 = vand.u32 %v2614, 65535
          %v2616 = vshra.s32 %v2614, 16
          %v2617 = vcvt.s32.f32 %v2615
          %v2618 = vcvt.s32.f32 %v2616
          %2619 = vmin.xlane.f32.xlu0 %v2618
          %v2620 = vpop.xlane.xlu0 %2619
          %vm2621 = vcmp.eq.f32.partialorder %v2618, %v2620
          %v2622 = vsel %vm2621, %v2617, inf
          %2623 = vmin.xlane.f32.xlu0 %v2622
          %v2624 = vpop.xlane.xlu0 %2623
          %v2625 = vcvt.f32.s32 %v2624
          %v2626 = vcvt.f32.s32 %v2620
          %v2627 = vshll.u32 %v2626, 16
          %v2628 = vadd.s32 %v2627, %v2625
          %vm2629 = vcmp.eq.s32.totalorder %v331, %v2628
          %v2630 = vsel %vm2629, 1, 0
          %v2631 = vcvt.s32.f32 %v2630
          %v2632 = vld [vmem:[#allocation8] sm:$0xff]
          %v2633 = vld [vmem:[#allocation8 + $0x8] sm:$0xff]
          %v2634 = vld [vmem:[#allocation8 + $0x10] sm:$0xff]
          %v2635 = vld [vmem:[#allocation8 + $0x18] sm:$0xff]
          %v2636 = vld [vmem:[#allocation8 + $0x20] sm:$0xff]
          %v2637 = vld [vmem:[#allocation8 + $0x28] sm:$0xff]
          %v2638 = vld [vmem:[#allocation8 + $0x30] sm:$0xff]
          %v2639 = vld [vmem:[#allocation8 + $0x38] sm:$0xff]
          %v2640 = vld [vmem:[#allocation8 + $0x40] sm:$0xff]
          %v2641 = vld [vmem:[#allocation8 + $0x48] sm:$0xff]
          %v2642 = vld [vmem:[#allocation8 + $0x50] sm:$0xff]
          %v2643 = vld [vmem:[#allocation8 + $0x58] sm:$0xff]
          %v2644 = vld [vmem:[#allocation8 + $0x60] sm:$0xff]
          %v2645 = vld [vmem:[#allocation8 + $0x68] sm:$0xff]
          %v2646 = vld [vmem:[#allocation8 + $0x70] sm:$0xff]
          %v2647 = vld [vmem:[#allocation8 + $0x78] sm:$0xff]
          %2648 = vmatprep.subr.mxu0 0.0
          %2649 = vmatpush1.msra.mxu0 %v2632
          %2650 = vmatprep.subr.mxu0 0.0
          %2651 = vmatpush1.msra.mxu0 %v2633
          %2652 = vmatprep.subr.mxu0 0.0
          %2653 = vmatpush1.msra.mxu0 %v2634
          %2654 = vmatprep.subr.mxu0 0.0
          %2655 = vmatpush1.msra.mxu0 %v2635
          %2656 = vmatprep.subr.mxu0 0.0
          %2657 = vmatpush1.msra.mxu0 %v2636
          %2658 = vmatprep.subr.mxu0 0.0
          %2659 = vmatpush1.msra.mxu0 %v2637
          %2660 = vmatprep.subr.mxu0 0.0
          %2661 = vmatpush1.msra.mxu0 %v2638
          %2662 = vmatprep.subr.mxu0 0.0
          %2663 = vmatpush1.msra.mxu0 %v2639
          %2664 = vmatprep.subr.mxu0 0.0
          %2665 = vmatpush1.msra.mxu0 %v2640
          %2666 = vmatprep.subr.mxu0 0.0
          %2667 = vmatpush1.msra.mxu0 %v2641
          %2668 = vmatprep.subr.mxu0 0.0
          %2669 = vmatpush1.msra.mxu0 %v2642
          %2670 = vmatprep.subr.mxu0 0.0
          %2671 = vmatpush1.msra.mxu0 %v2643
          %2672 = vmatprep.subr.mxu0 0.0
          %2673 = vmatpush1.msra.mxu0 %v2644
          %2674 = vmatprep.subr.mxu0 0.0
          %2675 = vmatpush1.msra.mxu0 %v2645
          %2676 = vmatprep.subr.mxu0 0.0
          %2677 = vmatpush1.msra.mxu0 %v2646
          %2678 = vmatprep.subr.mxu0 0.0
          %2679 = vmatpush1.msra.mxu0 %v2647
          %2680 = vmatprep.subr.mxu0 0.0
          %2681 = vmatpush1.msra.mxu0 0.0
          %2682 = vmatprep.subr.mxu0 0.0
          %2683 = vmatpush1.msra.mxu0 0.0
          %2684 = vmatprep.subr.mxu0 0.0
          %2685 = vmatpush1.msra.mxu0 0.0
          %2686 = vmatprep.subr.mxu0 0.0
          %2687 = vmatpush1.msra.mxu0 0.0
          %2688 = vmatprep.subr.mxu0 0.0
          %2689 = vmatpush1.msra.mxu0 0.0
          %2690 = vmatprep.subr.mxu0 0.0
          %2691 = vmatpush1.msra.mxu0 0.0
          %2692 = vmatprep.subr.mxu0 0.0
          %2693 = vmatpush1.msra.mxu0 0.0
          %2694 = vmatprep.subr.mxu0 0.0
          %2695 = vmatpush1.msra.mxu0 0.0
          %2696 = vmatprep.subr.mxu0 0.0
          %2697 = vmatpush1.msra.mxu0 0.0
          %2698 = vmatprep.subr.mxu0 0.0
          %2699 = vmatpush1.msra.mxu0 0.0
          %2700 = vmatprep.subr.mxu0 0.0
          %2701 = vmatpush1.msra.mxu0 0.0
          %2702 = vmatprep.subr.mxu0 0.0
          %2703 = vmatpush1.msra.mxu0 0.0
          %2704 = vmatprep.subr.mxu0 0.0
          %2705 = vmatpush1.msra.mxu0 0.0
          %2706 = vmatprep.subr.mxu0 0.0
          %2707 = vmatpush1.msra.mxu0 0.0
          %2708 = vmatprep.subr.mxu0 0.0
          %2709 = vmatpush1.msra.mxu0 0.0
          %2710 = vmatprep.subr.mxu0 0.0
          %2711 = vmatpush1.msra.mxu0 0.0
          %2712 = vmatprep.mubr.f32.mxu0 0.0
          %2713 = vmatmul.mubr.f32.gmra.mrb[0].mxu0 %v2631
          %v2714 = vpop.f32.mrb[0].mxu0
          %v2715 = vadd.f32 0.0, %v2714
          %v2716 = vpop.f32.mrb[0].mxu0
          %2717 = vdwg.mxu0
          %2718 = vst [vmem:[#allocation3] sm:$0xff] %v2715
        $region84: #{tpu_custom_call.1} parent=43 // pred_fallthru
          _
        %s2719 = sadd.s32 %s332, 3
        %v2720 = vld [vmem:[#allocation2] sm:$0xff]
        %2721 = vst [vmem:[#allocation3 + $0x8] sm:$0xff] %v2720
        %v2722 = vld [vmem:[#allocation2] sm:$0xff]
        %v2723 = vld [vmem:[#allocation3] sm:$0xff]
        %v2724 = vld [vmem:[#allocation3 + $0x8] sm:$0xff]
        %v2725 = vpack.c.bf16 %v2723, %v2723
        %v2726 = vpack.c.bf16 %v2724, %v2724
        %v2727 = vld [vmem:[#allocation11] sm:$0xff]
        %v2728 = vld [vmem:[#allocation11 + $0x8] sm:$0xff]
        %v2729 = vld [vmem:[#allocation11 + $0x10] sm:$0xff]
        %v2730 = vld [vmem:[#allocation11 + $0x18] sm:$0xff]
        %v2731 = vld [vmem:[#allocation11 + $0x20] sm:$0xff]
        %v2732 = vld [vmem:[#allocation11 + $0x28] sm:$0xff]
        %v2733 = vld [vmem:[#allocation11 + $0x30] sm:$0xff]
        %v2734 = vld [vmem:[#allocation11 + $0x38] sm:$0xff]
        %v2735 = vld [vmem:[#allocation11 + $0x40] sm:$0xff]
        %v2736 = vld [vmem:[#allocation11 + $0x48] sm:$0xff]
        %v2737 = vld [vmem:[#allocation11 + $0x50] sm:$0xff]
        %v2738 = vld [vmem:[#allocation11 + $0x58] sm:$0xff]
        %v2739 = vld [vmem:[#allocation11 + $0x60] sm:$0xff]
        %v2740 = vld [vmem:[#allocation11 + $0x68] sm:$0xff]
        %v2741 = vld [vmem:[#allocation11 + $0x70] sm:$0xff]
        %v2742 = vld [vmem:[#allocation11 + $0x78] sm:$0xff]
        %v2743 = vld [vmem:[#allocation11 + $0x80] sm:$0xff]
        %v2744 = vld [vmem:[#allocation11 + $0x88] sm:$0xff]
        %v2745 = vld [vmem:[#allocation11 + $0x90] sm:$0xff]
        %v2746 = vld [vmem:[#allocation11 + $0x98] sm:$0xff]
        %v2747 = vld [vmem:[#allocation11 + $0xa0] sm:$0xff]
        %v2748 = vld [vmem:[#allocation11 + $0xa8] sm:$0xff]
        %v2749 = vld [vmem:[#allocation11 + $0xb0] sm:$0xff]
        %v2750 = vld [vmem:[#allocation11 + $0xb8] sm:$0xff]
        %v2751 = vld [vmem:[#allocation11 + $0xc0] sm:$0xff]
        %v2752 = vld [vmem:[#allocation11 + $0xc8] sm:$0xff]
        %v2753 = vld [vmem:[#allocation11 + $0xd0] sm:$0xff]
        %v2754 = vld [vmem:[#allocation11 + $0xd8] sm:$0xff]
        %v2755 = vld [vmem:[#allocation11 + $0xe0] sm:$0xff]
        %v2756 = vld [vmem:[#allocation11 + $0xe8] sm:$0xff]
        %v2757 = vld [vmem:[#allocation11 + $0xf0] sm:$0xff]
        %v2758 = vld [vmem:[#allocation11 + $0xf8] sm:$0xff]
        %v2759 = vld [vmem:[#allocation11 + $0x100] sm:$0xff]
        %v2760 = vld [vmem:[#allocation11 + $0x108] sm:$0xff]
        %v2761 = vld [vmem:[#allocation11 + $0x110] sm:$0xff]
        %v2762 = vld [vmem:[#allocation11 + $0x118] sm:$0xff]
        %v2763 = vld [vmem:[#allocation11 + $0x120] sm:$0xff]
        %v2764 = vld [vmem:[#allocation11 + $0x128] sm:$0xff]
        %v2765 = vld [vmem:[#allocation11 + $0x130] sm:$0xff]
        %v2766 = vld [vmem:[#allocation11 + $0x138] sm:$0xff]
        %v2767 = vld [vmem:[#allocation11 + $0x140] sm:$0xff]
        %v2768 = vld [vmem:[#allocation11 + $0x148] sm:$0xff]
        %v2769 = vld [vmem:[#allocation11 + $0x150] sm:$0xff]
        %v2770 = vld [vmem:[#allocation11 + $0x158] sm:$0xff]
        %v2771 = vld [vmem:[#allocation11 + $0x160] sm:$0xff]
        %v2772 = vld [vmem:[#allocation11 + $0x168] sm:$0xff]
        %v2773 = vld [vmem:[#allocation11 + $0x170] sm:$0xff]
        %v2774 = vld [vmem:[#allocation11 + $0x178] sm:$0xff]
        %v2775 = vld [vmem:[#allocation11 + $0x180] sm:$0xff]
        %v2776 = vld [vmem:[#allocation11 + $0x188] sm:$0xff]
        %v2777 = vld [vmem:[#allocation11 + $0x190] sm:$0xff]
        %v2778 = vld [vmem:[#allocation11 + $0x198] sm:$0xff]
        %v2779 = vld [vmem:[#allocation11 + $0x1a0] sm:$0xff]
        %v2780 = vld [vmem:[#allocation11 + $0x1a8] sm:$0xff]
        %v2781 = vld [vmem:[#allocation11 + $0x1b0] sm:$0xff]
        %v2782 = vld [vmem:[#allocation11 + $0x1b8] sm:$0xff]
        %v2783 = vld [vmem:[#allocation11 + $0x1c0] sm:$0xff]
        %v2784 = vld [vmem:[#allocation11 + $0x1c8] sm:$0xff]
        %v2785 = vld [vmem:[#allocation11 + $0x1d0] sm:$0xff]
        %v2786 = vld [vmem:[#allocation11 + $0x1d8] sm:$0xff]
        %v2787 = vld [vmem:[#allocation11 + $0x1e0] sm:$0xff]
        %v2788 = vld [vmem:[#allocation11 + $0x1e8] sm:$0xff]
        %v2789 = vld [vmem:[#allocation11 + $0x1f0] sm:$0xff]
        %v2790 = vld [vmem:[#allocation11 + $0x1f8] sm:$0xff]
        %v2791 = vld [vmem:[%s6] sm:$0xf]
        %v2793 = vlaneseq
        %v2794 = vshrl.u32 %v2793, 7
        %v2795 = vsub.s32 0, %v2794
        %v2796 = vrot.slane %v2791, %v2795
        %v2797 = vlaneseq
        %v2798 = vshrl.u32 %v2797, 7
        %v2799 = vsub.s32 1, %v2798
        %v2800 = vrot.slane %v2791, %v2799
        %v2801 = vlaneseq
        %v2802 = vshrl.u32 %v2801, 7
        %v2803 = vsub.s32 2, %v2802
        %v2804 = vrot.slane %v2791, %v2803
        %v2805 = vlaneseq
        %v2806 = vshrl.u32 %v2805, 7
        %v2807 = vsub.s32 3, %v2806
        %v2808 = vrot.slane %v2791, %v2807
        %v2877 = vunpack.c.l.b16 %v2727
        %v2878 = vunpack.c.h.b16 %v2727
        %v2879 = vunpack.c.l.b16 %v2728
        %v2880 = vunpack.c.h.b16 %v2728
        %v2881 = vunpack.c.l.b16 %v2729
        %v2882 = vunpack.c.h.b16 %v2729
        %v2883 = vunpack.c.l.b16 %v2730
        %v2884 = vunpack.c.h.b16 %v2730
        %v2885 = vunpack.c.l.b16 %v2731
        %v2886 = vunpack.c.h.b16 %v2731
        %v2887 = vunpack.c.l.b16 %v2732
        %v2888 = vunpack.c.h.b16 %v2732
        %v2889 = vunpack.c.l.b16 %v2733
        %v2890 = vunpack.c.h.b16 %v2733
        %v2891 = vunpack.c.l.b16 %v2734
        %v2892 = vunpack.c.h.b16 %v2734
        %v2893 = vunpack.c.l.b16 %v2735
        %v2894 = vunpack.c.h.b16 %v2735
        %v2895 = vunpack.c.l.b16 %v2736
        %v2896 = vunpack.c.h.b16 %v2736
        %v2897 = vunpack.c.l.b16 %v2737
        %v2898 = vunpack.c.h.b16 %v2737
        %v2899 = vunpack.c.l.b16 %v2738
        %v2900 = vunpack.c.h.b16 %v2738
        %v2901 = vunpack.c.l.b16 %v2739
        %v2902 = vunpack.c.h.b16 %v2739
        %v2903 = vunpack.c.l.b16 %v2740
        %v2904 = vunpack.c.h.b16 %v2740
        %v2905 = vunpack.c.l.b16 %v2741
        %v2906 = vunpack.c.h.b16 %v2741
        %v2907 = vunpack.c.l.b16 %v2742
        %v2908 = vunpack.c.h.b16 %v2742
        %v2909 = vunpack.c.l.b16 %v2743
        %v2910 = vunpack.c.h.b16 %v2743
        %v2911 = vunpack.c.l.b16 %v2744
        %v2912 = vunpack.c.h.b16 %v2744
        %v2913 = vunpack.c.l.b16 %v2745
        %v2914 = vunpack.c.h.b16 %v2745
        %v2915 = vunpack.c.l.b16 %v2746
        %v2916 = vunpack.c.h.b16 %v2746
        %v2917 = vunpack.c.l.b16 %v2747
        %v2918 = vunpack.c.h.b16 %v2747
        %v2919 = vunpack.c.l.b16 %v2748
        %v2920 = vunpack.c.h.b16 %v2748
        %v2921 = vunpack.c.l.b16 %v2749
        %v2922 = vunpack.c.h.b16 %v2749
        %v2923 = vunpack.c.l.b16 %v2750
        %v2924 = vunpack.c.h.b16 %v2750
        %v2925 = vunpack.c.l.b16 %v2751
        %v2926 = vunpack.c.h.b16 %v2751
        %v2927 = vunpack.c.l.b16 %v2752
        %v2928 = vunpack.c.h.b16 %v2752
        %v2929 = vunpack.c.l.b16 %v2753
        %v2930 = vunpack.c.h.b16 %v2753
        %v2931 = vunpack.c.l.b16 %v2754
        %v2932 = vunpack.c.h.b16 %v2754
        %v2933 = vunpack.c.l.b16 %v2755
        %v2934 = vunpack.c.h.b16 %v2755
        %v2935 = vunpack.c.l.b16 %v2756
        %v2936 = vunpack.c.h.b16 %v2756
        %v2937 = vunpack.c.l.b16 %v2757
        %v2938 = vunpack.c.h.b16 %v2757
        %v2939 = vunpack.c.l.b16 %v2758
        %v2940 = vunpack.c.h.b16 %v2758
        %v2941 = vunpack.c.l.b16 %v2759
        %v2942 = vunpack.c.h.b16 %v2759
        %v2943 = vunpack.c.l.b16 %v2760
        %v2944 = vunpack.c.h.b16 %v2760
        %v2945 = vunpack.c.l.b16 %v2761
        %v2946 = vunpack.c.h.b16 %v2761
        %v2947 = vunpack.c.l.b16 %v2762
        %v2948 = vunpack.c.h.b16 %v2762
        %v2949 = vunpack.c.l.b16 %v2763
        %v2950 = vunpack.c.h.b16 %v2763
        %v2951 = vunpack.c.l.b16 %v2764
        %v2952 = vunpack.c.h.b16 %v2764
        %v2953 = vunpack.c.l.b16 %v2765
        %v2954 = vunpack.c.h.b16 %v2765
        %v2955 = vunpack.c.l.b16 %v2766
        %v2956 = vunpack.c.h.b16 %v2766
        %v2957 = vunpack.c.l.b16 %v2767
        %v2958 = vunpack.c.h.b16 %v2767
        %v2959 = vunpack.c.l.b16 %v2768
        %v2960 = vunpack.c.h.b16 %v2768
        %v2961 = vunpack.c.l.b16 %v2769
        %v2962 = vunpack.c.h.b16 %v2769
        %v2963 = vunpack.c.l.b16 %v2770
        %v2964 = vunpack.c.h.b16 %v2770
        %v2965 = vunpack.c.l.b16 %v2771
        %v2966 = vunpack.c.h.b16 %v2771
        %v2967 = vunpack.c.l.b16 %v2772
        %v2968 = vunpack.c.h.b16 %v2772
        %v2969 = vunpack.c.l.b16 %v2773
        %v2970 = vunpack.c.h.b16 %v2773
        %v2971 = vunpack.c.l.b16 %v2774
        %v2972 = vunpack.c.h.b16 %v2774
        %v2973 = vunpack.c.l.b16 %v2775
        %v2974 = vunpack.c.h.b16 %v2775
        %v2975 = vunpack.c.l.b16 %v2776
        %v2976 = vunpack.c.h.b16 %v2776
        %v2977 = vunpack.c.l.b16 %v2777
        %v2978 = vunpack.c.h.b16 %v2777
        %v2979 = vunpack.c.l.b16 %v2778
        %v2980 = vunpack.c.h.b16 %v2778
        %v2981 = vunpack.c.l.b16 %v2779
        %v2982 = vunpack.c.h.b16 %v2779
        %v2983 = vunpack.c.l.b16 %v2780
        %v2984 = vunpack.c.h.b16 %v2780
        %v2985 = vunpack.c.l.b16 %v2781
        %v2986 = vunpack.c.h.b16 %v2781
        %v2987 = vunpack.c.l.b16 %v2782
        %v2988 = vunpack.c.h.b16 %v2782
        %v2989 = vunpack.c.l.b16 %v2783
        %v2990 = vunpack.c.h.b16 %v2783
        %v2991 = vunpack.c.l.b16 %v2784
        %v2992 = vunpack.c.h.b16 %v2784
        %v2993 = vunpack.c.l.b16 %v2785
        %v2994 = vunpack.c.h.b16 %v2785
        %v2995 = vunpack.c.l.b16 %v2786
        %v2996 = vunpack.c.h.b16 %v2786
        %v2997 = vunpack.c.l.b16 %v2787
        %v2998 = vunpack.c.h.b16 %v2787
        %v2999 = vunpack.c.l.b16 %v2788
        %v3000 = vunpack.c.h.b16 %v2788
        %v3001 = vunpack.c.l.b16 %v2789
        %v3002 = vunpack.c.h.b16 %v2789
        %v3003 = vunpack.c.l.b16 %v2790
        %v3004 = vunpack.c.h.b16 %v2790
        %v3005 = vpack.c.b16 %v2881, %v2877
        %v3006 = vpack.c.b16 %v2882, %v2878
        %v3007 = vpack.c.b16 %v2883, %v2879
        %v3008 = vpack.c.b16 %v2884, %v2880
        %v3009 = vpack.c.b16 %v2889, %v2885
        %v3010 = vpack.c.b16 %v2890, %v2886
        %v3011 = vpack.c.b16 %v2891, %v2887
        %v3012 = vpack.c.b16 %v2892, %v2888
        %v3013 = vpack.c.b16 %v2897, %v2893
        %v3014 = vpack.c.b16 %v2898, %v2894
        %v3015 = vpack.c.b16 %v2899, %v2895
        %v3016 = vpack.c.b16 %v2900, %v2896
        %v3017 = vpack.c.b16 %v2905, %v2901
        %v3018 = vpack.c.b16 %v2906, %v2902
        %v3019 = vpack.c.b16 %v2907, %v2903
        %v3020 = vpack.c.b16 %v2908, %v2904
        %v3021 = vpack.c.b16 %v2913, %v2909
        %v3022 = vpack.c.b16 %v2914, %v2910
        %v3023 = vpack.c.b16 %v2915, %v2911
        %v3024 = vpack.c.b16 %v2916, %v2912
        %v3025 = vpack.c.b16 %v2921, %v2917
        %v3026 = vpack.c.b16 %v2922, %v2918
        %v3027 = vpack.c.b16 %v2923, %v2919
        %v3028 = vpack.c.b16 %v2924, %v2920
        %v3029 = vpack.c.b16 %v2929, %v2925
        %v3030 = vpack.c.b16 %v2930, %v2926
        %v3031 = vpack.c.b16 %v2931, %v2927
        %v3032 = vpack.c.b16 %v2932, %v2928
        %v3033 = vpack.c.b16 %v2937, %v2933
        %v3034 = vpack.c.b16 %v2938, %v2934
        %v3035 = vpack.c.b16 %v2939, %v2935
        %v3036 = vpack.c.b16 %v2940, %v2936
        %v3037 = vpack.c.b16 %v2945, %v2941
        %v3038 = vpack.c.b16 %v2946, %v2942
        %v3039 = vpack.c.b16 %v2947, %v2943
        %v3040 = vpack.c.b16 %v2948, %v2944
        %v3041 = vpack.c.b16 %v2953, %v2949
        %v3042 = vpack.c.b16 %v2954, %v2950
        %v3043 = vpack.c.b16 %v2955, %v2951
        %v3044 = vpack.c.b16 %v2956, %v2952
        %v3045 = vpack.c.b16 %v2961, %v2957
        %v3046 = vpack.c.b16 %v2962, %v2958
        %v3047 = vpack.c.b16 %v2963, %v2959
        %v3048 = vpack.c.b16 %v2964, %v2960
        %v3049 = vpack.c.b16 %v2969, %v2965
        %v3050 = vpack.c.b16 %v2970, %v2966
        %v3051 = vpack.c.b16 %v2971, %v2967
        %v3052 = vpack.c.b16 %v2972, %v2968
        %v3053 = vpack.c.b16 %v2977, %v2973
        %v3054 = vpack.c.b16 %v2978, %v2974
        %v3055 = vpack.c.b16 %v2979, %v2975
        %v3056 = vpack.c.b16 %v2980, %v2976
        %v3057 = vpack.c.b16 %v2985, %v2981
        %v3058 = vpack.c.b16 %v2986, %v2982
        %v3059 = vpack.c.b16 %v2987, %v2983
        %v3060 = vpack.c.b16 %v2988, %v2984
        %v3061 = vpack.c.b16 %v2993, %v2989
        %v3062 = vpack.c.b16 %v2994, %v2990
        %v3063 = vpack.c.b16 %v2995, %v2991
        %v3064 = vpack.c.b16 %v2996, %v2992
        %v3065 = vpack.c.b16 %v3001, %v2997
        %v3066 = vpack.c.b16 %v3002, %v2998
        %v3067 = vpack.c.b16 %v3003, %v2999
        %v3068 = vpack.c.b16 %v3004, %v3000
        %3133 = vmatprep.subr.bf16.mxu0 %v3006
        %3134 = vmatpush1.bf16.msra.mxu0 %v3005
        %3135 = vmatprep.subr.bf16.mxu0 %v3010
        %3136 = vmatpush1.bf16.msra.mxu0 %v3009
        %3137 = vmatprep.subr.bf16.mxu0 %v3014
        %3138 = vmatpush1.bf16.msra.mxu0 %v3013
        %3139 = vmatprep.subr.bf16.mxu0 %v3018
        %3140 = vmatpush1.bf16.msra.mxu0 %v3017
        %3141 = vmatprep.subr.bf16.mxu0 %v3022
        %3142 = vmatpush1.bf16.msra.mxu0 %v3021
        %3143 = vmatprep.subr.bf16.mxu0 %v3026
        %3144 = vmatpush1.bf16.msra.mxu0 %v3025
        %3145 = vmatprep.subr.bf16.mxu0 %v3030
        %3146 = vmatpush1.bf16.msra.mxu0 %v3029
        %3147 = vmatprep.subr.bf16.mxu0 %v3034
        %3148 = vmatpush1.bf16.msra.mxu0 %v3033
        %3149 = vmatprep.subr.bf16.mxu0 %v3038
        %3150 = vmatpush1.bf16.msra.mxu0 %v3037
        %3151 = vmatprep.subr.bf16.mxu0 %v3042
        %3152 = vmatpush1.bf16.msra.mxu0 %v3041
        %3153 = vmatprep.subr.bf16.mxu0 %v3046
        %3154 = vmatpush1.bf16.msra.mxu0 %v3045
        %3155 = vmatprep.subr.bf16.mxu0 %v3050
        %3156 = vmatpush1.bf16.msra.mxu0 %v3049
        %3157 = vmatprep.subr.bf16.mxu0 %v3054
        %3158 = vmatpush1.bf16.msra.mxu0 %v3053
        %3159 = vmatprep.subr.bf16.mxu0 %v3058
        %3160 = vmatpush1.bf16.msra.mxu0 %v3057
        %3161 = vmatprep.subr.bf16.mxu0 %v3062
        %3162 = vmatpush1.bf16.msra.mxu0 %v3061
        %3163 = vmatprep.subr.bf16.mxu0 %v3066
        %3164 = vmatpush1.bf16.msra.mxu0 %v3065
        %3165 = vmatprep.mubr.bf16.mxu0 %v2726
        %3166 = vmatmul.mubr.bf16.gmra.mrb[0].mxu0 %v2725
        %v3167 = vpop.f32.mrb[0].mxu0
        %v3168 = vadd.f32 %v2796, %v3167
        %v3169 = vpop.f32.mrb[0].mxu0
        %v3170 = vadd.f32 %v2800, %v3169
        %v3171 = vpop.f32.mrb[0].mxu0
        %v3172 = vpop.f32.mrb[0].mxu0
        %3173 = vdwg.mxu0
        %3174 = vmatprep.subr.bf16.mxu0 %v3008
        %3175 = vmatpush1.bf16.msra.mxu0 %v3007
        %3176 = vmatprep.subr.bf16.mxu0 %v3012
        %3177 = vmatpush1.bf16.msra.mxu0 %v3011
        %3178 = vmatprep.subr.bf16.mxu0 %v3016
        %3179 = vmatpush1.bf16.msra.mxu0 %v3015
        %3180 = vmatprep.subr.bf16.mxu0 %v3020
        %3181 = vmatpush1.bf16.msra.mxu0 %v3019
        %3182 = vmatprep.subr.bf16.mxu0 %v3024
        %3183 = vmatpush1.bf16.msra.mxu0 %v3023
        %3184 = vmatprep.subr.bf16.mxu0 %v3028
        %3185 = vmatpush1.bf16.msra.mxu0 %v3027
        %3186 = vmatprep.subr.bf16.mxu0 %v3032
        %3187 = vmatpush1.bf16.msra.mxu0 %v3031
        %3188 = vmatprep.subr.bf16.mxu0 %v3036
        %3189 = vmatpush1.bf16.msra.mxu0 %v3035
        %3190 = vmatprep.subr.bf16.mxu0 %v3040
        %3191 = vmatpush1.bf16.msra.mxu0 %v3039
        %3192 = vmatprep.subr.bf16.mxu0 %v3044
        %3193 = vmatpush1.bf16.msra.mxu0 %v3043
        %3194 = vmatprep.subr.bf16.mxu0 %v3048
        %3195 = vmatpush1.bf16.msra.mxu0 %v3047
        %3196 = vmatprep.subr.bf16.mxu0 %v3052
        %3197 = vmatpush1.bf16.msra.mxu0 %v3051
        %3198 = vmatprep.subr.bf16.mxu0 %v3056
        %3199 = vmatpush1.bf16.msra.mxu0 %v3055
        %3200 = vmatprep.subr.bf16.mxu0 %v3060
        %3201 = vmatpush1.bf16.msra.mxu0 %v3059
        %3202 = vmatprep.subr.bf16.mxu0 %v3064
        %3203 = vmatpush1.bf16.msra.mxu0 %v3063
        %3204 = vmatprep.subr.bf16.mxu0 %v3068
        %3205 = vmatpush1.bf16.msra.mxu0 %v3067
        %3206 = vmatprep.mubr.bf16.mxu0 %v2726
        %3207 = vmatmul.mubr.bf16.gmra.mrb[0].mxu0 %v2725
        %v3208 = vpop.f32.mrb[0].mxu0
        %v3209 = vadd.f32 %v2804, %v3208
        %v3210 = vpop.f32.mrb[0].mxu0
        %v3211 = vadd.f32 %v2808, %v3210
        %v3212 = vpop.f32.mrb[0].mxu0
        %v3213 = vpop.f32.mrb[0].mxu0
        %3214 = vdwg.mxu0
        %v3215 = vxor.u32 %v3168, 2147483648
        %v3216 = vmul.f32 %v3215, 1.442695
        %v3217 = vpow.pop %v3216
        %v3218 = vadd.f32 %v3217, 1.0
        %v3219 = vrcp.pop %v3218
        %v3220 = vmul.f32 1.0, %v3219
        %v3221 = vxor.u32 %v3170, 2147483648
        %v3222 = vmul.f32 %v3221, 1.442695
        %v3223 = vpow.pop %v3222
        %v3224 = vadd.f32 %v3223, 1.0
        %v3225 = vrcp.pop %v3224
        %v3226 = vmul.f32 1.0, %v3225
        %v3227 = vmul.f32 %v3220, %v3211
        %v3228 = vadd.f32 %v3209, %v3227
        %v3229 = vtanh.pop %v3228
        %v3230 = vsub.f32 1.0, %v3226
        %v3231 = vmul.f32 %v3230, %v3229
        %v3232 = vmul.f32 %v3226, %v2722
        %v3233 = vadd.f32 %v3231, %v3232
        %3234 = vst [vmem:[#allocation2] sm:$0xff] %v3233
        %v3235 = vpack.c.bf16 %v3233, %v3233
        %v3236 = vld [vmem:[#allocation13] sm:$0xf]
        %v3237 = vld [vmem:[#allocation13 + $0x4] sm:$0xf]
        %v3238 = vld [vmem:[#allocation13 + $0x8] sm:$0xf]
        %v3239 = vld [vmem:[#allocation13 + $0xc] sm:$0xf]
        %v3240 = vld [vmem:[#allocation13 + $0x10] sm:$0xf]
        %v3241 = vld [vmem:[#allocation13 + $0x14] sm:$0xf]
        %v3242 = vld [vmem:[#allocation13 + $0x18] sm:$0xf]
        %v3243 = vld [vmem:[#allocation13 + $0x1c] sm:$0xf]
        %v3244 = vld [vmem:[#allocation13 + $0x20] sm:$0xf]
        %v3245 = vld [vmem:[#allocation13 + $0x24] sm:$0xf]
        %v3246 = vld [vmem:[#allocation13 + $0x28] sm:$0xf]
        %v3247 = vld [vmem:[#allocation13 + $0x2c] sm:$0xf]
        %v3248 = vld [vmem:[#allocation13 + $0x30] sm:$0xf]
        %v3249 = vld [vmem:[#allocation13 + $0x34] sm:$0xf]
        %v3250 = vld [vmem:[#allocation13 + $0x38] sm:$0xf]
        %v3251 = vld [vmem:[#allocation13 + $0x3c] sm:$0xf]
        %v3252 = vld [vmem:[%s8] sm:$0x1]
        %v3254 = vlaneseq
        %v3255 = vshrl.u32 %v3254, 7
        %v3256 = vsub.s32 0, %v3255
        %v3257 = vrot.slane %v3252, %v3256
        %v3275 = vunpack.c.l.b16 %v3236
        %v3276 = vunpack.c.l.b16 %v3237
        %v3277 = vunpack.c.l.b16 %v3238
        %v3278 = vunpack.c.l.b16 %v3239
        %v3279 = vunpack.c.l.b16 %v3240
        %v3280 = vunpack.c.l.b16 %v3241
        %v3281 = vunpack.c.l.b16 %v3242
        %v3282 = vunpack.c.l.b16 %v3243
        %v3283 = vunpack.c.l.b16 %v3244
        %v3284 = vunpack.c.l.b16 %v3245
        %v3285 = vunpack.c.l.b16 %v3246
        %v3286 = vunpack.c.l.b16 %v3247
        %v3287 = vunpack.c.l.b16 %v3248
        %v3288 = vunpack.c.l.b16 %v3249
        %v3289 = vunpack.c.l.b16 %v3250
        %v3290 = vunpack.c.l.b16 %v3251
        %v3291 = vpack.c.b16 %v3276, %v3275
        %v3292 = vpack.c.b16 %v3278, %v3277
        %v3293 = vpack.c.b16 %v3280, %v3279
        %v3294 = vpack.c.b16 %v3282, %v3281
        %v3295 = vpack.c.b16 %v3284, %v3283
        %v3296 = vpack.c.b16 %v3286, %v3285
        %v3297 = vpack.c.b16 %v3288, %v3287
        %v3298 = vpack.c.b16 %v3290, %v3289
        %3307 = vmatprep.subr.bf16.mxu0 0
        %3308 = vmatpush1.bf16.msra.mxu0 %v3291
        %3309 = vmatprep.subr.bf16.mxu0 0
        %3310 = vmatpush1.bf16.msra.mxu0 %v3292
        %3311 = vmatprep.subr.bf16.mxu0 0
        %3312 = vmatpush1.bf16.msra.mxu0 %v3293
        %3313 = vmatprep.subr.bf16.mxu0 0
        %3314 = vmatpush1.bf16.msra.mxu0 %v3294
        %3315 = vmatprep.subr.bf16.mxu0 0
        %3316 = vmatpush1.bf16.msra.mxu0 %v3295
        %3317 = vmatprep.subr.bf16.mxu0 0
        %3318 = vmatpush1.bf16.msra.mxu0 %v3296
        %3319 = vmatprep.subr.bf16.mxu0 0
        %3320 = vmatpush1.bf16.msra.mxu0 %v3297
        %3321 = vmatprep.subr.bf16.mxu0 0
        %3322 = vmatpush1.bf16.msra.mxu0 %v3298
        %3323 = vmatprep.subr.bf16.mxu0 0
        %3324 = vmatpush1.bf16.msra.mxu0 0
        %3325 = vmatprep.subr.bf16.mxu0 0
        %3326 = vmatpush1.bf16.msra.mxu0 0
        %3327 = vmatprep.subr.bf16.mxu0 0
        %3328 = vmatpush1.bf16.msra.mxu0 0
        %3329 = vmatprep.subr.bf16.mxu0 0
        %3330 = vmatpush1.bf16.msra.mxu0 0
        %3331 = vmatprep.subr.bf16.mxu0 0
        %3332 = vmatpush1.bf16.msra.mxu0 0
        %3333 = vmatprep.subr.bf16.mxu0 0
        %3334 = vmatpush1.bf16.msra.mxu0 0
        %3335 = vmatprep.subr.bf16.mxu0 0
        %3336 = vmatpush1.bf16.msra.mxu0 0
        %3337 = vmatprep.subr.bf16.mxu0 0
        %3338 = vmatpush1.bf16.msra.mxu0 0
        %3339 = vmatprep.mubr.bf16.mxu0 0
        %3340 = vmatmul.mubr.bf16.gmra.mrb[0].mxu0 %v3235
        %v3341 = vpop.f32.mrb[0].mxu0
        %v3342 = vadd.f32 %v3257, %v3341
        %v3343 = vpop.f32.mrb[0].mxu0
        %v3344 = vpop.f32.mrb[0].mxu0
        %v3345 = vpop.f32.mrb[0].mxu0
        %3346 = vdwg.mxu0
        %3347 = vmax.xlane.f32.xlu0 %v3342
        %v3348 = vpop.xlane.xlu0 %3347
        %v3349 = vsub.f32 %v3342, %v3348
        %v3350 = vmul.f32 %v3349, 1.442695
        %v3351 = vpow.pop %v3350
        %3352 = vadd.xlane.f32.xlu0 %v3351
        %v3353 = vpop.xlane.xlu0 %3352
        %v3354 = vlog2.pop %v3353
        %v3355 = vmul.f32 %v3354, 0.6931472
        %v3356 = vadd.f32 %v3348, %v3355
        %v3357 = vsub.f32 %v3342, %v3356
        %s3358 = scalar_lea.vmem %s311, 24 [#allocation14]
        %3359 = vst [vmem:[%s3358] sm:$0xff] %v3357
        %s3360 = sld [smem:[#allocation6 + %s2719]]
        %p3361 = scmp.eq.s32.totalorder %s3360, 1
        // Predicated region
        $region85: #{tpu_custom_call.1} parent=43 // pred_check
          %p3362 = pneg %p3361
        $region86: #{tpu_custom_call.1} parent=43 // pred_check_branch
          %3364 = sbr.rel (%p3362) target = $region88
        $region87: #{tpu_custom_call.1} parent=43 // pred_region
          %s3365 = smul.u32 %s2719, 8
          %s3366 = sld [smem:[#allocation7 + %s3365]]
          %s3367 = scalar_lea.vmem [#allocation8], %s3366
          %v3368 = vld [vmem:[%s3367] sm:$0x1]
          %3369 = vst [vmem:[#allocation3] sm:$0x1] %v3368
          %s3370 = sadd.s32 %s3365, 1
          %s3371 = sld [smem:[#allocation7 + %s3370]]
          %s3372 = scalar_lea.vmem [#allocation8], %s3371
          %v3373 = vld [vmem:[%s3372] sm:$0x1]
          %3374 = vst [vmem:[#allocation3 + $0x1] sm:$0x1] %v3373
          %s3375 = sadd.s32 %s3365, 2
          %s3376 = sld [smem:[#allocation7 + %s3375]]
          %s3377 = scalar_lea.vmem [#allocation8], %s3376
          %v3378 = vld [vmem:[%s3377] sm:$0x1]
          %3379 = vst [vmem:[#allocation3 + $0x2] sm:$0x1] %v3378
          %s3380 = sadd.s32 %s3365, 3
          %s3381 = sld [smem:[#allocation7 + %s3380]]
          %s3382 = scalar_lea.vmem [#allocation8], %s3381
          %v3383 = vld [vmem:[%s3382] sm:$0x1]
          %3384 = vst [vmem:[#allocation3 + $0x3] sm:$0x1] %v3383
          %s3385 = sadd.s32 %s3365, 4
          %s3386 = sld [smem:[#allocation7 + %s3385]]
          %s3387 = scalar_lea.vmem [#allocation8], %s3386
          %v3388 = vld [vmem:[%s3387] sm:$0x1]
          %3389 = vst [vmem:[#allocation3 + $0x4] sm:$0x1] %v3388
          %s3390 = sadd.s32 %s3365, 5
          %s3391 = sld [smem:[#allocation7 + %s3390]]
          %s3392 = scalar_lea.vmem [#allocation8], %s3391
          %v3393 = vld [vmem:[%s3392] sm:$0x1]
          %3394 = vst [vmem:[#allocation3 + $0x5] sm:$0x1] %v3393
          %s3395 = sadd.s32 %s3365, 6
          %s3396 = sld [smem:[#allocation7 + %s3395]]
          %s3397 = scalar_lea.vmem [#allocation8], %s3396
          %v3398 = vld [vmem:[%s3397] sm:$0x1]
          %3399 = vst [vmem:[#allocation3 + $0x6] sm:$0x1] %v3398
          %s3400 = sadd.s32 %s3365, 7
          %s3401 = sld [smem:[#allocation7 + %s3400]]
          %s3402 = scalar_lea.vmem [#allocation8], %s3401
          %v3403 = vld [vmem:[%s3402] sm:$0x1]
          %3404 = vst [vmem:[#allocation3 + $0x7] sm:$0x1] %v3403
        $region88: #{tpu_custom_call.1} parent=43 // pred_fallthru
          _
        %p3405 = scmp.eq.s32.totalorder %s3360, 0
        // Predicated region
        $region89: #{tpu_custom_call.1} parent=43 // pred_check
          %p3406 = pneg %p3405
        $region90: #{tpu_custom_call.1} parent=43 // pred_check_branch
          %3408 = sbr.rel (%p3406) target = $region92
        $region91: #{tpu_custom_call.1} parent=43 // pred_region
          %vm3409 = vcmp.ge.f32.partialorder %v3342, %v3348
          %v3410 = vsel %vm3409, %v331, 128
          %v3411 = vand.u32 %v3410, 65535
          %v3412 = vshra.s32 %v3410, 16
          %v3413 = vcvt.s32.f32 %v3411
          %v3414 = vcvt.s32.f32 %v3412
          %3415 = vmin.xlane.f32.xlu0 %v3414
          %v3416 = vpop.xlane.xlu0 %3415
          %vm3417 = vcmp.eq.f32.partialorder %v3414, %v3416
          %v3418 = vsel %vm3417, %v3413, inf
          %3419 = vmin.xlane.f32.xlu0 %v3418
          %v3420 = vpop.xlane.xlu0 %3419
          %v3421 = vcvt.f32.s32 %v3420
          %v3422 = vcvt.f32.s32 %v3416
          %v3423 = vshll.u32 %v3422, 16
          %v3424 = vadd.s32 %v3423, %v3421
          %vm3425 = vcmp.eq.s32.totalorder %v331, %v3424
          %v3426 = vsel %vm3425, 1, 0
          %v3427 = vcvt.s32.f32 %v3426
          %v3428 = vld [vmem:[#allocation8] sm:$0xff]
          %v3429 = vld [vmem:[#allocation8 + $0x8] sm:$0xff]
          %v3430 = vld [vmem:[#allocation8 + $0x10] sm:$0xff]
          %v3431 = vld [vmem:[#allocation8 + $0x18] sm:$0xff]
          %v3432 = vld [vmem:[#allocation8 + $0x20] sm:$0xff]
          %v3433 = vld [vmem:[#allocation8 + $0x28] sm:$0xff]
          %v3434 = vld [vmem:[#allocation8 + $0x30] sm:$0xff]
          %v3435 = vld [vmem:[#allocation8 + $0x38] sm:$0xff]
          %v3436 = vld [vmem:[#allocation8 + $0x40] sm:$0xff]
          %v3437 = vld [vmem:[#allocation8 + $0x48] sm:$0xff]
          %v3438 = vld [vmem:[#allocation8 + $0x50] sm:$0xff]
          %v3439 = vld [vmem:[#allocation8 + $0x58] sm:$0xff]
          %v3440 = vld [vmem:[#allocation8 + $0x60] sm:$0xff]
          %v3441 = vld [vmem:[#allocation8 + $0x68] sm:$0xff]
          %v3442 = vld [vmem:[#allocation8 + $0x70] sm:$0xff]
          %v3443 = vld [vmem:[#allocation8 + $0x78] sm:$0xff]
          %3444 = vmatprep.subr.mxu0 0.0
          %3445 = vmatpush1.msra.mxu0 %v3428
          %3446 = vmatprep.subr.mxu0 0.0
          %3447 = vmatpush1.msra.mxu0 %v3429
          %3448 = vmatprep.subr.mxu0 0.0
          %3449 = vmatpush1.msra.mxu0 %v3430
          %3450 = vmatprep.subr.mxu0 0.0
          %3451 = vmatpush1.msra.mxu0 %v3431
          %3452 = vmatprep.subr.mxu0 0.0
          %3453 = vmatpush1.msra.mxu0 %v3432
          %3454 = vmatprep.subr.mxu0 0.0
          %3455 = vmatpush1.msra.mxu0 %v3433
          %3456 = vmatprep.subr.mxu0 0.0
          %3457 = vmatpush1.msra.mxu0 %v3434
          %3458 = vmatprep.subr.mxu0 0.0
          %3459 = vmatpush1.msra.mxu0 %v3435
          %3460 = vmatprep.subr.mxu0 0.0
          %3461 = vmatpush1.msra.mxu0 %v3436
          %3462 = vmatprep.subr.mxu0 0.0
          %3463 = vmatpush1.msra.mxu0 %v3437
          %3464 = vmatprep.subr.mxu0 0.0
          %3465 = vmatpush1.msra.mxu0 %v3438
          %3466 = vmatprep.subr.mxu0 0.0
          %3467 = vmatpush1.msra.mxu0 %v3439
          %3468 = vmatprep.subr.mxu0 0.0
          %3469 = vmatpush1.msra.mxu0 %v3440
          %3470 = vmatprep.subr.mxu0 0.0
          %3471 = vmatpush1.msra.mxu0 %v3441
          %3472 = vmatprep.subr.mxu0 0.0
          %3473 = vmatpush1.msra.mxu0 %v3442
          %3474 = vmatprep.subr.mxu0 0.0
          %3475 = vmatpush1.msra.mxu0 %v3443
          %3476 = vmatprep.subr.mxu0 0.0
          %3477 = vmatpush1.msra.mxu0 0.0
          %3478 = vmatprep.subr.mxu0 0.0
          %3479 = vmatpush1.msra.mxu0 0.0
          %3480 = vmatprep.subr.mxu0 0.0
          %3481 = vmatpush1.msra.mxu0 0.0
          %3482 = vmatprep.subr.mxu0 0.0
          %3483 = vmatpush1.msra.mxu0 0.0
          %3484 = vmatprep.subr.mxu0 0.0
          %3485 = vmatpush1.msra.mxu0 0.0
          %3486 = vmatprep.subr.mxu0 0.0
          %3487 = vmatpush1.msra.mxu0 0.0
          %3488 = vmatprep.subr.mxu0 0.0
          %3489 = vmatpush1.msra.mxu0 0.0
          %3490 = vmatprep.subr.mxu0 0.0
          %3491 = vmatpush1.msra.mxu0 0.0
          %3492 = vmatprep.subr.mxu0 0.0
          %3493 = vmatpush1.msra.mxu0 0.0
          %3494 = vmatprep.subr.mxu0 0.0
          %3495 = vmatpush1.msra.mxu0 0.0
          %3496 = vmatprep.subr.mxu0 0.0
          %3497 = vmatpush1.msra.mxu0 0.0
          %3498 = vmatprep.subr.mxu0 0.0
          %3499 = vmatpush1.msra.mxu0 0.0
          %3500 = vmatprep.subr.mxu0 0.0
          %3501 = vmatpush1.msra.mxu0 0.0
          %3502 = vmatprep.subr.mxu0 0.0
          %3503 = vmatpush1.msra.mxu0 0.0
          %3504 = vmatprep.subr.mxu0 0.0
          %3505 = vmatpush1.msra.mxu0 0.0
          %3506 = vmatprep.subr.mxu0 0.0
          %3507 = vmatpush1.msra.mxu0 0.0
          %3508 = vmatprep.mubr.f32.mxu0 0.0
          %3509 = vmatmul.mubr.f32.gmra.mrb[0].mxu0 %v3427
          %v3510 = vpop.f32.mrb[0].mxu0
          %v3511 = vadd.f32 0.0, %v3510
          %v3512 = vpop.f32.mrb[0].mxu0
          %3513 = vdwg.mxu0
          %3514 = vst [vmem:[#allocation3] sm:$0xff] %v3511
        $region92: #{tpu_custom_call.1} parent=43 // pred_fallthru
          _
        %p3515 = scmp.eq.s32.totalorder %s39, 1
        // Predicated region
        $region93: #{tpu_custom_call.1} parent=43 // pred_check
          %p3516 = pneg %p3515
        $region94: #{tpu_custom_call.1} parent=43 // pred_check_branch
          %3518 = sbr.rel (%p3516) target = $region96
        $region95: #{tpu_custom_call.1} parent=43 // pred_region
          %v3519 = vld [vmem:[#allocation2] sm:$0xff]
          %3520 = vst [vmem:[#allocation15] sm:$0xff] %v3519
        $region96: #{tpu_custom_call.1} parent=43 // pred_fallthru
          _
        %s3521 = sand.u32 %s173, 1
        %s3522 = scalar_lea.sflag [#allocation10], %s3521
        %s3523 = sand.u32 %s173, 1
        %s3524 = smul.addr %s3523, 32
        %s3525 = scalar_lea.vmem [#allocation14], %s3524
        // Predicated region
        $region97: #{tpu_custom_call.1} parent=43 // pred_check
          %p3526 = pneg %p183
        $region98: #{tpu_custom_call.1} parent=43 // pred_check_branch
          %3528 = sbr.rel (%p3526) target = $region100
        $region99: #{tpu_custom_call.1} parent=43 // pred_region
          %s3529 = smul.u32 4, %s39
          %s3531 = ssub.s32 512, 512
          %3532 = vsyncadd %s3522, %s3531
          %s3533 = smul.addr %s3529, 128
          %s3534 = scalar_lea.hbm %s9, %s3533
          %s3535 = sshll.u32 %s3525, 4
          %s3536 = int_to_ptr.vmem [resolvable:$true] %s3535
          %3541 = dma.vmem_to_hbm [thread:$0]  %s3536, 512, %s3534, %s3522, 128, 128, 8
        $region100: #{tpu_custom_call.1} parent=43 // pred_fallthru
          _
        // Predicated region
        $region101: #{tpu_custom_call.1} parent=43 // pred_check
          %p3542 = pneg %p204
        $region102: #{tpu_custom_call.1} parent=43 // pred_check_branch
          %3544 = sbr.rel (%p3542) target = $region104
        $region103: #{tpu_custom_call.1} parent=43 // pred_region
          %s3546 = ssub.s32 128, 128
          %3547 = vsyncadd [#allocation16], %s3546
          %s3549 = sshll.u32 [#allocation15], 4
          %s3550 = int_to_ptr.vmem [resolvable:$true] %s3549
          %3552 = dma.vmem_to_hbm [thread:$0]  %s3550, 128, %s10, [#allocation16]
        $region104: #{tpu_custom_call.1} parent=43 // pred_fallthru
          _
        // Predicated region
        $region105: #{tpu_custom_call.1} parent=43 // pred_check
          %p3553 = pneg %p204
        $region106: #{tpu_custom_call.1} parent=43 // pred_check_branch
          %3555 = sbr.rel (%p3553) target = $region108
        $region107: #{tpu_custom_call.1} parent=43 // pred_region
          %3556 = dma.done [#allocation16], 128
        $region108: #{tpu_custom_call.1} parent=43 // pred_fallthru
          _
      $region44: #{tpu_custom_call.1} parent=5 // pred_fallthru
        _
      %p3557 = scmp.le.s32.totalorder 2, %s34
      // Predicated region
      $region109: #{tpu_custom_call.1} parent=5 // pred_check
        %p3558 = pneg %p3557
      $region110: #{tpu_custom_call.1} parent=5 // pred_check_branch
        %3560 = sbr.rel (%p3558) target = $region112
      $region111: #{tpu_custom_call.1} parent=5 // pred_region
        %s3561 = ssub.s32 %s34, 2
        // Predicated region
        $region113: #{tpu_custom_call.1} parent=111 // pred_check
          %p3562 = pneg %p189
        $region114: #{tpu_custom_call.1} parent=111 // pred_check_branch
          %3564 = sbr.rel (%p3562) target = $region116
        $region115: #{tpu_custom_call.1} parent=111 // pred_region
          %s3565 = sand.u32 %s174, 1
          %s3566 = scalar_lea.sflag [#allocation10], %s3565
          %s3567 = sand.u32 %s174, 1
          %s3568 = smul.addr %s3567, 32
          %s3569 = scalar_lea.vmem [#allocation14], %s3568
          %3570 = dma.done %s3566, 512
        $region116: #{tpu_custom_call.1} parent=111 // pred_fallthru
          _
      $region112: #{tpu_custom_call.1} parent=5 // pred_fallthru
        _
    $region6: #{tpu_custom_call.1} parent=1 // loop_footer
      %s38 = sadd.s32 1, %s34
    $region7: #{tpu_custom_call.1} parent=1 // loop_footer_branch
      %33 = sbr.rel target = $region3
    $region8: #{tpu_custom_call.1} parent=1 // loop_exit
      _
    %3571 = vsyncpa [#allocation9], 1
    %s3572 = scalar_lea.sflag [#allocation9], 1
    %3573 = vsyncpa %s3572, 1
    %3574 = vsyncpa [#allocation12], 1
    %3575 = vsyncpa [#allocation10], 1
    %s3576 = scalar_lea.sflag [#allocation10], 1
    %3577 = vsyncpa %s3576, 1
    %3578 = vsyncpa [#allocation16], 1

</llo_original>
